<compile_context>
chip_gen: v6e
topology: v6e:2x2x1
jax: 0.10.0
libtpu: 0.0.40
codegen_flags: <defaults>
</compile_context>

<pallas_src>
import jax
import jax.numpy as jnp
import numpy as np
from jax import lax
from jax.experimental import pallas as pl
from jax.experimental.pallas import tpu as pltpu


# ----------------------------------------------------------------------------
# In-kernel helpers (operate on values, not refs)
# ----------------------------------------------------------------------------

def _col_const(per_level_vals, P, dtype):
    """[1, L*P] row vector: column (l*P + p) == per_level_vals[l].

    Built from splats + iota + selects so Mosaic lowering never sees a
    non-splat dense constant.
    """
    L = len(per_level_vals)
    LP = L * P
    out = jnp.full((1, LP), per_level_vals[-1], dtype)
    if L > 1:
        col = lax.broadcasted_iota(jnp.int32, (1, LP), 1)
        for l in range(L - 2, -1, -1):
            out = jnp.where(col < (l + 1) * P,
                            jnp.full((1, LP), per_level_vals[l], dtype), out)
    return out


def _tree_sum(terms):
    """Balanced binary-tree sum of a list of same-shaped arrays."""
    terms = list(terms)
    while len(terms) > 1:
        nxt = []
        for i in range(0, len(terms) - 1, 2):
            nxt.append(terms[i] + terms[i + 1])
        if len(terms) % 2:
            nxt.append(terms[-1])
        terms = nxt
    return terms[0]


def _layer_norm(x, g, b):
    mu = jnp.mean(x, axis=-1, keepdims=True)
    xc = x - mu
    var = jnp.mean(xc * xc, axis=-1, keepdims=True)
    return xc * lax.rsqrt(var + 1e-5) * g + b


def _defor_attn(x, qpos, value, refx, refy, wv, bv, wq, bq, wout, bout,
                shapes, H, P):
    """DeforAttn forward on VMEM-resident values.

    x, qpos : [Qb, C]      refx, refy : [Qb, L*P]  (level-repeated ref points)
    value   : [Vt, C]      wq, bq     : fused [C, 3*H*L*P] projection
    """
    Qb, C = x.shape
    Vt = value.shape[0]
    L = len(shapes)
    LP = L * P
    HLP = H * LP
    Dh = C // H

    sizes = [h * w for h, w in shapes]
    starts = [0]
    for s in sizes[:-1]:
        starts.append(starts[-1] + s)

    # per-(level, point) column constants, baked at trace time
    wl_f = _col_const([float(w) for _, w in shapes], P, jnp.float32)
    hl_f = _col_const([float(h) for h, _ in shapes], P, jnp.float32)
    wl_i = _col_const([int(w) for _, w in shapes], P, jnp.int32)
    hl_i = _col_const([int(h) for h, _ in shapes], P, jnp.int32)
    st_i = _col_const([int(s) for s in starts], P, jnp.int32)

    q = x + qpos                                              # query + query_pos
    # value projection  [Vt, C]
    v = jnp.dot(value, wv, preferred_element_type=jnp.float32) + bv
    # fused q-side projection (x-offsets | y-offsets | attn logits): ONE matmul
    proj = jnp.dot(q, wq, preferred_element_type=jnp.float32) + bq   # [Qb, 3*HLP]

    iota_v = lax.broadcasted_iota(jnp.int32, (Qb, Vt), 1)

    out = None
    for h in range(H):
        offx = proj[:, h * LP:(h + 1) * LP]
        offy = proj[:, HLP + h * LP:HLP + (h + 1) * LP]
        logit = proj[:, 2 * HLP + h * LP:2 * HLP + (h + 1) * LP]

        # softmax over the L*P slots of this head (reciprocal on the EUP)
        m = jnp.max(logit, axis=-1, keepdims=True)
        e = jnp.exp(logit - m)
        attn = e * pl.reciprocal(jnp.sum(e, axis=-1, keepdims=True), approx=True)

        # bilinear sample coords, vectorized over all L*P samples
        # loc = ref + off / (W, H);  pix = loc * size - 0.5 (align_corners=False)
        px = refx * wl_f + offx - 0.5
        py = refy * hl_f + offy - 0.5
        x0f = jnp.floor(px)
        y0f = jnp.floor(py)
        lx = px - x0f
        ly = py - y0f
        x0 = x0f.astype(jnp.int32)
        y0 = y0f.astype(jnp.int32)
        x1 = x0 + 1
        y1 = y0 + 1
        omx = 1.0 - lx
        omy = 1.0 - ly

        # shared in-bounds sub-masks (8 compares / sample instead of 16)
        mx0 = (x0 >= 0) & (x0 < wl_i)
        mx1 = (x1 >= 0) & (x1 < wl_i)
        my0 = (y0 >= 0) & (y0 < hl_i)
        my1 = (y1 >= 0) & (y1 < hl_i)

        # shared linear-index math: NW corner, then +1 / +Wl / +Wl+1
        idx00 = y0 * wl_i + x0 + st_i
        idx10 = idx00 + 1
        idx01 = idx00 + wl_i
        idx11 = idx01 + 1

        # pre-scale by the attention weight along x once (6 muls vs 8 / sample)
        ax0 = omx * attn
        ax1 = lx * attn

        corners = ((idx00, mx0 & my0, ax0 * omy),
                   (idx10, mx1 & my0, ax1 * omy),
                   (idx01, mx0 & my1, ax0 * ly),
                   (idx11, mx1 & my1, ax1 * ly))

        # Dense sampling matrix A [Qb, Vt]: 8 independent accumulation chains
        # (2 per corner, even/odd sample columns) -> VALU ILP with a bounded
        # live vreg set, then a balanced tree-sum.
        # NOTE: an out-of-bounds corner may produce an idx that lands in a
        # neighbouring level's column range, but its weight is zero-masked
        # here, so the contribution is exactly 0 (grid_sample zero padding).
        chains = []
        for idx, inb, cw in corners:
            w = jnp.where(inb, cw, 0.0)                       # [Qb, LP]
            accs = [None, None]
            for s in range(LP):
                term = jnp.where(iota_v == idx[:, s:s + 1], w[:, s:s + 1], 0.0)
                k = s & 1
                accs[k] = term if accs[k] is None else accs[k] + term
            chains.extend(a for a in accs if a is not None)
        A = _tree_sum(chains)

        # Fold head concat + output projection into per-head MXU accumulation:
        #   out += A @ (v_h @ Wout_h)     (K = Vt matmul, no lane-axis concat)
        vproj = jnp.dot(v[:, h * Dh:(h + 1) * Dh], wout[h * Dh:(h + 1) * Dh, :],
                        preferred_element_type=jnp.float32)    # [Vt, C]
        contrib = jnp.dot(A, vproj, preferred_element_type=jnp.float32)
        out = contrib if out is None else out + contrib

    # dropout == identity (eval); residual uses the pre-pos query
    return out + bout + x


# ----------------------------------------------------------------------------
# Fused block kernel (single pallas_call for the whole Block forward)
# ----------------------------------------------------------------------------

def make_block_kernel(ss_self, ss_cross, num_heads, num_points):
    ss_self = tuple((int(h), int(w)) for h, w in ss_self)
    ss_cross = tuple((int(h), int(w)) for h, w in ss_cross)
    H, P = int(num_heads), int(num_points)

    def kernel(q_ref, qfull_ref, qpos_ref, val_ref,
               rxs_ref, rys_ref, rxc_ref, ryc_ref,
               sa_wv, sa_bv, sa_wq, sa_bq, sa_wo, sa_bo,
               ln1_g, ln1_b,
               ca_wv, ca_bv, ca_wq, ca_bq, ca_wo, ca_bo,
               ln2_g, ln2_b,
               ffn_w1, ffn_b1, ffn_w2, ffn_b2,
               ln3_g, ln3_b,
               o_ref):
        qpos = qpos_ref[...]
        x = q_ref[...]

        # ---- self_attn (value = the full pre-block query sequence) ----
        x = _defor_attn(x, qpos, qfull_ref[...], rxs_ref[...], rys_ref[...],
                        sa_wv[...], sa_bv[...], sa_wq[...], sa_bq[...],
                        sa_wo[...], sa_bo[...], ss_self, H, P)
        x = _layer_norm(x, ln1_g[...], ln1_b[...])

        # ---- cross_attn ----
        x = _defor_attn(x, qpos, val_ref[...], rxc_ref[...], ryc_ref[...],
                        ca_wv[...], ca_bv[...], ca_wq[...], ca_bq[...],
                        ca_wo[...], ca_bo[...], ss_cross, H, P)
        x = _layer_norm(x, ln2_g[...], ln2_b[...])

        # ---- ffn (ReLU MLP, add_identity, dropout == identity) ----
        hmid = jnp.dot(x, ffn_w1[...],
                       preferred_element_type=jnp.float32) + ffn_b1[...]
        hmid = jnp.maximum(hmid, 0.0)
        x = x + jnp.dot(hmid, ffn_w2[...],
                        preferred_element_type=jnp.float32) + ffn_b2[...]
        x = _layer_norm(x, ln3_g[...], ln3_b[...])

        o_ref[...] = x

    return kernel


# ----------------------------------------------------------------------------
# Wrappers (glue: parameter permutation / layout plumbing only)
# ----------------------------------------------------------------------------

def _fuse_qside_weights(p, H, L, P):
    """Concatenate (x-offset | y-offset | attn-logit) projections -> one matmul."""
    C = p['wv'].shape[0]
    HLP = H * L * P
    woff = p['woff'].reshape(C, H, L, P, 2)
    boff = p['boff'].reshape(1, H, L, P, 2)
    wq = jnp.concatenate([woff[..., 0].reshape(C, HLP),
                          woff[..., 1].reshape(C, HLP),
                          p['wattn']], axis=1)                 # [C, 3*HLP]
    bq = jnp.concatenate([boff[..., 0].reshape(1, HLP),
                          boff[..., 1].reshape(1, HLP),
                          p['battn']], axis=1)                 # [1, 3*HLP]
    return wq, bq


def block_forward_pallas(query, query_pos, value, ref_2d, ss_cross, ss_self,
                         params, num_heads, num_points, q_tile=None):
    """cfgs = ['self_attn', 'norm', 'cross_attn', 'norm', 'ffn', 'norm']."""
    q = query[0]
    qp = query_pos[0]
    v = value[0]
    ref = ref_2d[0]
    Q, C = q.shape
    P = int(num_points)
    assert len(ss_self) == 1              # module: self-attn uses ref[:, :, :1]
    Ls, Lc = len(ss_self), len(ss_cross)

    # Wrapper-side layout plumbing (not compute hoisting): repeat each level's
    # reference point across its P sample columns so the kernel's bilinear
    # math is fully vectorized over the (level, point) axis.
    rxs = jnp.repeat(ref[:, :1, 0], P, axis=1)                 # [Q, Ls*P]
    rys = jnp.repeat(ref[:, :1, 1], P, axis=1)
    rxc = jnp.repeat(ref[:, :, 0], P, axis=1)                  # [Q, Lc*P]
    ryc = jnp.repeat(ref[:, :, 1], P, axis=1)

    sa = params['self_attn']
    ca = params['cross_attn']
    fp = params['ffn']
    sa_wq, sa_bq = _fuse_qside_weights(sa, num_heads, Ls, P)
    ca_wq, ca_bq = _fuse_qside_weights(ca, num_heads, Lc, P)

    # Single grid step on v5e/v6e (1 TC); on v7x pick q_tile = Q // (2k) so
    # the "parallel" axis shards across both TensorCores at production Q.
    if q_tile is None:
        q_tile = Q
    assert Q % q_tile == 0 and q_tile % 8 == 0
    grid = (Q // q_tile,)

    def tiled(cols):
        return pl.BlockSpec((q_tile, cols), lambda i: (i, 0))

    def full(arr):
        return pl.BlockSpec(arr.shape, lambda i: (0, 0))

    args = (q, q, qp, v, rxs, rys, rxc, ryc,
            sa['wv'], sa['bv'], sa_wq, sa_bq, sa['wout'], sa['bout'],
            params['ln1']['gamma'], params['ln1']['beta'],
            ca['wv'], ca['bv'], ca_wq, ca_bq, ca['wout'], ca['bout'],
            params['ln2']['gamma'], params['ln2']['beta'],
            fp['w1'], fp['b1'], fp['w2'], fp['b2'],
            params['ln3']['gamma'], params['ln3']['beta'])
    in_specs = ([tiled(C), full(q), tiled(C), full(v),
                 tiled(Ls * P), tiled(Ls * P), tiled(Lc * P), tiled(Lc * P)]
                + [full(a) for a in args[8:]])

    kernel = make_block_kernel(ss_self, ss_cross, num_heads, num_points)
    out = pl.pallas_call(
        kernel,
        out_shape=jax.ShapeDtypeStruct((Q, C), jnp.float32),
        grid=grid,
        in_specs=in_specs,
        out_specs=pl.BlockSpec((q_tile, C), lambda i: (i, 0)),
        compiler_params=pltpu.CompilerParams(
            dimension_semantics=("parallel",),
            # Working set here is < 1 MiB; 32 MiB fits the v7x 64 MiB VMEM
            # with double-buffering headroom (re-derive q_tile for big Q*V).
            vmem_limit_bytes=32 * 1024 * 1024),
    )(*args)
    return out[None]


# ----------------------------------------------------------------------------
# Pure-JAX reference (for correctness check)
# ----------------------------------------------------------------------------

def _dot(a, b):
    return jnp.dot(a, b, precision=lax.Precision.HIGHEST)


def defor_attn_ref(query, query_pos, value, ref_pts, spatial_shapes, p, H, P):
    Q, C = query.shape
    L = len(spatial_shapes)
    Dh = C // H
    q = query + query_pos
    v = _dot(value, p['wv']) + p['bv']
    off = (_dot(q, p['woff']) + p['boff']).reshape(Q, H, L, P, 2)
    att = (_dot(q, p['wattn']) + p['battn']).reshape(Q, H, L * P)
    att = jax.nn.softmax(att, axis=-1).reshape(Q, H, L, P)
    starts = [0]
    for h_, w_ in spatial_shapes[:-1]:
        starts.append(starts[-1] + h_ * w_)
    outs = []
    for h in range(H):
        vh = v[:, h * Dh:(h + 1) * Dh]
        acc = jnp.zeros((Q, Dh), jnp.float32)
        for l, (Hl, Wl) in enumerate(spatial_shapes):
            for pt in range(P):
                locx = ref_pts[:, l, 0] + off[:, h, l, pt, 0] / Wl
                locy = ref_pts[:, l, 1] + off[:, h, l, pt, 1] / Hl
                px = locx * Wl - 0.5
                py = locy * Hl - 0.5
                x0 = jnp.floor(px)
                y0 = jnp.floor(py)
                lx = px - x0
                ly = py - y0
                x0i = x0.astype(jnp.int32)
                y0i = y0.astype(jnp.int32)
                aw = att[:, h, l, pt]
                for dx, dy, wgt in ((0, 0, (1 - lx) * (1 - ly)),
                                    (1, 0, lx * (1 - ly)),
                                    (0, 1, (1 - lx) * ly),
                                    (1, 1, lx * ly)):
                    xi = x0i + dx
                    yi = y0i + dy
                    inb = (xi >= 0) & (xi < Wl) & (yi >= 0) & (yi < Hl)
                    idx = jnp.clip(yi * Wl + xi + starts[l], 0, v.shape[0] - 1)
                    samp = vh[idx]
                    acc = acc + samp * jnp.where(inb, wgt * aw, 0.0)[:, None]
        outs.append(acc)
    out = outs[0] if H == 1 else jnp.concatenate(outs, axis=-1)
    out = _dot(out, p['wout']) + p['bout']
    return out + query


def layernorm_ref(x, p):
    mu = jnp.mean(x, axis=-1, keepdims=True)
    xc = x - mu
    var = jnp.mean(xc * xc, axis=-1, keepdims=True)
    return xc * lax.rsqrt(var + 1e-5) * p['gamma'] + p['beta']


def ffn_ref(x, p):
    h = jnp.maximum(_dot(x, p['w1']) + p['b1'], 0.0)
    return x + _dot(h, p['w2']) + p['b2']


def block_forward_ref(query, query_pos, value, ref_2d, ss_cross, ss_self,
                      params, H, P):
    q = query[0]
    qp = query_pos[0]
    v = value[0]
    ref = ref_2d[0]
    x = defor_attn_ref(q, qp, q, ref[:, :1, :], ss_self, params['self_attn'], H, P)
    x = layernorm_ref(x, params['ln1'])
    x = defor_attn_ref(x, qp, v, ref, ss_cross, params['cross_attn'], H, P)
    x = layernorm_ref(x, params['ln2'])
    x = ffn_ref(x, params['ffn'])
    x = layernorm_ref(x, params['ln3'])
    return x[None]


# ----------------------------------------------------------------------------
# Deterministic parameter init (shapes from the module's __init__)
# ----------------------------------------------------------------------------

def _init_linear(key, fan_in, fan_out, w_scale=0.08, b_scale=0.02):
    kw, kb = jax.random.split(key)
    w = jax.random.normal(kw, (fan_in, fan_out), jnp.float32) * w_scale
    b = jax.random.normal(kb, (1, fan_out), jnp.float32) * b_scale
    return w, b


def _init_defor_attn(key, C, H, L, P):
    ks = jax.random.split(key, 4)
    wv, bv = _init_linear(ks[0], C, C)
    woff, boff = _init_linear(ks[1], C, H * L * P * 2, w_scale=0.02, b_scale=0.05)
    wattn, battn = _init_linear(ks[2], C, H * L * P, w_scale=0.05)
    wout, bout = _init_linear(ks[3], C, C)
    return dict(wv=wv, bv=bv, woff=woff, boff=boff,
                wattn=wattn, battn=battn, wout=wout, bout=bout)


def _init_ln(key, C):
    k1, k2 = jax.random.split(key)
    return dict(gamma=1.0 + 0.05 * jax.random.normal(k1, (1, C), jnp.float32),
                beta=0.05 * jax.random.normal(k2, (1, C), jnp.float32))


def init_block_params(key, C, H, P, num_levels_cross):
    ks = jax.random.split(key, 6)
    k_ffn = jax.random.split(ks[4], 2)
    w1, b1 = _init_linear(k_ffn[0], C, 4 * C)
    w2, b2 = _init_linear(k_ffn[1], 4 * C, C)
    return dict(
        self_attn=_init_defor_attn(ks[0], C, H, 1, P),
        ln1=_init_ln(ks[1], C),
        cross_attn=_init_defor_attn(ks[2], C, H, num_levels_cross, P),
        ln2=_init_ln(ks[3], C),
        ffn=dict(w1=w1, b1=b1, w2=w2, b2=b2),
        ln3=_init_ln(ks[5], C),
    )


# ----------------------------------------------------------------------------
# Main
# ----------------------------------------------------------------------------

if __name__ == "__main__":
    C = 32                                   # embed_dims
    Hm, Wm = 8, 8                            # query spatial shape -> Q = 64
    Q = Hm * Wm
    ss_cross = ((8, 8), (4, 4), (2, 2))      # feature_levels=[3] (single agent)
    ss_self = ((8, 8),)                      # self-attn uses the query map
    V = sum(h * w for h, w in ss_cross)      # 84
    num_heads, num_points = 1, 4             # module defaults

    key = jax.random.PRNGKey(0)
    keys = jax.random.split(key, 5)
    query = jax.random.normal(keys[0], (1, Q, C), jnp.float32)
    query_pos = jax.random.normal(keys[1], (1, Q, C), jnp.float32)
    value = jax.random.normal(keys[2], (1, V, C), jnp.float32)
    ref_2d = jax.random.uniform(keys[3], (1, Q, len(ss_cross), 2), jnp.float32)

    params = init_block_params(keys[4], C, num_heads, num_points, len(ss_cross))

    out = block_forward_pallas(query, query_pos, value, ref_2d,
                               ss_cross, ss_self, params,
                               num_heads, num_points)
    out = jax.block_until_ready(out)

    ref = jax.block_until_ready(
        block_forward_ref(query, query_pos, value, ref_2d,
                          ss_cross, ss_self, params, num_heads, num_points))

    out_np = np.asarray(out)
    ref_np = np.asarray(ref)
    assert out_np.shape == (1, Q, C)
    assert np.all(np.isfinite(out_np))
    # 5e-3 tolerance: pl.reciprocal(approx=True) in the softmax denominator
    # adds ~2^-12 relative error on top of f32 MXU rounding.
    assert np.allclose(out_np, ref_np, atol=5e-3, rtol=5e-3), \
        f"max abs err = {np.abs(out_np - ref_np).max()}"
    print("KERNEL_OK")
</pallas_src>

<mosaic_0001>
module attributes {stable_mosaic.version = 11 : i64} {
  func.func @kernel(%arg0: i32, %arg1: memref<64x32xf32, #tpu.memory_space<vmem>>, %arg2: memref<64x32xf32, #tpu.memory_space<vmem>>, %arg3: memref<64x32xf32, #tpu.memory_space<vmem>>, %arg4: memref<84x32xf32, #tpu.memory_space<vmem>>, %arg5: memref<64x4xf32, #tpu.memory_space<vmem>>, %arg6: memref<64x4xf32, #tpu.memory_space<vmem>>, %arg7: memref<64x12xf32, #tpu.memory_space<vmem>>, %arg8: memref<64x12xf32, #tpu.memory_space<vmem>>, %arg9: memref<32x32xf32, #tpu.memory_space<vmem>>, %arg10: memref<1x32xf32, #tpu.memory_space<vmem>>, %arg11: memref<32x12xf32, #tpu.memory_space<vmem>>, %arg12: memref<1x12xf32, #tpu.memory_space<vmem>>, %arg13: memref<32x32xf32, #tpu.memory_space<vmem>>, %arg14: memref<1x32xf32, #tpu.memory_space<vmem>>, %arg15: memref<1x32xf32, #tpu.memory_space<vmem>>, %arg16: memref<1x32xf32, #tpu.memory_space<vmem>>, %arg17: memref<32x32xf32, #tpu.memory_space<vmem>>, %arg18: memref<1x32xf32, #tpu.memory_space<vmem>>, %arg19: memref<32x36xf32, #tpu.memory_space<vmem>>, %arg20: memref<1x36xf32, #tpu.memory_space<vmem>>, %arg21: memref<32x32xf32, #tpu.memory_space<vmem>>, %arg22: memref<1x32xf32, #tpu.memory_space<vmem>>, %arg23: memref<1x32xf32, #tpu.memory_space<vmem>>, %arg24: memref<1x32xf32, #tpu.memory_space<vmem>>, %arg25: memref<32x128xf32, #tpu.memory_space<vmem>>, %arg26: memref<1x128xf32, #tpu.memory_space<vmem>>, %arg27: memref<128x32xf32, #tpu.memory_space<vmem>>, %arg28: memref<1x32xf32, #tpu.memory_space<vmem>>, %arg29: memref<1x32xf32, #tpu.memory_space<vmem>>, %arg30: memref<1x32xf32, #tpu.memory_space<vmem>>, %arg31: memref<64x32xf32, #tpu.memory_space<vmem>>) attributes {dimension_semantics = [#tpu.dimension_semantics<parallel>], iteration_bounds = array<i64: 1>, scalar_prefetch = 0 : i64, scratch_operands = 0 : i64, tpu.core_type = #tpu.core_type<tc>, window_params = [{transform_indices = @transform_0, window_bounds = array<i64: 64, 32>}, {pipeline_mode = #tpu.pipeline_mode<synchronous>, transform_indices = @transform_1, window_bounds = array<i64: 64, 32>}, {transform_indices = @transform_2, window_bounds = array<i64: 64, 32>}, {pipeline_mode = #tpu.pipeline_mode<synchronous>, transform_indices = @transform_3, window_bounds = array<i64: 84, 32>}, {transform_indices = @transform_4, window_bounds = array<i64: 64, 4>}, {transform_indices = @transform_5, window_bounds = array<i64: 64, 4>}, {transform_indices = @transform_6, window_bounds = array<i64: 64, 12>}, {transform_indices = @transform_7, window_bounds = array<i64: 64, 12>}, {pipeline_mode = #tpu.pipeline_mode<synchronous>, transform_indices = @transform_8, window_bounds = array<i64: 32, 32>}, {pipeline_mode = #tpu.pipeline_mode<synchronous>, transform_indices = @transform_9, window_bounds = array<i64: 1, 32>}, {pipeline_mode = #tpu.pipeline_mode<synchronous>, transform_indices = @transform_10, window_bounds = array<i64: 32, 12>}, {pipeline_mode = #tpu.pipeline_mode<synchronous>, transform_indices = @transform_11, window_bounds = array<i64: 1, 12>}, {pipeline_mode = #tpu.pipeline_mode<synchronous>, transform_indices = @transform_12, window_bounds = array<i64: 32, 32>}, {pipeline_mode = #tpu.pipeline_mode<synchronous>, transform_indices = @transform_13, window_bounds = array<i64: 1, 32>}, {pipeline_mode = #tpu.pipeline_mode<synchronous>, transform_indices = @transform_14, window_bounds = array<i64: 1, 32>}, {pipeline_mode = #tpu.pipeline_mode<synchronous>, transform_indices = @transform_15, window_bounds = array<i64: 1, 32>}, {pipeline_mode = #tpu.pipeline_mode<synchronous>, transform_indices = @transform_16, window_bounds = array<i64: 32, 32>}, {pipeline_mode = #tpu.pipeline_mode<synchronous>, transform_indices = @transform_17, window_bounds = array<i64: 1, 32>}, {pipeline_mode = #tpu.pipeline_mode<synchronous>, transform_indices = @transform_18, window_bounds = array<i64: 32, 36>}, {pipeline_mode = #tpu.pipeline_mode<synchronous>, transform_indices = @transform_19, window_bounds = array<i64: 1, 36>}, {pipeline_mode = #tpu.pipeline_mode<synchronous>, transform_indices = @transform_20, window_bounds = array<i64: 32, 32>}, {pipeline_mode = #tpu.pipeline_mode<synchronous>, transform_indices = @transform_21, window_bounds = array<i64: 1, 32>}, {pipeline_mode = #tpu.pipeline_mode<synchronous>, transform_indices = @transform_22, window_bounds = array<i64: 1, 32>}, {pipeline_mode = #tpu.pipeline_mode<synchronous>, transform_indices = @transform_23, window_bounds = array<i64: 1, 32>}, {pipeline_mode = #tpu.pipeline_mode<synchronous>, transform_indices = @transform_24, window_bounds = array<i64: 32, 128>}, {pipeline_mode = #tpu.pipeline_mode<synchronous>, transform_indices = @transform_25, window_bounds = array<i64: 1, 128>}, {pipeline_mode = #tpu.pipeline_mode<synchronous>, transform_indices = @transform_26, window_bounds = array<i64: 128, 32>}, {pipeline_mode = #tpu.pipeline_mode<synchronous>, transform_indices = @transform_27, window_bounds = array<i64: 1, 32>}, {pipeline_mode = #tpu.pipeline_mode<synchronous>, transform_indices = @transform_28, window_bounds = array<i64: 1, 32>}, {pipeline_mode = #tpu.pipeline_mode<synchronous>, transform_indices = @transform_29, window_bounds = array<i64: 1, 32>}, {transform_indices = @transform_30, window_bounds = array<i64: 64, 32>}]} {
    %c0 = arith.constant 0 : index
    %c0_0 = arith.constant 0 : index
    %0 = vector.load %arg3[%c0, %c0_0] : memref<64x32xf32, #tpu.memory_space<vmem>>, vector<64x32xf32>
    %c0_1 = arith.constant 0 : index
    %c0_2 = arith.constant 0 : index
    %1 = vector.load %arg1[%c0_1, %c0_2] : memref<64x32xf32, #tpu.memory_space<vmem>>, vector<64x32xf32>
    %c0_3 = arith.constant 0 : index
    %c0_4 = arith.constant 0 : index
    %2 = vector.load %arg2[%c0_3, %c0_4] : memref<64x32xf32, #tpu.memory_space<vmem>>, vector<64x32xf32>
    %c0_5 = arith.constant 0 : index
    %c0_6 = arith.constant 0 : index
    %3 = vector.load %arg5[%c0_5, %c0_6] : memref<64x4xf32, #tpu.memory_space<vmem>>, vector<64x4xf32>
    %c0_7 = arith.constant 0 : index
    %c0_8 = arith.constant 0 : index
    %4 = vector.load %arg6[%c0_7, %c0_8] : memref<64x4xf32, #tpu.memory_space<vmem>>, vector<64x4xf32>
    %c0_9 = arith.constant 0 : index
    %c0_10 = arith.constant 0 : index
    %5 = vector.load %arg9[%c0_9, %c0_10] : memref<32x32xf32, #tpu.memory_space<vmem>>, vector<32x32xf32>
    %c0_11 = arith.constant 0 : index
    %c0_12 = arith.constant 0 : index
    %6 = vector.load %arg10[%c0_11, %c0_12] : memref<1x32xf32, #tpu.memory_space<vmem>>, vector<1x32xf32>
    %c0_13 = arith.constant 0 : index
    %c0_14 = arith.constant 0 : index
    %7 = vector.load %arg11[%c0_13, %c0_14] : memref<32x12xf32, #tpu.memory_space<vmem>>, vector<32x12xf32>
    %c0_15 = arith.constant 0 : index
    %c0_16 = arith.constant 0 : index
    %8 = vector.load %arg12[%c0_15, %c0_16] : memref<1x12xf32, #tpu.memory_space<vmem>>, vector<1x12xf32>
    %c0_17 = arith.constant 0 : index
    %c0_18 = arith.constant 0 : index
    %9 = vector.load %arg13[%c0_17, %c0_18] : memref<32x32xf32, #tpu.memory_space<vmem>>, vector<32x32xf32>
    %c0_19 = arith.constant 0 : index
    %c0_20 = arith.constant 0 : index
    %10 = vector.load %arg14[%c0_19, %c0_20] : memref<1x32xf32, #tpu.memory_space<vmem>>, vector<1x32xf32>
    %cst = arith.constant 8.000000e+00 : f32
    %11 = vector.broadcast %cst : f32 to vector<1x4xf32>
    %cst_21 = arith.constant 8.000000e+00 : f32
    %12 = vector.broadcast %cst_21 : f32 to vector<1x4xf32>
    %c8_i32 = arith.constant 8 : i32
    %13 = vector.broadcast %c8_i32 : i32 to vector<1x4xi32>
    %c8_i32_22 = arith.constant 8 : i32
    %14 = vector.broadcast %c8_i32_22 : i32 to vector<1x4xi32>
    %c0_i32 = arith.constant 0 : i32
    %15 = vector.broadcast %c0_i32 : i32 to vector<1x4xi32>
    %16 = arith.addf %1, %0 : vector<64x32xf32>
    %cst_23 = arith.constant dense<0.000000e+00> : vector<64x32xf32>
    %17 = tpu.matmul %2, %5, %cst_23 {dimension_numbers = #tpu.dot_dimension_numbers<[1], [0], [0], [1], [0, 0, 1, 1], [], []>} : vector<64x32xf32>, vector<32x32xf32>, vector<64x32xf32> -> vector<64x32xf32>
    %18 = vector.broadcast %6 : vector<1x32xf32> to vector<64x32xf32>
    %19 = arith.addf %17, %18 : vector<64x32xf32>
    %cst_24 = arith.constant dense<0.000000e+00> : vector<64x12xf32>
    %20 = tpu.matmul %16, %7, %cst_24 {dimension_numbers = #tpu.dot_dimension_numbers<[1], [0], [0], [1], [0, 0, 1, 1], [], []>} : vector<64x32xf32>, vector<32x12xf32>, vector<64x12xf32> -> vector<64x12xf32>
    %21 = vector.broadcast %8 : vector<1x12xf32> to vector<64x12xf32>
    %22 = arith.addf %20, %21 : vector<64x12xf32>
    %23 = tpu.iota {dimensions = array<i32: 1>} : vector<64x64xi32>
    %24 = vector.extract_strided_slice %22 {offsets = [0, 0], sizes = [64, 4], strides = [1, 1]} : vector<64x12xf32> to vector<64x4xf32>
    %25 = vector.extract_strided_slice %22 {offsets = [0, 4], sizes = [64, 4], strides = [1, 1]} : vector<64x12xf32> to vector<64x4xf32>
    %26 = vector.extract_strided_slice %22 {offsets = [0, 8], sizes = [64, 4], strides = [1, 1]} : vector<64x12xf32> to vector<64x4xf32>
    %cst_25 = arith.constant dense<0xFF800000> : vector<64xf32>
    %27 = vector.multi_reduction <maximumf>, %26, %cst_25 [1] : vector<64x4xf32> to vector<64xf32>
    %28 = vector.shape_cast %27 : vector<64xf32> to vector<64x1xf32>
    %29 = vector.broadcast %28 : vector<64x1xf32> to vector<64x4xf32>
    %30 = arith.subf %26, %29 : vector<64x4xf32>
    %31 = math.exp %30 : vector<64x4xf32>
    %cst_26 = arith.constant dense<0.000000e+00> : vector<64xf32>
    %32 = vector.multi_reduction <add>, %31, %cst_26 [1] : vector<64x4xf32> to vector<64xf32>
    %33 = vector.shape_cast %32 : vector<64xf32> to vector<64x1xf32>
    %34 = tpu.reciprocal %33 {approx = true} : vector<64x1xf32> -> vector<64x1xf32>
    %35 = vector.broadcast %34 : vector<64x1xf32> to vector<64x4xf32>
    %36 = arith.mulf %31, %35 : vector<64x4xf32>
    %37 = vector.broadcast %11 : vector<1x4xf32> to vector<64x4xf32>
    %38 = arith.mulf %3, %37 : vector<64x4xf32>
    %39 = arith.addf %38, %24 : vector<64x4xf32>
    %cst_27 = arith.constant 5.000000e-01 : f32
    %40 = vector.broadcast %cst_27 : f32 to vector<64x4xf32>
    %41 = arith.subf %39, %40 : vector<64x4xf32>
    %42 = vector.broadcast %12 : vector<1x4xf32> to vector<64x4xf32>
    %43 = arith.mulf %4, %42 : vector<64x4xf32>
    %44 = arith.addf %43, %25 : vector<64x4xf32>
    %cst_28 = arith.constant 5.000000e-01 : f32
    %45 = vector.broadcast %cst_28 : f32 to vector<64x4xf32>
    %46 = arith.subf %44, %45 : vector<64x4xf32>
    %47 = math.floor %41 : vector<64x4xf32>
    %48 = math.floor %46 : vector<64x4xf32>
    %49 = arith.subf %41, %47 : vector<64x4xf32>
    %50 = arith.subf %46, %48 : vector<64x4xf32>
    %51 = arith.fptosi %47 : vector<64x4xf32> to vector<64x4xi32>
    %52 = arith.fptosi %48 : vector<64x4xf32> to vector<64x4xi32>
    %c1_i32 = arith.constant 1 : i32
    %53 = vector.broadcast %c1_i32 : i32 to vector<64x4xi32>
    %54 = arith.addi %51, %53 : vector<64x4xi32>
    %c1_i32_29 = arith.constant 1 : i32
    %55 = vector.broadcast %c1_i32_29 : i32 to vector<64x4xi32>
    %56 = arith.addi %52, %55 : vector<64x4xi32>
    %cst_30 = arith.constant 1.000000e+00 : f32
    %57 = vector.broadcast %cst_30 : f32 to vector<64x4xf32>
    %58 = arith.subf %57, %49 : vector<64x4xf32>
    %cst_31 = arith.constant 1.000000e+00 : f32
    %59 = vector.broadcast %cst_31 : f32 to vector<64x4xf32>
    %60 = arith.subf %59, %50 : vector<64x4xf32>
    %c0_i32_32 = arith.constant 0 : i32
    %61 = vector.broadcast %c0_i32_32 : i32 to vector<64x4xi32>
    %62 = arith.cmpi sge, %51, %61 : vector<64x4xi32>
    %63 = vector.broadcast %13 : vector<1x4xi32> to vector<64x4xi32>
    %64 = arith.cmpi slt, %51, %63 : vector<64x4xi32>
    %65 = arith.andi %62, %64 : vector<64x4xi1>
    %c0_i32_33 = arith.constant 0 : i32
    %66 = vector.broadcast %c0_i32_33 : i32 to vector<64x4xi32>
    %67 = arith.cmpi sge, %54, %66 : vector<64x4xi32>
    %68 = vector.broadcast %13 : vector<1x4xi32> to vector<64x4xi32>
    %69 = arith.cmpi slt, %54, %68 : vector<64x4xi32>
    %70 = arith.andi %67, %69 : vector<64x4xi1>
    %c0_i32_34 = arith.constant 0 : i32
    %71 = vector.broadcast %c0_i32_34 : i32 to vector<64x4xi32>
    %72 = arith.cmpi sge, %52, %71 : vector<64x4xi32>
    %73 = vector.broadcast %14 : vector<1x4xi32> to vector<64x4xi32>
    %74 = arith.cmpi slt, %52, %73 : vector<64x4xi32>
    %75 = arith.andi %72, %74 : vector<64x4xi1>
    %c0_i32_35 = arith.constant 0 : i32
    %76 = vector.broadcast %c0_i32_35 : i32 to vector<64x4xi32>
    %77 = arith.cmpi sge, %56, %76 : vector<64x4xi32>
    %78 = vector.broadcast %14 : vector<1x4xi32> to vector<64x4xi32>
    %79 = arith.cmpi slt, %56, %78 : vector<64x4xi32>
    %80 = arith.andi %77, %79 : vector<64x4xi1>
    %81 = vector.broadcast %13 : vector<1x4xi32> to vector<64x4xi32>
    %82 = arith.muli %52, %81 : vector<64x4xi32>
    %83 = arith.addi %82, %51 : vector<64x4xi32>
    %84 = vector.broadcast %15 : vector<1x4xi32> to vector<64x4xi32>
    %85 = arith.addi %83, %84 : vector<64x4xi32>
    %c1_i32_36 = arith.constant 1 : i32
    %86 = vector.broadcast %c1_i32_36 : i32 to vector<64x4xi32>
    %87 = arith.addi %85, %86 : vector<64x4xi32>
    %88 = vector.broadcast %13 : vector<1x4xi32> to vector<64x4xi32>
    %89 = arith.addi %85, %88 : vector<64x4xi32>
    %c1_i32_37 = arith.constant 1 : i32
    %90 = vector.broadcast %c1_i32_37 : i32 to vector<64x4xi32>
    %91 = arith.addi %89, %90 : vector<64x4xi32>
    %92 = arith.mulf %58, %36 : vector<64x4xf32>
    %93 = arith.mulf %49, %36 : vector<64x4xf32>
    %94 = arith.andi %65, %75 : vector<64x4xi1>
    %95 = arith.mulf %92, %60 : vector<64x4xf32>
    %96 = arith.andi %70, %75 : vector<64x4xi1>
    %97 = arith.mulf %93, %60 : vector<64x4xf32>
    %98 = arith.andi %65, %80 : vector<64x4xi1>
    %99 = arith.mulf %92, %50 : vector<64x4xf32>
    %100 = arith.andi %70, %80 : vector<64x4xi1>
    %101 = arith.mulf %93, %50 : vector<64x4xf32>
    %cst_38 = arith.constant 0.000000e+00 : f32
    %102 = vector.broadcast %cst_38 : f32 to vector<64x4xf32>
    %103 = arith.select %94, %95, %102 : vector<64x4xi1>, vector<64x4xf32>
    %104 = vector.extract_strided_slice %85 {offsets = [0, 0], sizes = [64, 1], strides = [1, 1]} : vector<64x4xi32> to vector<64x1xi32>
    %105 = vector.broadcast %104 : vector<64x1xi32> to vector<64x64xi32>
    %106 = arith.cmpi eq, %23, %105 : vector<64x64xi32>
    %107 = vector.extract_strided_slice %103 {offsets = [0, 0], sizes = [64, 1], strides = [1, 1]} : vector<64x4xf32> to vector<64x1xf32>
    %cst_39 = arith.constant 0.000000e+00 : f32
    %108 = vector.shape_cast %107 : vector<64x1xf32> to vector<64x1xf32>
    %109 = vector.broadcast %108 : vector<64x1xf32> to vector<64x64xf32>
    %110 = vector.broadcast %cst_39 : f32 to vector<64x64xf32>
    %111 = arith.select %106, %109, %110 : vector<64x64xi1>, vector<64x64xf32>
    %112 = vector.extract_strided_slice %85 {offsets = [0, 1], sizes = [64, 1], strides = [1, 1]} : vector<64x4xi32> to vector<64x1xi32>
    %113 = vector.broadcast %112 : vector<64x1xi32> to vector<64x64xi32>
    %114 = arith.cmpi eq, %23, %113 : vector<64x64xi32>
    %115 = vector.extract_strided_slice %103 {offsets = [0, 1], sizes = [64, 1], strides = [1, 1]} : vector<64x4xf32> to vector<64x1xf32>
    %cst_40 = arith.constant 0.000000e+00 : f32
    %116 = vector.shape_cast %115 : vector<64x1xf32> to vector<64x1xf32>
    %117 = vector.broadcast %116 : vector<64x1xf32> to vector<64x64xf32>
    %118 = vector.broadcast %cst_40 : f32 to vector<64x64xf32>
    %119 = arith.select %114, %117, %118 : vector<64x64xi1>, vector<64x64xf32>
    %120 = vector.extract_strided_slice %85 {offsets = [0, 2], sizes = [64, 1], strides = [1, 1]} : vector<64x4xi32> to vector<64x1xi32>
    %121 = vector.broadcast %120 : vector<64x1xi32> to vector<64x64xi32>
    %122 = arith.cmpi eq, %23, %121 : vector<64x64xi32>
    %123 = vector.extract_strided_slice %103 {offsets = [0, 2], sizes = [64, 1], strides = [1, 1]} : vector<64x4xf32> to vector<64x1xf32>
    %cst_41 = arith.constant 0.000000e+00 : f32
    %124 = vector.shape_cast %123 : vector<64x1xf32> to vector<64x1xf32>
    %125 = vector.broadcast %124 : vector<64x1xf32> to vector<64x64xf32>
    %126 = vector.broadcast %cst_41 : f32 to vector<64x64xf32>
    %127 = arith.select %122, %125, %126 : vector<64x64xi1>, vector<64x64xf32>
    %128 = arith.addf %111, %127 : vector<64x64xf32>
    %129 = vector.extract_strided_slice %85 {offsets = [0, 3], sizes = [64, 1], strides = [1, 1]} : vector<64x4xi32> to vector<64x1xi32>
    %130 = vector.broadcast %129 : vector<64x1xi32> to vector<64x64xi32>
    %131 = arith.cmpi eq, %23, %130 : vector<64x64xi32>
    %132 = vector.extract_strided_slice %103 {offsets = [0, 3], sizes = [64, 1], strides = [1, 1]} : vector<64x4xf32> to vector<64x1xf32>
    %cst_42 = arith.constant 0.000000e+00 : f32
    %133 = vector.shape_cast %132 : vector<64x1xf32> to vector<64x1xf32>
    %134 = vector.broadcast %133 : vector<64x1xf32> to vector<64x64xf32>
    %135 = vector.broadcast %cst_42 : f32 to vector<64x64xf32>
    %136 = arith.select %131, %134, %135 : vector<64x64xi1>, vector<64x64xf32>
    %137 = arith.addf %119, %136 : vector<64x64xf32>
    %cst_43 = arith.constant 0.000000e+00 : f32
    %138 = vector.broadcast %cst_43 : f32 to vector<64x4xf32>
    %139 = arith.select %96, %97, %138 : vector<64x4xi1>, vector<64x4xf32>
    %140 = vector.extract_strided_slice %87 {offsets = [0, 0], sizes = [64, 1], strides = [1, 1]} : vector<64x4xi32> to vector<64x1xi32>
    %141 = vector.broadcast %140 : vector<64x1xi32> to vector<64x64xi32>
    %142 = arith.cmpi eq, %23, %141 : vector<64x64xi32>
    %143 = vector.extract_strided_slice %139 {offsets = [0, 0], sizes = [64, 1], strides = [1, 1]} : vector<64x4xf32> to vector<64x1xf32>
    %cst_44 = arith.constant 0.000000e+00 : f32
    %144 = vector.shape_cast %143 : vector<64x1xf32> to vector<64x1xf32>
    %145 = vector.broadcast %144 : vector<64x1xf32> to vector<64x64xf32>
    %146 = vector.broadcast %cst_44 : f32 to vector<64x64xf32>
    %147 = arith.select %142, %145, %146 : vector<64x64xi1>, vector<64x64xf32>
    %148 = vector.extract_strided_slice %87 {offsets = [0, 1], sizes = [64, 1], strides = [1, 1]} : vector<64x4xi32> to vector<64x1xi32>
    %149 = vector.broadcast %148 : vector<64x1xi32> to vector<64x64xi32>
    %150 = arith.cmpi eq, %23, %149 : vector<64x64xi32>
    %151 = vector.extract_strided_slice %139 {offsets = [0, 1], sizes = [64, 1], strides = [1, 1]} : vector<64x4xf32> to vector<64x1xf32>
    %cst_45 = arith.constant 0.000000e+00 : f32
    %152 = vector.shape_cast %151 : vector<64x1xf32> to vector<64x1xf32>
    %153 = vector.broadcast %152 : vector<64x1xf32> to vector<64x64xf32>
    %154 = vector.broadcast %cst_45 : f32 to vector<64x64xf32>
    %155 = arith.select %150, %153, %154 : vector<64x64xi1>, vector<64x64xf32>
    %156 = vector.extract_strided_slice %87 {offsets = [0, 2], sizes = [64, 1], strides = [1, 1]} : vector<64x4xi32> to vector<64x1xi32>
    %157 = vector.broadcast %156 : vector<64x1xi32> to vector<64x64xi32>
    %158 = arith.cmpi eq, %23, %157 : vector<64x64xi32>
    %159 = vector.extract_strided_slice %139 {offsets = [0, 2], sizes = [64, 1], strides = [1, 1]} : vector<64x4xf32> to vector<64x1xf32>
    %cst_46 = arith.constant 0.000000e+00 : f32
    %160 = vector.shape_cast %159 : vector<64x1xf32> to vector<64x1xf32>
    %161 = vector.broadcast %160 : vector<64x1xf32> to vector<64x64xf32>
    %162 = vector.broadcast %cst_46 : f32 to vector<64x64xf32>
    %163 = arith.select %158, %161, %162 : vector<64x64xi1>, vector<64x64xf32>
    %164 = arith.addf %147, %163 : vector<64x64xf32>
    %165 = vector.extract_strided_slice %87 {offsets = [0, 3], sizes = [64, 1], strides = [1, 1]} : vector<64x4xi32> to vector<64x1xi32>
    %166 = vector.broadcast %165 : vector<64x1xi32> to vector<64x64xi32>
    %167 = arith.cmpi eq, %23, %166 : vector<64x64xi32>
    %168 = vector.extract_strided_slice %139 {offsets = [0, 3], sizes = [64, 1], strides = [1, 1]} : vector<64x4xf32> to vector<64x1xf32>
    %cst_47 = arith.constant 0.000000e+00 : f32
    %169 = vector.shape_cast %168 : vector<64x1xf32> to vector<64x1xf32>
    %170 = vector.broadcast %169 : vector<64x1xf32> to vector<64x64xf32>
    %171 = vector.broadcast %cst_47 : f32 to vector<64x64xf32>
    %172 = arith.select %167, %170, %171 : vector<64x64xi1>, vector<64x64xf32>
    %173 = arith.addf %155, %172 : vector<64x64xf32>
    %cst_48 = arith.constant 0.000000e+00 : f32
    %174 = vector.broadcast %cst_48 : f32 to vector<64x4xf32>
    %175 = arith.select %98, %99, %174 : vector<64x4xi1>, vector<64x4xf32>
    %176 = vector.extract_strided_slice %89 {offsets = [0, 0], sizes = [64, 1], strides = [1, 1]} : vector<64x4xi32> to vector<64x1xi32>
    %177 = vector.broadcast %176 : vector<64x1xi32> to vector<64x64xi32>
    %178 = arith.cmpi eq, %23, %177 : vector<64x64xi32>
    %179 = vector.extract_strided_slice %175 {offsets = [0, 0], sizes = [64, 1], strides = [1, 1]} : vector<64x4xf32> to vector<64x1xf32>
    %cst_49 = arith.constant 0.000000e+00 : f32
    %180 = vector.shape_cast %179 : vector<64x1xf32> to vector<64x1xf32>
    %181 = vector.broadcast %180 : vector<64x1xf32> to vector<64x64xf32>
    %182 = vector.broadcast %cst_49 : f32 to vector<64x64xf32>
    %183 = arith.select %178, %181, %182 : vector<64x64xi1>, vector<64x64xf32>
    %184 = vector.extract_strided_slice %89 {offsets = [0, 1], sizes = [64, 1], strides = [1, 1]} : vector<64x4xi32> to vector<64x1xi32>
    %185 = vector.broadcast %184 : vector<64x1xi32> to vector<64x64xi32>
    %186 = arith.cmpi eq, %23, %185 : vector<64x64xi32>
    %187 = vector.extract_strided_slice %175 {offsets = [0, 1], sizes = [64, 1], strides = [1, 1]} : vector<64x4xf32> to vector<64x1xf32>
    %cst_50 = arith.constant 0.000000e+00 : f32
    %188 = vector.shape_cast %187 : vector<64x1xf32> to vector<64x1xf32>
    %189 = vector.broadcast %188 : vector<64x1xf32> to vector<64x64xf32>
    %190 = vector.broadcast %cst_50 : f32 to vector<64x64xf32>
    %191 = arith.select %186, %189, %190 : vector<64x64xi1>, vector<64x64xf32>
    %192 = vector.extract_strided_slice %89 {offsets = [0, 2], sizes = [64, 1], strides = [1, 1]} : vector<64x4xi32> to vector<64x1xi32>
    %193 = vector.broadcast %192 : vector<64x1xi32> to vector<64x64xi32>
    %194 = arith.cmpi eq, %23, %193 : vector<64x64xi32>
    %195 = vector.extract_strided_slice %175 {offsets = [0, 2], sizes = [64, 1], strides = [1, 1]} : vector<64x4xf32> to vector<64x1xf32>
    %cst_51 = arith.constant 0.000000e+00 : f32
    %196 = vector.shape_cast %195 : vector<64x1xf32> to vector<64x1xf32>
    %197 = vector.broadcast %196 : vector<64x1xf32> to vector<64x64xf32>
    %198 = vector.broadcast %cst_51 : f32 to vector<64x64xf32>
    %199 = arith.select %194, %197, %198 : vector<64x64xi1>, vector<64x64xf32>
    %200 = arith.addf %183, %199 : vector<64x64xf32>
    %201 = vector.extract_strided_slice %89 {offsets = [0, 3], sizes = [64, 1], strides = [1, 1]} : vector<64x4xi32> to vector<64x1xi32>
    %202 = vector.broadcast %201 : vector<64x1xi32> to vector<64x64xi32>
    %203 = arith.cmpi eq, %23, %202 : vector<64x64xi32>
    %204 = vector.extract_strided_slice %175 {offsets = [0, 3], sizes = [64, 1], strides = [1, 1]} : vector<64x4xf32> to vector<64x1xf32>
    %cst_52 = arith.constant 0.000000e+00 : f32
    %205 = vector.shape_cast %204 : vector<64x1xf32> to vector<64x1xf32>
    %206 = vector.broadcast %205 : vector<64x1xf32> to vector<64x64xf32>
    %207 = vector.broadcast %cst_52 : f32 to vector<64x64xf32>
    %208 = arith.select %203, %206, %207 : vector<64x64xi1>, vector<64x64xf32>
    %209 = arith.addf %191, %208 : vector<64x64xf32>
    %cst_53 = arith.constant 0.000000e+00 : f32
    %210 = vector.broadcast %cst_53 : f32 to vector<64x4xf32>
    %211 = arith.select %100, %101, %210 : vector<64x4xi1>, vector<64x4xf32>
    %212 = vector.extract_strided_slice %91 {offsets = [0, 0], sizes = [64, 1], strides = [1, 1]} : vector<64x4xi32> to vector<64x1xi32>
    %213 = vector.broadcast %212 : vector<64x1xi32> to vector<64x64xi32>
    %214 = arith.cmpi eq, %23, %213 : vector<64x64xi32>
    %215 = vector.extract_strided_slice %211 {offsets = [0, 0], sizes = [64, 1], strides = [1, 1]} : vector<64x4xf32> to vector<64x1xf32>
    %cst_54 = arith.constant 0.000000e+00 : f32
    %216 = vector.shape_cast %215 : vector<64x1xf32> to vector<64x1xf32>
    %217 = vector.broadcast %216 : vector<64x1xf32> to vector<64x64xf32>
    %218 = vector.broadcast %cst_54 : f32 to vector<64x64xf32>
    %219 = arith.select %214, %217, %218 : vector<64x64xi1>, vector<64x64xf32>
    %220 = vector.extract_strided_slice %91 {offsets = [0, 1], sizes = [64, 1], strides = [1, 1]} : vector<64x4xi32> to vector<64x1xi32>
    %221 = vector.broadcast %220 : vector<64x1xi32> to vector<64x64xi32>
    %222 = arith.cmpi eq, %23, %221 : vector<64x64xi32>
    %223 = vector.extract_strided_slice %211 {offsets = [0, 1], sizes = [64, 1], strides = [1, 1]} : vector<64x4xf32> to vector<64x1xf32>
    %cst_55 = arith.constant 0.000000e+00 : f32
    %224 = vector.shape_cast %223 : vector<64x1xf32> to vector<64x1xf32>
    %225 = vector.broadcast %224 : vector<64x1xf32> to vector<64x64xf32>
    %226 = vector.broadcast %cst_55 : f32 to vector<64x64xf32>
    %227 = arith.select %222, %225, %226 : vector<64x64xi1>, vector<64x64xf32>
    %228 = vector.extract_strided_slice %91 {offsets = [0, 2], sizes = [64, 1], strides = [1, 1]} : vector<64x4xi32> to vector<64x1xi32>
    %229 = vector.broadcast %228 : vector<64x1xi32> to vector<64x64xi32>
    %230 = arith.cmpi eq, %23, %229 : vector<64x64xi32>
    %231 = vector.extract_strided_slice %211 {offsets = [0, 2], sizes = [64, 1], strides = [1, 1]} : vector<64x4xf32> to vector<64x1xf32>
    %cst_56 = arith.constant 0.000000e+00 : f32
    %232 = vector.shape_cast %231 : vector<64x1xf32> to vector<64x1xf32>
    %233 = vector.broadcast %232 : vector<64x1xf32> to vector<64x64xf32>
    %234 = vector.broadcast %cst_56 : f32 to vector<64x64xf32>
    %235 = arith.select %230, %233, %234 : vector<64x64xi1>, vector<64x64xf32>
    %236 = arith.addf %219, %235 : vector<64x64xf32>
    %237 = vector.extract_strided_slice %91 {offsets = [0, 3], sizes = [64, 1], strides = [1, 1]} : vector<64x4xi32> to vector<64x1xi32>
    %238 = vector.broadcast %237 : vector<64x1xi32> to vector<64x64xi32>
    %239 = arith.cmpi eq, %23, %238 : vector<64x64xi32>
    %240 = vector.extract_strided_slice %211 {offsets = [0, 3], sizes = [64, 1], strides = [1, 1]} : vector<64x4xf32> to vector<64x1xf32>
    %cst_57 = arith.constant 0.000000e+00 : f32
    %241 = vector.shape_cast %240 : vector<64x1xf32> to vector<64x1xf32>
    %242 = vector.broadcast %241 : vector<64x1xf32> to vector<64x64xf32>
    %243 = vector.broadcast %cst_57 : f32 to vector<64x64xf32>
    %244 = arith.select %239, %242, %243 : vector<64x64xi1>, vector<64x64xf32>
    %245 = arith.addf %227, %244 : vector<64x64xf32>
    %246 = arith.addf %128, %137 : vector<64x64xf32>
    %247 = arith.addf %164, %173 : vector<64x64xf32>
    %248 = arith.addf %200, %209 : vector<64x64xf32>
    %249 = arith.addf %236, %245 : vector<64x64xf32>
    %250 = arith.addf %246, %247 : vector<64x64xf32>
    %251 = arith.addf %248, %249 : vector<64x64xf32>
    %252 = arith.addf %250, %251 : vector<64x64xf32>
    %cst_58 = arith.constant dense<0.000000e+00> : vector<64x32xf32>
    %253 = tpu.matmul %19, %9, %cst_58 {dimension_numbers = #tpu.dot_dimension_numbers<[1], [0], [0], [1], [0, 0, 1, 1], [], []>} : vector<64x32xf32>, vector<32x32xf32>, vector<64x32xf32> -> vector<64x32xf32>
    %cst_59 = arith.constant dense<0.000000e+00> : vector<64x32xf32>
    %254 = tpu.matmul %252, %253, %cst_59 {dimension_numbers = #tpu.dot_dimension_numbers<[1], [0], [0], [1], [0, 0, 1, 1], [], []>} : vector<64x64xf32>, vector<64x32xf32>, vector<64x32xf32> -> vector<64x32xf32>
    %255 = vector.broadcast %10 : vector<1x32xf32> to vector<64x32xf32>
    %256 = arith.addf %254, %255 : vector<64x32xf32>
    %257 = arith.addf %256, %1 : vector<64x32xf32>
    %c0_60 = arith.constant 0 : index
    %c0_61 = arith.constant 0 : index
    %258 = vector.load %arg15[%c0_60, %c0_61] : memref<1x32xf32, #tpu.memory_space<vmem>>, vector<1x32xf32>
    %c0_62 = arith.constant 0 : index
    %c0_63 = arith.constant 0 : index
    %259 = vector.load %arg16[%c0_62, %c0_63] : memref<1x32xf32, #tpu.memory_space<vmem>>, vector<1x32xf32>
    %cst_64 = arith.constant dense<0.000000e+00> : vector<64xf32>
    %260 = vector.multi_reduction <add>, %257, %cst_64 [1] : vector<64x32xf32> to vector<64xf32>
    %261 = vector.shape_cast %260 : vector<64xf32> to vector<64x1xf32>
    %cst_65 = arith.constant 3.200000e+01 : f32
    %262 = vector.broadcast %cst_65 : f32 to vector<64x1xf32>
    %263 = arith.divf %261, %262 : vector<64x1xf32>
    %264 = vector.broadcast %263 : vector<64x1xf32> to vector<64x32xf32>
    %265 = arith.subf %257, %264 : vector<64x32xf32>
    %266 = arith.mulf %265, %265 : vector<64x32xf32>
    %cst_66 = arith.constant dense<0.000000e+00> : vector<64xf32>
    %267 = vector.multi_reduction <add>, %266, %cst_66 [1] : vector<64x32xf32> to vector<64xf32>
    %268 = vector.shape_cast %267 : vector<64xf32> to vector<64x1xf32>
    %cst_67 = arith.constant 3.200000e+01 : f32
    %269 = vector.broadcast %cst_67 : f32 to vector<64x1xf32>
    %270 = arith.divf %268, %269 : vector<64x1xf32>
    %cst_68 = arith.constant 9.99999974E-6 : f32
    %271 = vector.broadcast %cst_68 : f32 to vector<64x1xf32>
    %272 = arith.addf %270, %271 : vector<64x1xf32>
    %273 = math.rsqrt %272 : vector<64x1xf32>
    %274 = vector.broadcast %273 : vector<64x1xf32> to vector<64x32xf32>
    %275 = arith.mulf %265, %274 : vector<64x32xf32>
    %276 = vector.broadcast %258 : vector<1x32xf32> to vector<64x32xf32>
    %277 = arith.mulf %275, %276 : vector<64x32xf32>
    %278 = vector.broadcast %259 : vector<1x32xf32> to vector<64x32xf32>
    %279 = arith.addf %277, %278 : vector<64x32xf32>
    %c0_69 = arith.constant 0 : index
    %c0_70 = arith.constant 0 : index
    %280 = vector.load %arg4[%c0_69, %c0_70] : memref<84x32xf32, #tpu.memory_space<vmem>>, vector<84x32xf32>
    %c0_71 = arith.constant 0 : index
    %c0_72 = arith.constant 0 : index
    %281 = vector.load %arg7[%c0_71, %c0_72] : memref<64x12xf32, #tpu.memory_space<vmem>>, vector<64x12xf32>
    %c0_73 = arith.constant 0 : index
    %c0_74 = arith.constant 0 : index
    %282 = vector.load %arg8[%c0_73, %c0_74] : memref<64x12xf32, #tpu.memory_space<vmem>>, vector<64x12xf32>
    %c0_75 = arith.constant 0 : index
    %c0_76 = arith.constant 0 : index
    %283 = vector.load %arg17[%c0_75, %c0_76] : memref<32x32xf32, #tpu.memory_space<vmem>>, vector<32x32xf32>
    %c0_77 = arith.constant 0 : index
    %c0_78 = arith.constant 0 : index
    %284 = vector.load %arg18[%c0_77, %c0_78] : memref<1x32xf32, #tpu.memory_space<vmem>>, vector<1x32xf32>
    %c0_79 = arith.constant 0 : index
    %c0_80 = arith.constant 0 : index
    %285 = vector.load %arg19[%c0_79, %c0_80] : memref<32x36xf32, #tpu.memory_space<vmem>>, vector<32x36xf32>
    %c0_81 = arith.constant 0 : index
    %c0_82 = arith.constant 0 : index
    %286 = vector.load %arg20[%c0_81, %c0_82] : memref<1x36xf32, #tpu.memory_space<vmem>>, vector<1x36xf32>
    %c0_83 = arith.constant 0 : index
    %c0_84 = arith.constant 0 : index
    %287 = vector.load %arg21[%c0_83, %c0_84] : memref<32x32xf32, #tpu.memory_space<vmem>>, vector<32x32xf32>
    %c0_85 = arith.constant 0 : index
    %c0_86 = arith.constant 0 : index
    %288 = vector.load %arg22[%c0_85, %c0_86] : memref<1x32xf32, #tpu.memory_space<vmem>>, vector<1x32xf32>
    %cst_87 = arith.constant 2.000000e+00 : f32
    %289 = vector.broadcast %cst_87 : f32 to vector<1x12xf32>
    %290 = tpu.iota {dimensions = array<i32: 1>} : vector<1x12xi32>
    %c8_i32_88 = arith.constant 8 : i32
    %291 = vector.broadcast %c8_i32_88 : i32 to vector<1x12xi32>
    %292 = arith.cmpi slt, %290, %291 : vector<1x12xi32>
    %cst_89 = arith.constant 4.000000e+00 : f32
    %293 = vector.broadcast %cst_89 : f32 to vector<1x12xf32>
    %294 = arith.select %292, %293, %289 : vector<1x12xi1>, vector<1x12xf32>
    %c4_i32 = arith.constant 4 : i32
    %295 = vector.broadcast %c4_i32 : i32 to vector<1x12xi32>
    %296 = arith.cmpi slt, %290, %295 : vector<1x12xi32>
    %cst_90 = arith.constant 8.000000e+00 : f32
    %297 = vector.broadcast %cst_90 : f32 to vector<1x12xf32>
    %298 = arith.select %296, %297, %294 : vector<1x12xi1>, vector<1x12xf32>
    %cst_91 = arith.constant 2.000000e+00 : f32
    %299 = vector.broadcast %cst_91 : f32 to vector<1x12xf32>
    %300 = tpu.iota {dimensions = array<i32: 1>} : vector<1x12xi32>
    %c8_i32_92 = arith.constant 8 : i32
    %301 = vector.broadcast %c8_i32_92 : i32 to vector<1x12xi32>
    %302 = arith.cmpi slt, %300, %301 : vector<1x12xi32>
    %cst_93 = arith.constant 4.000000e+00 : f32
    %303 = vector.broadcast %cst_93 : f32 to vector<1x12xf32>
    %304 = arith.select %302, %303, %299 : vector<1x12xi1>, vector<1x12xf32>
    %c4_i32_94 = arith.constant 4 : i32
    %305 = vector.broadcast %c4_i32_94 : i32 to vector<1x12xi32>
    %306 = arith.cmpi slt, %300, %305 : vector<1x12xi32>
    %cst_95 = arith.constant 8.000000e+00 : f32
    %307 = vector.broadcast %cst_95 : f32 to vector<1x12xf32>
    %308 = arith.select %306, %307, %304 : vector<1x12xi1>, vector<1x12xf32>
    %c2_i32 = arith.constant 2 : i32
    %309 = vector.broadcast %c2_i32 : i32 to vector<1x12xi32>
    %310 = tpu.iota {dimensions = array<i32: 1>} : vector<1x12xi32>
    %c8_i32_96 = arith.constant 8 : i32
    %311 = vector.broadcast %c8_i32_96 : i32 to vector<1x12xi32>
    %312 = arith.cmpi slt, %310, %311 : vector<1x12xi32>
    %c4_i32_97 = arith.constant 4 : i32
    %313 = vector.broadcast %c4_i32_97 : i32 to vector<1x12xi32>
    %314 = arith.select %312, %313, %309 : vector<1x12xi1>, vector<1x12xi32>
    %c4_i32_98 = arith.constant 4 : i32
    %315 = vector.broadcast %c4_i32_98 : i32 to vector<1x12xi32>
    %316 = arith.cmpi slt, %310, %315 : vector<1x12xi32>
    %c8_i32_99 = arith.constant 8 : i32
    %317 = vector.broadcast %c8_i32_99 : i32 to vector<1x12xi32>
    %318 = arith.select %316, %317, %314 : vector<1x12xi1>, vector<1x12xi32>
    %c2_i32_100 = arith.constant 2 : i32
    %319 = vector.broadcast %c2_i32_100 : i32 to vector<1x12xi32>
    %320 = tpu.iota {dimensions = array<i32: 1>} : vector<1x12xi32>
    %c8_i32_101 = arith.constant 8 : i32
    %321 = vector.broadcast %c8_i32_101 : i32 to vector<1x12xi32>
    %322 = arith.cmpi slt, %320, %321 : vector<1x12xi32>
    %c4_i32_102 = arith.constant 4 : i32
    %323 = vector.broadcast %c4_i32_102 : i32 to vector<1x12xi32>
    %324 = arith.select %322, %323, %319 : vector<1x12xi1>, vector<1x12xi32>
    %c4_i32_103 = arith.constant 4 : i32
    %325 = vector.broadcast %c4_i32_103 : i32 to vector<1x12xi32>
    %326 = arith.cmpi slt, %320, %325 : vector<1x12xi32>
    %c8_i32_104 = arith.constant 8 : i32
    %327 = vector.broadcast %c8_i32_104 : i32 to vector<1x12xi32>
    %328 = arith.select %326, %327, %324 : vector<1x12xi1>, vector<1x12xi32>
    %c80_i32 = arith.constant 80 : i32
    %329 = vector.broadcast %c80_i32 : i32 to vector<1x12xi32>
    %330 = tpu.iota {dimensions = array<i32: 1>} : vector<1x12xi32>
    %c8_i32_105 = arith.constant 8 : i32
    %331 = vector.broadcast %c8_i32_105 : i32 to vector<1x12xi32>
    %332 = arith.cmpi slt, %330, %331 : vector<1x12xi32>
    %c64_i32 = arith.constant 64 : i32
    %333 = vector.broadcast %c64_i32 : i32 to vector<1x12xi32>
    %334 = arith.select %332, %333, %329 : vector<1x12xi1>, vector<1x12xi32>
    %c4_i32_106 = arith.constant 4 : i32
    %335 = vector.broadcast %c4_i32_106 : i32 to vector<1x12xi32>
    %336 = arith.cmpi slt, %330, %335 : vector<1x12xi32>
    %c0_i32_107 = arith.constant 0 : i32
    %337 = vector.broadcast %c0_i32_107 : i32 to vector<1x12xi32>
    %338 = arith.select %336, %337, %334 : vector<1x12xi1>, vector<1x12xi32>
    %339 = arith.addf %279, %0 : vector<64x32xf32>
    %cst_108 = arith.constant dense<0.000000e+00> : vector<84x32xf32>
    %340 = tpu.matmul %280, %283, %cst_108 {dimension_numbers = #tpu.dot_dimension_numbers<[1], [0], [0], [1], [0, 0, 1, 1], [], []>} : vector<84x32xf32>, vector<32x32xf32>, vector<84x32xf32> -> vector<84x32xf32>
    %341 = vector.broadcast %284 : vector<1x32xf32> to vector<84x32xf32>
    %342 = arith.addf %340, %341 : vector<84x32xf32>
    %cst_109 = arith.constant dense<0.000000e+00> : vector<64x36xf32>
    %343 = tpu.matmul %339, %285, %cst_109 {dimension_numbers = #tpu.dot_dimension_numbers<[1], [0], [0], [1], [0, 0, 1, 1], [], []>} : vector<64x32xf32>, vector<32x36xf32>, vector<64x36xf32> -> vector<64x36xf32>
    %344 = vector.broadcast %286 : vector<1x36xf32> to vector<64x36xf32>
    %345 = arith.addf %343, %344 : vector<64x36xf32>
    %346 = tpu.iota {dimensions = array<i32: 1>} : vector<64x84xi32>
    %347 = vector.extract_strided_slice %345 {offsets = [0, 0], sizes = [64, 12], strides = [1, 1]} : vector<64x36xf32> to vector<64x12xf32>
    %348 = vector.extract_strided_slice %345 {offsets = [0, 12], sizes = [64, 12], strides = [1, 1]} : vector<64x36xf32> to vector<64x12xf32>
    %349 = vector.extract_strided_slice %345 {offsets = [0, 24], sizes = [64, 12], strides = [1, 1]} : vector<64x36xf32> to vector<64x12xf32>
    %cst_110 = arith.constant dense<0xFF800000> : vector<64xf32>
    %350 = vector.multi_reduction <maximumf>, %349, %cst_110 [1] : vector<64x12xf32> to vector<64xf32>
    %351 = vector.shape_cast %350 : vector<64xf32> to vector<64x1xf32>
    %352 = vector.broadcast %351 : vector<64x1xf32> to vector<64x12xf32>
    %353 = arith.subf %349, %352 : vector<64x12xf32>
    %354 = math.exp %353 : vector<64x12xf32>
    %cst_111 = arith.constant dense<0.000000e+00> : vector<64xf32>
    %355 = vector.multi_reduction <add>, %354, %cst_111 [1] : vector<64x12xf32> to vector<64xf32>
    %356 = vector.shape_cast %355 : vector<64xf32> to vector<64x1xf32>
    %357 = tpu.reciprocal %356 {approx = true} : vector<64x1xf32> -> vector<64x1xf32>
    %358 = vector.broadcast %357 : vector<64x1xf32> to vector<64x12xf32>
    %359 = arith.mulf %354, %358 : vector<64x12xf32>
    %360 = vector.broadcast %298 : vector<1x12xf32> to vector<64x12xf32>
    %361 = arith.mulf %281, %360 : vector<64x12xf32>
    %362 = arith.addf %361, %347 : vector<64x12xf32>
    %cst_112 = arith.constant 5.000000e-01 : f32
    %363 = vector.broadcast %cst_112 : f32 to vector<64x12xf32>
    %364 = arith.subf %362, %363 : vector<64x12xf32>
    %365 = vector.broadcast %308 : vector<1x12xf32> to vector<64x12xf32>
    %366 = arith.mulf %282, %365 : vector<64x12xf32>
    %367 = arith.addf %366, %348 : vector<64x12xf32>
    %cst_113 = arith.constant 5.000000e-01 : f32
    %368 = vector.broadcast %cst_113 : f32 to vector<64x12xf32>
    %369 = arith.subf %367, %368 : vector<64x12xf32>
    %370 = math.floor %364 : vector<64x12xf32>
    %371 = math.floor %369 : vector<64x12xf32>
    %372 = arith.subf %364, %370 : vector<64x12xf32>
    %373 = arith.subf %369, %371 : vector<64x12xf32>
    %374 = arith.fptosi %370 : vector<64x12xf32> to vector<64x12xi32>
    %375 = arith.fptosi %371 : vector<64x12xf32> to vector<64x12xi32>
    %c1_i32_114 = arith.constant 1 : i32
    %376 = vector.broadcast %c1_i32_114 : i32 to vector<64x12xi32>
    %377 = arith.addi %374, %376 : vector<64x12xi32>
    %c1_i32_115 = arith.constant 1 : i32
    %378 = vector.broadcast %c1_i32_115 : i32 to vector<64x12xi32>
    %379 = arith.addi %375, %378 : vector<64x12xi32>
    %cst_116 = arith.constant 1.000000e+00 : f32
    %380 = vector.broadcast %cst_116 : f32 to vector<64x12xf32>
    %381 = arith.subf %380, %372 : vector<64x12xf32>
    %cst_117 = arith.constant 1.000000e+00 : f32
    %382 = vector.broadcast %cst_117 : f32 to vector<64x12xf32>
    %383 = arith.subf %382, %373 : vector<64x12xf32>
    %c0_i32_118 = arith.constant 0 : i32
    %384 = vector.broadcast %c0_i32_118 : i32 to vector<64x12xi32>
    %385 = arith.cmpi sge, %374, %384 : vector<64x12xi32>
    %386 = vector.broadcast %318 : vector<1x12xi32> to vector<64x12xi32>
    %387 = arith.cmpi slt, %374, %386 : vector<64x12xi32>
    %388 = arith.andi %385, %387 : vector<64x12xi1>
    %c0_i32_119 = arith.constant 0 : i32
    %389 = vector.broadcast %c0_i32_119 : i32 to vector<64x12xi32>
    %390 = arith.cmpi sge, %377, %389 : vector<64x12xi32>
    %391 = vector.broadcast %318 : vector<1x12xi32> to vector<64x12xi32>
    %392 = arith.cmpi slt, %377, %391 : vector<64x12xi32>
    %393 = arith.andi %390, %392 : vector<64x12xi1>
    %c0_i32_120 = arith.constant 0 : i32
    %394 = vector.broadcast %c0_i32_120 : i32 to vector<64x12xi32>
    %395 = arith.cmpi sge, %375, %394 : vector<64x12xi32>
    %396 = vector.broadcast %328 : vector<1x12xi32> to vector<64x12xi32>
    %397 = arith.cmpi slt, %375, %396 : vector<64x12xi32>
    %398 = arith.andi %395, %397 : vector<64x12xi1>
    %c0_i32_121 = arith.constant 0 : i32
    %399 = vector.broadcast %c0_i32_121 : i32 to vector<64x12xi32>
    %400 = arith.cmpi sge, %379, %399 : vector<64x12xi32>
    %401 = vector.broadcast %328 : vector<1x12xi32> to vector<64x12xi32>
    %402 = arith.cmpi slt, %379, %401 : vector<64x12xi32>
    %403 = arith.andi %400, %402 : vector<64x12xi1>
    %404 = vector.broadcast %318 : vector<1x12xi32> to vector<64x12xi32>
    %405 = arith.muli %375, %404 : vector<64x12xi32>
    %406 = arith.addi %405, %374 : vector<64x12xi32>
    %407 = vector.broadcast %338 : vector<1x12xi32> to vector<64x12xi32>
    %408 = arith.addi %406, %407 : vector<64x12xi32>
    %c1_i32_122 = arith.constant 1 : i32
    %409 = vector.broadcast %c1_i32_122 : i32 to vector<64x12xi32>
    %410 = arith.addi %408, %409 : vector<64x12xi32>
    %411 = vector.broadcast %318 : vector<1x12xi32> to vector<64x12xi32>
    %412 = arith.addi %408, %411 : vector<64x12xi32>
    %c1_i32_123 = arith.constant 1 : i32
    %413 = vector.broadcast %c1_i32_123 : i32 to vector<64x12xi32>
    %414 = arith.addi %412, %413 : vector<64x12xi32>
    %415 = arith.mulf %381, %359 : vector<64x12xf32>
    %416 = arith.mulf %372, %359 : vector<64x12xf32>
    %417 = arith.andi %388, %398 : vector<64x12xi1>
    %418 = arith.mulf %415, %383 : vector<64x12xf32>
    %419 = arith.andi %393, %398 : vector<64x12xi1>
    %420 = arith.mulf %416, %383 : vector<64x12xf32>
    %421 = arith.andi %388, %403 : vector<64x12xi1>
    %422 = arith.mulf %415, %373 : vector<64x12xf32>
    %423 = arith.andi %393, %403 : vector<64x12xi1>
    %424 = arith.mulf %416, %373 : vector<64x12xf32>
    %cst_124 = arith.constant 0.000000e+00 : f32
    %425 = vector.broadcast %cst_124 : f32 to vector<64x12xf32>
    %426 = arith.select %417, %418, %425 : vector<64x12xi1>, vector<64x12xf32>
    %427 = vector.extract_strided_slice %408 {offsets = [0, 0], sizes = [64, 1], strides = [1, 1]} : vector<64x12xi32> to vector<64x1xi32>
    %428 = vector.broadcast %427 : vector<64x1xi32> to vector<64x84xi32>
    %429 = arith.cmpi eq, %346, %428 : vector<64x84xi32>
    %430 = vector.extract_strided_slice %426 {offsets = [0, 0], sizes = [64, 1], strides = [1, 1]} : vector<64x12xf32> to vector<64x1xf32>
    %cst_125 = arith.constant 0.000000e+00 : f32
    %431 = vector.shape_cast %430 : vector<64x1xf32> to vector<64x1xf32>
    %432 = vector.broadcast %431 : vector<64x1xf32> to vector<64x84xf32>
    %433 = vector.broadcast %cst_125 : f32 to vector<64x84xf32>
    %434 = arith.select %429, %432, %433 : vector<64x84xi1>, vector<64x84xf32>
    %435 = vector.extract_strided_slice %408 {offsets = [0, 1], sizes = [64, 1], strides = [1, 1]} : vector<64x12xi32> to vector<64x1xi32>
    %436 = vector.broadcast %435 : vector<64x1xi32> to vector<64x84xi32>
    %437 = arith.cmpi eq, %346, %436 : vector<64x84xi32>
    %438 = vector.extract_strided_slice %426 {offsets = [0, 1], sizes = [64, 1], strides = [1, 1]} : vector<64x12xf32> to vector<64x1xf32>
    %cst_126 = arith.constant 0.000000e+00 : f32
    %439 = vector.shape_cast %438 : vector<64x1xf32> to vector<64x1xf32>
    %440 = vector.broadcast %439 : vector<64x1xf32> to vector<64x84xf32>
    %441 = vector.broadcast %cst_126 : f32 to vector<64x84xf32>
    %442 = arith.select %437, %440, %441 : vector<64x84xi1>, vector<64x84xf32>
    %443 = vector.extract_strided_slice %408 {offsets = [0, 2], sizes = [64, 1], strides = [1, 1]} : vector<64x12xi32> to vector<64x1xi32>
    %444 = vector.broadcast %443 : vector<64x1xi32> to vector<64x84xi32>
    %445 = arith.cmpi eq, %346, %444 : vector<64x84xi32>
    %446 = vector.extract_strided_slice %426 {offsets = [0, 2], sizes = [64, 1], strides = [1, 1]} : vector<64x12xf32> to vector<64x1xf32>
    %cst_127 = arith.constant 0.000000e+00 : f32
    %447 = vector.shape_cast %446 : vector<64x1xf32> to vector<64x1xf32>
    %448 = vector.broadcast %447 : vector<64x1xf32> to vector<64x84xf32>
    %449 = vector.broadcast %cst_127 : f32 to vector<64x84xf32>
    %450 = arith.select %445, %448, %449 : vector<64x84xi1>, vector<64x84xf32>
    %451 = arith.addf %434, %450 : vector<64x84xf32>
    %452 = vector.extract_strided_slice %408 {offsets = [0, 3], sizes = [64, 1], strides = [1, 1]} : vector<64x12xi32> to vector<64x1xi32>
    %453 = vector.broadcast %452 : vector<64x1xi32> to vector<64x84xi32>
    %454 = arith.cmpi eq, %346, %453 : vector<64x84xi32>
    %455 = vector.extract_strided_slice %426 {offsets = [0, 3], sizes = [64, 1], strides = [1, 1]} : vector<64x12xf32> to vector<64x1xf32>
    %cst_128 = arith.constant 0.000000e+00 : f32
    %456 = vector.shape_cast %455 : vector<64x1xf32> to vector<64x1xf32>
    %457 = vector.broadcast %456 : vector<64x1xf32> to vector<64x84xf32>
    %458 = vector.broadcast %cst_128 : f32 to vector<64x84xf32>
    %459 = arith.select %454, %457, %458 : vector<64x84xi1>, vector<64x84xf32>
    %460 = arith.addf %442, %459 : vector<64x84xf32>
    %461 = vector.extract_strided_slice %408 {offsets = [0, 4], sizes = [64, 1], strides = [1, 1]} : vector<64x12xi32> to vector<64x1xi32>
    %462 = vector.broadcast %461 : vector<64x1xi32> to vector<64x84xi32>
    %463 = arith.cmpi eq, %346, %462 : vector<64x84xi32>
    %464 = vector.extract_strided_slice %426 {offsets = [0, 4], sizes = [64, 1], strides = [1, 1]} : vector<64x12xf32> to vector<64x1xf32>
    %cst_129 = arith.constant 0.000000e+00 : f32
    %465 = vector.shape_cast %464 : vector<64x1xf32> to vector<64x1xf32>
    %466 = vector.broadcast %465 : vector<64x1xf32> to vector<64x84xf32>
    %467 = vector.broadcast %cst_129 : f32 to vector<64x84xf32>
    %468 = arith.select %463, %466, %467 : vector<64x84xi1>, vector<64x84xf32>
    %469 = arith.addf %451, %468 : vector<64x84xf32>
    %470 = vector.extract_strided_slice %408 {offsets = [0, 5], sizes = [64, 1], strides = [1, 1]} : vector<64x12xi32> to vector<64x1xi32>
    %471 = vector.broadcast %470 : vector<64x1xi32> to vector<64x84xi32>
    %472 = arith.cmpi eq, %346, %471 : vector<64x84xi32>
    %473 = vector.extract_strided_slice %426 {offsets = [0, 5], sizes = [64, 1], strides = [1, 1]} : vector<64x12xf32> to vector<64x1xf32>
    %cst_130 = arith.constant 0.000000e+00 : f32
    %474 = vector.shape_cast %473 : vector<64x1xf32> to vector<64x1xf32>
    %475 = vector.broadcast %474 : vector<64x1xf32> to vector<64x84xf32>
    %476 = vector.broadcast %cst_130 : f32 to vector<64x84xf32>
    %477 = arith.select %472, %475, %476 : vector<64x84xi1>, vector<64x84xf32>
    %478 = arith.addf %460, %477 : vector<64x84xf32>
    %479 = vector.extract_strided_slice %408 {offsets = [0, 6], sizes = [64, 1], strides = [1, 1]} : vector<64x12xi32> to vector<64x1xi32>
    %480 = vector.broadcast %479 : vector<64x1xi32> to vector<64x84xi32>
    %481 = arith.cmpi eq, %346, %480 : vector<64x84xi32>
    %482 = vector.extract_strided_slice %426 {offsets = [0, 6], sizes = [64, 1], strides = [1, 1]} : vector<64x12xf32> to vector<64x1xf32>
    %cst_131 = arith.constant 0.000000e+00 : f32
    %483 = vector.shape_cast %482 : vector<64x1xf32> to vector<64x1xf32>
    %484 = vector.broadcast %483 : vector<64x1xf32> to vector<64x84xf32>
    %485 = vector.broadcast %cst_131 : f32 to vector<64x84xf32>
    %486 = arith.select %481, %484, %485 : vector<64x84xi1>, vector<64x84xf32>
    %487 = arith.addf %469, %486 : vector<64x84xf32>
    %488 = vector.extract_strided_slice %408 {offsets = [0, 7], sizes = [64, 1], strides = [1, 1]} : vector<64x12xi32> to vector<64x1xi32>
    %489 = vector.broadcast %488 : vector<64x1xi32> to vector<64x84xi32>
    %490 = arith.cmpi eq, %346, %489 : vector<64x84xi32>
    %491 = vector.extract_strided_slice %426 {offsets = [0, 7], sizes = [64, 1], strides = [1, 1]} : vector<64x12xf32> to vector<64x1xf32>
    %cst_132 = arith.constant 0.000000e+00 : f32
    %492 = vector.shape_cast %491 : vector<64x1xf32> to vector<64x1xf32>
    %493 = vector.broadcast %492 : vector<64x1xf32> to vector<64x84xf32>
    %494 = vector.broadcast %cst_132 : f32 to vector<64x84xf32>
    %495 = arith.select %490, %493, %494 : vector<64x84xi1>, vector<64x84xf32>
    %496 = arith.addf %478, %495 : vector<64x84xf32>
    %497 = vector.extract_strided_slice %408 {offsets = [0, 8], sizes = [64, 1], strides = [1, 1]} : vector<64x12xi32> to vector<64x1xi32>
    %498 = vector.broadcast %497 : vector<64x1xi32> to vector<64x84xi32>
    %499 = arith.cmpi eq, %346, %498 : vector<64x84xi32>
    %500 = vector.extract_strided_slice %426 {offsets = [0, 8], sizes = [64, 1], strides = [1, 1]} : vector<64x12xf32> to vector<64x1xf32>
    %cst_133 = arith.constant 0.000000e+00 : f32
    %501 = vector.shape_cast %500 : vector<64x1xf32> to vector<64x1xf32>
    %502 = vector.broadcast %501 : vector<64x1xf32> to vector<64x84xf32>
    %503 = vector.broadcast %cst_133 : f32 to vector<64x84xf32>
    %504 = arith.select %499, %502, %503 : vector<64x84xi1>, vector<64x84xf32>
    %505 = arith.addf %487, %504 : vector<64x84xf32>
    %506 = vector.extract_strided_slice %408 {offsets = [0, 9], sizes = [64, 1], strides = [1, 1]} : vector<64x12xi32> to vector<64x1xi32>
    %507 = vector.broadcast %506 : vector<64x1xi32> to vector<64x84xi32>
    %508 = arith.cmpi eq, %346, %507 : vector<64x84xi32>
    %509 = vector.extract_strided_slice %426 {offsets = [0, 9], sizes = [64, 1], strides = [1, 1]} : vector<64x12xf32> to vector<64x1xf32>
    %cst_134 = arith.constant 0.000000e+00 : f32
    %510 = vector.shape_cast %509 : vector<64x1xf32> to vector<64x1xf32>
    %511 = vector.broadcast %510 : vector<64x1xf32> to vector<64x84xf32>
    %512 = vector.broadcast %cst_134 : f32 to vector<64x84xf32>
    %513 = arith.select %508, %511, %512 : vector<64x84xi1>, vector<64x84xf32>
    %514 = arith.addf %496, %513 : vector<64x84xf32>
    %515 = vector.extract_strided_slice %408 {offsets = [0, 10], sizes = [64, 1], strides = [1, 1]} : vector<64x12xi32> to vector<64x1xi32>
    %516 = vector.broadcast %515 : vector<64x1xi32> to vector<64x84xi32>
    %517 = arith.cmpi eq, %346, %516 : vector<64x84xi32>
    %518 = vector.extract_strided_slice %426 {offsets = [0, 10], sizes = [64, 1], strides = [1, 1]} : vector<64x12xf32> to vector<64x1xf32>
    %cst_135 = arith.constant 0.000000e+00 : f32
    %519 = vector.shape_cast %518 : vector<64x1xf32> to vector<64x1xf32>
    %520 = vector.broadcast %519 : vector<64x1xf32> to vector<64x84xf32>
    %521 = vector.broadcast %cst_135 : f32 to vector<64x84xf32>
    %522 = arith.select %517, %520, %521 : vector<64x84xi1>, vector<64x84xf32>
    %523 = arith.addf %505, %522 : vector<64x84xf32>
    %524 = vector.extract_strided_slice %408 {offsets = [0, 11], sizes = [64, 1], strides = [1, 1]} : vector<64x12xi32> to vector<64x1xi32>
    %525 = vector.broadcast %524 : vector<64x1xi32> to vector<64x84xi32>
    %526 = arith.cmpi eq, %346, %525 : vector<64x84xi32>
    %527 = vector.extract_strided_slice %426 {offsets = [0, 11], sizes = [64, 1], strides = [1, 1]} : vector<64x12xf32> to vector<64x1xf32>
    %cst_136 = arith.constant 0.000000e+00 : f32
    %528 = vector.shape_cast %527 : vector<64x1xf32> to vector<64x1xf32>
    %529 = vector.broadcast %528 : vector<64x1xf32> to vector<64x84xf32>
    %530 = vector.broadcast %cst_136 : f32 to vector<64x84xf32>
    %531 = arith.select %526, %529, %530 : vector<64x84xi1>, vector<64x84xf32>
    %532 = arith.addf %514, %531 : vector<64x84xf32>
    %cst_137 = arith.constant 0.000000e+00 : f32
    %533 = vector.broadcast %cst_137 : f32 to vector<64x12xf32>
    %534 = arith.select %419, %420, %533 : vector<64x12xi1>, vector<64x12xf32>
    %535 = vector.extract_strided_slice %410 {offsets = [0, 0], sizes = [64, 1], strides = [1, 1]} : vector<64x12xi32> to vector<64x1xi32>
    %536 = vector.broadcast %535 : vector<64x1xi32> to vector<64x84xi32>
    %537 = arith.cmpi eq, %346, %536 : vector<64x84xi32>
    %538 = vector.extract_strided_slice %534 {offsets = [0, 0], sizes = [64, 1], strides = [1, 1]} : vector<64x12xf32> to vector<64x1xf32>
    %cst_138 = arith.constant 0.000000e+00 : f32
    %539 = vector.shape_cast %538 : vector<64x1xf32> to vector<64x1xf32>
    %540 = vector.broadcast %539 : vector<64x1xf32> to vector<64x84xf32>
    %541 = vector.broadcast %cst_138 : f32 to vector<64x84xf32>
    %542 = arith.select %537, %540, %541 : vector<64x84xi1>, vector<64x84xf32>
    %543 = vector.extract_strided_slice %410 {offsets = [0, 1], sizes = [64, 1], strides = [1, 1]} : vector<64x12xi32> to vector<64x1xi32>
    %544 = vector.broadcast %543 : vector<64x1xi32> to vector<64x84xi32>
    %545 = arith.cmpi eq, %346, %544 : vector<64x84xi32>
    %546 = vector.extract_strided_slice %534 {offsets = [0, 1], sizes = [64, 1], strides = [1, 1]} : vector<64x12xf32> to vector<64x1xf32>
    %cst_139 = arith.constant 0.000000e+00 : f32
    %547 = vector.shape_cast %546 : vector<64x1xf32> to vector<64x1xf32>
    %548 = vector.broadcast %547 : vector<64x1xf32> to vector<64x84xf32>
    %549 = vector.broadcast %cst_139 : f32 to vector<64x84xf32>
    %550 = arith.select %545, %548, %549 : vector<64x84xi1>, vector<64x84xf32>
    %551 = vector.extract_strided_slice %410 {offsets = [0, 2], sizes = [64, 1], strides = [1, 1]} : vector<64x12xi32> to vector<64x1xi32>
    %552 = vector.broadcast %551 : vector<64x1xi32> to vector<64x84xi32>
    %553 = arith.cmpi eq, %346, %552 : vector<64x84xi32>
    %554 = vector.extract_strided_slice %534 {offsets = [0, 2], sizes = [64, 1], strides = [1, 1]} : vector<64x12xf32> to vector<64x1xf32>
    %cst_140 = arith.constant 0.000000e+00 : f32
    %555 = vector.shape_cast %554 : vector<64x1xf32> to vector<64x1xf32>
    %556 = vector.broadcast %555 : vector<64x1xf32> to vector<64x84xf32>
    %557 = vector.broadcast %cst_140 : f32 to vector<64x84xf32>
    %558 = arith.select %553, %556, %557 : vector<64x84xi1>, vector<64x84xf32>
    %559 = arith.addf %542, %558 : vector<64x84xf32>
    %560 = vector.extract_strided_slice %410 {offsets = [0, 3], sizes = [64, 1], strides = [1, 1]} : vector<64x12xi32> to vector<64x1xi32>
    %561 = vector.broadcast %560 : vector<64x1xi32> to vector<64x84xi32>
    %562 = arith.cmpi eq, %346, %561 : vector<64x84xi32>
    %563 = vector.extract_strided_slice %534 {offsets = [0, 3], sizes = [64, 1], strides = [1, 1]} : vector<64x12xf32> to vector<64x1xf32>
    %cst_141 = arith.constant 0.000000e+00 : f32
    %564 = vector.shape_cast %563 : vector<64x1xf32> to vector<64x1xf32>
    %565 = vector.broadcast %564 : vector<64x1xf32> to vector<64x84xf32>
    %566 = vector.broadcast %cst_141 : f32 to vector<64x84xf32>
    %567 = arith.select %562, %565, %566 : vector<64x84xi1>, vector<64x84xf32>
    %568 = arith.addf %550, %567 : vector<64x84xf32>
    %569 = vector.extract_strided_slice %410 {offsets = [0, 4], sizes = [64, 1], strides = [1, 1]} : vector<64x12xi32> to vector<64x1xi32>
    %570 = vector.broadcast %569 : vector<64x1xi32> to vector<64x84xi32>
    %571 = arith.cmpi eq, %346, %570 : vector<64x84xi32>
    %572 = vector.extract_strided_slice %534 {offsets = [0, 4], sizes = [64, 1], strides = [1, 1]} : vector<64x12xf32> to vector<64x1xf32>
    %cst_142 = arith.constant 0.000000e+00 : f32
    %573 = vector.shape_cast %572 : vector<64x1xf32> to vector<64x1xf32>
    %574 = vector.broadcast %573 : vector<64x1xf32> to vector<64x84xf32>
    %575 = vector.broadcast %cst_142 : f32 to vector<64x84xf32>
    %576 = arith.select %571, %574, %575 : vector<64x84xi1>, vector<64x84xf32>
    %577 = arith.addf %559, %576 : vector<64x84xf32>
    %578 = vector.extract_strided_slice %410 {offsets = [0, 5], sizes = [64, 1], strides = [1, 1]} : vector<64x12xi32> to vector<64x1xi32>
    %579 = vector.broadcast %578 : vector<64x1xi32> to vector<64x84xi32>
    %580 = arith.cmpi eq, %346, %579 : vector<64x84xi32>
    %581 = vector.extract_strided_slice %534 {offsets = [0, 5], sizes = [64, 1], strides = [1, 1]} : vector<64x12xf32> to vector<64x1xf32>
    %cst_143 = arith.constant 0.000000e+00 : f32
    %582 = vector.shape_cast %581 : vector<64x1xf32> to vector<64x1xf32>
    %583 = vector.broadcast %582 : vector<64x1xf32> to vector<64x84xf32>
    %584 = vector.broadcast %cst_143 : f32 to vector<64x84xf32>
    %585 = arith.select %580, %583, %584 : vector<64x84xi1>, vector<64x84xf32>
    %586 = arith.addf %568, %585 : vector<64x84xf32>
    %587 = vector.extract_strided_slice %410 {offsets = [0, 6], sizes = [64, 1], strides = [1, 1]} : vector<64x12xi32> to vector<64x1xi32>
    %588 = vector.broadcast %587 : vector<64x1xi32> to vector<64x84xi32>
    %589 = arith.cmpi eq, %346, %588 : vector<64x84xi32>
    %590 = vector.extract_strided_slice %534 {offsets = [0, 6], sizes = [64, 1], strides = [1, 1]} : vector<64x12xf32> to vector<64x1xf32>
    %cst_144 = arith.constant 0.000000e+00 : f32
    %591 = vector.shape_cast %590 : vector<64x1xf32> to vector<64x1xf32>
    %592 = vector.broadcast %591 : vector<64x1xf32> to vector<64x84xf32>
    %593 = vector.broadcast %cst_144 : f32 to vector<64x84xf32>
    %594 = arith.select %589, %592, %593 : vector<64x84xi1>, vector<64x84xf32>
    %595 = arith.addf %577, %594 : vector<64x84xf32>
    %596 = vector.extract_strided_slice %410 {offsets = [0, 7], sizes = [64, 1], strides = [1, 1]} : vector<64x12xi32> to vector<64x1xi32>
    %597 = vector.broadcast %596 : vector<64x1xi32> to vector<64x84xi32>
    %598 = arith.cmpi eq, %346, %597 : vector<64x84xi32>
    %599 = vector.extract_strided_slice %534 {offsets = [0, 7], sizes = [64, 1], strides = [1, 1]} : vector<64x12xf32> to vector<64x1xf32>
    %cst_145 = arith.constant 0.000000e+00 : f32
    %600 = vector.shape_cast %599 : vector<64x1xf32> to vector<64x1xf32>
    %601 = vector.broadcast %600 : vector<64x1xf32> to vector<64x84xf32>
    %602 = vector.broadcast %cst_145 : f32 to vector<64x84xf32>
    %603 = arith.select %598, %601, %602 : vector<64x84xi1>, vector<64x84xf32>
    %604 = arith.addf %586, %603 : vector<64x84xf32>
    %605 = vector.extract_strided_slice %410 {offsets = [0, 8], sizes = [64, 1], strides = [1, 1]} : vector<64x12xi32> to vector<64x1xi32>
    %606 = vector.broadcast %605 : vector<64x1xi32> to vector<64x84xi32>
    %607 = arith.cmpi eq, %346, %606 : vector<64x84xi32>
    %608 = vector.extract_strided_slice %534 {offsets = [0, 8], sizes = [64, 1], strides = [1, 1]} : vector<64x12xf32> to vector<64x1xf32>
    %cst_146 = arith.constant 0.000000e+00 : f32
    %609 = vector.shape_cast %608 : vector<64x1xf32> to vector<64x1xf32>
    %610 = vector.broadcast %609 : vector<64x1xf32> to vector<64x84xf32>
    %611 = vector.broadcast %cst_146 : f32 to vector<64x84xf32>
    %612 = arith.select %607, %610, %611 : vector<64x84xi1>, vector<64x84xf32>
    %613 = arith.addf %595, %612 : vector<64x84xf32>
    %614 = vector.extract_strided_slice %410 {offsets = [0, 9], sizes = [64, 1], strides = [1, 1]} : vector<64x12xi32> to vector<64x1xi32>
    %615 = vector.broadcast %614 : vector<64x1xi32> to vector<64x84xi32>
    %616 = arith.cmpi eq, %346, %615 : vector<64x84xi32>
    %617 = vector.extract_strided_slice %534 {offsets = [0, 9], sizes = [64, 1], strides = [1, 1]} : vector<64x12xf32> to vector<64x1xf32>
    %cst_147 = arith.constant 0.000000e+00 : f32
    %618 = vector.shape_cast %617 : vector<64x1xf32> to vector<64x1xf32>
    %619 = vector.broadcast %618 : vector<64x1xf32> to vector<64x84xf32>
    %620 = vector.broadcast %cst_147 : f32 to vector<64x84xf32>
    %621 = arith.select %616, %619, %620 : vector<64x84xi1>, vector<64x84xf32>
    %622 = arith.addf %604, %621 : vector<64x84xf32>
    %623 = vector.extract_strided_slice %410 {offsets = [0, 10], sizes = [64, 1], strides = [1, 1]} : vector<64x12xi32> to vector<64x1xi32>
    %624 = vector.broadcast %623 : vector<64x1xi32> to vector<64x84xi32>
    %625 = arith.cmpi eq, %346, %624 : vector<64x84xi32>
    %626 = vector.extract_strided_slice %534 {offsets = [0, 10], sizes = [64, 1], strides = [1, 1]} : vector<64x12xf32> to vector<64x1xf32>
    %cst_148 = arith.constant 0.000000e+00 : f32
    %627 = vector.shape_cast %626 : vector<64x1xf32> to vector<64x1xf32>
    %628 = vector.broadcast %627 : vector<64x1xf32> to vector<64x84xf32>
    %629 = vector.broadcast %cst_148 : f32 to vector<64x84xf32>
    %630 = arith.select %625, %628, %629 : vector<64x84xi1>, vector<64x84xf32>
    %631 = arith.addf %613, %630 : vector<64x84xf32>
    %632 = vector.extract_strided_slice %410 {offsets = [0, 11], sizes = [64, 1], strides = [1, 1]} : vector<64x12xi32> to vector<64x1xi32>
    %633 = vector.broadcast %632 : vector<64x1xi32> to vector<64x84xi32>
    %634 = arith.cmpi eq, %346, %633 : vector<64x84xi32>
    %635 = vector.extract_strided_slice %534 {offsets = [0, 11], sizes = [64, 1], strides = [1, 1]} : vector<64x12xf32> to vector<64x1xf32>
    %cst_149 = arith.constant 0.000000e+00 : f32
    %636 = vector.shape_cast %635 : vector<64x1xf32> to vector<64x1xf32>
    %637 = vector.broadcast %636 : vector<64x1xf32> to vector<64x84xf32>
    %638 = vector.broadcast %cst_149 : f32 to vector<64x84xf32>
    %639 = arith.select %634, %637, %638 : vector<64x84xi1>, vector<64x84xf32>
    %640 = arith.addf %622, %639 : vector<64x84xf32>
    %cst_150 = arith.constant 0.000000e+00 : f32
    %641 = vector.broadcast %cst_150 : f32 to vector<64x12xf32>
    %642 = arith.select %421, %422, %641 : vector<64x12xi1>, vector<64x12xf32>
    %643 = vector.extract_strided_slice %412 {offsets = [0, 0], sizes = [64, 1], strides = [1, 1]} : vector<64x12xi32> to vector<64x1xi32>
    %644 = vector.broadcast %643 : vector<64x1xi32> to vector<64x84xi32>
    %645 = arith.cmpi eq, %346, %644 : vector<64x84xi32>
    %646 = vector.extract_strided_slice %642 {offsets = [0, 0], sizes = [64, 1], strides = [1, 1]} : vector<64x12xf32> to vector<64x1xf32>
    %cst_151 = arith.constant 0.000000e+00 : f32
    %647 = vector.shape_cast %646 : vector<64x1xf32> to vector<64x1xf32>
    %648 = vector.broadcast %647 : vector<64x1xf32> to vector<64x84xf32>
    %649 = vector.broadcast %cst_151 : f32 to vector<64x84xf32>
    %650 = arith.select %645, %648, %649 : vector<64x84xi1>, vector<64x84xf32>
    %651 = vector.extract_strided_slice %412 {offsets = [0, 1], sizes = [64, 1], strides = [1, 1]} : vector<64x12xi32> to vector<64x1xi32>
    %652 = vector.broadcast %651 : vector<64x1xi32> to vector<64x84xi32>
    %653 = arith.cmpi eq, %346, %652 : vector<64x84xi32>
    %654 = vector.extract_strided_slice %642 {offsets = [0, 1], sizes = [64, 1], strides = [1, 1]} : vector<64x12xf32> to vector<64x1xf32>
    %cst_152 = arith.constant 0.000000e+00 : f32
    %655 = vector.shape_cast %654 : vector<64x1xf32> to vector<64x1xf32>
    %656 = vector.broadcast %655 : vector<64x1xf32> to vector<64x84xf32>
    %657 = vector.broadcast %cst_152 : f32 to vector<64x84xf32>
    %658 = arith.select %653, %656, %657 : vector<64x84xi1>, vector<64x84xf32>
    %659 = vector.extract_strided_slice %412 {offsets = [0, 2], sizes = [64, 1], strides = [1, 1]} : vector<64x12xi32> to vector<64x1xi32>
    %660 = vector.broadcast %659 : vector<64x1xi32> to vector<64x84xi32>
    %661 = arith.cmpi eq, %346, %660 : vector<64x84xi32>
    %662 = vector.extract_strided_slice %642 {offsets = [0, 2], sizes = [64, 1], strides = [1, 1]} : vector<64x12xf32> to vector<64x1xf32>
    %cst_153 = arith.constant 0.000000e+00 : f32
    %663 = vector.shape_cast %662 : vector<64x1xf32> to vector<64x1xf32>
    %664 = vector.broadcast %663 : vector<64x1xf32> to vector<64x84xf32>
    %665 = vector.broadcast %cst_153 : f32 to vector<64x84xf32>
    %666 = arith.select %661, %664, %665 : vector<64x84xi1>, vector<64x84xf32>
    %667 = arith.addf %650, %666 : vector<64x84xf32>
    %668 = vector.extract_strided_slice %412 {offsets = [0, 3], sizes = [64, 1], strides = [1, 1]} : vector<64x12xi32> to vector<64x1xi32>
    %669 = vector.broadcast %668 : vector<64x1xi32> to vector<64x84xi32>
    %670 = arith.cmpi eq, %346, %669 : vector<64x84xi32>
    %671 = vector.extract_strided_slice %642 {offsets = [0, 3], sizes = [64, 1], strides = [1, 1]} : vector<64x12xf32> to vector<64x1xf32>
    %cst_154 = arith.constant 0.000000e+00 : f32
    %672 = vector.shape_cast %671 : vector<64x1xf32> to vector<64x1xf32>
    %673 = vector.broadcast %672 : vector<64x1xf32> to vector<64x84xf32>
    %674 = vector.broadcast %cst_154 : f32 to vector<64x84xf32>
    %675 = arith.select %670, %673, %674 : vector<64x84xi1>, vector<64x84xf32>
    %676 = arith.addf %658, %675 : vector<64x84xf32>
    %677 = vector.extract_strided_slice %412 {offsets = [0, 4], sizes = [64, 1], strides = [1, 1]} : vector<64x12xi32> to vector<64x1xi32>
    %678 = vector.broadcast %677 : vector<64x1xi32> to vector<64x84xi32>
    %679 = arith.cmpi eq, %346, %678 : vector<64x84xi32>
    %680 = vector.extract_strided_slice %642 {offsets = [0, 4], sizes = [64, 1], strides = [1, 1]} : vector<64x12xf32> to vector<64x1xf32>
    %cst_155 = arith.constant 0.000000e+00 : f32
    %681 = vector.shape_cast %680 : vector<64x1xf32> to vector<64x1xf32>
    %682 = vector.broadcast %681 : vector<64x1xf32> to vector<64x84xf32>
    %683 = vector.broadcast %cst_155 : f32 to vector<64x84xf32>
    %684 = arith.select %679, %682, %683 : vector<64x84xi1>, vector<64x84xf32>
    %685 = arith.addf %667, %684 : vector<64x84xf32>
    %686 = vector.extract_strided_slice %412 {offsets = [0, 5], sizes = [64, 1], strides = [1, 1]} : vector<64x12xi32> to vector<64x1xi32>
    %687 = vector.broadcast %686 : vector<64x1xi32> to vector<64x84xi32>
    %688 = arith.cmpi eq, %346, %687 : vector<64x84xi32>
    %689 = vector.extract_strided_slice %642 {offsets = [0, 5], sizes = [64, 1], strides = [1, 1]} : vector<64x12xf32> to vector<64x1xf32>
    %cst_156 = arith.constant 0.000000e+00 : f32
    %690 = vector.shape_cast %689 : vector<64x1xf32> to vector<64x1xf32>
    %691 = vector.broadcast %690 : vector<64x1xf32> to vector<64x84xf32>
    %692 = vector.broadcast %cst_156 : f32 to vector<64x84xf32>
    %693 = arith.select %688, %691, %692 : vector<64x84xi1>, vector<64x84xf32>
    %694 = arith.addf %676, %693 : vector<64x84xf32>
    %695 = vector.extract_strided_slice %412 {offsets = [0, 6], sizes = [64, 1], strides = [1, 1]} : vector<64x12xi32> to vector<64x1xi32>
    %696 = vector.broadcast %695 : vector<64x1xi32> to vector<64x84xi32>
    %697 = arith.cmpi eq, %346, %696 : vector<64x84xi32>
    %698 = vector.extract_strided_slice %642 {offsets = [0, 6], sizes = [64, 1], strides = [1, 1]} : vector<64x12xf32> to vector<64x1xf32>
    %cst_157 = arith.constant 0.000000e+00 : f32
    %699 = vector.shape_cast %698 : vector<64x1xf32> to vector<64x1xf32>
    %700 = vector.broadcast %699 : vector<64x1xf32> to vector<64x84xf32>
    %701 = vector.broadcast %cst_157 : f32 to vector<64x84xf32>
    %702 = arith.select %697, %700, %701 : vector<64x84xi1>, vector<64x84xf32>
    %703 = arith.addf %685, %702 : vector<64x84xf32>
    %704 = vector.extract_strided_slice %412 {offsets = [0, 7], sizes = [64, 1], strides = [1, 1]} : vector<64x12xi32> to vector<64x1xi32>
    %705 = vector.broadcast %704 : vector<64x1xi32> to vector<64x84xi32>
    %706 = arith.cmpi eq, %346, %705 : vector<64x84xi32>
    %707 = vector.extract_strided_slice %642 {offsets = [0, 7], sizes = [64, 1], strides = [1, 1]} : vector<64x12xf32> to vector<64x1xf32>
    %cst_158 = arith.constant 0.000000e+00 : f32
    %708 = vector.shape_cast %707 : vector<64x1xf32> to vector<64x1xf32>
    %709 = vector.broadcast %708 : vector<64x1xf32> to vector<64x84xf32>
    %710 = vector.broadcast %cst_158 : f32 to vector<64x84xf32>
    %711 = arith.select %706, %709, %710 : vector<64x84xi1>, vector<64x84xf32>
    %712 = arith.addf %694, %711 : vector<64x84xf32>
    %713 = vector.extract_strided_slice %412 {offsets = [0, 8], sizes = [64, 1], strides = [1, 1]} : vector<64x12xi32> to vector<64x1xi32>
    %714 = vector.broadcast %713 : vector<64x1xi32> to vector<64x84xi32>
    %715 = arith.cmpi eq, %346, %714 : vector<64x84xi32>
    %716 = vector.extract_strided_slice %642 {offsets = [0, 8], sizes = [64, 1], strides = [1, 1]} : vector<64x12xf32> to vector<64x1xf32>
    %cst_159 = arith.constant 0.000000e+00 : f32
    %717 = vector.shape_cast %716 : vector<64x1xf32> to vector<64x1xf32>
    %718 = vector.broadcast %717 : vector<64x1xf32> to vector<64x84xf32>
    %719 = vector.broadcast %cst_159 : f32 to vector<64x84xf32>
    %720 = arith.select %715, %718, %719 : vector<64x84xi1>, vector<64x84xf32>
    %721 = arith.addf %703, %720 : vector<64x84xf32>
    %722 = vector.extract_strided_slice %412 {offsets = [0, 9], sizes = [64, 1], strides = [1, 1]} : vector<64x12xi32> to vector<64x1xi32>
    %723 = vector.broadcast %722 : vector<64x1xi32> to vector<64x84xi32>
    %724 = arith.cmpi eq, %346, %723 : vector<64x84xi32>
    %725 = vector.extract_strided_slice %642 {offsets = [0, 9], sizes = [64, 1], strides = [1, 1]} : vector<64x12xf32> to vector<64x1xf32>
    %cst_160 = arith.constant 0.000000e+00 : f32
    %726 = vector.shape_cast %725 : vector<64x1xf32> to vector<64x1xf32>
    %727 = vector.broadcast %726 : vector<64x1xf32> to vector<64x84xf32>
    %728 = vector.broadcast %cst_160 : f32 to vector<64x84xf32>
    %729 = arith.select %724, %727, %728 : vector<64x84xi1>, vector<64x84xf32>
    %730 = arith.addf %712, %729 : vector<64x84xf32>
    %731 = vector.extract_strided_slice %412 {offsets = [0, 10], sizes = [64, 1], strides = [1, 1]} : vector<64x12xi32> to vector<64x1xi32>
    %732 = vector.broadcast %731 : vector<64x1xi32> to vector<64x84xi32>
    %733 = arith.cmpi eq, %346, %732 : vector<64x84xi32>
    %734 = vector.extract_strided_slice %642 {offsets = [0, 10], sizes = [64, 1], strides = [1, 1]} : vector<64x12xf32> to vector<64x1xf32>
    %cst_161 = arith.constant 0.000000e+00 : f32
    %735 = vector.shape_cast %734 : vector<64x1xf32> to vector<64x1xf32>
    %736 = vector.broadcast %735 : vector<64x1xf32> to vector<64x84xf32>
    %737 = vector.broadcast %cst_161 : f32 to vector<64x84xf32>
    %738 = arith.select %733, %736, %737 : vector<64x84xi1>, vector<64x84xf32>
    %739 = arith.addf %721, %738 : vector<64x84xf32>
    %740 = vector.extract_strided_slice %412 {offsets = [0, 11], sizes = [64, 1], strides = [1, 1]} : vector<64x12xi32> to vector<64x1xi32>
    %741 = vector.broadcast %740 : vector<64x1xi32> to vector<64x84xi32>
    %742 = arith.cmpi eq, %346, %741 : vector<64x84xi32>
    %743 = vector.extract_strided_slice %642 {offsets = [0, 11], sizes = [64, 1], strides = [1, 1]} : vector<64x12xf32> to vector<64x1xf32>
    %cst_162 = arith.constant 0.000000e+00 : f32
    %744 = vector.shape_cast %743 : vector<64x1xf32> to vector<64x1xf32>
    %745 = vector.broadcast %744 : vector<64x1xf32> to vector<64x84xf32>
    %746 = vector.broadcast %cst_162 : f32 to vector<64x84xf32>
    %747 = arith.select %742, %745, %746 : vector<64x84xi1>, vector<64x84xf32>
    %748 = arith.addf %730, %747 : vector<64x84xf32>
    %cst_163 = arith.constant 0.000000e+00 : f32
    %749 = vector.broadcast %cst_163 : f32 to vector<64x12xf32>
    %750 = arith.select %423, %424, %749 : vector<64x12xi1>, vector<64x12xf32>
    %751 = vector.extract_strided_slice %414 {offsets = [0, 0], sizes = [64, 1], strides = [1, 1]} : vector<64x12xi32> to vector<64x1xi32>
    %752 = vector.broadcast %751 : vector<64x1xi32> to vector<64x84xi32>
    %753 = arith.cmpi eq, %346, %752 : vector<64x84xi32>
    %754 = vector.extract_strided_slice %750 {offsets = [0, 0], sizes = [64, 1], strides = [1, 1]} : vector<64x12xf32> to vector<64x1xf32>
    %cst_164 = arith.constant 0.000000e+00 : f32
    %755 = vector.shape_cast %754 : vector<64x1xf32> to vector<64x1xf32>
    %756 = vector.broadcast %755 : vector<64x1xf32> to vector<64x84xf32>
    %757 = vector.broadcast %cst_164 : f32 to vector<64x84xf32>
    %758 = arith.select %753, %756, %757 : vector<64x84xi1>, vector<64x84xf32>
    %759 = vector.extract_strided_slice %414 {offsets = [0, 1], sizes = [64, 1], strides = [1, 1]} : vector<64x12xi32> to vector<64x1xi32>
    %760 = vector.broadcast %759 : vector<64x1xi32> to vector<64x84xi32>
    %761 = arith.cmpi eq, %346, %760 : vector<64x84xi32>
    %762 = vector.extract_strided_slice %750 {offsets = [0, 1], sizes = [64, 1], strides = [1, 1]} : vector<64x12xf32> to vector<64x1xf32>
    %cst_165 = arith.constant 0.000000e+00 : f32
    %763 = vector.shape_cast %762 : vector<64x1xf32> to vector<64x1xf32>
    %764 = vector.broadcast %763 : vector<64x1xf32> to vector<64x84xf32>
    %765 = vector.broadcast %cst_165 : f32 to vector<64x84xf32>
    %766 = arith.select %761, %764, %765 : vector<64x84xi1>, vector<64x84xf32>
    %767 = vector.extract_strided_slice %414 {offsets = [0, 2], sizes = [64, 1], strides = [1, 1]} : vector<64x12xi32> to vector<64x1xi32>
    %768 = vector.broadcast %767 : vector<64x1xi32> to vector<64x84xi32>
    %769 = arith.cmpi eq, %346, %768 : vector<64x84xi32>
    %770 = vector.extract_strided_slice %750 {offsets = [0, 2], sizes = [64, 1], strides = [1, 1]} : vector<64x12xf32> to vector<64x1xf32>
    %cst_166 = arith.constant 0.000000e+00 : f32
    %771 = vector.shape_cast %770 : vector<64x1xf32> to vector<64x1xf32>
    %772 = vector.broadcast %771 : vector<64x1xf32> to vector<64x84xf32>
    %773 = vector.broadcast %cst_166 : f32 to vector<64x84xf32>
    %774 = arith.select %769, %772, %773 : vector<64x84xi1>, vector<64x84xf32>
    %775 = arith.addf %758, %774 : vector<64x84xf32>
    %776 = vector.extract_strided_slice %414 {offsets = [0, 3], sizes = [64, 1], strides = [1, 1]} : vector<64x12xi32> to vector<64x1xi32>
    %777 = vector.broadcast %776 : vector<64x1xi32> to vector<64x84xi32>
    %778 = arith.cmpi eq, %346, %777 : vector<64x84xi32>
    %779 = vector.extract_strided_slice %750 {offsets = [0, 3], sizes = [64, 1], strides = [1, 1]} : vector<64x12xf32> to vector<64x1xf32>
    %cst_167 = arith.constant 0.000000e+00 : f32
    %780 = vector.shape_cast %779 : vector<64x1xf32> to vector<64x1xf32>
    %781 = vector.broadcast %780 : vector<64x1xf32> to vector<64x84xf32>
    %782 = vector.broadcast %cst_167 : f32 to vector<64x84xf32>
    %783 = arith.select %778, %781, %782 : vector<64x84xi1>, vector<64x84xf32>
    %784 = arith.addf %766, %783 : vector<64x84xf32>
    %785 = vector.extract_strided_slice %414 {offsets = [0, 4], sizes = [64, 1], strides = [1, 1]} : vector<64x12xi32> to vector<64x1xi32>
    %786 = vector.broadcast %785 : vector<64x1xi32> to vector<64x84xi32>
    %787 = arith.cmpi eq, %346, %786 : vector<64x84xi32>
    %788 = vector.extract_strided_slice %750 {offsets = [0, 4], sizes = [64, 1], strides = [1, 1]} : vector<64x12xf32> to vector<64x1xf32>
    %cst_168 = arith.constant 0.000000e+00 : f32
    %789 = vector.shape_cast %788 : vector<64x1xf32> to vector<64x1xf32>
    %790 = vector.broadcast %789 : vector<64x1xf32> to vector<64x84xf32>
    %791 = vector.broadcast %cst_168 : f32 to vector<64x84xf32>
    %792 = arith.select %787, %790, %791 : vector<64x84xi1>, vector<64x84xf32>
    %793 = arith.addf %775, %792 : vector<64x84xf32>
    %794 = vector.extract_strided_slice %414 {offsets = [0, 5], sizes = [64, 1], strides = [1, 1]} : vector<64x12xi32> to vector<64x1xi32>
    %795 = vector.broadcast %794 : vector<64x1xi32> to vector<64x84xi32>
    %796 = arith.cmpi eq, %346, %795 : vector<64x84xi32>
    %797 = vector.extract_strided_slice %750 {offsets = [0, 5], sizes = [64, 1], strides = [1, 1]} : vector<64x12xf32> to vector<64x1xf32>
    %cst_169 = arith.constant 0.000000e+00 : f32
    %798 = vector.shape_cast %797 : vector<64x1xf32> to vector<64x1xf32>
    %799 = vector.broadcast %798 : vector<64x1xf32> to vector<64x84xf32>
    %800 = vector.broadcast %cst_169 : f32 to vector<64x84xf32>
    %801 = arith.select %796, %799, %800 : vector<64x84xi1>, vector<64x84xf32>
    %802 = arith.addf %784, %801 : vector<64x84xf32>
    %803 = vector.extract_strided_slice %414 {offsets = [0, 6], sizes = [64, 1], strides = [1, 1]} : vector<64x12xi32> to vector<64x1xi32>
    %804 = vector.broadcast %803 : vector<64x1xi32> to vector<64x84xi32>
    %805 = arith.cmpi eq, %346, %804 : vector<64x84xi32>
    %806 = vector.extract_strided_slice %750 {offsets = [0, 6], sizes = [64, 1], strides = [1, 1]} : vector<64x12xf32> to vector<64x1xf32>
    %cst_170 = arith.constant 0.000000e+00 : f32
    %807 = vector.shape_cast %806 : vector<64x1xf32> to vector<64x1xf32>
    %808 = vector.broadcast %807 : vector<64x1xf32> to vector<64x84xf32>
    %809 = vector.broadcast %cst_170 : f32 to vector<64x84xf32>
    %810 = arith.select %805, %808, %809 : vector<64x84xi1>, vector<64x84xf32>
    %811 = arith.addf %793, %810 : vector<64x84xf32>
    %812 = vector.extract_strided_slice %414 {offsets = [0, 7], sizes = [64, 1], strides = [1, 1]} : vector<64x12xi32> to vector<64x1xi32>
    %813 = vector.broadcast %812 : vector<64x1xi32> to vector<64x84xi32>
    %814 = arith.cmpi eq, %346, %813 : vector<64x84xi32>
    %815 = vector.extract_strided_slice %750 {offsets = [0, 7], sizes = [64, 1], strides = [1, 1]} : vector<64x12xf32> to vector<64x1xf32>
    %cst_171 = arith.constant 0.000000e+00 : f32
    %816 = vector.shape_cast %815 : vector<64x1xf32> to vector<64x1xf32>
    %817 = vector.broadcast %816 : vector<64x1xf32> to vector<64x84xf32>
    %818 = vector.broadcast %cst_171 : f32 to vector<64x84xf32>
    %819 = arith.select %814, %817, %818 : vector<64x84xi1>, vector<64x84xf32>
    %820 = arith.addf %802, %819 : vector<64x84xf32>
    %821 = vector.extract_strided_slice %414 {offsets = [0, 8], sizes = [64, 1], strides = [1, 1]} : vector<64x12xi32> to vector<64x1xi32>
    %822 = vector.broadcast %821 : vector<64x1xi32> to vector<64x84xi32>
    %823 = arith.cmpi eq, %346, %822 : vector<64x84xi32>
    %824 = vector.extract_strided_slice %750 {offsets = [0, 8], sizes = [64, 1], strides = [1, 1]} : vector<64x12xf32> to vector<64x1xf32>
    %cst_172 = arith.constant 0.000000e+00 : f32
    %825 = vector.shape_cast %824 : vector<64x1xf32> to vector<64x1xf32>
    %826 = vector.broadcast %825 : vector<64x1xf32> to vector<64x84xf32>
    %827 = vector.broadcast %cst_172 : f32 to vector<64x84xf32>
    %828 = arith.select %823, %826, %827 : vector<64x84xi1>, vector<64x84xf32>
    %829 = arith.addf %811, %828 : vector<64x84xf32>
    %830 = vector.extract_strided_slice %414 {offsets = [0, 9], sizes = [64, 1], strides = [1, 1]} : vector<64x12xi32> to vector<64x1xi32>
    %831 = vector.broadcast %830 : vector<64x1xi32> to vector<64x84xi32>
    %832 = arith.cmpi eq, %346, %831 : vector<64x84xi32>
    %833 = vector.extract_strided_slice %750 {offsets = [0, 9], sizes = [64, 1], strides = [1, 1]} : vector<64x12xf32> to vector<64x1xf32>
    %cst_173 = arith.constant 0.000000e+00 : f32
    %834 = vector.shape_cast %833 : vector<64x1xf32> to vector<64x1xf32>
    %835 = vector.broadcast %834 : vector<64x1xf32> to vector<64x84xf32>
    %836 = vector.broadcast %cst_173 : f32 to vector<64x84xf32>
    %837 = arith.select %832, %835, %836 : vector<64x84xi1>, vector<64x84xf32>
    %838 = arith.addf %820, %837 : vector<64x84xf32>
    %839 = vector.extract_strided_slice %414 {offsets = [0, 10], sizes = [64, 1], strides = [1, 1]} : vector<64x12xi32> to vector<64x1xi32>
    %840 = vector.broadcast %839 : vector<64x1xi32> to vector<64x84xi32>
    %841 = arith.cmpi eq, %346, %840 : vector<64x84xi32>
    %842 = vector.extract_strided_slice %750 {offsets = [0, 10], sizes = [64, 1], strides = [1, 1]} : vector<64x12xf32> to vector<64x1xf32>
    %cst_174 = arith.constant 0.000000e+00 : f32
    %843 = vector.shape_cast %842 : vector<64x1xf32> to vector<64x1xf32>
    %844 = vector.broadcast %843 : vector<64x1xf32> to vector<64x84xf32>
    %845 = vector.broadcast %cst_174 : f32 to vector<64x84xf32>
    %846 = arith.select %841, %844, %845 : vector<64x84xi1>, vector<64x84xf32>
    %847 = arith.addf %829, %846 : vector<64x84xf32>
    %848 = vector.extract_strided_slice %414 {offsets = [0, 11], sizes = [64, 1], strides = [1, 1]} : vector<64x12xi32> to vector<64x1xi32>
    %849 = vector.broadcast %848 : vector<64x1xi32> to vector<64x84xi32>
    %850 = arith.cmpi eq, %346, %849 : vector<64x84xi32>
    %851 = vector.extract_strided_slice %750 {offsets = [0, 11], sizes = [64, 1], strides = [1, 1]} : vector<64x12xf32> to vector<64x1xf32>
    %cst_175 = arith.constant 0.000000e+00 : f32
    %852 = vector.shape_cast %851 : vector<64x1xf32> to vector<64x1xf32>
    %853 = vector.broadcast %852 : vector<64x1xf32> to vector<64x84xf32>
    %854 = vector.broadcast %cst_175 : f32 to vector<64x84xf32>
    %855 = arith.select %850, %853, %854 : vector<64x84xi1>, vector<64x84xf32>
    %856 = arith.addf %838, %855 : vector<64x84xf32>
    %857 = arith.addf %523, %532 : vector<64x84xf32>
    %858 = arith.addf %631, %640 : vector<64x84xf32>
    %859 = arith.addf %739, %748 : vector<64x84xf32>
    %860 = arith.addf %847, %856 : vector<64x84xf32>
    %861 = arith.addf %857, %858 : vector<64x84xf32>
    %862 = arith.addf %859, %860 : vector<64x84xf32>
    %863 = arith.addf %861, %862 : vector<64x84xf32>
    %cst_176 = arith.constant dense<0.000000e+00> : vector<84x32xf32>
    %864 = tpu.matmul %342, %287, %cst_176 {dimension_numbers = #tpu.dot_dimension_numbers<[1], [0], [0], [1], [0, 0, 1, 1], [], []>} : vector<84x32xf32>, vector<32x32xf32>, vector<84x32xf32> -> vector<84x32xf32>
    %cst_177 = arith.constant dense<0.000000e+00> : vector<64x32xf32>
    %865 = tpu.matmul %863, %864, %cst_177 {dimension_numbers = #tpu.dot_dimension_numbers<[1], [0], [0], [1], [0, 0, 1, 1], [], []>} : vector<64x84xf32>, vector<84x32xf32>, vector<64x32xf32> -> vector<64x32xf32>
    %866 = vector.broadcast %288 : vector<1x32xf32> to vector<64x32xf32>
    %867 = arith.addf %865, %866 : vector<64x32xf32>
    %868 = arith.addf %867, %279 : vector<64x32xf32>
    %c0_178 = arith.constant 0 : index
    %c0_179 = arith.constant 0 : index
    %869 = vector.load %arg23[%c0_178, %c0_179] : memref<1x32xf32, #tpu.memory_space<vmem>>, vector<1x32xf32>
    %c0_180 = arith.constant 0 : index
    %c0_181 = arith.constant 0 : index
    %870 = vector.load %arg24[%c0_180, %c0_181] : memref<1x32xf32, #tpu.memory_space<vmem>>, vector<1x32xf32>
    %cst_182 = arith.constant dense<0.000000e+00> : vector<64xf32>
    %871 = vector.multi_reduction <add>, %868, %cst_182 [1] : vector<64x32xf32> to vector<64xf32>
    %872 = vector.shape_cast %871 : vector<64xf32> to vector<64x1xf32>
    %cst_183 = arith.constant 3.200000e+01 : f32
    %873 = vector.broadcast %cst_183 : f32 to vector<64x1xf32>
    %874 = arith.divf %872, %873 : vector<64x1xf32>
    %875 = vector.broadcast %874 : vector<64x1xf32> to vector<64x32xf32>
    %876 = arith.subf %868, %875 : vector<64x32xf32>
    %877 = arith.mulf %876, %876 : vector<64x32xf32>
    %cst_184 = arith.constant dense<0.000000e+00> : vector<64xf32>
    %878 = vector.multi_reduction <add>, %877, %cst_184 [1] : vector<64x32xf32> to vector<64xf32>
    %879 = vector.shape_cast %878 : vector<64xf32> to vector<64x1xf32>
    %cst_185 = arith.constant 3.200000e+01 : f32
    %880 = vector.broadcast %cst_185 : f32 to vector<64x1xf32>
    %881 = arith.divf %879, %880 : vector<64x1xf32>
    %cst_186 = arith.constant 9.99999974E-6 : f32
    %882 = vector.broadcast %cst_186 : f32 to vector<64x1xf32>
    %883 = arith.addf %881, %882 : vector<64x1xf32>
    %884 = math.rsqrt %883 : vector<64x1xf32>
    %885 = vector.broadcast %884 : vector<64x1xf32> to vector<64x32xf32>
    %886 = arith.mulf %876, %885 : vector<64x32xf32>
    %887 = vector.broadcast %869 : vector<1x32xf32> to vector<64x32xf32>
    %888 = arith.mulf %886, %887 : vector<64x32xf32>
    %889 = vector.broadcast %870 : vector<1x32xf32> to vector<64x32xf32>
    %890 = arith.addf %888, %889 : vector<64x32xf32>
    %c0_187 = arith.constant 0 : index
    %c0_188 = arith.constant 0 : index
    %891 = vector.load %arg25[%c0_187, %c0_188] : memref<32x128xf32, #tpu.memory_space<vmem>>, vector<32x128xf32>
    %cst_189 = arith.constant dense<0.000000e+00> : vector<64x128xf32>
    %892 = tpu.matmul %890, %891, %cst_189 {dimension_numbers = #tpu.dot_dimension_numbers<[1], [0], [0], [1], [0, 0, 1, 1], [], []>} : vector<64x32xf32>, vector<32x128xf32>, vector<64x128xf32> -> vector<64x128xf32>
    %c0_190 = arith.constant 0 : index
    %c0_191 = arith.constant 0 : index
    %893 = vector.load %arg26[%c0_190, %c0_191] : memref<1x128xf32, #tpu.memory_space<vmem>>, vector<1x128xf32>
    %894 = vector.broadcast %893 : vector<1x128xf32> to vector<64x128xf32>
    %895 = arith.addf %892, %894 : vector<64x128xf32>
    %cst_192 = arith.constant 0.000000e+00 : f32
    %896 = vector.broadcast %cst_192 : f32 to vector<64x128xf32>
    %897 = arith.maximumf %895, %896 : vector<64x128xf32>
    %c0_193 = arith.constant 0 : index
    %c0_194 = arith.constant 0 : index
    %898 = vector.load %arg27[%c0_193, %c0_194] : memref<128x32xf32, #tpu.memory_space<vmem>>, vector<128x32xf32>
    %cst_195 = arith.constant dense<0.000000e+00> : vector<64x32xf32>
    %899 = tpu.matmul %897, %898, %cst_195 {dimension_numbers = #tpu.dot_dimension_numbers<[1], [0], [0], [1], [0, 0, 1, 1], [], []>} : vector<64x128xf32>, vector<128x32xf32>, vector<64x32xf32> -> vector<64x32xf32>
    %900 = arith.addf %890, %899 : vector<64x32xf32>
    %c0_196 = arith.constant 0 : index
    %c0_197 = arith.constant 0 : index
    %901 = vector.load %arg28[%c0_196, %c0_197] : memref<1x32xf32, #tpu.memory_space<vmem>>, vector<1x32xf32>
    %902 = vector.broadcast %901 : vector<1x32xf32> to vector<64x32xf32>
    %903 = arith.addf %900, %902 : vector<64x32xf32>
    %c0_198 = arith.constant 0 : index
    %c0_199 = arith.constant 0 : index
    %904 = vector.load %arg29[%c0_198, %c0_199] : memref<1x32xf32, #tpu.memory_space<vmem>>, vector<1x32xf32>
    %c0_200 = arith.constant 0 : index
    %c0_201 = arith.constant 0 : index
    %905 = vector.load %arg30[%c0_200, %c0_201] : memref<1x32xf32, #tpu.memory_space<vmem>>, vector<1x32xf32>
    %cst_202 = arith.constant dense<0.000000e+00> : vector<64xf32>
    %906 = vector.multi_reduction <add>, %903, %cst_202 [1] : vector<64x32xf32> to vector<64xf32>
    %907 = vector.shape_cast %906 : vector<64xf32> to vector<64x1xf32>
    %cst_203 = arith.constant 3.200000e+01 : f32
    %908 = vector.broadcast %cst_203 : f32 to vector<64x1xf32>
    %909 = arith.divf %907, %908 : vector<64x1xf32>
    %910 = vector.broadcast %909 : vector<64x1xf32> to vector<64x32xf32>
    %911 = arith.subf %903, %910 : vector<64x32xf32>
    %912 = arith.mulf %911, %911 : vector<64x32xf32>
    %cst_204 = arith.constant dense<0.000000e+00> : vector<64xf32>
    %913 = vector.multi_reduction <add>, %912, %cst_204 [1] : vector<64x32xf32> to vector<64xf32>
    %914 = vector.shape_cast %913 : vector<64xf32> to vector<64x1xf32>
    %cst_205 = arith.constant 3.200000e+01 : f32
    %915 = vector.broadcast %cst_205 : f32 to vector<64x1xf32>
    %916 = arith.divf %914, %915 : vector<64x1xf32>
    %cst_206 = arith.constant 9.99999974E-6 : f32
    %917 = vector.broadcast %cst_206 : f32 to vector<64x1xf32>
    %918 = arith.addf %916, %917 : vector<64x1xf32>
    %919 = math.rsqrt %918 : vector<64x1xf32>
    %920 = vector.broadcast %919 : vector<64x1xf32> to vector<64x32xf32>
    %921 = arith.mulf %911, %920 : vector<64x32xf32>
    %922 = vector.broadcast %904 : vector<1x32xf32> to vector<64x32xf32>
    %923 = arith.mulf %921, %922 : vector<64x32xf32>
    %924 = vector.broadcast %905 : vector<1x32xf32> to vector<64x32xf32>
    %925 = arith.addf %923, %924 : vector<64x32xf32>
    %c0_207 = arith.constant 0 : index
    %c0_208 = arith.constant 0 : index
    %926 = vector.load %arg31[%c0_207, %c0_208] : memref<64x32xf32, #tpu.memory_space<vmem>>, vector<64x32xf32>
    tpu.vector_store %arg31[%c0_207, %c0_208], %925 {strides = array<i32>} : memref<64x32xf32, #tpu.memory_space<vmem>>, vector<64x32xf32>,
    return
  }
  func.func @transform_0(%arg0: i32) -> (i32, i32) {
    %c0_i32 = arith.constant 0 : i32
    %c0_i32_0 = arith.constant 0 : i32
    return %arg0, %c0_i32 : i32, i32
  }
  func.func @transform_1(%arg0: i32) -> (i32, i32) {
    %c0_i32 = arith.constant 0 : i32
    %c0_i32_0 = arith.constant 0 : i32
    %c0_i32_1 = arith.constant 0 : i32
    return %c0_i32, %c0_i32_0 : i32, i32
  }
  func.func @transform_2(%arg0: i32) -> (i32, i32) {
    %c0_i32 = arith.constant 0 : i32
    %c0_i32_0 = arith.constant 0 : i32
    return %arg0, %c0_i32 : i32, i32
  }
  func.func @transform_3(%arg0: i32) -> (i32, i32) {
    %c0_i32 = arith.constant 0 : i32
    %c0_i32_0 = arith.constant 0 : i32
    %c0_i32_1 = arith.constant 0 : i32
    return %c0_i32, %c0_i32_0 : i32, i32
  }
  func.func @transform_4(%arg0: i32) -> (i32, i32) {
    %c0_i32 = arith.constant 0 : i32
    %c0_i32_0 = arith.constant 0 : i32
    return %arg0, %c0_i32 : i32, i32
  }
  func.func @transform_5(%arg0: i32) -> (i32, i32) {
    %c0_i32 = arith.constant 0 : i32
    %c0_i32_0 = arith.constant 0 : i32
    return %arg0, %c0_i32 : i32, i32
  }
  func.func @transform_6(%arg0: i32) -> (i32, i32) {
    %c0_i32 = arith.constant 0 : i32
    %c0_i32_0 = arith.constant 0 : i32
    return %arg0, %c0_i32 : i32, i32
  }
  func.func @transform_7(%arg0: i32) -> (i32, i32) {
    %c0_i32 = arith.constant 0 : i32
    %c0_i32_0 = arith.constant 0 : i32
    return %arg0, %c0_i32 : i32, i32
  }
  func.func @transform_8(%arg0: i32) -> (i32, i32) {
    %c0_i32 = arith.constant 0 : i32
    %c0_i32_0 = arith.constant 0 : i32
    %c0_i32_1 = arith.constant 0 : i32
    return %c0_i32, %c0_i32_0 : i32, i32
  }
  func.func @transform_9(%arg0: i32) -> (i32, i32) {
    %c0_i32 = arith.constant 0 : i32
    %c0_i32_0 = arith.constant 0 : i32
    %c0_i32_1 = arith.constant 0 : i32
    return %c0_i32, %c0_i32_0 : i32, i32
  }
  func.func @transform_10(%arg0: i32) -> (i32, i32) {
    %c0_i32 = arith.constant 0 : i32
    %c0_i32_0 = arith.constant 0 : i32
    %c0_i32_1 = arith.constant 0 : i32
    return %c0_i32, %c0_i32_0 : i32, i32
  }
  func.func @transform_11(%arg0: i32) -> (i32, i32) {
    %c0_i32 = arith.constant 0 : i32
    %c0_i32_0 = arith.constant 0 : i32
    %c0_i32_1 = arith.constant 0 : i32
    return %c0_i32, %c0_i32_0 : i32, i32
  }
  func.func @transform_12(%arg0: i32) -> (i32, i32) {
    %c0_i32 = arith.constant 0 : i32
    %c0_i32_0 = arith.constant 0 : i32
    %c0_i32_1 = arith.constant 0 : i32
    return %c0_i32, %c0_i32_0 : i32, i32
  }
  func.func @transform_13(%arg0: i32) -> (i32, i32) {
    %c0_i32 = arith.constant 0 : i32
    %c0_i32_0 = arith.constant 0 : i32
    %c0_i32_1 = arith.constant 0 : i32
    return %c0_i32, %c0_i32_0 : i32, i32
  }
  func.func @transform_14(%arg0: i32) -> (i32, i32) {
    %c0_i32 = arith.constant 0 : i32
    %c0_i32_0 = arith.constant 0 : i32
    %c0_i32_1 = arith.constant 0 : i32
    return %c0_i32, %c0_i32_0 : i32, i32
  }
  func.func @transform_15(%arg0: i32) -> (i32, i32) {
    %c0_i32 = arith.constant 0 : i32
    %c0_i32_0 = arith.constant 0 : i32
    %c0_i32_1 = arith.constant 0 : i32
    return %c0_i32, %c0_i32_0 : i32, i32
  }
  func.func @transform_16(%arg0: i32) -> (i32, i32) {
    %c0_i32 = arith.constant 0 : i32
    %c0_i32_0 = arith.constant 0 : i32
    %c0_i32_1 = arith.constant 0 : i32
    return %c0_i32, %c0_i32_0 : i32, i32
  }
  func.func @transform_17(%arg0: i32) -> (i32, i32) {
    %c0_i32 = arith.constant 0 : i32
    %c0_i32_0 = arith.constant 0 : i32
    %c0_i32_1 = arith.constant 0 : i32
    return %c0_i32, %c0_i32_0 : i32, i32
  }
  func.func @transform_18(%arg0: i32) -> (i32, i32) {
    %c0_i32 = arith.constant 0 : i32
    %c0_i32_0 = arith.constant 0 : i32
    %c0_i32_1 = arith.constant 0 : i32
    return %c0_i32, %c0_i32_0 : i32, i32
  }
  func.func @transform_19(%arg0: i32) -> (i32, i32) {
    %c0_i32 = arith.constant 0 : i32
    %c0_i32_0 = arith.constant 0 : i32
    %c0_i32_1 = arith.constant 0 : i32
    return %c0_i32, %c0_i32_0 : i32, i32
  }
  func.func @transform_20(%arg0: i32) -> (i32, i32) {
    %c0_i32 = arith.constant 0 : i32
    %c0_i32_0 = arith.constant 0 : i32
    %c0_i32_1 = arith.constant 0 : i32
    return %c0_i32, %c0_i32_0 : i32, i32
  }
  func.func @transform_21(%arg0: i32) -> (i32, i32) {
    %c0_i32 = arith.constant 0 : i32
    %c0_i32_0 = arith.constant 0 : i32
    %c0_i32_1 = arith.constant 0 : i32
    return %c0_i32, %c0_i32_0 : i32, i32
  }
  func.func @transform_22(%arg0: i32) -> (i32, i32) {
    %c0_i32 = arith.constant 0 : i32
    %c0_i32_0 = arith.constant 0 : i32
    %c0_i32_1 = arith.constant 0 : i32
    return %c0_i32, %c0_i32_0 : i32, i32
  }
  func.func @transform_23(%arg0: i32) -> (i32, i32) {
    %c0_i32 = arith.constant 0 : i32
    %c0_i32_0 = arith.constant 0 : i32
    %c0_i32_1 = arith.constant 0 : i32
    return %c0_i32, %c0_i32_0 : i32, i32
  }
  func.func @transform_24(%arg0: i32) -> (i32, i32) {
    %c0_i32 = arith.constant 0 : i32
    %c0_i32_0 = arith.constant 0 : i32
    %c0_i32_1 = arith.constant 0 : i32
    return %c0_i32, %c0_i32_0 : i32, i32
  }
  func.func @transform_25(%arg0: i32) -> (i32, i32) {
    %c0_i32 = arith.constant 0 : i32
    %c0_i32_0 = arith.constant 0 : i32
    %c0_i32_1 = arith.constant 0 : i32
    return %c0_i32, %c0_i32_0 : i32, i32
  }
  func.func @transform_26(%arg0: i32) -> (i32, i32) {
    %c0_i32 = arith.constant 0 : i32
    %c0_i32_0 = arith.constant 0 : i32
    %c0_i32_1 = arith.constant 0 : i32
    return %c0_i32, %c0_i32_0 : i32, i32
  }
  func.func @transform_27(%arg0: i32) -> (i32, i32) {
    %c0_i32 = arith.constant 0 : i32
    %c0_i32_0 = arith.constant 0 : i32
    %c0_i32_1 = arith.constant 0 : i32
    return %c0_i32, %c0_i32_0 : i32, i32
  }
  func.func @transform_28(%arg0: i32) -> (i32, i32) {
    %c0_i32 = arith.constant 0 : i32
    %c0_i32_0 = arith.constant 0 : i32
    %c0_i32_1 = arith.constant 0 : i32
    return %c0_i32, %c0_i32_0 : i32, i32
  }
  func.func @transform_29(%arg0: i32) -> (i32, i32) {
    %c0_i32 = arith.constant 0 : i32
    %c0_i32_0 = arith.constant 0 : i32
    %c0_i32_1 = arith.constant 0 : i32
    return %c0_i32, %c0_i32_0 : i32, i32
  }
  func.func @transform_30(%arg0: i32) -> (i32, i32) {
    %c0_i32 = arith.constant 0 : i32
    %c0_i32_0 = arith.constant 0 : i32
    return %arg0, %c0_i32 : i32, i32
  }
}

</mosaic_0001>

<llo_original>
// kernel: tpu_custom_call.1
$region0: #{tpu_custom_call.1}
  #allocation0 [shape = 'u32[]', space=smem, size = 0x4, offset = 0x4, fixed_abs, tag = 'smem constant byte address 0x4 - core index']
  #allocation1 [shape = 'u32[144,128]{1,0:T(1,128)}', space=vmem, size = 0x12000, scoped, tag = 'internal scratch']
  %s0 = inlined_call_operand.smem [shape: u32[31], index: -1, kind: input, shape index: {}]
  %s1 = sld [smem:[%s0]]
  %s2 = scalar_lea.smem %s0, 1
  %s3 = sld [smem:[%s2]]
  %s4 = scalar_lea.smem %s0, 2
  %s5 = sld [smem:[%s4]]
  %s6 = scalar_lea.smem %s0, 3
  %s7 = sld [smem:[%s6]]
  %s8 = scalar_lea.smem %s0, 4
  %s9 = sld [smem:[%s8]]
  %s10 = scalar_lea.smem %s0, 5
  %s11 = sld [smem:[%s10]]
  %s12 = scalar_lea.smem %s0, 6
  %s13 = sld [smem:[%s12]]
  %s14 = scalar_lea.smem %s0, 7
  %s15 = sld [smem:[%s14]]
  %s16 = scalar_lea.smem %s0, 8
  %s17 = sld [smem:[%s16]]
  %s18 = scalar_lea.smem %s0, 9
  %s19 = sld [smem:[%s18]]
  %s20 = scalar_lea.smem %s0, 10
  %s21 = sld [smem:[%s20]]
  %s22 = scalar_lea.smem %s0, 11
  %s23 = sld [smem:[%s22]]
  %s24 = scalar_lea.smem %s0, 12
  %s25 = sld [smem:[%s24]]
  %s26 = scalar_lea.smem %s0, 13
  %s27 = sld [smem:[%s26]]
  %s28 = scalar_lea.smem %s0, 14
  %s29 = sld [smem:[%s28]]
  %s30 = scalar_lea.smem %s0, 15
  %s31 = sld [smem:[%s30]]
  %s32 = scalar_lea.smem %s0, 16
  %s33 = sld [smem:[%s32]]
  %s34 = scalar_lea.smem %s0, 17
  %s35 = sld [smem:[%s34]]
  %s36 = scalar_lea.smem %s0, 18
  %s37 = sld [smem:[%s36]]
  %s38 = scalar_lea.smem %s0, 19
  %s39 = sld [smem:[%s38]]
  %s40 = scalar_lea.smem %s0, 20
  %s41 = sld [smem:[%s40]]
  %s42 = scalar_lea.smem %s0, 21
  %s43 = sld [smem:[%s42]]
  %s44 = scalar_lea.smem %s0, 22
  %s45 = sld [smem:[%s44]]
  %s46 = scalar_lea.smem %s0, 23
  %s47 = sld [smem:[%s46]]
  %s48 = scalar_lea.smem %s0, 24
  %s49 = sld [smem:[%s48]]
  %s50 = scalar_lea.smem %s0, 25
  %s51 = sld [smem:[%s50]]
  %s52 = scalar_lea.smem %s0, 26
  %s53 = sld [smem:[%s52]]
  %s54 = scalar_lea.smem %s0, 27
  %s55 = sld [smem:[%s54]]
  %s56 = scalar_lea.smem %s0, 28
  %s57 = sld [smem:[%s56]]
  %s58 = scalar_lea.smem %s0, 29
  %s59 = sld [smem:[%s58]]
  %s60 = scalar_lea.smem %s0, 30
  %s61 = sld [smem:[%s60]]
  %s62 = sld [smem:[#allocation0]]
  $region130: #{tpu_custom_call.1} parent=0
    _
  %s64 = ssub.s32 1, %s62
  %s65 = scalar_select 0, %s64, %s62
  // Predicated region
  $region2: #{tpu_custom_call.1} parent=0 // pred_check
    _
  $region3: #{tpu_custom_call.1} parent=0 // pred_check_branch
    %67 = sbr.rel (0) target = $region5
  $region4: #{tpu_custom_call.1} parent=0 // pred_region
    _
  $region5: #{tpu_custom_call.1} parent=0 // pred_fallthru
    _
  // Predicated region
  $region6: #{tpu_custom_call.1} parent=0 // pred_check
    _
  $region7: #{tpu_custom_call.1} parent=0 // pred_check_branch
    %69 = sbr.rel (0) target = $region9
  $region8: #{tpu_custom_call.1} parent=0 // pred_region
    _
  $region9: #{tpu_custom_call.1} parent=0 // pred_fallthru
    _
  // Predicated region
  $region10: #{tpu_custom_call.1} parent=0 // pred_check
    _
  $region11: #{tpu_custom_call.1} parent=0 // pred_check_branch
    %71 = sbr.rel (0) target = $region13
  $region12: #{tpu_custom_call.1} parent=0 // pred_region
    _
  $region13: #{tpu_custom_call.1} parent=0 // pred_fallthru
    _
  // Predicated region
  $region14: #{tpu_custom_call.1} parent=0 // pred_check
    _
  $region15: #{tpu_custom_call.1} parent=0 // pred_check_branch
    %73 = sbr.rel (0) target = $region17
  $region16: #{tpu_custom_call.1} parent=0 // pred_region
    _
  $region17: #{tpu_custom_call.1} parent=0 // pred_fallthru
    _
  // Predicated region
  $region18: #{tpu_custom_call.1} parent=0 // pred_check
    _
  $region19: #{tpu_custom_call.1} parent=0 // pred_check_branch
    %75 = sbr.rel (0) target = $region21
  $region20: #{tpu_custom_call.1} parent=0 // pred_region
    _
  $region21: #{tpu_custom_call.1} parent=0 // pred_fallthru
    _
  // Predicated region
  $region22: #{tpu_custom_call.1} parent=0 // pred_check
    _
  $region23: #{tpu_custom_call.1} parent=0 // pred_check_branch
    %77 = sbr.rel (0) target = $region25
  $region24: #{tpu_custom_call.1} parent=0 // pred_region
    _
  $region25: #{tpu_custom_call.1} parent=0 // pred_fallthru
    _
  // Predicated region
  $region26: #{tpu_custom_call.1} parent=0 // pred_check
    _
  $region27: #{tpu_custom_call.1} parent=0 // pred_check_branch
    %79 = sbr.rel (0) target = $region29
  $region28: #{tpu_custom_call.1} parent=0 // pred_region
    _
  $region29: #{tpu_custom_call.1} parent=0 // pred_fallthru
    _
  // Predicated region
  $region30: #{tpu_custom_call.1} parent=0 // pred_check
    _
  $region31: #{tpu_custom_call.1} parent=0 // pred_check_branch
    %81 = sbr.rel (0) target = $region33
  $region32: #{tpu_custom_call.1} parent=0 // pred_region
    _
  $region33: #{tpu_custom_call.1} parent=0 // pred_fallthru
    _
  // Predicated region
  $region34: #{tpu_custom_call.1} parent=0 // pred_check
    _
  $region35: #{tpu_custom_call.1} parent=0 // pred_check_branch
    %83 = sbr.rel (0) target = $region37
  $region36: #{tpu_custom_call.1} parent=0 // pred_region
    _
  $region37: #{tpu_custom_call.1} parent=0 // pred_fallthru
    _
  // Predicated region
  $region38: #{tpu_custom_call.1} parent=0 // pred_check
    _
  $region39: #{tpu_custom_call.1} parent=0 // pred_check_branch
    %85 = sbr.rel (0) target = $region41
  $region40: #{tpu_custom_call.1} parent=0 // pred_region
    _
  $region41: #{tpu_custom_call.1} parent=0 // pred_fallthru
    _
  // Predicated region
  $region42: #{tpu_custom_call.1} parent=0 // pred_check
    _
  $region43: #{tpu_custom_call.1} parent=0 // pred_check_branch
    %87 = sbr.rel (0) target = $region45
  $region44: #{tpu_custom_call.1} parent=0 // pred_region
    _
  $region45: #{tpu_custom_call.1} parent=0 // pred_fallthru
    _
  // Predicated region
  $region46: #{tpu_custom_call.1} parent=0 // pred_check
    _
  $region47: #{tpu_custom_call.1} parent=0 // pred_check_branch
    %89 = sbr.rel (0) target = $region49
  $region48: #{tpu_custom_call.1} parent=0 // pred_region
    _
  $region49: #{tpu_custom_call.1} parent=0 // pred_fallthru
    _
  // Predicated region
  $region50: #{tpu_custom_call.1} parent=0 // pred_check
    _
  $region51: #{tpu_custom_call.1} parent=0 // pred_check_branch
    %91 = sbr.rel (0) target = $region53
  $region52: #{tpu_custom_call.1} parent=0 // pred_region
    _
  $region53: #{tpu_custom_call.1} parent=0 // pred_fallthru
    _
  // Predicated region
  $region54: #{tpu_custom_call.1} parent=0 // pred_check
    _
  $region55: #{tpu_custom_call.1} parent=0 // pred_check_branch
    %93 = sbr.rel (0) target = $region57
  $region56: #{tpu_custom_call.1} parent=0 // pred_region
    _
  $region57: #{tpu_custom_call.1} parent=0 // pred_fallthru
    _
  // Predicated region
  $region58: #{tpu_custom_call.1} parent=0 // pred_check
    _
  $region59: #{tpu_custom_call.1} parent=0 // pred_check_branch
    %95 = sbr.rel (0) target = $region61
  $region60: #{tpu_custom_call.1} parent=0 // pred_region
    _
  $region61: #{tpu_custom_call.1} parent=0 // pred_fallthru
    _
  // Predicated region
  $region62: #{tpu_custom_call.1} parent=0 // pred_check
    _
  $region63: #{tpu_custom_call.1} parent=0 // pred_check_branch
    %97 = sbr.rel (0) target = $region65
  $region64: #{tpu_custom_call.1} parent=0 // pred_region
    _
  $region65: #{tpu_custom_call.1} parent=0 // pred_fallthru
    _
  // Predicated region
  $region66: #{tpu_custom_call.1} parent=0 // pred_check
    _
  $region67: #{tpu_custom_call.1} parent=0 // pred_check_branch
    %99 = sbr.rel (0) target = $region69
  $region68: #{tpu_custom_call.1} parent=0 // pred_region
    _
  $region69: #{tpu_custom_call.1} parent=0 // pred_fallthru
    _
  // Predicated region
  $region70: #{tpu_custom_call.1} parent=0 // pred_check
    _
  $region71: #{tpu_custom_call.1} parent=0 // pred_check_branch
    %101 = sbr.rel (0) target = $region73
  $region72: #{tpu_custom_call.1} parent=0 // pred_region
    _
  $region73: #{tpu_custom_call.1} parent=0 // pred_fallthru
    _
  // Predicated region
  $region74: #{tpu_custom_call.1} parent=0 // pred_check
    _
  $region75: #{tpu_custom_call.1} parent=0 // pred_check_branch
    %103 = sbr.rel (0) target = $region77
  $region76: #{tpu_custom_call.1} parent=0 // pred_region
    _
  $region77: #{tpu_custom_call.1} parent=0 // pred_fallthru
    _
  // Predicated region
  $region78: #{tpu_custom_call.1} parent=0 // pred_check
    _
  $region79: #{tpu_custom_call.1} parent=0 // pred_check_branch
    %105 = sbr.rel (0) target = $region81
  $region80: #{tpu_custom_call.1} parent=0 // pred_region
    _
  $region81: #{tpu_custom_call.1} parent=0 // pred_fallthru
    _
  // Predicated region
  $region82: #{tpu_custom_call.1} parent=0 // pred_check
    _
  $region83: #{tpu_custom_call.1} parent=0 // pred_check_branch
    %107 = sbr.rel (0) target = $region85
  $region84: #{tpu_custom_call.1} parent=0 // pred_region
    _
  $region85: #{tpu_custom_call.1} parent=0 // pred_fallthru
    _
  // Predicated region
  $region86: #{tpu_custom_call.1} parent=0 // pred_check
    _
  $region87: #{tpu_custom_call.1} parent=0 // pred_check_branch
    %109 = sbr.rel (0) target = $region89
  $region88: #{tpu_custom_call.1} parent=0 // pred_region
    _
  $region89: #{tpu_custom_call.1} parent=0 // pred_fallthru
    _
  // Predicated region
  $region90: #{tpu_custom_call.1} parent=0 // pred_check
    _
  $region91: #{tpu_custom_call.1} parent=0 // pred_check_branch
    %111 = sbr.rel (0) target = $region93
  $region92: #{tpu_custom_call.1} parent=0 // pred_region
    _
  $region93: #{tpu_custom_call.1} parent=0 // pred_fallthru
    _
  // Predicated region
  $region94: #{tpu_custom_call.1} parent=0 // pred_check
    _
  $region95: #{tpu_custom_call.1} parent=0 // pred_check_branch
    %113 = sbr.rel (0) target = $region97
  $region96: #{tpu_custom_call.1} parent=0 // pred_region
    _
  $region97: #{tpu_custom_call.1} parent=0 // pred_fallthru
    _
  // Predicated region
  $region98: #{tpu_custom_call.1} parent=0 // pred_check
    _
  $region99: #{tpu_custom_call.1} parent=0 // pred_check_branch
    %115 = sbr.rel (0) target = $region101
  $region100: #{tpu_custom_call.1} parent=0 // pred_region
    _
  $region101: #{tpu_custom_call.1} parent=0 // pred_fallthru
    _
  // Predicated region
  $region102: #{tpu_custom_call.1} parent=0 // pred_check
    _
  $region103: #{tpu_custom_call.1} parent=0 // pred_check_branch
    %117 = sbr.rel (0) target = $region105
  $region104: #{tpu_custom_call.1} parent=0 // pred_region
    _
  $region105: #{tpu_custom_call.1} parent=0 // pred_fallthru
    _
  // Predicated region
  $region106: #{tpu_custom_call.1} parent=0 // pred_check
    _
  $region107: #{tpu_custom_call.1} parent=0 // pred_check_branch
    %119 = sbr.rel (0) target = $region109
  $region108: #{tpu_custom_call.1} parent=0 // pred_region
    _
  $region109: #{tpu_custom_call.1} parent=0 // pred_fallthru
    _
  // Predicated region
  $region110: #{tpu_custom_call.1} parent=0 // pred_check
    _
  $region111: #{tpu_custom_call.1} parent=0 // pred_check_branch
    %121 = sbr.rel (0) target = $region113
  $region112: #{tpu_custom_call.1} parent=0 // pred_region
    _
  $region113: #{tpu_custom_call.1} parent=0 // pred_fallthru
    _
  // Predicated region
  $region114: #{tpu_custom_call.1} parent=0 // pred_check
    _
  $region115: #{tpu_custom_call.1} parent=0 // pred_check_branch
    %123 = sbr.rel (0) target = $region117
  $region116: #{tpu_custom_call.1} parent=0 // pred_region
    _
  $region117: #{tpu_custom_call.1} parent=0 // pred_fallthru
    _
  // Predicated region
  $region118: #{tpu_custom_call.1} parent=0 // pred_check
    _
  $region119: #{tpu_custom_call.1} parent=0 // pred_check_branch
    %125 = sbr.rel (0) target = $region121
  $region120: #{tpu_custom_call.1} parent=0 // pred_region
    _
  $region121: #{tpu_custom_call.1} parent=0 // pred_fallthru
    _
  %v126 = vld [vmem:[%s5] sm:$0xff]
  %v127 = vld [vmem:[%s5 + $0x8] sm:$0xff]
  %v128 = vld [vmem:[%s5 + $0x10] sm:$0xff]
  %v129 = vld [vmem:[%s5 + $0x18] sm:$0xff]
  %v130 = vld [vmem:[%s5 + $0x20] sm:$0xff]
  %v131 = vld [vmem:[%s5 + $0x28] sm:$0xff]
  %v132 = vld [vmem:[%s5 + $0x30] sm:$0xff]
  %v133 = vld [vmem:[%s5 + $0x38] sm:$0xff]
  %v134 = vld [vmem:[%s1] sm:$0xff]
  %v135 = vld [vmem:[%s1 + $0x8] sm:$0xff]
  %v136 = vld [vmem:[%s1 + $0x10] sm:$0xff]
  %v137 = vld [vmem:[%s1 + $0x18] sm:$0xff]
  %v138 = vld [vmem:[%s1 + $0x20] sm:$0xff]
  %v139 = vld [vmem:[%s1 + $0x28] sm:$0xff]
  %v140 = vld [vmem:[%s1 + $0x30] sm:$0xff]
  %v141 = vld [vmem:[%s1 + $0x38] sm:$0xff]
  %v142 = vld [vmem:[%s3] sm:$0xff]
  %v143 = vld [vmem:[%s3 + $0x8] sm:$0xff]
  %v144 = vld [vmem:[%s3 + $0x10] sm:$0xff]
  %v145 = vld [vmem:[%s3 + $0x18] sm:$0xff]
  %v146 = vld [vmem:[%s3 + $0x20] sm:$0xff]
  %v147 = vld [vmem:[%s3 + $0x28] sm:$0xff]
  %v148 = vld [vmem:[%s3 + $0x30] sm:$0xff]
  %v149 = vld [vmem:[%s3 + $0x38] sm:$0xff]
  %v150 = vld [vmem:[%s9] sm:$0xff]
  %v151 = vld [vmem:[%s9 + $0x8] sm:$0xff]
  %v152 = vld [vmem:[%s9 + $0x10] sm:$0xff]
  %v153 = vld [vmem:[%s9 + $0x18] sm:$0xff]
  %v154 = vld [vmem:[%s9 + $0x20] sm:$0xff]
  %v155 = vld [vmem:[%s9 + $0x28] sm:$0xff]
  %v156 = vld [vmem:[%s9 + $0x30] sm:$0xff]
  %v157 = vld [vmem:[%s9 + $0x38] sm:$0xff]
  %v158 = vld [vmem:[%s11] sm:$0xff]
  %v159 = vld [vmem:[%s11 + $0x8] sm:$0xff]
  %v160 = vld [vmem:[%s11 + $0x10] sm:$0xff]
  %v161 = vld [vmem:[%s11 + $0x18] sm:$0xff]
  %v162 = vld [vmem:[%s11 + $0x20] sm:$0xff]
  %v163 = vld [vmem:[%s11 + $0x28] sm:$0xff]
  %v164 = vld [vmem:[%s11 + $0x30] sm:$0xff]
  %v165 = vld [vmem:[%s11 + $0x38] sm:$0xff]
  %v166 = vld [vmem:[%s17] sm:$0xff]
  %v167 = vld [vmem:[%s17 + $0x8] sm:$0xff]
  %v168 = vld [vmem:[%s17 + $0x10] sm:$0xff]
  %v169 = vld [vmem:[%s17 + $0x18] sm:$0xff]
  %v170 = vld [vmem:[%s19] sm:$0x1]
  %v171 = vld [vmem:[%s21] sm:$0xff]
  %v172 = vld [vmem:[%s21 + $0x8] sm:$0xff]
  %v173 = vld [vmem:[%s21 + $0x10] sm:$0xff]
  %v174 = vld [vmem:[%s21 + $0x18] sm:$0xff]
  %v175 = vld [vmem:[%s23] sm:$0x1]
  %v176 = vld [vmem:[%s25] sm:$0xff]
  %v177 = vld [vmem:[%s25 + $0x8] sm:$0xff]
  %v178 = vld [vmem:[%s25 + $0x10] sm:$0xff]
  %v179 = vld [vmem:[%s25 + $0x18] sm:$0xff]
  %v180 = vld [vmem:[%s27] sm:$0x1]
  %v181 = vadd.f32 %v134, %v126
  %v182 = vadd.f32 %v135, %v127
  %v183 = vadd.f32 %v136, %v128
  %v184 = vadd.f32 %v137, %v129
  %v185 = vadd.f32 %v138, %v130
  %v186 = vadd.f32 %v139, %v131
  %v187 = vadd.f32 %v140, %v132
  %v188 = vadd.f32 %v141, %v133
  %v190 = vlaneseq
  %v191 = vshrl.u32 %v190, 7
  %v192 = vsub.s32 0, %v191
  %v193 = vrot.slane %v170, %v192
  %vm195 = vcmask 261120
  %v197 = vsel %vm195, %v142, 0
  %v200 = vsel %vm195, %v143, 0
  %v203 = vsel %vm195, %v144, 0
  %v206 = vsel %vm195, %v145, 0
  %v209 = vsel %vm195, %v146, 0
  %v212 = vsel %vm195, %v147, 0
  %v215 = vsel %vm195, %v148, 0
  %v218 = vsel %vm195, %v149, 0
  %220 = vmatprep.subr.mxu0 0.0
  %221 = vmatpush1.msra.mxu0 0.0
  %222 = vmatprep.subr.mxu0 0.0
  %223 = vmatpush1.msra.mxu0 0.0
  %224 = vmatprep.subr.mxu0 0.0
  %225 = vmatpush1.msra.mxu0 0.0
  %226 = vmatprep.subr.mxu0 0.0
  %227 = vmatpush1.msra.mxu0 0.0
  %228 = vmatprep.subr.mxu0 0.0
  %229 = vmatpush1.msra.mxu0 0.0
  %230 = vmatprep.subr.mxu0 0.0
  %231 = vmatpush1.msra.mxu0 0.0
  %232 = vmatprep.subr.mxu0 0.0
  %233 = vmatpush1.msra.mxu0 0.0
  %234 = vmatprep.subr.mxu0 0.0
  %235 = vmatpush1.msra.mxu0 0.0
  %236 = vmatprep.subr.mxu0 0.0
  %237 = vmatpush1.msra.mxu0 0.0
  %238 = vmatprep.subr.mxu0 0.0
  %239 = vmatpush1.msra.mxu0 0.0
  %240 = vmatprep.subr.mxu0 0.0
  %241 = vmatpush1.msra.mxu0 0.0
  %242 = vmatprep.subr.mxu0 0.0
  %243 = vmatpush1.msra.mxu0 0.0
  %244 = vmatprep.subr.mxu0 0.0
  %245 = vmatpush1.msra.mxu0 %v169
  %246 = vmatprep.subr.mxu0 0.0
  %247 = vmatpush1.msra.mxu0 %v168
  %248 = vmatprep.subr.mxu0 0.0
  %249 = vmatpush1.msra.mxu0 %v167
  %250 = vmatprep.subr.mxu0 0.0
  %251 = vmatpush1.msra.mxu0 %v166
  %252 = vmatprep.subr.mxu0 0.0
  %253 = vmatpush2.msra.mxu0 0.0
  %254 = vmatprep.subr.mxu0 0.0
  %255 = vmatpush2.msra.mxu0 0.0
  %256 = vmatprep.subr.mxu0 0.0
  %257 = vmatpush2.msra.mxu0 0.0
  %258 = vmatprep.subr.mxu0 0.0
  %259 = vmatpush2.msra.mxu0 0.0
  %260 = vmatprep.subr.mxu0 0.0
  %261 = vmatpush2.msra.mxu0 0.0
  %262 = vmatprep.subr.mxu0 0.0
  %263 = vmatpush2.msra.mxu0 0.0
  %264 = vmatprep.subr.mxu0 0.0
  %265 = vmatpush2.msra.mxu0 0.0
  %266 = vmatprep.subr.mxu0 0.0
  %267 = vmatpush2.msra.mxu0 0.0
  %268 = vmatprep.subr.mxu0 0.0
  %269 = vmatpush2.msra.mxu0 0.0
  %270 = vmatprep.subr.mxu0 0.0
  %271 = vmatpush2.msra.mxu0 0.0
  %272 = vmatprep.subr.mxu0 0.0
  %273 = vmatpush2.msra.mxu0 0.0
  %274 = vmatprep.subr.mxu0 0.0
  %275 = vmatpush2.msra.mxu0 0.0
  %276 = vmatprep.subr.mxu0 0.0
  %277 = vmatpush2.msra.mxu0 0.0
  %278 = vmatprep.subr.mxu0 0.0
  %279 = vmatpush2.msra.mxu0 0.0
  %280 = vmatprep.subr.mxu0 0.0
  %281 = vmatpush2.msra.mxu0 0.0
  %282 = vmatprep.subr.mxu0 0.0
  %283 = vmatpush2.msra.mxu0 0.0
  %284 = vmatprep.mubr.f32.mxu0 0.0
  %285 = vmatmul.mubr.f32.gmra.mxu0 %v197
  %v286 = vpop.f32.mrf.mxu0
  %v287 = vadd.f32 %v193, %v286
  %v288 = vpop.f32.mrf.mxu0
  %289 = vmatprep.mubr.f32.mxu0 0.0
  %290 = vmatmul.mubr.f32.gmra.mxu0 %v200
  %v291 = vpop.f32.mrf.mxu0
  %v292 = vadd.f32 %v193, %v291
  %v293 = vpop.f32.mrf.mxu0
  %294 = vmatprep.mubr.f32.mxu0 0.0
  %295 = vmatmul.mubr.f32.gmra.mxu0 %v203
  %v296 = vpop.f32.mrf.mxu0
  %v297 = vadd.f32 %v193, %v296
  %v298 = vpop.f32.mrf.mxu0
  %299 = vmatprep.mubr.f32.mxu0 0.0
  %300 = vmatmul.mubr.f32.gmra.mxu0 %v206
  %v301 = vpop.f32.mrf.mxu0
  %v302 = vadd.f32 %v193, %v301
  %v303 = vpop.f32.mrf.mxu0
  %304 = vmatprep.mubr.f32.mxu0 0.0
  %305 = vmatmul.mubr.f32.gmra.mxu0 %v209
  %v306 = vpop.f32.mrf.mxu0
  %v307 = vadd.f32 %v193, %v306
  %v308 = vpop.f32.mrf.mxu0
  %309 = vmatprep.mubr.f32.mxu0 0.0
  %310 = vmatmul.mubr.f32.gmra.mxu0 %v212
  %v311 = vpop.f32.mrf.mxu0
  %v312 = vadd.f32 %v193, %v311
  %v313 = vpop.f32.mrf.mxu0
  %314 = vmatprep.mubr.f32.mxu0 0.0
  %315 = vmatmul.mubr.f32.gmra.mxu0 %v215
  %v316 = vpop.f32.mrf.mxu0
  %v317 = vadd.f32 %v193, %v316
  %v318 = vpop.f32.mrf.mxu0
  %319 = vmatprep.mubr.f32.mxu0 0.0
  %320 = vmatmul.mubr.f32.gmra.mxu0 %v218
  %v321 = vpop.f32.mrf.mxu0
  %v322 = vadd.f32 %v193, %v321
  %v323 = vpop.f32.mrf.mxu0
  %324 = vdwg.mxu0
  %v326 = vlaneseq
  %v327 = vshrl.u32 %v326, 7
  %v328 = vsub.s32 0, %v327
  %v329 = vrot.slane %v175, %v328
  %v332 = vsel %vm195, %v181, 0
  %v335 = vsel %vm195, %v182, 0
  %v338 = vsel %vm195, %v183, 0
  %v341 = vsel %vm195, %v184, 0
  %v344 = vsel %vm195, %v185, 0
  %v347 = vsel %vm195, %v186, 0
  %v350 = vsel %vm195, %v187, 0
  %v353 = vsel %vm195, %v188, 0
  %355 = vmatprep.subr.mxu0 0.0
  %356 = vmatpush1.msra.mxu0 0.0
  %357 = vmatprep.subr.mxu0 0.0
  %358 = vmatpush1.msra.mxu0 0.0
  %359 = vmatprep.subr.mxu0 0.0
  %360 = vmatpush1.msra.mxu0 0.0
  %361 = vmatprep.subr.mxu0 0.0
  %362 = vmatpush1.msra.mxu0 0.0
  %363 = vmatprep.subr.mxu0 0.0
  %364 = vmatpush1.msra.mxu0 0.0
  %365 = vmatprep.subr.mxu0 0.0
  %366 = vmatpush1.msra.mxu0 0.0
  %367 = vmatprep.subr.mxu0 0.0
  %368 = vmatpush1.msra.mxu0 0.0
  %369 = vmatprep.subr.mxu0 0.0
  %370 = vmatpush1.msra.mxu0 0.0
  %371 = vmatprep.subr.mxu0 0.0
  %372 = vmatpush1.msra.mxu0 0.0
  %373 = vmatprep.subr.mxu0 0.0
  %374 = vmatpush1.msra.mxu0 0.0
  %375 = vmatprep.subr.mxu0 0.0
  %376 = vmatpush1.msra.mxu0 0.0
  %377 = vmatprep.subr.mxu0 0.0
  %378 = vmatpush1.msra.mxu0 0.0
  %379 = vmatprep.subr.mxu0 0.0
  %380 = vmatpush1.msra.mxu0 %v174
  %381 = vmatprep.subr.mxu0 0.0
  %382 = vmatpush1.msra.mxu0 %v173
  %383 = vmatprep.subr.mxu0 0.0
  %384 = vmatpush1.msra.mxu0 %v172
  %385 = vmatprep.subr.mxu0 0.0
  %386 = vmatpush1.msra.mxu0 %v171
  %387 = vmatprep.subr.mxu0 0.0
  %388 = vmatpush2.msra.mxu0 0.0
  %389 = vmatprep.subr.mxu0 0.0
  %390 = vmatpush2.msra.mxu0 0.0
  %391 = vmatprep.subr.mxu0 0.0
  %392 = vmatpush2.msra.mxu0 0.0
  %393 = vmatprep.subr.mxu0 0.0
  %394 = vmatpush2.msra.mxu0 0.0
  %395 = vmatprep.subr.mxu0 0.0
  %396 = vmatpush2.msra.mxu0 0.0
  %397 = vmatprep.subr.mxu0 0.0
  %398 = vmatpush2.msra.mxu0 0.0
  %399 = vmatprep.subr.mxu0 0.0
  %400 = vmatpush2.msra.mxu0 0.0
  %401 = vmatprep.subr.mxu0 0.0
  %402 = vmatpush2.msra.mxu0 0.0
  %403 = vmatprep.subr.mxu0 0.0
  %404 = vmatpush2.msra.mxu0 0.0
  %405 = vmatprep.subr.mxu0 0.0
  %406 = vmatpush2.msra.mxu0 0.0
  %407 = vmatprep.subr.mxu0 0.0
  %408 = vmatpush2.msra.mxu0 0.0
  %409 = vmatprep.subr.mxu0 0.0
  %410 = vmatpush2.msra.mxu0 0.0
  %411 = vmatprep.subr.mxu0 0.0
  %412 = vmatpush2.msra.mxu0 0.0
  %413 = vmatprep.subr.mxu0 0.0
  %414 = vmatpush2.msra.mxu0 0.0
  %415 = vmatprep.subr.mxu0 0.0
  %416 = vmatpush2.msra.mxu0 0.0
  %417 = vmatprep.subr.mxu0 0.0
  %418 = vmatpush2.msra.mxu0 0.0
  %419 = vmatprep.mubr.f32.mxu0 0.0
  %420 = vmatmul.mubr.f32.gmra.mxu0 %v332
  %v421 = vpop.f32.mrf.mxu0
  %v422 = vadd.f32 %v329, %v421
  %v423 = vpop.f32.mrf.mxu0
  %424 = vmatprep.mubr.f32.mxu0 0.0
  %425 = vmatmul.mubr.f32.gmra.mxu0 %v335
  %v426 = vpop.f32.mrf.mxu0
  %v427 = vadd.f32 %v329, %v426
  %v428 = vpop.f32.mrf.mxu0
  %429 = vmatprep.mubr.f32.mxu0 0.0
  %430 = vmatmul.mubr.f32.gmra.mxu0 %v338
  %v431 = vpop.f32.mrf.mxu0
  %v432 = vadd.f32 %v329, %v431
  %v433 = vpop.f32.mrf.mxu0
  %434 = vmatprep.mubr.f32.mxu0 0.0
  %435 = vmatmul.mubr.f32.gmra.mxu0 %v341
  %v436 = vpop.f32.mrf.mxu0
  %v437 = vadd.f32 %v329, %v436
  %v438 = vpop.f32.mrf.mxu0
  %439 = vmatprep.mubr.f32.mxu0 0.0
  %440 = vmatmul.mubr.f32.gmra.mxu0 %v344
  %v441 = vpop.f32.mrf.mxu0
  %v442 = vadd.f32 %v329, %v441
  %v443 = vpop.f32.mrf.mxu0
  %444 = vmatprep.mubr.f32.mxu0 0.0
  %445 = vmatmul.mubr.f32.gmra.mxu0 %v347
  %v446 = vpop.f32.mrf.mxu0
  %v447 = vadd.f32 %v329, %v446
  %v448 = vpop.f32.mrf.mxu0
  %449 = vmatprep.mubr.f32.mxu0 0.0
  %450 = vmatmul.mubr.f32.gmra.mxu0 %v350
  %v451 = vpop.f32.mrf.mxu0
  %v452 = vadd.f32 %v329, %v451
  %v453 = vpop.f32.mrf.mxu0
  %454 = vmatprep.mubr.f32.mxu0 0.0
  %455 = vmatmul.mubr.f32.gmra.mxu0 %v353
  %v456 = vpop.f32.mrf.mxu0
  %v457 = vadd.f32 %v329, %v456
  %v458 = vpop.f32.mrf.mxu0
  %459 = vdwg.mxu0
  %v460 = vlaneseq
  %v461 = vand.u32 %v460, 127
  %vm462 = vcmask 97344
  %v463 = vsel %vm462, %v422, -inf
  %464 = vmax.xlane.f32.xlu0 %v463
  %v465 = vpop.xlane.xlu0 %464
  %v466 = vsel %vm462, %v427, -inf
  %467 = vmax.xlane.f32.xlu0 %v466
  %v468 = vpop.xlane.xlu0 %467
  %v469 = vsel %vm462, %v432, -inf
  %470 = vmax.xlane.f32.xlu0 %v469
  %v471 = vpop.xlane.xlu0 %470
  %v472 = vsel %vm462, %v437, -inf
  %473 = vmax.xlane.f32.xlu0 %v472
  %v474 = vpop.xlane.xlu0 %473
  %v475 = vsel %vm462, %v442, -inf
  %476 = vmax.xlane.f32.xlu0 %v475
  %v477 = vpop.xlane.xlu0 %476
  %v478 = vsel %vm462, %v447, -inf
  %479 = vmax.xlane.f32.xlu0 %v478
  %v480 = vpop.xlane.xlu0 %479
  %v481 = vsel %vm462, %v452, -inf
  %482 = vmax.xlane.f32.xlu0 %v481
  %v483 = vpop.xlane.xlu0 %482
  %v484 = vsel %vm462, %v457, -inf
  %485 = vmax.xlane.f32.xlu0 %v484
  %v486 = vpop.xlane.xlu0 %485
  %v487 = vsub.f32 %v422, %v465
  %v488 = vsub.f32 %v427, %v468
  %v489 = vsub.f32 %v432, %v471
  %v490 = vsub.f32 %v437, %v474
  %v491 = vsub.f32 %v442, %v477
  %v492 = vsub.f32 %v447, %v480
  %v493 = vsub.f32 %v452, %v483
  %v494 = vsub.f32 %v457, %v486
  %v495 = vmul.f32 %v487, 1.442695
  %v496 = vpow.pop %v495
  %v497 = vmul.f32 %v488, 1.442695
  %v498 = vpow.pop %v497
  %v499 = vmul.f32 %v489, 1.442695
  %v500 = vpow.pop %v499
  %v501 = vmul.f32 %v490, 1.442695
  %v502 = vpow.pop %v501
  %v503 = vmul.f32 %v491, 1.442695
  %v504 = vpow.pop %v503
  %v505 = vmul.f32 %v492, 1.442695
  %v506 = vpow.pop %v505
  %v507 = vmul.f32 %v493, 1.442695
  %v508 = vpow.pop %v507
  %v509 = vmul.f32 %v494, 1.442695
  %v510 = vpow.pop %v509
  %519 = vrot.lane.b32.xlu0 %v496, 120
  %v520 = vpop.permute.xlu0 %519
  %521 = vrot.lane.b32.xlu0 %v498, 120
  %v522 = vpop.permute.xlu0 %521
  %523 = vrot.lane.b32.xlu0 %v500, 120
  %v524 = vpop.permute.xlu0 %523
  %525 = vrot.lane.b32.xlu0 %v502, 120
  %v526 = vpop.permute.xlu0 %525
  %527 = vrot.lane.b32.xlu0 %v504, 120
  %v528 = vpop.permute.xlu0 %527
  %529 = vrot.lane.b32.xlu0 %v506, 120
  %v530 = vpop.permute.xlu0 %529
  %531 = vrot.lane.b32.xlu0 %v508, 120
  %v532 = vpop.permute.xlu0 %531
  %533 = vrot.lane.b32.xlu0 %v510, 120
  %v534 = vpop.permute.xlu0 %533
  %vm543 = vcmask 31744
  %v544 = vsel %vm543, %v520, 0.0
  %545 = vadd.xlane.f32.xlu0 %v544
  %v546 = vpop.xlane.xlu0 %545
  %v547 = vsel %vm543, %v522, 0.0
  %548 = vadd.xlane.f32.xlu0 %v547
  %v549 = vpop.xlane.xlu0 %548
  %v550 = vsel %vm543, %v524, 0.0
  %551 = vadd.xlane.f32.xlu0 %v550
  %v552 = vpop.xlane.xlu0 %551
  %v553 = vsel %vm543, %v526, 0.0
  %554 = vadd.xlane.f32.xlu0 %v553
  %v555 = vpop.xlane.xlu0 %554
  %v556 = vsel %vm543, %v528, 0.0
  %557 = vadd.xlane.f32.xlu0 %v556
  %v558 = vpop.xlane.xlu0 %557
  %v559 = vsel %vm543, %v530, 0.0
  %560 = vadd.xlane.f32.xlu0 %v559
  %v561 = vpop.xlane.xlu0 %560
  %v562 = vsel %vm543, %v532, 0.0
  %563 = vadd.xlane.f32.xlu0 %v562
  %v564 = vpop.xlane.xlu0 %563
  %v565 = vsel %vm543, %v534, 0.0
  %566 = vadd.xlane.f32.xlu0 %v565
  %v567 = vpop.xlane.xlu0 %566
  %v568 = vrcp.pop %v546
  %v569 = vrcp.pop %v549
  %v570 = vrcp.pop %v552
  %v571 = vrcp.pop %v555
  %v572 = vrcp.pop %v558
  %v573 = vrcp.pop %v561
  %v574 = vrcp.pop %v564
  %v575 = vrcp.pop %v567
  %v576 = vmul.f32 %v496, %v568
  %v577 = vmul.f32 %v498, %v569
  %v578 = vmul.f32 %v500, %v570
  %v579 = vmul.f32 %v502, %v571
  %v580 = vmul.f32 %v504, %v572
  %v581 = vmul.f32 %v506, %v573
  %v582 = vmul.f32 %v508, %v574
  %v583 = vmul.f32 %v510, %v575
  %v584 = vmul.f32 %v150, 8.0
  %v585 = vmul.f32 %v151, 8.0
  %v586 = vmul.f32 %v152, 8.0
  %v587 = vmul.f32 %v153, 8.0
  %v588 = vmul.f32 %v154, 8.0
  %v589 = vmul.f32 %v155, 8.0
  %v590 = vmul.f32 %v156, 8.0
  %v591 = vmul.f32 %v157, 8.0
  %v592 = vadd.f32 %v584, %v422
  %v593 = vadd.f32 %v585, %v427
  %v594 = vadd.f32 %v586, %v432
  %v595 = vadd.f32 %v587, %v437
  %v596 = vadd.f32 %v588, %v442
  %v597 = vadd.f32 %v589, %v447
  %v598 = vadd.f32 %v590, %v452
  %v599 = vadd.f32 %v591, %v457
  %v600 = vsub.f32 %v592, 0.5
  %v601 = vsub.f32 %v593, 0.5
  %v602 = vsub.f32 %v594, 0.5
  %v603 = vsub.f32 %v595, 0.5
  %v604 = vsub.f32 %v596, 0.5
  %v605 = vsub.f32 %v597, 0.5
  %v606 = vsub.f32 %v598, 0.5
  %v607 = vsub.f32 %v599, 0.5
  %v608 = vmul.f32 %v158, 8.0
  %v609 = vmul.f32 %v159, 8.0
  %v610 = vmul.f32 %v160, 8.0
  %v611 = vmul.f32 %v161, 8.0
  %v612 = vmul.f32 %v162, 8.0
  %v613 = vmul.f32 %v163, 8.0
  %v614 = vmul.f32 %v164, 8.0
  %v615 = vmul.f32 %v165, 8.0
  %624 = vrot.lane.b32.xlu0 %v422, 124
  %v625 = vpop.permute.xlu0 %624
  %626 = vrot.lane.b32.xlu0 %v427, 124
  %v627 = vpop.permute.xlu0 %626
  %628 = vrot.lane.b32.xlu0 %v432, 124
  %v629 = vpop.permute.xlu0 %628
  %630 = vrot.lane.b32.xlu0 %v437, 124
  %v631 = vpop.permute.xlu0 %630
  %632 = vrot.lane.b32.xlu0 %v442, 124
  %v633 = vpop.permute.xlu0 %632
  %634 = vrot.lane.b32.xlu0 %v447, 124
  %v635 = vpop.permute.xlu0 %634
  %636 = vrot.lane.b32.xlu0 %v452, 124
  %v637 = vpop.permute.xlu0 %636
  %638 = vrot.lane.b32.xlu0 %v457, 124
  %v639 = vpop.permute.xlu0 %638
  %v648 = vadd.f32 %v608, %v625
  %v649 = vadd.f32 %v609, %v627
  %v650 = vadd.f32 %v610, %v629
  %v651 = vadd.f32 %v611, %v631
  %v652 = vadd.f32 %v612, %v633
  %v653 = vadd.f32 %v613, %v635
  %v654 = vadd.f32 %v614, %v637
  %v655 = vadd.f32 %v615, %v639
  %v656 = vsub.f32 %v648, 0.5
  %v657 = vsub.f32 %v649, 0.5
  %v658 = vsub.f32 %v650, 0.5
  %v659 = vsub.f32 %v651, 0.5
  %v660 = vsub.f32 %v652, 0.5
  %v661 = vsub.f32 %v653, 0.5
  %v662 = vsub.f32 %v654, 0.5
  %v663 = vsub.f32 %v655, 0.5
  %v664 = vfloor.f32 %v600
  %v665 = vfloor.f32 %v601
  %v666 = vfloor.f32 %v602
  %v667 = vfloor.f32 %v603
  %v668 = vfloor.f32 %v604
  %v669 = vfloor.f32 %v605
  %v670 = vfloor.f32 %v606
  %v671 = vfloor.f32 %v607
  %v672 = vfloor.f32 %v656
  %v673 = vfloor.f32 %v657
  %v674 = vfloor.f32 %v658
  %v675 = vfloor.f32 %v659
  %v676 = vfloor.f32 %v660
  %v677 = vfloor.f32 %v661
  %v678 = vfloor.f32 %v662
  %v679 = vfloor.f32 %v663
  %v680 = vsub.f32 %v600, %v664
  %v681 = vsub.f32 %v601, %v665
  %v682 = vsub.f32 %v602, %v666
  %v683 = vsub.f32 %v603, %v667
  %v684 = vsub.f32 %v604, %v668
  %v685 = vsub.f32 %v605, %v669
  %v686 = vsub.f32 %v606, %v670
  %v687 = vsub.f32 %v607, %v671
  %v688 = vsub.f32 %v656, %v672
  %v689 = vsub.f32 %v657, %v673
  %v690 = vsub.f32 %v658, %v674
  %v691 = vsub.f32 %v659, %v675
  %v692 = vsub.f32 %v660, %v676
  %v693 = vsub.f32 %v661, %v677
  %v694 = vsub.f32 %v662, %v678
  %v695 = vsub.f32 %v663, %v679
  %v696 = vcvt.f32.s32.to.zero.pseudo %v664
  %v697 = vcvt.f32.s32.to.zero.pseudo %v665
  %v698 = vcvt.f32.s32.to.zero.pseudo %v666
  %v699 = vcvt.f32.s32.to.zero.pseudo %v667
  %v700 = vcvt.f32.s32.to.zero.pseudo %v668
  %v701 = vcvt.f32.s32.to.zero.pseudo %v669
  %v702 = vcvt.f32.s32.to.zero.pseudo %v670
  %v703 = vcvt.f32.s32.to.zero.pseudo %v671
  %v704 = vcvt.f32.s32.to.zero.pseudo %v672
  %v705 = vcvt.f32.s32.to.zero.pseudo %v673
  %v706 = vcvt.f32.s32.to.zero.pseudo %v674
  %v707 = vcvt.f32.s32.to.zero.pseudo %v675
  %v708 = vcvt.f32.s32.to.zero.pseudo %v676
  %v709 = vcvt.f32.s32.to.zero.pseudo %v677
  %v710 = vcvt.f32.s32.to.zero.pseudo %v678
  %v711 = vcvt.f32.s32.to.zero.pseudo %v679
  %v712 = vadd.s32 %v696, 1
  %v713 = vadd.s32 %v697, 1
  %v714 = vadd.s32 %v698, 1
  %v715 = vadd.s32 %v699, 1
  %v716 = vadd.s32 %v700, 1
  %v717 = vadd.s32 %v701, 1
  %v718 = vadd.s32 %v702, 1
  %v719 = vadd.s32 %v703, 1
  %v720 = vadd.s32 %v704, 1
  %v721 = vadd.s32 %v705, 1
  %v722 = vadd.s32 %v706, 1
  %v723 = vadd.s32 %v707, 1
  %v724 = vadd.s32 %v708, 1
  %v725 = vadd.s32 %v709, 1
  %v726 = vadd.s32 %v710, 1
  %v727 = vadd.s32 %v711, 1
  %v728 = vsub.f32 1.0, %v680
  %v729 = vsub.f32 1.0, %v681
  %v730 = vsub.f32 1.0, %v682
  %v731 = vsub.f32 1.0, %v683
  %v732 = vsub.f32 1.0, %v684
  %v733 = vsub.f32 1.0, %v685
  %v734 = vsub.f32 1.0, %v686
  %v735 = vsub.f32 1.0, %v687
  %v736 = vsub.f32 1.0, %v688
  %v737 = vsub.f32 1.0, %v689
  %v738 = vsub.f32 1.0, %v690
  %v739 = vsub.f32 1.0, %v691
  %v740 = vsub.f32 1.0, %v692
  %v741 = vsub.f32 1.0, %v693
  %v742 = vsub.f32 1.0, %v694
  %v743 = vsub.f32 1.0, %v695
  %vm744 = vcmp.ge.s32.totalorder %v696, 0
  %vm745 = vcmp.ge.s32.totalorder %v697, 0
  %vm746 = vcmp.ge.s32.totalorder %v698, 0
  %vm747 = vcmp.ge.s32.totalorder %v699, 0
  %vm748 = vcmp.ge.s32.totalorder %v700, 0
  %vm749 = vcmp.ge.s32.totalorder %v701, 0
  %vm750 = vcmp.ge.s32.totalorder %v702, 0
  %vm751 = vcmp.ge.s32.totalorder %v703, 0
  %vm752 = vcmp.lt.s32.totalorder %v696, 8
  %vm753 = vcmp.lt.s32.totalorder %v697, 8
  %vm754 = vcmp.lt.s32.totalorder %v698, 8
  %vm755 = vcmp.lt.s32.totalorder %v699, 8
  %vm756 = vcmp.lt.s32.totalorder %v700, 8
  %vm757 = vcmp.lt.s32.totalorder %v701, 8
  %vm758 = vcmp.lt.s32.totalorder %v702, 8
  %vm759 = vcmp.lt.s32.totalorder %v703, 8
  %vm760 = vmand %vm744, %vm752
  %vm761 = vmand %vm745, %vm753
  %vm762 = vmand %vm746, %vm754
  %vm763 = vmand %vm747, %vm755
  %vm764 = vmand %vm748, %vm756
  %vm765 = vmand %vm749, %vm757
  %vm766 = vmand %vm750, %vm758
  %vm767 = vmand %vm751, %vm759
  %vm768 = vcmp.ge.s32.totalorder %v712, 0
  %vm769 = vcmp.ge.s32.totalorder %v713, 0
  %vm770 = vcmp.ge.s32.totalorder %v714, 0
  %vm771 = vcmp.ge.s32.totalorder %v715, 0
  %vm772 = vcmp.ge.s32.totalorder %v716, 0
  %vm773 = vcmp.ge.s32.totalorder %v717, 0
  %vm774 = vcmp.ge.s32.totalorder %v718, 0
  %vm775 = vcmp.ge.s32.totalorder %v719, 0
  %vm776 = vcmp.lt.s32.totalorder %v712, 8
  %vm777 = vcmp.lt.s32.totalorder %v713, 8
  %vm778 = vcmp.lt.s32.totalorder %v714, 8
  %vm779 = vcmp.lt.s32.totalorder %v715, 8
  %vm780 = vcmp.lt.s32.totalorder %v716, 8
  %vm781 = vcmp.lt.s32.totalorder %v717, 8
  %vm782 = vcmp.lt.s32.totalorder %v718, 8
  %vm783 = vcmp.lt.s32.totalorder %v719, 8
  %vm784 = vmand %vm768, %vm776
  %vm785 = vmand %vm769, %vm777
  %vm786 = vmand %vm770, %vm778
  %vm787 = vmand %vm771, %vm779
  %vm788 = vmand %vm772, %vm780
  %vm789 = vmand %vm773, %vm781
  %vm790 = vmand %vm774, %vm782
  %vm791 = vmand %vm775, %vm783
  %vm792 = vcmp.ge.s32.totalorder %v704, 0
  %vm793 = vcmp.ge.s32.totalorder %v705, 0
  %vm794 = vcmp.ge.s32.totalorder %v706, 0
  %vm795 = vcmp.ge.s32.totalorder %v707, 0
  %vm796 = vcmp.ge.s32.totalorder %v708, 0
  %vm797 = vcmp.ge.s32.totalorder %v709, 0
  %vm798 = vcmp.ge.s32.totalorder %v710, 0
  %vm799 = vcmp.ge.s32.totalorder %v711, 0
  %vm800 = vcmp.lt.s32.totalorder %v704, 8
  %vm801 = vcmp.lt.s32.totalorder %v705, 8
  %vm802 = vcmp.lt.s32.totalorder %v706, 8
  %vm803 = vcmp.lt.s32.totalorder %v707, 8
  %vm804 = vcmp.lt.s32.totalorder %v708, 8
  %vm805 = vcmp.lt.s32.totalorder %v709, 8
  %vm806 = vcmp.lt.s32.totalorder %v710, 8
  %vm807 = vcmp.lt.s32.totalorder %v711, 8
  %vm808 = vmand %vm792, %vm800
  %vm809 = vmand %vm793, %vm801
  %vm810 = vmand %vm794, %vm802
  %vm811 = vmand %vm795, %vm803
  %vm812 = vmand %vm796, %vm804
  %vm813 = vmand %vm797, %vm805
  %vm814 = vmand %vm798, %vm806
  %vm815 = vmand %vm799, %vm807
  %vm816 = vcmp.ge.s32.totalorder %v720, 0
  %vm817 = vcmp.ge.s32.totalorder %v721, 0
  %vm818 = vcmp.ge.s32.totalorder %v722, 0
  %vm819 = vcmp.ge.s32.totalorder %v723, 0
  %vm820 = vcmp.ge.s32.totalorder %v724, 0
  %vm821 = vcmp.ge.s32.totalorder %v725, 0
  %vm822 = vcmp.ge.s32.totalorder %v726, 0
  %vm823 = vcmp.ge.s32.totalorder %v727, 0
  %vm824 = vcmp.lt.s32.totalorder %v720, 8
  %vm825 = vcmp.lt.s32.totalorder %v721, 8
  %vm826 = vcmp.lt.s32.totalorder %v722, 8
  %vm827 = vcmp.lt.s32.totalorder %v723, 8
  %vm828 = vcmp.lt.s32.totalorder %v724, 8
  %vm829 = vcmp.lt.s32.totalorder %v725, 8
  %vm830 = vcmp.lt.s32.totalorder %v726, 8
  %vm831 = vcmp.lt.s32.totalorder %v727, 8
  %vm832 = vmand %vm816, %vm824
  %vm833 = vmand %vm817, %vm825
  %vm834 = vmand %vm818, %vm826
  %vm835 = vmand %vm819, %vm827
  %vm836 = vmand %vm820, %vm828
  %vm837 = vmand %vm821, %vm829
  %vm838 = vmand %vm822, %vm830
  %vm839 = vmand %vm823, %vm831
  %v840 = vmul.u32 %v704, 8
  %v841 = vmul.u32 %v705, 8
  %v842 = vmul.u32 %v706, 8
  %v843 = vmul.u32 %v707, 8
  %v844 = vmul.u32 %v708, 8
  %v845 = vmul.u32 %v709, 8
  %v846 = vmul.u32 %v710, 8
  %v847 = vmul.u32 %v711, 8
  %v848 = vadd.s32 %v840, %v696
  %v849 = vadd.s32 %v841, %v697
  %v850 = vadd.s32 %v842, %v698
  %v851 = vadd.s32 %v843, %v699
  %v852 = vadd.s32 %v844, %v700
  %v853 = vadd.s32 %v845, %v701
  %v854 = vadd.s32 %v846, %v702
  %v855 = vadd.s32 %v847, %v703
  %v856 = vadd.s32 %v848, 1
  %v857 = vadd.s32 %v849, 1
  %v858 = vadd.s32 %v850, 1
  %v859 = vadd.s32 %v851, 1
  %v860 = vadd.s32 %v852, 1
  %v861 = vadd.s32 %v853, 1
  %v862 = vadd.s32 %v854, 1
  %v863 = vadd.s32 %v855, 1
  %v864 = vadd.s32 %v848, 8
  %v865 = vadd.s32 %v849, 8
  %v866 = vadd.s32 %v850, 8
  %v867 = vadd.s32 %v851, 8
  %v868 = vadd.s32 %v852, 8
  %v869 = vadd.s32 %v853, 8
  %v870 = vadd.s32 %v854, 8
  %v871 = vadd.s32 %v855, 8
  %v872 = vadd.s32 %v864, 1
  %v873 = vadd.s32 %v865, 1
  %v874 = vadd.s32 %v866, 1
  %v875 = vadd.s32 %v867, 1
  %v876 = vadd.s32 %v868, 1
  %v877 = vadd.s32 %v869, 1
  %v878 = vadd.s32 %v870, 1
  %v879 = vadd.s32 %v871, 1
  %888 = vrot.lane.b32.xlu0 %v576, 120
  %v889 = vpop.permute.xlu0 %888
  %890 = vrot.lane.b32.xlu0 %v577, 120
  %v891 = vpop.permute.xlu0 %890
  %892 = vrot.lane.b32.xlu0 %v578, 120
  %v893 = vpop.permute.xlu0 %892
  %894 = vrot.lane.b32.xlu0 %v579, 120
  %v895 = vpop.permute.xlu0 %894
  %896 = vrot.lane.b32.xlu0 %v580, 120
  %v897 = vpop.permute.xlu0 %896
  %898 = vrot.lane.b32.xlu0 %v581, 120
  %v899 = vpop.permute.xlu0 %898
  %900 = vrot.lane.b32.xlu0 %v582, 120
  %v901 = vpop.permute.xlu0 %900
  %902 = vrot.lane.b32.xlu0 %v583, 120
  %v903 = vpop.permute.xlu0 %902
  %v912 = vmul.f32 %v728, %v889
  %v913 = vmul.f32 %v729, %v891
  %v914 = vmul.f32 %v730, %v893
  %v915 = vmul.f32 %v731, %v895
  %v916 = vmul.f32 %v732, %v897
  %v917 = vmul.f32 %v733, %v899
  %v918 = vmul.f32 %v734, %v901
  %v919 = vmul.f32 %v735, %v903
  %v920 = vmul.f32 %v680, %v889
  %v921 = vmul.f32 %v681, %v891
  %v922 = vmul.f32 %v682, %v893
  %v923 = vmul.f32 %v683, %v895
  %v924 = vmul.f32 %v684, %v897
  %v925 = vmul.f32 %v685, %v899
  %v926 = vmul.f32 %v686, %v901
  %v927 = vmul.f32 %v687, %v903
  %vm928 = vmand %vm760, %vm808
  %vm929 = vmand %vm761, %vm809
  %vm930 = vmand %vm762, %vm810
  %vm931 = vmand %vm763, %vm811
  %vm932 = vmand %vm764, %vm812
  %vm933 = vmand %vm765, %vm813
  %vm934 = vmand %vm766, %vm814
  %vm935 = vmand %vm767, %vm815
  %v936 = vmul.f32 %v912, %v736
  %v937 = vmul.f32 %v913, %v737
  %v938 = vmul.f32 %v914, %v738
  %v939 = vmul.f32 %v915, %v739
  %v940 = vmul.f32 %v916, %v740
  %v941 = vmul.f32 %v917, %v741
  %v942 = vmul.f32 %v918, %v742
  %v943 = vmul.f32 %v919, %v743
  %vm944 = vmand %vm784, %vm808
  %vm945 = vmand %vm785, %vm809
  %vm946 = vmand %vm786, %vm810
  %vm947 = vmand %vm787, %vm811
  %vm948 = vmand %vm788, %vm812
  %vm949 = vmand %vm789, %vm813
  %vm950 = vmand %vm790, %vm814
  %vm951 = vmand %vm791, %vm815
  %v952 = vmul.f32 %v920, %v736
  %v953 = vmul.f32 %v921, %v737
  %v954 = vmul.f32 %v922, %v738
  %v955 = vmul.f32 %v923, %v739
  %v956 = vmul.f32 %v924, %v740
  %v957 = vmul.f32 %v925, %v741
  %v958 = vmul.f32 %v926, %v742
  %v959 = vmul.f32 %v927, %v743
  %vm960 = vmand %vm760, %vm832
  %vm961 = vmand %vm761, %vm833
  %vm962 = vmand %vm762, %vm834
  %vm963 = vmand %vm763, %vm835
  %vm964 = vmand %vm764, %vm836
  %vm965 = vmand %vm765, %vm837
  %vm966 = vmand %vm766, %vm838
  %vm967 = vmand %vm767, %vm839
  %v968 = vmul.f32 %v912, %v688
  %v969 = vmul.f32 %v913, %v689
  %v970 = vmul.f32 %v914, %v690
  %v971 = vmul.f32 %v915, %v691
  %v972 = vmul.f32 %v916, %v692
  %v973 = vmul.f32 %v917, %v693
  %v974 = vmul.f32 %v918, %v694
  %v975 = vmul.f32 %v919, %v695
  %vm976 = vmand %vm784, %vm832
  %vm977 = vmand %vm785, %vm833
  %vm978 = vmand %vm786, %vm834
  %vm979 = vmand %vm787, %vm835
  %vm980 = vmand %vm788, %vm836
  %vm981 = vmand %vm789, %vm837
  %vm982 = vmand %vm790, %vm838
  %vm983 = vmand %vm791, %vm839
  %v984 = vmul.f32 %v920, %v688
  %v985 = vmul.f32 %v921, %v689
  %v986 = vmul.f32 %v922, %v690
  %v987 = vmul.f32 %v923, %v691
  %v988 = vmul.f32 %v924, %v692
  %v989 = vmul.f32 %v925, %v693
  %v990 = vmul.f32 %v926, %v694
  %v991 = vmul.f32 %v927, %v695
  %v992 = vsel %vm928, %v936, 0.0
  %v993 = vsel %vm929, %v937, 0.0
  %v994 = vsel %vm930, %v938, 0.0
  %v995 = vsel %vm931, %v939, 0.0
  %v996 = vsel %vm932, %v940, 0.0
  %v997 = vsel %vm933, %v941, 0.0
  %v998 = vsel %vm934, %v942, 0.0
  %v999 = vsel %vm935, %v943, 0.0
  %1000 = vset.pattern.permute.xlu0 0
  %1001 = vperm.xlu0 %1000, %v848
  %v1002 = vpop.permute.xlu0 %1001
  %1003 = vset.pattern.permute.xlu0 0
  %1004 = vperm.xlu0 %1003, %v849
  %v1005 = vpop.permute.xlu0 %1004
  %1006 = vset.pattern.permute.xlu0 0
  %1007 = vperm.xlu0 %1006, %v850
  %v1008 = vpop.permute.xlu0 %1007
  %1009 = vset.pattern.permute.xlu0 0
  %1010 = vperm.xlu0 %1009, %v851
  %v1011 = vpop.permute.xlu0 %1010
  %1012 = vset.pattern.permute.xlu0 0
  %1013 = vperm.xlu0 %1012, %v852
  %v1014 = vpop.permute.xlu0 %1013
  %1015 = vset.pattern.permute.xlu0 0
  %1016 = vperm.xlu0 %1015, %v853
  %v1017 = vpop.permute.xlu0 %1016
  %1018 = vset.pattern.permute.xlu0 0
  %1019 = vperm.xlu0 %1018, %v854
  %v1020 = vpop.permute.xlu0 %1019
  %1021 = vset.pattern.permute.xlu0 0
  %1022 = vperm.xlu0 %1021, %v855
  %v1023 = vpop.permute.xlu0 %1022
  %vm1024 = vcmp.eq.s32.totalorder %v461, %v1002
  %vm1025 = vcmp.eq.s32.totalorder %v461, %v1005
  %vm1026 = vcmp.eq.s32.totalorder %v461, %v1008
  %vm1027 = vcmp.eq.s32.totalorder %v461, %v1011
  %vm1028 = vcmp.eq.s32.totalorder %v461, %v1014
  %vm1029 = vcmp.eq.s32.totalorder %v461, %v1017
  %vm1030 = vcmp.eq.s32.totalorder %v461, %v1020
  %vm1031 = vcmp.eq.s32.totalorder %v461, %v1023
  %1033 = vset.pattern.permute.xlu0 0
  %1034 = vperm.xlu0 %1033, %v992
  %v1035 = vpop.permute.xlu0 %1034
  %1038 = vset.pattern.permute.xlu0 0
  %1039 = vperm.xlu0 %1038, %v993
  %v1040 = vpop.permute.xlu0 %1039
  %1043 = vset.pattern.permute.xlu0 0
  %1044 = vperm.xlu0 %1043, %v994
  %v1045 = vpop.permute.xlu0 %1044
  %1048 = vset.pattern.permute.xlu0 0
  %1049 = vperm.xlu0 %1048, %v995
  %v1050 = vpop.permute.xlu0 %1049
  %1053 = vset.pattern.permute.xlu0 0
  %1054 = vperm.xlu0 %1053, %v996
  %v1055 = vpop.permute.xlu0 %1054
  %1058 = vset.pattern.permute.xlu0 0
  %1059 = vperm.xlu0 %1058, %v997
  %v1060 = vpop.permute.xlu0 %1059
  %1063 = vset.pattern.permute.xlu0 0
  %1064 = vperm.xlu0 %1063, %v998
  %v1065 = vpop.permute.xlu0 %1064
  %1068 = vset.pattern.permute.xlu0 0
  %1069 = vperm.xlu0 %1068, %v999
  %v1070 = vpop.permute.xlu0 %1069
  %v1072 = vsel %vm1024, %v1035, 0.0
  %v1073 = vsel %vm1025, %v1040, 0.0
  %v1074 = vsel %vm1026, %v1045, 0.0
  %v1075 = vsel %vm1027, %v1050, 0.0
  %v1076 = vsel %vm1028, %v1055, 0.0
  %v1077 = vsel %vm1029, %v1060, 0.0
  %v1078 = vsel %vm1030, %v1065, 0.0
  %v1079 = vsel %vm1031, %v1070, 0.0
  %1080 = vset.pattern.permute.xlu0 1
  %1081 = vperm.xlu0 %1080, %v848
  %v1082 = vpop.permute.xlu0 %1081
  %1083 = vset.pattern.permute.xlu0 1
  %1084 = vperm.xlu0 %1083, %v849
  %v1085 = vpop.permute.xlu0 %1084
  %1086 = vset.pattern.permute.xlu0 1
  %1087 = vperm.xlu0 %1086, %v850
  %v1088 = vpop.permute.xlu0 %1087
  %1089 = vset.pattern.permute.xlu0 1
  %1090 = vperm.xlu0 %1089, %v851
  %v1091 = vpop.permute.xlu0 %1090
  %1092 = vset.pattern.permute.xlu0 1
  %1093 = vperm.xlu0 %1092, %v852
  %v1094 = vpop.permute.xlu0 %1093
  %1095 = vset.pattern.permute.xlu0 1
  %1096 = vperm.xlu0 %1095, %v853
  %v1097 = vpop.permute.xlu0 %1096
  %1098 = vset.pattern.permute.xlu0 1
  %1099 = vperm.xlu0 %1098, %v854
  %v1100 = vpop.permute.xlu0 %1099
  %1101 = vset.pattern.permute.xlu0 1
  %1102 = vperm.xlu0 %1101, %v855
  %v1103 = vpop.permute.xlu0 %1102
  %vm1104 = vcmp.eq.s32.totalorder %v461, %v1082
  %vm1105 = vcmp.eq.s32.totalorder %v461, %v1085
  %vm1106 = vcmp.eq.s32.totalorder %v461, %v1088
  %vm1107 = vcmp.eq.s32.totalorder %v461, %v1091
  %vm1108 = vcmp.eq.s32.totalorder %v461, %v1094
  %vm1109 = vcmp.eq.s32.totalorder %v461, %v1097
  %vm1110 = vcmp.eq.s32.totalorder %v461, %v1100
  %vm1111 = vcmp.eq.s32.totalorder %v461, %v1103
  %1112 = vset.pattern.permute.xlu0 1
  %1113 = vperm.xlu0 %1112, %v992
  %v1114 = vpop.permute.xlu0 %1113
  %1116 = vset.pattern.permute.xlu0 1
  %1117 = vperm.xlu0 %1116, %v993
  %v1118 = vpop.permute.xlu0 %1117
  %1120 = vset.pattern.permute.xlu0 1
  %1121 = vperm.xlu0 %1120, %v994
  %v1122 = vpop.permute.xlu0 %1121
  %1124 = vset.pattern.permute.xlu0 1
  %1125 = vperm.xlu0 %1124, %v995
  %v1126 = vpop.permute.xlu0 %1125
  %1128 = vset.pattern.permute.xlu0 1
  %1129 = vperm.xlu0 %1128, %v996
  %v1130 = vpop.permute.xlu0 %1129
  %1132 = vset.pattern.permute.xlu0 1
  %1133 = vperm.xlu0 %1132, %v997
  %v1134 = vpop.permute.xlu0 %1133
  %1136 = vset.pattern.permute.xlu0 1
  %1137 = vperm.xlu0 %1136, %v998
  %v1138 = vpop.permute.xlu0 %1137
  %1140 = vset.pattern.permute.xlu0 1
  %1141 = vperm.xlu0 %1140, %v999
  %v1142 = vpop.permute.xlu0 %1141
  %v1144 = vsel %vm1104, %v1114, 0.0
  %v1145 = vsel %vm1105, %v1118, 0.0
  %v1146 = vsel %vm1106, %v1122, 0.0
  %v1147 = vsel %vm1107, %v1126, 0.0
  %v1148 = vsel %vm1108, %v1130, 0.0
  %v1149 = vsel %vm1109, %v1134, 0.0
  %v1150 = vsel %vm1110, %v1138, 0.0
  %v1151 = vsel %vm1111, %v1142, 0.0
  %1152 = vset.pattern.permute.xlu0 2
  %1153 = vperm.xlu0 %1152, %v848
  %v1154 = vpop.permute.xlu0 %1153
  %1155 = vset.pattern.permute.xlu0 2
  %1156 = vperm.xlu0 %1155, %v849
  %v1157 = vpop.permute.xlu0 %1156
  %1158 = vset.pattern.permute.xlu0 2
  %1159 = vperm.xlu0 %1158, %v850
  %v1160 = vpop.permute.xlu0 %1159
  %1161 = vset.pattern.permute.xlu0 2
  %1162 = vperm.xlu0 %1161, %v851
  %v1163 = vpop.permute.xlu0 %1162
  %1164 = vset.pattern.permute.xlu0 2
  %1165 = vperm.xlu0 %1164, %v852
  %v1166 = vpop.permute.xlu0 %1165
  %1167 = vset.pattern.permute.xlu0 2
  %1168 = vperm.xlu0 %1167, %v853
  %v1169 = vpop.permute.xlu0 %1168
  %1170 = vset.pattern.permute.xlu0 2
  %1171 = vperm.xlu0 %1170, %v854
  %v1172 = vpop.permute.xlu0 %1171
  %1173 = vset.pattern.permute.xlu0 2
  %1174 = vperm.xlu0 %1173, %v855
  %v1175 = vpop.permute.xlu0 %1174
  %vm1176 = vcmp.eq.s32.totalorder %v461, %v1154
  %vm1177 = vcmp.eq.s32.totalorder %v461, %v1157
  %vm1178 = vcmp.eq.s32.totalorder %v461, %v1160
  %vm1179 = vcmp.eq.s32.totalorder %v461, %v1163
  %vm1180 = vcmp.eq.s32.totalorder %v461, %v1166
  %vm1181 = vcmp.eq.s32.totalorder %v461, %v1169
  %vm1182 = vcmp.eq.s32.totalorder %v461, %v1172
  %vm1183 = vcmp.eq.s32.totalorder %v461, %v1175
  %1184 = vset.pattern.permute.xlu0 2
  %1185 = vperm.xlu0 %1184, %v992
  %v1186 = vpop.permute.xlu0 %1185
  %1188 = vset.pattern.permute.xlu0 2
  %1189 = vperm.xlu0 %1188, %v993
  %v1190 = vpop.permute.xlu0 %1189
  %1192 = vset.pattern.permute.xlu0 2
  %1193 = vperm.xlu0 %1192, %v994
  %v1194 = vpop.permute.xlu0 %1193
  %1196 = vset.pattern.permute.xlu0 2
  %1197 = vperm.xlu0 %1196, %v995
  %v1198 = vpop.permute.xlu0 %1197
  %1200 = vset.pattern.permute.xlu0 2
  %1201 = vperm.xlu0 %1200, %v996
  %v1202 = vpop.permute.xlu0 %1201
  %1204 = vset.pattern.permute.xlu0 2
  %1205 = vperm.xlu0 %1204, %v997
  %v1206 = vpop.permute.xlu0 %1205
  %1208 = vset.pattern.permute.xlu0 2
  %1209 = vperm.xlu0 %1208, %v998
  %v1210 = vpop.permute.xlu0 %1209
  %1212 = vset.pattern.permute.xlu0 2
  %1213 = vperm.xlu0 %1212, %v999
  %v1214 = vpop.permute.xlu0 %1213
  %v1216 = vsel %vm1176, %v1186, 0.0
  %v1217 = vsel %vm1177, %v1190, 0.0
  %v1218 = vsel %vm1178, %v1194, 0.0
  %v1219 = vsel %vm1179, %v1198, 0.0
  %v1220 = vsel %vm1180, %v1202, 0.0
  %v1221 = vsel %vm1181, %v1206, 0.0
  %v1222 = vsel %vm1182, %v1210, 0.0
  %v1223 = vsel %vm1183, %v1214, 0.0
  %v1224 = vadd.f32 %v1072, %v1216
  %v1225 = vadd.f32 %v1073, %v1217
  %v1226 = vadd.f32 %v1074, %v1218
  %v1227 = vadd.f32 %v1075, %v1219
  %v1228 = vadd.f32 %v1076, %v1220
  %v1229 = vadd.f32 %v1077, %v1221
  %v1230 = vadd.f32 %v1078, %v1222
  %v1231 = vadd.f32 %v1079, %v1223
  %1232 = vset.pattern.permute.xlu0 3
  %1233 = vperm.xlu0 %1232, %v848
  %v1234 = vpop.permute.xlu0 %1233
  %1235 = vset.pattern.permute.xlu0 3
  %1236 = vperm.xlu0 %1235, %v849
  %v1237 = vpop.permute.xlu0 %1236
  %1238 = vset.pattern.permute.xlu0 3
  %1239 = vperm.xlu0 %1238, %v850
  %v1240 = vpop.permute.xlu0 %1239
  %1241 = vset.pattern.permute.xlu0 3
  %1242 = vperm.xlu0 %1241, %v851
  %v1243 = vpop.permute.xlu0 %1242
  %1244 = vset.pattern.permute.xlu0 3
  %1245 = vperm.xlu0 %1244, %v852
  %v1246 = vpop.permute.xlu0 %1245
  %1247 = vset.pattern.permute.xlu0 3
  %1248 = vperm.xlu0 %1247, %v853
  %v1249 = vpop.permute.xlu0 %1248
  %1250 = vset.pattern.permute.xlu0 3
  %1251 = vperm.xlu0 %1250, %v854
  %v1252 = vpop.permute.xlu0 %1251
  %1253 = vset.pattern.permute.xlu0 3
  %1254 = vperm.xlu0 %1253, %v855
  %v1255 = vpop.permute.xlu0 %1254
  %vm1256 = vcmp.eq.s32.totalorder %v461, %v1234
  %vm1257 = vcmp.eq.s32.totalorder %v461, %v1237
  %vm1258 = vcmp.eq.s32.totalorder %v461, %v1240
  %vm1259 = vcmp.eq.s32.totalorder %v461, %v1243
  %vm1260 = vcmp.eq.s32.totalorder %v461, %v1246
  %vm1261 = vcmp.eq.s32.totalorder %v461, %v1249
  %vm1262 = vcmp.eq.s32.totalorder %v461, %v1252
  %vm1263 = vcmp.eq.s32.totalorder %v461, %v1255
  %1264 = vset.pattern.permute.xlu0 3
  %1265 = vperm.xlu0 %1264, %v992
  %v1266 = vpop.permute.xlu0 %1265
  %1268 = vset.pattern.permute.xlu0 3
  %1269 = vperm.xlu0 %1268, %v993
  %v1270 = vpop.permute.xlu0 %1269
  %1272 = vset.pattern.permute.xlu0 3
  %1273 = vperm.xlu0 %1272, %v994
  %v1274 = vpop.permute.xlu0 %1273
  %1276 = vset.pattern.permute.xlu0 3
  %1277 = vperm.xlu0 %1276, %v995
  %v1278 = vpop.permute.xlu0 %1277
  %1280 = vset.pattern.permute.xlu0 3
  %1281 = vperm.xlu0 %1280, %v996
  %v1282 = vpop.permute.xlu0 %1281
  %1284 = vset.pattern.permute.xlu0 3
  %1285 = vperm.xlu0 %1284, %v997
  %v1286 = vpop.permute.xlu0 %1285
  %1288 = vset.pattern.permute.xlu0 3
  %1289 = vperm.xlu0 %1288, %v998
  %v1290 = vpop.permute.xlu0 %1289
  %1292 = vset.pattern.permute.xlu0 3
  %1293 = vperm.xlu0 %1292, %v999
  %v1294 = vpop.permute.xlu0 %1293
  %v1296 = vsel %vm1256, %v1266, 0.0
  %v1297 = vsel %vm1257, %v1270, 0.0
  %v1298 = vsel %vm1258, %v1274, 0.0
  %v1299 = vsel %vm1259, %v1278, 0.0
  %v1300 = vsel %vm1260, %v1282, 0.0
  %v1301 = vsel %vm1261, %v1286, 0.0
  %v1302 = vsel %vm1262, %v1290, 0.0
  %v1303 = vsel %vm1263, %v1294, 0.0
  %v1304 = vadd.f32 %v1144, %v1296
  %v1305 = vadd.f32 %v1145, %v1297
  %v1306 = vadd.f32 %v1146, %v1298
  %v1307 = vadd.f32 %v1147, %v1299
  %v1308 = vadd.f32 %v1148, %v1300
  %v1309 = vadd.f32 %v1149, %v1301
  %v1310 = vadd.f32 %v1150, %v1302
  %v1311 = vadd.f32 %v1151, %v1303
  %v1312 = vsel %vm944, %v952, 0.0
  %v1313 = vsel %vm945, %v953, 0.0
  %v1314 = vsel %vm946, %v954, 0.0
  %v1315 = vsel %vm947, %v955, 0.0
  %v1316 = vsel %vm948, %v956, 0.0
  %v1317 = vsel %vm949, %v957, 0.0
  %v1318 = vsel %vm950, %v958, 0.0
  %v1319 = vsel %vm951, %v959, 0.0
  %1320 = vset.pattern.permute.xlu0 0
  %1321 = vperm.xlu0 %1320, %v856
  %v1322 = vpop.permute.xlu0 %1321
  %1323 = vset.pattern.permute.xlu0 0
  %1324 = vperm.xlu0 %1323, %v857
  %v1325 = vpop.permute.xlu0 %1324
  %1326 = vset.pattern.permute.xlu0 0
  %1327 = vperm.xlu0 %1326, %v858
  %v1328 = vpop.permute.xlu0 %1327
  %1329 = vset.pattern.permute.xlu0 0
  %1330 = vperm.xlu0 %1329, %v859
  %v1331 = vpop.permute.xlu0 %1330
  %1332 = vset.pattern.permute.xlu0 0
  %1333 = vperm.xlu0 %1332, %v860
  %v1334 = vpop.permute.xlu0 %1333
  %1335 = vset.pattern.permute.xlu0 0
  %1336 = vperm.xlu0 %1335, %v861
  %v1337 = vpop.permute.xlu0 %1336
  %1338 = vset.pattern.permute.xlu0 0
  %1339 = vperm.xlu0 %1338, %v862
  %v1340 = vpop.permute.xlu0 %1339
  %1341 = vset.pattern.permute.xlu0 0
  %1342 = vperm.xlu0 %1341, %v863
  %v1343 = vpop.permute.xlu0 %1342
  %vm1344 = vcmp.eq.s32.totalorder %v461, %v1322
  %vm1345 = vcmp.eq.s32.totalorder %v461, %v1325
  %vm1346 = vcmp.eq.s32.totalorder %v461, %v1328
  %vm1347 = vcmp.eq.s32.totalorder %v461, %v1331
  %vm1348 = vcmp.eq.s32.totalorder %v461, %v1334
  %vm1349 = vcmp.eq.s32.totalorder %v461, %v1337
  %vm1350 = vcmp.eq.s32.totalorder %v461, %v1340
  %vm1351 = vcmp.eq.s32.totalorder %v461, %v1343
  %1353 = vset.pattern.permute.xlu0 0
  %1354 = vperm.xlu0 %1353, %v1312
  %v1355 = vpop.permute.xlu0 %1354
  %1358 = vset.pattern.permute.xlu0 0
  %1359 = vperm.xlu0 %1358, %v1313
  %v1360 = vpop.permute.xlu0 %1359
  %1363 = vset.pattern.permute.xlu0 0
  %1364 = vperm.xlu0 %1363, %v1314
  %v1365 = vpop.permute.xlu0 %1364
  %1368 = vset.pattern.permute.xlu0 0
  %1369 = vperm.xlu0 %1368, %v1315
  %v1370 = vpop.permute.xlu0 %1369
  %1373 = vset.pattern.permute.xlu0 0
  %1374 = vperm.xlu0 %1373, %v1316
  %v1375 = vpop.permute.xlu0 %1374
  %1378 = vset.pattern.permute.xlu0 0
  %1379 = vperm.xlu0 %1378, %v1317
  %v1380 = vpop.permute.xlu0 %1379
  %1383 = vset.pattern.permute.xlu0 0
  %1384 = vperm.xlu0 %1383, %v1318
  %v1385 = vpop.permute.xlu0 %1384
  %1388 = vset.pattern.permute.xlu0 0
  %1389 = vperm.xlu0 %1388, %v1319
  %v1390 = vpop.permute.xlu0 %1389
  %v1392 = vsel %vm1344, %v1355, 0.0
  %v1393 = vsel %vm1345, %v1360, 0.0
  %v1394 = vsel %vm1346, %v1365, 0.0
  %v1395 = vsel %vm1347, %v1370, 0.0
  %v1396 = vsel %vm1348, %v1375, 0.0
  %v1397 = vsel %vm1349, %v1380, 0.0
  %v1398 = vsel %vm1350, %v1385, 0.0
  %v1399 = vsel %vm1351, %v1390, 0.0
  %1400 = vset.pattern.permute.xlu0 1
  %1401 = vperm.xlu0 %1400, %v856
  %v1402 = vpop.permute.xlu0 %1401
  %1403 = vset.pattern.permute.xlu0 1
  %1404 = vperm.xlu0 %1403, %v857
  %v1405 = vpop.permute.xlu0 %1404
  %1406 = vset.pattern.permute.xlu0 1
  %1407 = vperm.xlu0 %1406, %v858
  %v1408 = vpop.permute.xlu0 %1407
  %1409 = vset.pattern.permute.xlu0 1
  %1410 = vperm.xlu0 %1409, %v859
  %v1411 = vpop.permute.xlu0 %1410
  %1412 = vset.pattern.permute.xlu0 1
  %1413 = vperm.xlu0 %1412, %v860
  %v1414 = vpop.permute.xlu0 %1413
  %1415 = vset.pattern.permute.xlu0 1
  %1416 = vperm.xlu0 %1415, %v861
  %v1417 = vpop.permute.xlu0 %1416
  %1418 = vset.pattern.permute.xlu0 1
  %1419 = vperm.xlu0 %1418, %v862
  %v1420 = vpop.permute.xlu0 %1419
  %1421 = vset.pattern.permute.xlu0 1
  %1422 = vperm.xlu0 %1421, %v863
  %v1423 = vpop.permute.xlu0 %1422
  %vm1424 = vcmp.eq.s32.totalorder %v461, %v1402
  %vm1425 = vcmp.eq.s32.totalorder %v461, %v1405
  %vm1426 = vcmp.eq.s32.totalorder %v461, %v1408
  %vm1427 = vcmp.eq.s32.totalorder %v461, %v1411
  %vm1428 = vcmp.eq.s32.totalorder %v461, %v1414
  %vm1429 = vcmp.eq.s32.totalorder %v461, %v1417
  %vm1430 = vcmp.eq.s32.totalorder %v461, %v1420
  %vm1431 = vcmp.eq.s32.totalorder %v461, %v1423
  %1432 = vset.pattern.permute.xlu0 1
  %1433 = vperm.xlu0 %1432, %v1312
  %v1434 = vpop.permute.xlu0 %1433
  %1436 = vset.pattern.permute.xlu0 1
  %1437 = vperm.xlu0 %1436, %v1313
  %v1438 = vpop.permute.xlu0 %1437
  %1440 = vset.pattern.permute.xlu0 1
  %1441 = vperm.xlu0 %1440, %v1314
  %v1442 = vpop.permute.xlu0 %1441
  %1444 = vset.pattern.permute.xlu0 1
  %1445 = vperm.xlu0 %1444, %v1315
  %v1446 = vpop.permute.xlu0 %1445
  %1448 = vset.pattern.permute.xlu0 1
  %1449 = vperm.xlu0 %1448, %v1316
  %v1450 = vpop.permute.xlu0 %1449
  %1452 = vset.pattern.permute.xlu0 1
  %1453 = vperm.xlu0 %1452, %v1317
  %v1454 = vpop.permute.xlu0 %1453
  %1456 = vset.pattern.permute.xlu0 1
  %1457 = vperm.xlu0 %1456, %v1318
  %v1458 = vpop.permute.xlu0 %1457
  %1460 = vset.pattern.permute.xlu0 1
  %1461 = vperm.xlu0 %1460, %v1319
  %v1462 = vpop.permute.xlu0 %1461
  %v1464 = vsel %vm1424, %v1434, 0.0
  %v1465 = vsel %vm1425, %v1438, 0.0
  %v1466 = vsel %vm1426, %v1442, 0.0
  %v1467 = vsel %vm1427, %v1446, 0.0
  %v1468 = vsel %vm1428, %v1450, 0.0
  %v1469 = vsel %vm1429, %v1454, 0.0
  %v1470 = vsel %vm1430, %v1458, 0.0
  %v1471 = vsel %vm1431, %v1462, 0.0
  %1472 = vset.pattern.permute.xlu0 2
  %1473 = vperm.xlu0 %1472, %v856
  %v1474 = vpop.permute.xlu0 %1473
  %1475 = vset.pattern.permute.xlu0 2
  %1476 = vperm.xlu0 %1475, %v857
  %v1477 = vpop.permute.xlu0 %1476
  %1478 = vset.pattern.permute.xlu0 2
  %1479 = vperm.xlu0 %1478, %v858
  %v1480 = vpop.permute.xlu0 %1479
  %1481 = vset.pattern.permute.xlu0 2
  %1482 = vperm.xlu0 %1481, %v859
  %v1483 = vpop.permute.xlu0 %1482
  %1484 = vset.pattern.permute.xlu0 2
  %1485 = vperm.xlu0 %1484, %v860
  %v1486 = vpop.permute.xlu0 %1485
  %1487 = vset.pattern.permute.xlu0 2
  %1488 = vperm.xlu0 %1487, %v861
  %v1489 = vpop.permute.xlu0 %1488
  %1490 = vset.pattern.permute.xlu0 2
  %1491 = vperm.xlu0 %1490, %v862
  %v1492 = vpop.permute.xlu0 %1491
  %1493 = vset.pattern.permute.xlu0 2
  %1494 = vperm.xlu0 %1493, %v863
  %v1495 = vpop.permute.xlu0 %1494
  %vm1496 = vcmp.eq.s32.totalorder %v461, %v1474
  %vm1497 = vcmp.eq.s32.totalorder %v461, %v1477
  %vm1498 = vcmp.eq.s32.totalorder %v461, %v1480
  %vm1499 = vcmp.eq.s32.totalorder %v461, %v1483
  %vm1500 = vcmp.eq.s32.totalorder %v461, %v1486
  %vm1501 = vcmp.eq.s32.totalorder %v461, %v1489
  %vm1502 = vcmp.eq.s32.totalorder %v461, %v1492
  %vm1503 = vcmp.eq.s32.totalorder %v461, %v1495
  %1504 = vset.pattern.permute.xlu0 2
  %1505 = vperm.xlu0 %1504, %v1312
  %v1506 = vpop.permute.xlu0 %1505
  %1508 = vset.pattern.permute.xlu0 2
  %1509 = vperm.xlu0 %1508, %v1313
  %v1510 = vpop.permute.xlu0 %1509
  %1512 = vset.pattern.permute.xlu0 2
  %1513 = vperm.xlu0 %1512, %v1314
  %v1514 = vpop.permute.xlu0 %1513
  %1516 = vset.pattern.permute.xlu0 2
  %1517 = vperm.xlu0 %1516, %v1315
  %v1518 = vpop.permute.xlu0 %1517
  %1520 = vset.pattern.permute.xlu0 2
  %1521 = vperm.xlu0 %1520, %v1316
  %v1522 = vpop.permute.xlu0 %1521
  %1524 = vset.pattern.permute.xlu0 2
  %1525 = vperm.xlu0 %1524, %v1317
  %v1526 = vpop.permute.xlu0 %1525
  %1528 = vset.pattern.permute.xlu0 2
  %1529 = vperm.xlu0 %1528, %v1318
  %v1530 = vpop.permute.xlu0 %1529
  %1532 = vset.pattern.permute.xlu0 2
  %1533 = vperm.xlu0 %1532, %v1319
  %v1534 = vpop.permute.xlu0 %1533
  %v1536 = vsel %vm1496, %v1506, 0.0
  %v1537 = vsel %vm1497, %v1510, 0.0
  %v1538 = vsel %vm1498, %v1514, 0.0
  %v1539 = vsel %vm1499, %v1518, 0.0
  %v1540 = vsel %vm1500, %v1522, 0.0
  %v1541 = vsel %vm1501, %v1526, 0.0
  %v1542 = vsel %vm1502, %v1530, 0.0
  %v1543 = vsel %vm1503, %v1534, 0.0
  %v1544 = vadd.f32 %v1392, %v1536
  %v1545 = vadd.f32 %v1393, %v1537
  %v1546 = vadd.f32 %v1394, %v1538
  %v1547 = vadd.f32 %v1395, %v1539
  %v1548 = vadd.f32 %v1396, %v1540
  %v1549 = vadd.f32 %v1397, %v1541
  %v1550 = vadd.f32 %v1398, %v1542
  %v1551 = vadd.f32 %v1399, %v1543
  %1552 = vset.pattern.permute.xlu0 3
  %1553 = vperm.xlu0 %1552, %v856
  %v1554 = vpop.permute.xlu0 %1553
  %1555 = vset.pattern.permute.xlu0 3
  %1556 = vperm.xlu0 %1555, %v857
  %v1557 = vpop.permute.xlu0 %1556
  %1558 = vset.pattern.permute.xlu0 3
  %1559 = vperm.xlu0 %1558, %v858
  %v1560 = vpop.permute.xlu0 %1559
  %1561 = vset.pattern.permute.xlu0 3
  %1562 = vperm.xlu0 %1561, %v859
  %v1563 = vpop.permute.xlu0 %1562
  %1564 = vset.pattern.permute.xlu0 3
  %1565 = vperm.xlu0 %1564, %v860
  %v1566 = vpop.permute.xlu0 %1565
  %1567 = vset.pattern.permute.xlu0 3
  %1568 = vperm.xlu0 %1567, %v861
  %v1569 = vpop.permute.xlu0 %1568
  %1570 = vset.pattern.permute.xlu0 3
  %1571 = vperm.xlu0 %1570, %v862
  %v1572 = vpop.permute.xlu0 %1571
  %1573 = vset.pattern.permute.xlu0 3
  %1574 = vperm.xlu0 %1573, %v863
  %v1575 = vpop.permute.xlu0 %1574
  %vm1576 = vcmp.eq.s32.totalorder %v461, %v1554
  %vm1577 = vcmp.eq.s32.totalorder %v461, %v1557
  %vm1578 = vcmp.eq.s32.totalorder %v461, %v1560
  %vm1579 = vcmp.eq.s32.totalorder %v461, %v1563
  %vm1580 = vcmp.eq.s32.totalorder %v461, %v1566
  %vm1581 = vcmp.eq.s32.totalorder %v461, %v1569
  %vm1582 = vcmp.eq.s32.totalorder %v461, %v1572
  %vm1583 = vcmp.eq.s32.totalorder %v461, %v1575
  %1584 = vset.pattern.permute.xlu0 3
  %1585 = vperm.xlu0 %1584, %v1312
  %v1586 = vpop.permute.xlu0 %1585
  %1588 = vset.pattern.permute.xlu0 3
  %1589 = vperm.xlu0 %1588, %v1313
  %v1590 = vpop.permute.xlu0 %1589
  %1592 = vset.pattern.permute.xlu0 3
  %1593 = vperm.xlu0 %1592, %v1314
  %v1594 = vpop.permute.xlu0 %1593
  %1596 = vset.pattern.permute.xlu0 3
  %1597 = vperm.xlu0 %1596, %v1315
  %v1598 = vpop.permute.xlu0 %1597
  %1600 = vset.pattern.permute.xlu0 3
  %1601 = vperm.xlu0 %1600, %v1316
  %v1602 = vpop.permute.xlu0 %1601
  %1604 = vset.pattern.permute.xlu0 3
  %1605 = vperm.xlu0 %1604, %v1317
  %v1606 = vpop.permute.xlu0 %1605
  %1608 = vset.pattern.permute.xlu0 3
  %1609 = vperm.xlu0 %1608, %v1318
  %v1610 = vpop.permute.xlu0 %1609
  %1612 = vset.pattern.permute.xlu0 3
  %1613 = vperm.xlu0 %1612, %v1319
  %v1614 = vpop.permute.xlu0 %1613
  %v1616 = vsel %vm1576, %v1586, 0.0
  %v1617 = vsel %vm1577, %v1590, 0.0
  %v1618 = vsel %vm1578, %v1594, 0.0
  %v1619 = vsel %vm1579, %v1598, 0.0
  %v1620 = vsel %vm1580, %v1602, 0.0
  %v1621 = vsel %vm1581, %v1606, 0.0
  %v1622 = vsel %vm1582, %v1610, 0.0
  %v1623 = vsel %vm1583, %v1614, 0.0
  %v1624 = vadd.f32 %v1464, %v1616
  %v1625 = vadd.f32 %v1465, %v1617
  %v1626 = vadd.f32 %v1466, %v1618
  %v1627 = vadd.f32 %v1467, %v1619
  %v1628 = vadd.f32 %v1468, %v1620
  %v1629 = vadd.f32 %v1469, %v1621
  %v1630 = vadd.f32 %v1470, %v1622
  %v1631 = vadd.f32 %v1471, %v1623
  %v1632 = vsel %vm960, %v968, 0.0
  %v1633 = vsel %vm961, %v969, 0.0
  %v1634 = vsel %vm962, %v970, 0.0
  %v1635 = vsel %vm963, %v971, 0.0
  %v1636 = vsel %vm964, %v972, 0.0
  %v1637 = vsel %vm965, %v973, 0.0
  %v1638 = vsel %vm966, %v974, 0.0
  %v1639 = vsel %vm967, %v975, 0.0
  %1640 = vset.pattern.permute.xlu0 0
  %1641 = vperm.xlu0 %1640, %v864
  %v1642 = vpop.permute.xlu0 %1641
  %1643 = vset.pattern.permute.xlu0 0
  %1644 = vperm.xlu0 %1643, %v865
  %v1645 = vpop.permute.xlu0 %1644
  %1646 = vset.pattern.permute.xlu0 0
  %1647 = vperm.xlu0 %1646, %v866
  %v1648 = vpop.permute.xlu0 %1647
  %1649 = vset.pattern.permute.xlu0 0
  %1650 = vperm.xlu0 %1649, %v867
  %v1651 = vpop.permute.xlu0 %1650
  %1652 = vset.pattern.permute.xlu0 0
  %1653 = vperm.xlu0 %1652, %v868
  %v1654 = vpop.permute.xlu0 %1653
  %1655 = vset.pattern.permute.xlu0 0
  %1656 = vperm.xlu0 %1655, %v869
  %v1657 = vpop.permute.xlu0 %1656
  %1658 = vset.pattern.permute.xlu0 0
  %1659 = vperm.xlu0 %1658, %v870
  %v1660 = vpop.permute.xlu0 %1659
  %1661 = vset.pattern.permute.xlu0 0
  %1662 = vperm.xlu0 %1661, %v871
  %v1663 = vpop.permute.xlu0 %1662
  %vm1664 = vcmp.eq.s32.totalorder %v461, %v1642
  %vm1665 = vcmp.eq.s32.totalorder %v461, %v1645
  %vm1666 = vcmp.eq.s32.totalorder %v461, %v1648
  %vm1667 = vcmp.eq.s32.totalorder %v461, %v1651
  %vm1668 = vcmp.eq.s32.totalorder %v461, %v1654
  %vm1669 = vcmp.eq.s32.totalorder %v461, %v1657
  %vm1670 = vcmp.eq.s32.totalorder %v461, %v1660
  %vm1671 = vcmp.eq.s32.totalorder %v461, %v1663
  %1673 = vset.pattern.permute.xlu0 0
  %1674 = vperm.xlu0 %1673, %v1632
  %v1675 = vpop.permute.xlu0 %1674
  %1678 = vset.pattern.permute.xlu0 0
  %1679 = vperm.xlu0 %1678, %v1633
  %v1680 = vpop.permute.xlu0 %1679
  %1683 = vset.pattern.permute.xlu0 0
  %1684 = vperm.xlu0 %1683, %v1634
  %v1685 = vpop.permute.xlu0 %1684
  %1688 = vset.pattern.permute.xlu0 0
  %1689 = vperm.xlu0 %1688, %v1635
  %v1690 = vpop.permute.xlu0 %1689
  %1693 = vset.pattern.permute.xlu0 0
  %1694 = vperm.xlu0 %1693, %v1636
  %v1695 = vpop.permute.xlu0 %1694
  %1698 = vset.pattern.permute.xlu0 0
  %1699 = vperm.xlu0 %1698, %v1637
  %v1700 = vpop.permute.xlu0 %1699
  %1703 = vset.pattern.permute.xlu0 0
  %1704 = vperm.xlu0 %1703, %v1638
  %v1705 = vpop.permute.xlu0 %1704
  %1708 = vset.pattern.permute.xlu0 0
  %1709 = vperm.xlu0 %1708, %v1639
  %v1710 = vpop.permute.xlu0 %1709
  %v1712 = vsel %vm1664, %v1675, 0.0
  %v1713 = vsel %vm1665, %v1680, 0.0
  %v1714 = vsel %vm1666, %v1685, 0.0
  %v1715 = vsel %vm1667, %v1690, 0.0
  %v1716 = vsel %vm1668, %v1695, 0.0
  %v1717 = vsel %vm1669, %v1700, 0.0
  %v1718 = vsel %vm1670, %v1705, 0.0
  %v1719 = vsel %vm1671, %v1710, 0.0
  %1720 = vset.pattern.permute.xlu0 1
  %1721 = vperm.xlu0 %1720, %v864
  %v1722 = vpop.permute.xlu0 %1721
  %1723 = vset.pattern.permute.xlu0 1
  %1724 = vperm.xlu0 %1723, %v865
  %v1725 = vpop.permute.xlu0 %1724
  %1726 = vset.pattern.permute.xlu0 1
  %1727 = vperm.xlu0 %1726, %v866
  %v1728 = vpop.permute.xlu0 %1727
  %1729 = vset.pattern.permute.xlu0 1
  %1730 = vperm.xlu0 %1729, %v867
  %v1731 = vpop.permute.xlu0 %1730
  %1732 = vset.pattern.permute.xlu0 1
  %1733 = vperm.xlu0 %1732, %v868
  %v1734 = vpop.permute.xlu0 %1733
  %1735 = vset.pattern.permute.xlu0 1
  %1736 = vperm.xlu0 %1735, %v869
  %v1737 = vpop.permute.xlu0 %1736
  %1738 = vset.pattern.permute.xlu0 1
  %1739 = vperm.xlu0 %1738, %v870
  %v1740 = vpop.permute.xlu0 %1739
  %1741 = vset.pattern.permute.xlu0 1
  %1742 = vperm.xlu0 %1741, %v871
  %v1743 = vpop.permute.xlu0 %1742
  %vm1744 = vcmp.eq.s32.totalorder %v461, %v1722
  %vm1745 = vcmp.eq.s32.totalorder %v461, %v1725
  %vm1746 = vcmp.eq.s32.totalorder %v461, %v1728
  %vm1747 = vcmp.eq.s32.totalorder %v461, %v1731
  %vm1748 = vcmp.eq.s32.totalorder %v461, %v1734
  %vm1749 = vcmp.eq.s32.totalorder %v461, %v1737
  %vm1750 = vcmp.eq.s32.totalorder %v461, %v1740
  %vm1751 = vcmp.eq.s32.totalorder %v461, %v1743
  %1752 = vset.pattern.permute.xlu0 1
  %1753 = vperm.xlu0 %1752, %v1632
  %v1754 = vpop.permute.xlu0 %1753
  %1756 = vset.pattern.permute.xlu0 1
  %1757 = vperm.xlu0 %1756, %v1633
  %v1758 = vpop.permute.xlu0 %1757
  %1760 = vset.pattern.permute.xlu0 1
  %1761 = vperm.xlu0 %1760, %v1634
  %v1762 = vpop.permute.xlu0 %1761
  %1764 = vset.pattern.permute.xlu0 1
  %1765 = vperm.xlu0 %1764, %v1635
  %v1766 = vpop.permute.xlu0 %1765
  %1768 = vset.pattern.permute.xlu0 1
  %1769 = vperm.xlu0 %1768, %v1636
  %v1770 = vpop.permute.xlu0 %1769
  %1772 = vset.pattern.permute.xlu0 1
  %1773 = vperm.xlu0 %1772, %v1637
  %v1774 = vpop.permute.xlu0 %1773
  %1776 = vset.pattern.permute.xlu0 1
  %1777 = vperm.xlu0 %1776, %v1638
  %v1778 = vpop.permute.xlu0 %1777
  %1780 = vset.pattern.permute.xlu0 1
  %1781 = vperm.xlu0 %1780, %v1639
  %v1782 = vpop.permute.xlu0 %1781
  %v1784 = vsel %vm1744, %v1754, 0.0
  %v1785 = vsel %vm1745, %v1758, 0.0
  %v1786 = vsel %vm1746, %v1762, 0.0
  %v1787 = vsel %vm1747, %v1766, 0.0
  %v1788 = vsel %vm1748, %v1770, 0.0
  %v1789 = vsel %vm1749, %v1774, 0.0
  %v1790 = vsel %vm1750, %v1778, 0.0
  %v1791 = vsel %vm1751, %v1782, 0.0
  %1792 = vset.pattern.permute.xlu0 2
  %1793 = vperm.xlu0 %1792, %v864
  %v1794 = vpop.permute.xlu0 %1793
  %1795 = vset.pattern.permute.xlu0 2
  %1796 = vperm.xlu0 %1795, %v865
  %v1797 = vpop.permute.xlu0 %1796
  %1798 = vset.pattern.permute.xlu0 2
  %1799 = vperm.xlu0 %1798, %v866
  %v1800 = vpop.permute.xlu0 %1799
  %1801 = vset.pattern.permute.xlu0 2
  %1802 = vperm.xlu0 %1801, %v867
  %v1803 = vpop.permute.xlu0 %1802
  %1804 = vset.pattern.permute.xlu0 2
  %1805 = vperm.xlu0 %1804, %v868
  %v1806 = vpop.permute.xlu0 %1805
  %1807 = vset.pattern.permute.xlu0 2
  %1808 = vperm.xlu0 %1807, %v869
  %v1809 = vpop.permute.xlu0 %1808
  %1810 = vset.pattern.permute.xlu0 2
  %1811 = vperm.xlu0 %1810, %v870
  %v1812 = vpop.permute.xlu0 %1811
  %1813 = vset.pattern.permute.xlu0 2
  %1814 = vperm.xlu0 %1813, %v871
  %v1815 = vpop.permute.xlu0 %1814
  %vm1816 = vcmp.eq.s32.totalorder %v461, %v1794
  %vm1817 = vcmp.eq.s32.totalorder %v461, %v1797
  %vm1818 = vcmp.eq.s32.totalorder %v461, %v1800
  %vm1819 = vcmp.eq.s32.totalorder %v461, %v1803
  %vm1820 = vcmp.eq.s32.totalorder %v461, %v1806
  %vm1821 = vcmp.eq.s32.totalorder %v461, %v1809
  %vm1822 = vcmp.eq.s32.totalorder %v461, %v1812
  %vm1823 = vcmp.eq.s32.totalorder %v461, %v1815
  %1824 = vset.pattern.permute.xlu0 2
  %1825 = vperm.xlu0 %1824, %v1632
  %v1826 = vpop.permute.xlu0 %1825
  %1828 = vset.pattern.permute.xlu0 2
  %1829 = vperm.xlu0 %1828, %v1633
  %v1830 = vpop.permute.xlu0 %1829
  %1832 = vset.pattern.permute.xlu0 2
  %1833 = vperm.xlu0 %1832, %v1634
  %v1834 = vpop.permute.xlu0 %1833
  %1836 = vset.pattern.permute.xlu0 2
  %1837 = vperm.xlu0 %1836, %v1635
  %v1838 = vpop.permute.xlu0 %1837
  %1840 = vset.pattern.permute.xlu0 2
  %1841 = vperm.xlu0 %1840, %v1636
  %v1842 = vpop.permute.xlu0 %1841
  %1844 = vset.pattern.permute.xlu0 2
  %1845 = vperm.xlu0 %1844, %v1637
  %v1846 = vpop.permute.xlu0 %1845
  %1848 = vset.pattern.permute.xlu0 2
  %1849 = vperm.xlu0 %1848, %v1638
  %v1850 = vpop.permute.xlu0 %1849
  %1852 = vset.pattern.permute.xlu0 2
  %1853 = vperm.xlu0 %1852, %v1639
  %v1854 = vpop.permute.xlu0 %1853
  %v1856 = vsel %vm1816, %v1826, 0.0
  %v1857 = vsel %vm1817, %v1830, 0.0
  %v1858 = vsel %vm1818, %v1834, 0.0
  %v1859 = vsel %vm1819, %v1838, 0.0
  %v1860 = vsel %vm1820, %v1842, 0.0
  %v1861 = vsel %vm1821, %v1846, 0.0
  %v1862 = vsel %vm1822, %v1850, 0.0
  %v1863 = vsel %vm1823, %v1854, 0.0
  %v1864 = vadd.f32 %v1712, %v1856
  %v1865 = vadd.f32 %v1713, %v1857
  %v1866 = vadd.f32 %v1714, %v1858
  %v1867 = vadd.f32 %v1715, %v1859
  %v1868 = vadd.f32 %v1716, %v1860
  %v1869 = vadd.f32 %v1717, %v1861
  %v1870 = vadd.f32 %v1718, %v1862
  %v1871 = vadd.f32 %v1719, %v1863
  %1872 = vset.pattern.permute.xlu0 3
  %1873 = vperm.xlu0 %1872, %v864
  %v1874 = vpop.permute.xlu0 %1873
  %1875 = vset.pattern.permute.xlu0 3
  %1876 = vperm.xlu0 %1875, %v865
  %v1877 = vpop.permute.xlu0 %1876
  %1878 = vset.pattern.permute.xlu0 3
  %1879 = vperm.xlu0 %1878, %v866
  %v1880 = vpop.permute.xlu0 %1879
  %1881 = vset.pattern.permute.xlu0 3
  %1882 = vperm.xlu0 %1881, %v867
  %v1883 = vpop.permute.xlu0 %1882
  %1884 = vset.pattern.permute.xlu0 3
  %1885 = vperm.xlu0 %1884, %v868
  %v1886 = vpop.permute.xlu0 %1885
  %1887 = vset.pattern.permute.xlu0 3
  %1888 = vperm.xlu0 %1887, %v869
  %v1889 = vpop.permute.xlu0 %1888
  %1890 = vset.pattern.permute.xlu0 3
  %1891 = vperm.xlu0 %1890, %v870
  %v1892 = vpop.permute.xlu0 %1891
  %1893 = vset.pattern.permute.xlu0 3
  %1894 = vperm.xlu0 %1893, %v871
  %v1895 = vpop.permute.xlu0 %1894
  %vm1896 = vcmp.eq.s32.totalorder %v461, %v1874
  %vm1897 = vcmp.eq.s32.totalorder %v461, %v1877
  %vm1898 = vcmp.eq.s32.totalorder %v461, %v1880
  %vm1899 = vcmp.eq.s32.totalorder %v461, %v1883
  %vm1900 = vcmp.eq.s32.totalorder %v461, %v1886
  %vm1901 = vcmp.eq.s32.totalorder %v461, %v1889
  %vm1902 = vcmp.eq.s32.totalorder %v461, %v1892
  %vm1903 = vcmp.eq.s32.totalorder %v461, %v1895
  %1904 = vset.pattern.permute.xlu0 3
  %1905 = vperm.xlu0 %1904, %v1632
  %v1906 = vpop.permute.xlu0 %1905
  %1908 = vset.pattern.permute.xlu0 3
  %1909 = vperm.xlu0 %1908, %v1633
  %v1910 = vpop.permute.xlu0 %1909
  %1912 = vset.pattern.permute.xlu0 3
  %1913 = vperm.xlu0 %1912, %v1634
  %v1914 = vpop.permute.xlu0 %1913
  %1916 = vset.pattern.permute.xlu0 3
  %1917 = vperm.xlu0 %1916, %v1635
  %v1918 = vpop.permute.xlu0 %1917
  %1920 = vset.pattern.permute.xlu0 3
  %1921 = vperm.xlu0 %1920, %v1636
  %v1922 = vpop.permute.xlu0 %1921
  %1924 = vset.pattern.permute.xlu0 3
  %1925 = vperm.xlu0 %1924, %v1637
  %v1926 = vpop.permute.xlu0 %1925
  %1928 = vset.pattern.permute.xlu0 3
  %1929 = vperm.xlu0 %1928, %v1638
  %v1930 = vpop.permute.xlu0 %1929
  %1932 = vset.pattern.permute.xlu0 3
  %1933 = vperm.xlu0 %1932, %v1639
  %v1934 = vpop.permute.xlu0 %1933
  %v1936 = vsel %vm1896, %v1906, 0.0
  %v1937 = vsel %vm1897, %v1910, 0.0
  %v1938 = vsel %vm1898, %v1914, 0.0
  %v1939 = vsel %vm1899, %v1918, 0.0
  %v1940 = vsel %vm1900, %v1922, 0.0
  %v1941 = vsel %vm1901, %v1926, 0.0
  %v1942 = vsel %vm1902, %v1930, 0.0
  %v1943 = vsel %vm1903, %v1934, 0.0
  %v1944 = vadd.f32 %v1784, %v1936
  %v1945 = vadd.f32 %v1785, %v1937
  %v1946 = vadd.f32 %v1786, %v1938
  %v1947 = vadd.f32 %v1787, %v1939
  %v1948 = vadd.f32 %v1788, %v1940
  %v1949 = vadd.f32 %v1789, %v1941
  %v1950 = vadd.f32 %v1790, %v1942
  %v1951 = vadd.f32 %v1791, %v1943
  %v1952 = vsel %vm976, %v984, 0.0
  %v1953 = vsel %vm977, %v985, 0.0
  %v1954 = vsel %vm978, %v986, 0.0
  %v1955 = vsel %vm979, %v987, 0.0
  %v1956 = vsel %vm980, %v988, 0.0
  %v1957 = vsel %vm981, %v989, 0.0
  %v1958 = vsel %vm982, %v990, 0.0
  %v1959 = vsel %vm983, %v991, 0.0
  %1960 = vset.pattern.permute.xlu0 0
  %1961 = vperm.xlu0 %1960, %v872
  %v1962 = vpop.permute.xlu0 %1961
  %1963 = vset.pattern.permute.xlu0 0
  %1964 = vperm.xlu0 %1963, %v873
  %v1965 = vpop.permute.xlu0 %1964
  %1966 = vset.pattern.permute.xlu0 0
  %1967 = vperm.xlu0 %1966, %v874
  %v1968 = vpop.permute.xlu0 %1967
  %1969 = vset.pattern.permute.xlu0 0
  %1970 = vperm.xlu0 %1969, %v875
  %v1971 = vpop.permute.xlu0 %1970
  %1972 = vset.pattern.permute.xlu0 0
  %1973 = vperm.xlu0 %1972, %v876
  %v1974 = vpop.permute.xlu0 %1973
  %1975 = vset.pattern.permute.xlu0 0
  %1976 = vperm.xlu0 %1975, %v877
  %v1977 = vpop.permute.xlu0 %1976
  %1978 = vset.pattern.permute.xlu0 0
  %1979 = vperm.xlu0 %1978, %v878
  %v1980 = vpop.permute.xlu0 %1979
  %1981 = vset.pattern.permute.xlu0 0
  %1982 = vperm.xlu0 %1981, %v879
  %v1983 = vpop.permute.xlu0 %1982
  %vm1984 = vcmp.eq.s32.totalorder %v461, %v1962
  %vm1985 = vcmp.eq.s32.totalorder %v461, %v1965
  %vm1986 = vcmp.eq.s32.totalorder %v461, %v1968
  %vm1987 = vcmp.eq.s32.totalorder %v461, %v1971
  %vm1988 = vcmp.eq.s32.totalorder %v461, %v1974
  %vm1989 = vcmp.eq.s32.totalorder %v461, %v1977
  %vm1990 = vcmp.eq.s32.totalorder %v461, %v1980
  %vm1991 = vcmp.eq.s32.totalorder %v461, %v1983
  %1993 = vset.pattern.permute.xlu0 0
  %1994 = vperm.xlu0 %1993, %v1952
  %v1995 = vpop.permute.xlu0 %1994
  %1998 = vset.pattern.permute.xlu0 0
  %1999 = vperm.xlu0 %1998, %v1953
  %v2000 = vpop.permute.xlu0 %1999
  %2003 = vset.pattern.permute.xlu0 0
  %2004 = vperm.xlu0 %2003, %v1954
  %v2005 = vpop.permute.xlu0 %2004
  %2008 = vset.pattern.permute.xlu0 0
  %2009 = vperm.xlu0 %2008, %v1955
  %v2010 = vpop.permute.xlu0 %2009
  %2013 = vset.pattern.permute.xlu0 0
  %2014 = vperm.xlu0 %2013, %v1956
  %v2015 = vpop.permute.xlu0 %2014
  %2018 = vset.pattern.permute.xlu0 0
  %2019 = vperm.xlu0 %2018, %v1957
  %v2020 = vpop.permute.xlu0 %2019
  %2023 = vset.pattern.permute.xlu0 0
  %2024 = vperm.xlu0 %2023, %v1958
  %v2025 = vpop.permute.xlu0 %2024
  %2028 = vset.pattern.permute.xlu0 0
  %2029 = vperm.xlu0 %2028, %v1959
  %v2030 = vpop.permute.xlu0 %2029
  %v2032 = vsel %vm1984, %v1995, 0.0
  %v2033 = vsel %vm1985, %v2000, 0.0
  %v2034 = vsel %vm1986, %v2005, 0.0
  %v2035 = vsel %vm1987, %v2010, 0.0
  %v2036 = vsel %vm1988, %v2015, 0.0
  %v2037 = vsel %vm1989, %v2020, 0.0
  %v2038 = vsel %vm1990, %v2025, 0.0
  %v2039 = vsel %vm1991, %v2030, 0.0
  %2040 = vset.pattern.permute.xlu0 1
  %2041 = vperm.xlu0 %2040, %v872
  %v2042 = vpop.permute.xlu0 %2041
  %2043 = vset.pattern.permute.xlu0 1
  %2044 = vperm.xlu0 %2043, %v873
  %v2045 = vpop.permute.xlu0 %2044
  %2046 = vset.pattern.permute.xlu0 1
  %2047 = vperm.xlu0 %2046, %v874
  %v2048 = vpop.permute.xlu0 %2047
  %2049 = vset.pattern.permute.xlu0 1
  %2050 = vperm.xlu0 %2049, %v875
  %v2051 = vpop.permute.xlu0 %2050
  %2052 = vset.pattern.permute.xlu0 1
  %2053 = vperm.xlu0 %2052, %v876
  %v2054 = vpop.permute.xlu0 %2053
  %2055 = vset.pattern.permute.xlu0 1
  %2056 = vperm.xlu0 %2055, %v877
  %v2057 = vpop.permute.xlu0 %2056
  %2058 = vset.pattern.permute.xlu0 1
  %2059 = vperm.xlu0 %2058, %v878
  %v2060 = vpop.permute.xlu0 %2059
  %2061 = vset.pattern.permute.xlu0 1
  %2062 = vperm.xlu0 %2061, %v879
  %v2063 = vpop.permute.xlu0 %2062
  %vm2064 = vcmp.eq.s32.totalorder %v461, %v2042
  %vm2065 = vcmp.eq.s32.totalorder %v461, %v2045
  %vm2066 = vcmp.eq.s32.totalorder %v461, %v2048
  %vm2067 = vcmp.eq.s32.totalorder %v461, %v2051
  %vm2068 = vcmp.eq.s32.totalorder %v461, %v2054
  %vm2069 = vcmp.eq.s32.totalorder %v461, %v2057
  %vm2070 = vcmp.eq.s32.totalorder %v461, %v2060
  %vm2071 = vcmp.eq.s32.totalorder %v461, %v2063
  %2072 = vset.pattern.permute.xlu0 1
  %2073 = vperm.xlu0 %2072, %v1952
  %v2074 = vpop.permute.xlu0 %2073
  %2076 = vset.pattern.permute.xlu0 1
  %2077 = vperm.xlu0 %2076, %v1953
  %v2078 = vpop.permute.xlu0 %2077
  %2080 = vset.pattern.permute.xlu0 1
  %2081 = vperm.xlu0 %2080, %v1954
  %v2082 = vpop.permute.xlu0 %2081
  %2084 = vset.pattern.permute.xlu0 1
  %2085 = vperm.xlu0 %2084, %v1955
  %v2086 = vpop.permute.xlu0 %2085
  %2088 = vset.pattern.permute.xlu0 1
  %2089 = vperm.xlu0 %2088, %v1956
  %v2090 = vpop.permute.xlu0 %2089
  %2092 = vset.pattern.permute.xlu0 1
  %2093 = vperm.xlu0 %2092, %v1957
  %v2094 = vpop.permute.xlu0 %2093
  %2096 = vset.pattern.permute.xlu0 1
  %2097 = vperm.xlu0 %2096, %v1958
  %v2098 = vpop.permute.xlu0 %2097
  %2100 = vset.pattern.permute.xlu0 1
  %2101 = vperm.xlu0 %2100, %v1959
  %v2102 = vpop.permute.xlu0 %2101
  %v2104 = vsel %vm2064, %v2074, 0.0
  %v2105 = vsel %vm2065, %v2078, 0.0
  %v2106 = vsel %vm2066, %v2082, 0.0
  %v2107 = vsel %vm2067, %v2086, 0.0
  %v2108 = vsel %vm2068, %v2090, 0.0
  %v2109 = vsel %vm2069, %v2094, 0.0
  %v2110 = vsel %vm2070, %v2098, 0.0
  %v2111 = vsel %vm2071, %v2102, 0.0
  %2112 = vset.pattern.permute.xlu0 2
  %2113 = vperm.xlu0 %2112, %v872
  %v2114 = vpop.permute.xlu0 %2113
  %2115 = vset.pattern.permute.xlu0 2
  %2116 = vperm.xlu0 %2115, %v873
  %v2117 = vpop.permute.xlu0 %2116
  %2118 = vset.pattern.permute.xlu0 2
  %2119 = vperm.xlu0 %2118, %v874
  %v2120 = vpop.permute.xlu0 %2119
  %2121 = vset.pattern.permute.xlu0 2
  %2122 = vperm.xlu0 %2121, %v875
  %v2123 = vpop.permute.xlu0 %2122
  %2124 = vset.pattern.permute.xlu0 2
  %2125 = vperm.xlu0 %2124, %v876
  %v2126 = vpop.permute.xlu0 %2125
  %2127 = vset.pattern.permute.xlu0 2
  %2128 = vperm.xlu0 %2127, %v877
  %v2129 = vpop.permute.xlu0 %2128
  %2130 = vset.pattern.permute.xlu0 2
  %2131 = vperm.xlu0 %2130, %v878
  %v2132 = vpop.permute.xlu0 %2131
  %2133 = vset.pattern.permute.xlu0 2
  %2134 = vperm.xlu0 %2133, %v879
  %v2135 = vpop.permute.xlu0 %2134
  %vm2136 = vcmp.eq.s32.totalorder %v461, %v2114
  %vm2137 = vcmp.eq.s32.totalorder %v461, %v2117
  %vm2138 = vcmp.eq.s32.totalorder %v461, %v2120
  %vm2139 = vcmp.eq.s32.totalorder %v461, %v2123
  %vm2140 = vcmp.eq.s32.totalorder %v461, %v2126
  %vm2141 = vcmp.eq.s32.totalorder %v461, %v2129
  %vm2142 = vcmp.eq.s32.totalorder %v461, %v2132
  %vm2143 = vcmp.eq.s32.totalorder %v461, %v2135
  %2144 = vset.pattern.permute.xlu0 2
  %2145 = vperm.xlu0 %2144, %v1952
  %v2146 = vpop.permute.xlu0 %2145
  %2148 = vset.pattern.permute.xlu0 2
  %2149 = vperm.xlu0 %2148, %v1953
  %v2150 = vpop.permute.xlu0 %2149
  %2152 = vset.pattern.permute.xlu0 2
  %2153 = vperm.xlu0 %2152, %v1954
  %v2154 = vpop.permute.xlu0 %2153
  %2156 = vset.pattern.permute.xlu0 2
  %2157 = vperm.xlu0 %2156, %v1955
  %v2158 = vpop.permute.xlu0 %2157
  %2160 = vset.pattern.permute.xlu0 2
  %2161 = vperm.xlu0 %2160, %v1956
  %v2162 = vpop.permute.xlu0 %2161
  %2164 = vset.pattern.permute.xlu0 2
  %2165 = vperm.xlu0 %2164, %v1957
  %v2166 = vpop.permute.xlu0 %2165
  %2168 = vset.pattern.permute.xlu0 2
  %2169 = vperm.xlu0 %2168, %v1958
  %v2170 = vpop.permute.xlu0 %2169
  %2172 = vset.pattern.permute.xlu0 2
  %2173 = vperm.xlu0 %2172, %v1959
  %v2174 = vpop.permute.xlu0 %2173
  %v2176 = vsel %vm2136, %v2146, 0.0
  %v2177 = vsel %vm2137, %v2150, 0.0
  %v2178 = vsel %vm2138, %v2154, 0.0
  %v2179 = vsel %vm2139, %v2158, 0.0
  %v2180 = vsel %vm2140, %v2162, 0.0
  %v2181 = vsel %vm2141, %v2166, 0.0
  %v2182 = vsel %vm2142, %v2170, 0.0
  %v2183 = vsel %vm2143, %v2174, 0.0
  %v2184 = vadd.f32 %v2032, %v2176
  %v2185 = vadd.f32 %v2033, %v2177
  %v2186 = vadd.f32 %v2034, %v2178
  %v2187 = vadd.f32 %v2035, %v2179
  %v2188 = vadd.f32 %v2036, %v2180
  %v2189 = vadd.f32 %v2037, %v2181
  %v2190 = vadd.f32 %v2038, %v2182
  %v2191 = vadd.f32 %v2039, %v2183
  %2192 = vset.pattern.permute.xlu0 3
  %2193 = vperm.xlu0 %2192, %v872
  %v2194 = vpop.permute.xlu0 %2193
  %2195 = vset.pattern.permute.xlu0 3
  %2196 = vperm.xlu0 %2195, %v873
  %v2197 = vpop.permute.xlu0 %2196
  %2198 = vset.pattern.permute.xlu0 3
  %2199 = vperm.xlu0 %2198, %v874
  %v2200 = vpop.permute.xlu0 %2199
  %2201 = vset.pattern.permute.xlu0 3
  %2202 = vperm.xlu0 %2201, %v875
  %v2203 = vpop.permute.xlu0 %2202
  %2204 = vset.pattern.permute.xlu0 3
  %2205 = vperm.xlu0 %2204, %v876
  %v2206 = vpop.permute.xlu0 %2205
  %2207 = vset.pattern.permute.xlu0 3
  %2208 = vperm.xlu0 %2207, %v877
  %v2209 = vpop.permute.xlu0 %2208
  %2210 = vset.pattern.permute.xlu0 3
  %2211 = vperm.xlu0 %2210, %v878
  %v2212 = vpop.permute.xlu0 %2211
  %2213 = vset.pattern.permute.xlu0 3
  %2214 = vperm.xlu0 %2213, %v879
  %v2215 = vpop.permute.xlu0 %2214
  %vm2216 = vcmp.eq.s32.totalorder %v461, %v2194
  %vm2217 = vcmp.eq.s32.totalorder %v461, %v2197
  %vm2218 = vcmp.eq.s32.totalorder %v461, %v2200
  %vm2219 = vcmp.eq.s32.totalorder %v461, %v2203
  %vm2220 = vcmp.eq.s32.totalorder %v461, %v2206
  %vm2221 = vcmp.eq.s32.totalorder %v461, %v2209
  %vm2222 = vcmp.eq.s32.totalorder %v461, %v2212
  %vm2223 = vcmp.eq.s32.totalorder %v461, %v2215
  %2224 = vset.pattern.permute.xlu0 3
  %2225 = vperm.xlu0 %2224, %v1952
  %v2226 = vpop.permute.xlu0 %2225
  %2228 = vset.pattern.permute.xlu0 3
  %2229 = vperm.xlu0 %2228, %v1953
  %v2230 = vpop.permute.xlu0 %2229
  %2232 = vset.pattern.permute.xlu0 3
  %2233 = vperm.xlu0 %2232, %v1954
  %v2234 = vpop.permute.xlu0 %2233
  %2236 = vset.pattern.permute.xlu0 3
  %2237 = vperm.xlu0 %2236, %v1955
  %v2238 = vpop.permute.xlu0 %2237
  %2240 = vset.pattern.permute.xlu0 3
  %2241 = vperm.xlu0 %2240, %v1956
  %v2242 = vpop.permute.xlu0 %2241
  %2244 = vset.pattern.permute.xlu0 3
  %2245 = vperm.xlu0 %2244, %v1957
  %v2246 = vpop.permute.xlu0 %2245
  %2248 = vset.pattern.permute.xlu0 3
  %2249 = vperm.xlu0 %2248, %v1958
  %v2250 = vpop.permute.xlu0 %2249
  %2252 = vset.pattern.permute.xlu0 3
  %2253 = vperm.xlu0 %2252, %v1959
  %v2254 = vpop.permute.xlu0 %2253
  %v2256 = vsel %vm2216, %v2226, 0.0
  %v2257 = vsel %vm2217, %v2230, 0.0
  %v2258 = vsel %vm2218, %v2234, 0.0
  %v2259 = vsel %vm2219, %v2238, 0.0
  %v2260 = vsel %vm2220, %v2242, 0.0
  %v2261 = vsel %vm2221, %v2246, 0.0
  %v2262 = vsel %vm2222, %v2250, 0.0
  %v2263 = vsel %vm2223, %v2254, 0.0
  %v2264 = vadd.f32 %v2104, %v2256
  %v2265 = vadd.f32 %v2105, %v2257
  %v2266 = vadd.f32 %v2106, %v2258
  %v2267 = vadd.f32 %v2107, %v2259
  %v2268 = vadd.f32 %v2108, %v2260
  %v2269 = vadd.f32 %v2109, %v2261
  %v2270 = vadd.f32 %v2110, %v2262
  %v2271 = vadd.f32 %v2111, %v2263
  %v2272 = vadd.f32 %v1224, %v1304
  %v2273 = vadd.f32 %v1225, %v1305
  %v2274 = vadd.f32 %v1226, %v1306
  %v2275 = vadd.f32 %v1227, %v1307
  %v2276 = vadd.f32 %v1228, %v1308
  %v2277 = vadd.f32 %v1229, %v1309
  %v2278 = vadd.f32 %v1230, %v1310
  %v2279 = vadd.f32 %v1231, %v1311
  %v2280 = vadd.f32 %v1544, %v1624
  %v2281 = vadd.f32 %v1545, %v1625
  %v2282 = vadd.f32 %v1546, %v1626
  %v2283 = vadd.f32 %v1547, %v1627
  %v2284 = vadd.f32 %v1548, %v1628
  %v2285 = vadd.f32 %v1549, %v1629
  %v2286 = vadd.f32 %v1550, %v1630
  %v2287 = vadd.f32 %v1551, %v1631
  %v2288 = vadd.f32 %v1864, %v1944
  %v2289 = vadd.f32 %v1865, %v1945
  %v2290 = vadd.f32 %v1866, %v1946
  %v2291 = vadd.f32 %v1867, %v1947
  %v2292 = vadd.f32 %v1868, %v1948
  %v2293 = vadd.f32 %v1869, %v1949
  %v2294 = vadd.f32 %v1870, %v1950
  %v2295 = vadd.f32 %v1871, %v1951
  %v2296 = vadd.f32 %v2184, %v2264
  %v2297 = vadd.f32 %v2185, %v2265
  %v2298 = vadd.f32 %v2186, %v2266
  %v2299 = vadd.f32 %v2187, %v2267
  %v2300 = vadd.f32 %v2188, %v2268
  %v2301 = vadd.f32 %v2189, %v2269
  %v2302 = vadd.f32 %v2190, %v2270
  %v2303 = vadd.f32 %v2191, %v2271
  %v2304 = vadd.f32 %v2272, %v2280
  %v2305 = vadd.f32 %v2273, %v2281
  %v2306 = vadd.f32 %v2274, %v2282
  %v2307 = vadd.f32 %v2275, %v2283
  %v2308 = vadd.f32 %v2276, %v2284
  %v2309 = vadd.f32 %v2277, %v2285
  %v2310 = vadd.f32 %v2278, %v2286
  %v2311 = vadd.f32 %v2279, %v2287
  %v2312 = vadd.f32 %v2288, %v2296
  %v2313 = vadd.f32 %v2289, %v2297
  %v2314 = vadd.f32 %v2290, %v2298
  %v2315 = vadd.f32 %v2291, %v2299
  %v2316 = vadd.f32 %v2292, %v2300
  %v2317 = vadd.f32 %v2293, %v2301
  %v2318 = vadd.f32 %v2294, %v2302
  %v2319 = vadd.f32 %v2295, %v2303
  %v2320 = vadd.f32 %v2304, %v2312
  %v2321 = vadd.f32 %v2305, %v2313
  %v2322 = vadd.f32 %v2306, %v2314
  %v2323 = vadd.f32 %v2307, %v2315
  %v2324 = vadd.f32 %v2308, %v2316
  %v2325 = vadd.f32 %v2309, %v2317
  %v2326 = vadd.f32 %v2310, %v2318
  %v2327 = vadd.f32 %v2311, %v2319
  %v2329 = vsel %vm195, %v287, 0
  %v2332 = vsel %vm195, %v292, 0
  %v2335 = vsel %vm195, %v297, 0
  %v2338 = vsel %vm195, %v302, 0
  %v2341 = vsel %vm195, %v307, 0
  %v2344 = vsel %vm195, %v312, 0
  %v2347 = vsel %vm195, %v317, 0
  %v2350 = vsel %vm195, %v322, 0
  %2352 = vmatprep.subr.mxu0 0.0
  %2353 = vmatpush1.msra.mxu0 0.0
  %2354 = vmatprep.subr.mxu0 0.0
  %2355 = vmatpush1.msra.mxu0 0.0
  %2356 = vmatprep.subr.mxu0 0.0
  %2357 = vmatpush1.msra.mxu0 0.0
  %2358 = vmatprep.subr.mxu0 0.0
  %2359 = vmatpush1.msra.mxu0 0.0
  %2360 = vmatprep.subr.mxu0 0.0
  %2361 = vmatpush1.msra.mxu0 0.0
  %2362 = vmatprep.subr.mxu0 0.0
  %2363 = vmatpush1.msra.mxu0 0.0
  %2364 = vmatprep.subr.mxu0 0.0
  %2365 = vmatpush1.msra.mxu0 0.0
  %2366 = vmatprep.subr.mxu0 0.0
  %2367 = vmatpush1.msra.mxu0 0.0
  %2368 = vmatprep.subr.mxu0 0.0
  %2369 = vmatpush1.msra.mxu0 0.0
  %2370 = vmatprep.subr.mxu0 0.0
  %2371 = vmatpush1.msra.mxu0 0.0
  %2372 = vmatprep.subr.mxu0 0.0
  %2373 = vmatpush1.msra.mxu0 0.0
  %2374 = vmatprep.subr.mxu0 0.0
  %2375 = vmatpush1.msra.mxu0 0.0
  %2376 = vmatprep.subr.mxu0 0.0
  %2377 = vmatpush1.msra.mxu0 %v179
  %2378 = vmatprep.subr.mxu0 0.0
  %2379 = vmatpush1.msra.mxu0 %v178
  %2380 = vmatprep.subr.mxu0 0.0
  %2381 = vmatpush1.msra.mxu0 %v177
  %2382 = vmatprep.subr.mxu0 0.0
  %2383 = vmatpush1.msra.mxu0 %v176
  %2384 = vmatprep.subr.mxu0 0.0
  %2385 = vmatpush2.msra.mxu0 0.0
  %2386 = vmatprep.subr.mxu0 0.0
  %2387 = vmatpush2.msra.mxu0 0.0
  %2388 = vmatprep.subr.mxu0 0.0
  %2389 = vmatpush2.msra.mxu0 0.0
  %2390 = vmatprep.subr.mxu0 0.0
  %2391 = vmatpush2.msra.mxu0 0.0
  %2392 = vmatprep.subr.mxu0 0.0
  %2393 = vmatpush2.msra.mxu0 0.0
  %2394 = vmatprep.subr.mxu0 0.0
  %2395 = vmatpush2.msra.mxu0 0.0
  %2396 = vmatprep.subr.mxu0 0.0
  %2397 = vmatpush2.msra.mxu0 0.0
  %2398 = vmatprep.subr.mxu0 0.0
  %2399 = vmatpush2.msra.mxu0 0.0
  %2400 = vmatprep.subr.mxu0 0.0
  %2401 = vmatpush2.msra.mxu0 0.0
  %2402 = vmatprep.subr.mxu0 0.0
  %2403 = vmatpush2.msra.mxu0 0.0
  %2404 = vmatprep.subr.mxu0 0.0
  %2405 = vmatpush2.msra.mxu0 0.0
  %2406 = vmatprep.subr.mxu0 0.0
  %2407 = vmatpush2.msra.mxu0 0.0
  %2408 = vmatprep.subr.mxu0 0.0
  %2409 = vmatpush2.msra.mxu0 0.0
  %2410 = vmatprep.subr.mxu0 0.0
  %2411 = vmatpush2.msra.mxu0 0.0
  %2412 = vmatprep.subr.mxu0 0.0
  %2413 = vmatpush2.msra.mxu0 0.0
  %2414 = vmatprep.subr.mxu0 0.0
  %2415 = vmatpush2.msra.mxu0 0.0
  %2416 = vmatprep.mubr.f32.mxu0 0.0
  %2417 = vmatmul.mubr.f32.gmra.mxu0 %v2329
  %v2418 = vpop.f32.mrf.mxu0
  %v2419 = vadd.f32 0.0, %v2418
  %v2420 = vpop.f32.mrf.mxu0
  %2421 = vmatprep.mubr.f32.mxu0 0.0
  %2422 = vmatmul.mubr.f32.gmra.mxu0 %v2332
  %v2423 = vpop.f32.mrf.mxu0
  %v2424 = vadd.f32 0.0, %v2423
  %v2425 = vpop.f32.mrf.mxu0
  %2426 = vmatprep.mubr.f32.mxu0 0.0
  %2427 = vmatmul.mubr.f32.gmra.mxu0 %v2335
  %v2428 = vpop.f32.mrf.mxu0
  %v2429 = vadd.f32 0.0, %v2428
  %v2430 = vpop.f32.mrf.mxu0
  %2431 = vmatprep.mubr.f32.mxu0 0.0
  %2432 = vmatmul.mubr.f32.gmra.mxu0 %v2338
  %v2433 = vpop.f32.mrf.mxu0
  %v2434 = vadd.f32 0.0, %v2433
  %v2435 = vpop.f32.mrf.mxu0
  %2436 = vmatprep.mubr.f32.mxu0 0.0
  %2437 = vmatmul.mubr.f32.gmra.mxu0 %v2341
  %v2438 = vpop.f32.mrf.mxu0
  %v2439 = vadd.f32 0.0, %v2438
  %v2440 = vpop.f32.mrf.mxu0
  %2441 = vmatprep.mubr.f32.mxu0 0.0
  %2442 = vmatmul.mubr.f32.gmra.mxu0 %v2344
  %v2443 = vpop.f32.mrf.mxu0
  %v2444 = vadd.f32 0.0, %v2443
  %v2445 = vpop.f32.mrf.mxu0
  %2446 = vmatprep.mubr.f32.mxu0 0.0
  %2447 = vmatmul.mubr.f32.gmra.mxu0 %v2347
  %v2448 = vpop.f32.mrf.mxu0
  %v2449 = vadd.f32 0.0, %v2448
  %v2450 = vpop.f32.mrf.mxu0
  %2451 = vmatprep.mubr.f32.mxu0 0.0
  %2452 = vmatmul.mubr.f32.gmra.mxu0 %v2350
  %v2453 = vpop.f32.mrf.mxu0
  %v2454 = vadd.f32 0.0, %v2453
  %v2455 = vpop.f32.mrf.mxu0
  %2456 = vdwg.mxu0
  %v2458 = vlaneseq
  %v2459 = vshrl.u32 %v2458, 7
  %v2460 = vsub.s32 0, %v2459
  %v2461 = vrot.slane %v180, %v2460
  %vm2463 = vcmask 523264
  %v2465 = vsel %vm2463, %v2320, 0
  %v2468 = vsel %vm2463, %v2321, 0
  %v2471 = vsel %vm2463, %v2322, 0
  %v2474 = vsel %vm2463, %v2323, 0
  %v2477 = vsel %vm2463, %v2324, 0
  %v2480 = vsel %vm2463, %v2325, 0
  %v2483 = vsel %vm2463, %v2326, 0
  %v2486 = vsel %vm2463, %v2327, 0
  %2488 = vmatprep.subr.mxu0 0.0
  %2489 = vmatpush1.msra.mxu0 0.0
  %2490 = vmatprep.subr.mxu0 0.0
  %2491 = vmatpush1.msra.mxu0 0.0
  %2492 = vmatprep.subr.mxu0 0.0
  %2493 = vmatpush1.msra.mxu0 0.0
  %2494 = vmatprep.subr.mxu0 0.0
  %2495 = vmatpush1.msra.mxu0 0.0
  %2496 = vmatprep.subr.mxu0 0.0
  %2497 = vmatpush1.msra.mxu0 0.0
  %2498 = vmatprep.subr.mxu0 0.0
  %2499 = vmatpush1.msra.mxu0 0.0
  %2500 = vmatprep.subr.mxu0 0.0
  %2501 = vmatpush1.msra.mxu0 0.0
  %2502 = vmatprep.subr.mxu0 0.0
  %2503 = vmatpush1.msra.mxu0 0.0
  %2504 = vmatprep.subr.mxu0 0.0
  %2505 = vmatpush1.msra.mxu0 %v2454
  %2506 = vmatprep.subr.mxu0 0.0
  %2507 = vmatpush1.msra.mxu0 %v2449
  %2508 = vmatprep.subr.mxu0 0.0
  %2509 = vmatpush1.msra.mxu0 %v2444
  %2510 = vmatprep.subr.mxu0 0.0
  %2511 = vmatpush1.msra.mxu0 %v2439
  %2512 = vmatprep.subr.mxu0 0.0
  %2513 = vmatpush1.msra.mxu0 %v2434
  %2514 = vmatprep.subr.mxu0 0.0
  %2515 = vmatpush1.msra.mxu0 %v2429
  %2516 = vmatprep.subr.mxu0 0.0
  %2517 = vmatpush1.msra.mxu0 %v2424
  %2518 = vmatprep.subr.mxu0 0.0
  %2519 = vmatpush1.msra.mxu0 %v2419
  %2520 = vmatprep.subr.mxu0 0.0
  %2521 = vmatpush2.msra.mxu0 0.0
  %2522 = vmatprep.subr.mxu0 0.0
  %2523 = vmatpush2.msra.mxu0 0.0
  %2524 = vmatprep.subr.mxu0 0.0
  %2525 = vmatpush2.msra.mxu0 0.0
  %2526 = vmatprep.subr.mxu0 0.0
  %2527 = vmatpush2.msra.mxu0 0.0
  %2528 = vmatprep.subr.mxu0 0.0
  %2529 = vmatpush2.msra.mxu0 0.0
  %2530 = vmatprep.subr.mxu0 0.0
  %2531 = vmatpush2.msra.mxu0 0.0
  %2532 = vmatprep.subr.mxu0 0.0
  %2533 = vmatpush2.msra.mxu0 0.0
  %2534 = vmatprep.subr.mxu0 0.0
  %2535 = vmatpush2.msra.mxu0 0.0
  %2536 = vmatprep.subr.mxu0 0.0
  %2537 = vmatpush2.msra.mxu0 0.0
  %2538 = vmatprep.subr.mxu0 0.0
  %2539 = vmatpush2.msra.mxu0 0.0
  %2540 = vmatprep.subr.mxu0 0.0
  %2541 = vmatpush2.msra.mxu0 0.0
  %2542 = vmatprep.subr.mxu0 0.0
  %2543 = vmatpush2.msra.mxu0 0.0
  %2544 = vmatprep.subr.mxu0 0.0
  %2545 = vmatpush2.msra.mxu0 0.0
  %2546 = vmatprep.subr.mxu0 0.0
  %2547 = vmatpush2.msra.mxu0 0.0
  %2548 = vmatprep.subr.mxu0 0.0
  %2549 = vmatpush2.msra.mxu0 0.0
  %2550 = vmatprep.subr.mxu0 0.0
  %2551 = vmatpush2.msra.mxu0 0.0
  %2552 = vmatprep.mubr.f32.mxu0 0.0
  %2553 = vmatmul.mubr.f32.gmra.mxu0 %v2465
  %v2554 = vpop.f32.mrf.mxu0
  %v2555 = vadd.f32 %v2461, %v2554
  %v2556 = vpop.f32.mrf.mxu0
  %2557 = vmatprep.mubr.f32.mxu0 0.0
  %2558 = vmatmul.mubr.f32.gmra.mxu0 %v2468
  %v2559 = vpop.f32.mrf.mxu0
  %v2560 = vadd.f32 %v2461, %v2559
  %v2561 = vpop.f32.mrf.mxu0
  %2562 = vmatprep.mubr.f32.mxu0 0.0
  %2563 = vmatmul.mubr.f32.gmra.mxu0 %v2471
  %v2564 = vpop.f32.mrf.mxu0
  %v2565 = vadd.f32 %v2461, %v2564
  %v2566 = vpop.f32.mrf.mxu0
  %2567 = vmatprep.mubr.f32.mxu0 0.0
  %2568 = vmatmul.mubr.f32.gmra.mxu0 %v2474
  %v2569 = vpop.f32.mrf.mxu0
  %v2570 = vadd.f32 %v2461, %v2569
  %v2571 = vpop.f32.mrf.mxu0
  %2572 = vmatprep.mubr.f32.mxu0 0.0
  %2573 = vmatmul.mubr.f32.gmra.mxu0 %v2477
  %v2574 = vpop.f32.mrf.mxu0
  %v2575 = vadd.f32 %v2461, %v2574
  %v2576 = vpop.f32.mrf.mxu0
  %2577 = vmatprep.mubr.f32.mxu0 0.0
  %2578 = vmatmul.mubr.f32.gmra.mxu0 %v2480
  %v2579 = vpop.f32.mrf.mxu0
  %v2580 = vadd.f32 %v2461, %v2579
  %v2581 = vpop.f32.mrf.mxu0
  %2582 = vmatprep.mubr.f32.mxu0 0.0
  %2583 = vmatmul.mubr.f32.gmra.mxu0 %v2483
  %v2584 = vpop.f32.mrf.mxu0
  %v2585 = vadd.f32 %v2461, %v2584
  %v2586 = vpop.f32.mrf.mxu0
  %2587 = vmatprep.mubr.f32.mxu0 0.0
  %2588 = vmatmul.mubr.f32.gmra.mxu0 %v2486
  %v2589 = vpop.f32.mrf.mxu0
  %v2590 = vadd.f32 %v2461, %v2589
  %v2591 = vpop.f32.mrf.mxu0
  %2592 = vdwg.mxu0
  %v2593 = vadd.f32 %v2555, %v134
  %v2594 = vadd.f32 %v2560, %v135
  %v2595 = vadd.f32 %v2565, %v136
  %v2596 = vadd.f32 %v2570, %v137
  %v2597 = vadd.f32 %v2575, %v138
  %v2598 = vadd.f32 %v2580, %v139
  %v2599 = vadd.f32 %v2585, %v140
  %v2600 = vadd.f32 %v2590, %v141
  %v2601 = vld [vmem:[%s29] sm:$0x1]
  %v2602 = vld [vmem:[%s31] sm:$0x1]
  %v2603 = vsel %vm195, %v2593, 0.0
  %2604 = vadd.xlane.f32.xlu0 %v2603
  %v2605 = vpop.xlane.xlu0 %2604
  %v2606 = vsel %vm195, %v2594, 0.0
  %2607 = vadd.xlane.f32.xlu0 %v2606
  %v2608 = vpop.xlane.xlu0 %2607
  %v2609 = vsel %vm195, %v2595, 0.0
  %2610 = vadd.xlane.f32.xlu0 %v2609
  %v2611 = vpop.xlane.xlu0 %2610
  %v2612 = vsel %vm195, %v2596, 0.0
  %2613 = vadd.xlane.f32.xlu0 %v2612
  %v2614 = vpop.xlane.xlu0 %2613
  %v2615 = vsel %vm195, %v2597, 0.0
  %2616 = vadd.xlane.f32.xlu0 %v2615
  %v2617 = vpop.xlane.xlu0 %2616
  %v2618 = vsel %vm195, %v2598, 0.0
  %2619 = vadd.xlane.f32.xlu0 %v2618
  %v2620 = vpop.xlane.xlu0 %2619
  %v2621 = vsel %vm195, %v2599, 0.0
  %2622 = vadd.xlane.f32.xlu0 %v2621
  %v2623 = vpop.xlane.xlu0 %2622
  %v2624 = vsel %vm195, %v2600, 0.0
  %2625 = vadd.xlane.f32.xlu0 %v2624
  %v2626 = vpop.xlane.xlu0 %2625
  %v2627 = vrcp.pop 32.0
  %v2628 = vmul.f32 %v2605, %v2627
  %v2629 = vmul.f32 %v2608, %v2627
  %v2630 = vmul.f32 %v2611, %v2627
  %v2631 = vmul.f32 %v2614, %v2627
  %v2632 = vmul.f32 %v2617, %v2627
  %v2633 = vmul.f32 %v2620, %v2627
  %v2634 = vmul.f32 %v2623, %v2627
  %v2635 = vmul.f32 %v2626, %v2627
  %v2636 = vsub.f32 %v2593, %v2628
  %v2637 = vsub.f32 %v2594, %v2629
  %v2638 = vsub.f32 %v2595, %v2630
  %v2639 = vsub.f32 %v2596, %v2631
  %v2640 = vsub.f32 %v2597, %v2632
  %v2641 = vsub.f32 %v2598, %v2633
  %v2642 = vsub.f32 %v2599, %v2634
  %v2643 = vsub.f32 %v2600, %v2635
  %v2644 = vmul.f32 %v2636, %v2636
  %v2645 = vmul.f32 %v2637, %v2637
  %v2646 = vmul.f32 %v2638, %v2638
  %v2647 = vmul.f32 %v2639, %v2639
  %v2648 = vmul.f32 %v2640, %v2640
  %v2649 = vmul.f32 %v2641, %v2641
  %v2650 = vmul.f32 %v2642, %v2642
  %v2651 = vmul.f32 %v2643, %v2643
  %v2652 = vsel %vm195, %v2644, 0.0
  %2653 = vadd.xlane.f32.xlu0 %v2652
  %v2654 = vpop.xlane.xlu0 %2653
  %v2655 = vsel %vm195, %v2645, 0.0
  %2656 = vadd.xlane.f32.xlu0 %v2655
  %v2657 = vpop.xlane.xlu0 %2656
  %v2658 = vsel %vm195, %v2646, 0.0
  %2659 = vadd.xlane.f32.xlu0 %v2658
  %v2660 = vpop.xlane.xlu0 %2659
  %v2661 = vsel %vm195, %v2647, 0.0
  %2662 = vadd.xlane.f32.xlu0 %v2661
  %v2663 = vpop.xlane.xlu0 %2662
  %v2664 = vsel %vm195, %v2648, 0.0
  %2665 = vadd.xlane.f32.xlu0 %v2664
  %v2666 = vpop.xlane.xlu0 %2665
  %v2667 = vsel %vm195, %v2649, 0.0
  %2668 = vadd.xlane.f32.xlu0 %v2667
  %v2669 = vpop.xlane.xlu0 %2668
  %v2670 = vsel %vm195, %v2650, 0.0
  %2671 = vadd.xlane.f32.xlu0 %v2670
  %v2672 = vpop.xlane.xlu0 %2671
  %v2673 = vsel %vm195, %v2651, 0.0
  %2674 = vadd.xlane.f32.xlu0 %v2673
  %v2675 = vpop.xlane.xlu0 %2674
  %v2676 = vmul.f32 %v2654, %v2627
  %v2677 = vmul.f32 %v2657, %v2627
  %v2678 = vmul.f32 %v2660, %v2627
  %v2679 = vmul.f32 %v2663, %v2627
  %v2680 = vmul.f32 %v2666, %v2627
  %v2681 = vmul.f32 %v2669, %v2627
  %v2682 = vmul.f32 %v2672, %v2627
  %v2683 = vmul.f32 %v2675, %v2627
  %v2684 = vadd.f32 %v2676, 1e-05
  %v2685 = vadd.f32 %v2677, 1e-05
  %v2686 = vadd.f32 %v2678, 1e-05
  %v2687 = vadd.f32 %v2679, 1e-05
  %v2688 = vadd.f32 %v2680, 1e-05
  %v2689 = vadd.f32 %v2681, 1e-05
  %v2690 = vadd.f32 %v2682, 1e-05
  %v2691 = vadd.f32 %v2683, 1e-05
  %v2692 = vrsqrt.pop %v2684
  %v2693 = vrsqrt.pop %v2685
  %v2694 = vrsqrt.pop %v2686
  %v2695 = vrsqrt.pop %v2687
  %v2696 = vrsqrt.pop %v2688
  %v2697 = vrsqrt.pop %v2689
  %v2698 = vrsqrt.pop %v2690
  %v2699 = vrsqrt.pop %v2691
  %v2700 = vmul.f32 %v2636, %v2692
  %v2701 = vmul.f32 %v2637, %v2693
  %v2702 = vmul.f32 %v2638, %v2694
  %v2703 = vmul.f32 %v2639, %v2695
  %v2704 = vmul.f32 %v2640, %v2696
  %v2705 = vmul.f32 %v2641, %v2697
  %v2706 = vmul.f32 %v2642, %v2698
  %v2707 = vmul.f32 %v2643, %v2699
  %v2709 = vlaneseq
  %v2710 = vshrl.u32 %v2709, 7
  %v2711 = vsub.s32 0, %v2710
  %v2712 = vrot.slane %v2601, %v2711
  %v2714 = vmul.f32 %v2700, %v2712
  %v2715 = vmul.f32 %v2701, %v2712
  %v2716 = vmul.f32 %v2702, %v2712
  %v2717 = vmul.f32 %v2703, %v2712
  %v2718 = vmul.f32 %v2704, %v2712
  %v2719 = vmul.f32 %v2705, %v2712
  %v2720 = vmul.f32 %v2706, %v2712
  %v2721 = vmul.f32 %v2707, %v2712
  %v2723 = vlaneseq
  %v2724 = vshrl.u32 %v2723, 7
  %v2725 = vsub.s32 0, %v2724
  %v2726 = vrot.slane %v2602, %v2725
  %v2728 = vadd.f32 %v2714, %v2726
  %v2729 = vadd.f32 %v2715, %v2726
  %v2730 = vadd.f32 %v2716, %v2726
  %v2731 = vadd.f32 %v2717, %v2726
  %v2732 = vadd.f32 %v2718, %v2726
  %v2733 = vadd.f32 %v2719, %v2726
  %v2734 = vadd.f32 %v2720, %v2726
  %v2735 = vadd.f32 %v2721, %v2726
  %v2736 = vld [vmem:[%s7] sm:$0xff]
  %v2737 = vld [vmem:[%s7 + $0x8] sm:$0xff]
  %v2738 = vld [vmem:[%s7 + $0x10] sm:$0xff]
  %v2739 = vld [vmem:[%s7 + $0x18] sm:$0xff]
  %v2740 = vld [vmem:[%s7 + $0x20] sm:$0xff]
  %v2741 = vld [vmem:[%s7 + $0x28] sm:$0xff]
  %v2742 = vld [vmem:[%s7 + $0x30] sm:$0xff]
  %v2743 = vld [vmem:[%s7 + $0x38] sm:$0xff]
  %v2744 = vld [vmem:[%s7 + $0x40] sm:$0xff]
  %v2745 = vld [vmem:[%s7 + $0x48] sm:$0xff]
  %v2746 = vld [vmem:[%s7 + $0x50] sm:$0xf]
  %v2747 = vld [vmem:[%s13] sm:$0xff]
  %v2748 = vld [vmem:[%s13 + $0x8] sm:$0xff]
  %v2749 = vld [vmem:[%s13 + $0x10] sm:$0xff]
  %v2750 = vld [vmem:[%s13 + $0x18] sm:$0xff]
  %v2751 = vld [vmem:[%s13 + $0x20] sm:$0xff]
  %v2752 = vld [vmem:[%s13 + $0x28] sm:$0xff]
  %v2753 = vld [vmem:[%s13 + $0x30] sm:$0xff]
  %v2754 = vld [vmem:[%s13 + $0x38] sm:$0xff]
  %v2755 = vld [vmem:[%s15] sm:$0xff]
  %v2756 = vld [vmem:[%s15 + $0x8] sm:$0xff]
  %v2757 = vld [vmem:[%s15 + $0x10] sm:$0xff]
  %v2758 = vld [vmem:[%s15 + $0x18] sm:$0xff]
  %v2759 = vld [vmem:[%s15 + $0x20] sm:$0xff]
  %v2760 = vld [vmem:[%s15 + $0x28] sm:$0xff]
  %v2761 = vld [vmem:[%s15 + $0x30] sm:$0xff]
  %v2762 = vld [vmem:[%s15 + $0x38] sm:$0xff]
  %v2763 = vld [vmem:[%s33] sm:$0xff]
  %v2764 = vld [vmem:[%s33 + $0x8] sm:$0xff]
  %v2765 = vld [vmem:[%s33 + $0x10] sm:$0xff]
  %v2766 = vld [vmem:[%s33 + $0x18] sm:$0xff]
  %v2767 = vld [vmem:[%s35] sm:$0x1]
  %v2768 = vld [vmem:[%s37] sm:$0xff]
  %v2769 = vld [vmem:[%s37 + $0x8] sm:$0xff]
  %v2770 = vld [vmem:[%s37 + $0x10] sm:$0xff]
  %v2771 = vld [vmem:[%s37 + $0x18] sm:$0xff]
  %v2772 = vld [vmem:[%s39] sm:$0x1]
  %v2773 = vld [vmem:[%s41] sm:$0xff]
  %v2774 = vld [vmem:[%s41 + $0x8] sm:$0xff]
  %v2775 = vld [vmem:[%s41 + $0x10] sm:$0xff]
  %v2776 = vld [vmem:[%s41 + $0x18] sm:$0xff]
  %v2777 = vld [vmem:[%s43] sm:$0x1]
  %vm2778 = vcmp.lt.s32.totalorder %v461, 8
  %v2779 = vsel %vm2778, 4.0, 2.0
  %vm2780 = vcmp.lt.s32.totalorder %v461, 4
  %v2781 = vsel %vm2780, 8.0, %v2779
  %v2782 = vsel %vm2778, 4, 2
  %v2783 = vsel %vm2780, 8, %v2782
  %v2784 = vsel %vm2778, 64, 80
  %v2785 = vsel %vm2780, 0, %v2784
  %v2786 = vadd.f32 %v2728, %v126
  %v2787 = vadd.f32 %v2729, %v127
  %v2788 = vadd.f32 %v2730, %v128
  %v2789 = vadd.f32 %v2731, %v129
  %v2790 = vadd.f32 %v2732, %v130
  %v2791 = vadd.f32 %v2733, %v131
  %v2792 = vadd.f32 %v2734, %v132
  %v2793 = vadd.f32 %v2735, %v133
  %v2795 = vlaneseq
  %v2796 = vshrl.u32 %v2795, 7
  %v2797 = vsub.s32 0, %v2796
  %v2798 = vrot.slane %v2767, %v2797
  %v2801 = vsel %vm195, %v2736, 0
  %v2804 = vsel %vm195, %v2737, 0
  %v2807 = vsel %vm195, %v2738, 0
  %v2810 = vsel %vm195, %v2739, 0
  %v2813 = vsel %vm195, %v2740, 0
  %v2816 = vsel %vm195, %v2741, 0
  %v2819 = vsel %vm195, %v2742, 0
  %v2822 = vsel %vm195, %v2743, 0
  %v2825 = vsel %vm195, %v2744, 0
  %v2828 = vsel %vm195, %v2745, 0
  %v2831 = vsel %vm195, %v2746, 0
  %2833 = vmatprep.subr.mxu0 0.0
  %2834 = vmatpush1.msra.mxu0 0.0
  %2835 = vmatprep.subr.mxu0 0.0
  %2836 = vmatpush1.msra.mxu0 0.0
  %2837 = vmatprep.subr.mxu0 0.0
  %2838 = vmatpush1.msra.mxu0 0.0
  %2839 = vmatprep.subr.mxu0 0.0
  %2840 = vmatpush1.msra.mxu0 0.0
  %2841 = vmatprep.subr.mxu0 0.0
  %2842 = vmatpush1.msra.mxu0 0.0
  %2843 = vmatprep.subr.mxu0 0.0
  %2844 = vmatpush1.msra.mxu0 0.0
  %2845 = vmatprep.subr.mxu0 0.0
  %2846 = vmatpush1.msra.mxu0 0.0
  %2847 = vmatprep.subr.mxu0 0.0
  %2848 = vmatpush1.msra.mxu0 0.0
  %2849 = vmatprep.subr.mxu0 0.0
  %2850 = vmatpush1.msra.mxu0 0.0
  %2851 = vmatprep.subr.mxu0 0.0
  %2852 = vmatpush1.msra.mxu0 0.0
  %2853 = vmatprep.subr.mxu0 0.0
  %2854 = vmatpush1.msra.mxu0 0.0
  %2855 = vmatprep.subr.mxu0 0.0
  %2856 = vmatpush1.msra.mxu0 0.0
  %2857 = vmatprep.subr.mxu0 0.0
  %2858 = vmatpush1.msra.mxu0 %v2766
  %2859 = vmatprep.subr.mxu0 0.0
  %2860 = vmatpush1.msra.mxu0 %v2765
  %2861 = vmatprep.subr.mxu0 0.0
  %2862 = vmatpush1.msra.mxu0 %v2764
  %2863 = vmatprep.subr.mxu0 0.0
  %2864 = vmatpush1.msra.mxu0 %v2763
  %2865 = vmatprep.subr.mxu0 0.0
  %2866 = vmatpush2.msra.mxu0 0.0
  %2867 = vmatprep.subr.mxu0 0.0
  %2868 = vmatpush2.msra.mxu0 0.0
  %2869 = vmatprep.subr.mxu0 0.0
  %2870 = vmatpush2.msra.mxu0 0.0
  %2871 = vmatprep.subr.mxu0 0.0
  %2872 = vmatpush2.msra.mxu0 0.0
  %2873 = vmatprep.subr.mxu0 0.0
  %2874 = vmatpush2.msra.mxu0 0.0
  %2875 = vmatprep.subr.mxu0 0.0
  %2876 = vmatpush2.msra.mxu0 0.0
  %2877 = vmatprep.subr.mxu0 0.0
  %2878 = vmatpush2.msra.mxu0 0.0
  %2879 = vmatprep.subr.mxu0 0.0
  %2880 = vmatpush2.msra.mxu0 0.0
  %2881 = vmatprep.subr.mxu0 0.0
  %2882 = vmatpush2.msra.mxu0 0.0
  %2883 = vmatprep.subr.mxu0 0.0
  %2884 = vmatpush2.msra.mxu0 0.0
  %2885 = vmatprep.subr.mxu0 0.0
  %2886 = vmatpush2.msra.mxu0 0.0
  %2887 = vmatprep.subr.mxu0 0.0
  %2888 = vmatpush2.msra.mxu0 0.0
  %2889 = vmatprep.subr.mxu0 0.0
  %2890 = vmatpush2.msra.mxu0 0.0
  %2891 = vmatprep.subr.mxu0 0.0
  %2892 = vmatpush2.msra.mxu0 0.0
  %2893 = vmatprep.subr.mxu0 0.0
  %2894 = vmatpush2.msra.mxu0 0.0
  %2895 = vmatprep.subr.mxu0 0.0
  %2896 = vmatpush2.msra.mxu0 0.0
  %2897 = vmatprep.mubr.f32.mxu0 0.0
  %2898 = vmatmul.mubr.f32.gmra.mxu0 %v2801
  %v2899 = vpop.f32.mrf.mxu0
  %v2900 = vadd.f32 %v2798, %v2899
  %v2901 = vpop.f32.mrf.mxu0
  %2902 = vmatprep.mubr.f32.mxu0 0.0
  %2903 = vmatmul.mubr.f32.gmra.mxu0 %v2804
  %v2904 = vpop.f32.mrf.mxu0
  %v2905 = vadd.f32 %v2798, %v2904
  %v2906 = vpop.f32.mrf.mxu0
  %2907 = vmatprep.mubr.f32.mxu0 0.0
  %2908 = vmatmul.mubr.f32.gmra.mxu0 %v2807
  %v2909 = vpop.f32.mrf.mxu0
  %v2910 = vadd.f32 %v2798, %v2909
  %v2911 = vpop.f32.mrf.mxu0
  %2912 = vmatprep.mubr.f32.mxu0 0.0
  %2913 = vmatmul.mubr.f32.gmra.mxu0 %v2810
  %v2914 = vpop.f32.mrf.mxu0
  %v2915 = vadd.f32 %v2798, %v2914
  %v2916 = vpop.f32.mrf.mxu0
  %2917 = vmatprep.mubr.f32.mxu0 0.0
  %2918 = vmatmul.mubr.f32.gmra.mxu0 %v2813
  %v2919 = vpop.f32.mrf.mxu0
  %v2920 = vadd.f32 %v2798, %v2919
  %v2921 = vpop.f32.mrf.mxu0
  %2922 = vmatprep.mubr.f32.mxu0 0.0
  %2923 = vmatmul.mubr.f32.gmra.mxu0 %v2816
  %v2924 = vpop.f32.mrf.mxu0
  %v2925 = vadd.f32 %v2798, %v2924
  %v2926 = vpop.f32.mrf.mxu0
  %2927 = vmatprep.mubr.f32.mxu0 0.0
  %2928 = vmatmul.mubr.f32.gmra.mxu0 %v2819
  %v2929 = vpop.f32.mrf.mxu0
  %v2930 = vadd.f32 %v2798, %v2929
  %v2931 = vpop.f32.mrf.mxu0
  %2932 = vmatprep.mubr.f32.mxu0 0.0
  %2933 = vmatmul.mubr.f32.gmra.mxu0 %v2822
  %v2934 = vpop.f32.mrf.mxu0
  %v2935 = vadd.f32 %v2798, %v2934
  %v2936 = vpop.f32.mrf.mxu0
  %2937 = vmatprep.mubr.f32.mxu0 0.0
  %2938 = vmatmul.mubr.f32.gmra.mxu0 %v2825
  %v2939 = vpop.f32.mrf.mxu0
  %v2940 = vadd.f32 %v2798, %v2939
  %v2941 = vpop.f32.mrf.mxu0
  %2942 = vmatprep.mubr.f32.mxu0 0.0
  %2943 = vmatmul.mubr.f32.gmra.mxu0 %v2828
  %v2944 = vpop.f32.mrf.mxu0
  %v2945 = vadd.f32 %v2798, %v2944
  %v2946 = vpop.f32.mrf.mxu0
  %2947 = vmatprep.mubr.f32.mxu0 0.0
  %2948 = vmatmul.mubr.f32.gmra.mxu0 %v2831
  %v2949 = vpop.f32.mrf.mxu0
  %v2950 = vadd.f32 %v2798, %v2949
  %v2951 = vpop.f32.mrf.mxu0
  %2952 = vdwg.mxu0
  %v2954 = vlaneseq
  %v2955 = vshrl.u32 %v2954, 7
  %v2956 = vsub.s32 0, %v2955
  %v2957 = vrot.slane %v2772, %v2956
  %v2960 = vsel %vm195, %v2786, 0
  %v2963 = vsel %vm195, %v2787, 0
  %v2966 = vsel %vm195, %v2788, 0
  %v2969 = vsel %vm195, %v2789, 0
  %v2972 = vsel %vm195, %v2790, 0
  %v2975 = vsel %vm195, %v2791, 0
  %v2978 = vsel %vm195, %v2792, 0
  %v2981 = vsel %vm195, %v2793, 0
  %2983 = vmatprep.subr.mxu0 0.0
  %2984 = vmatpush1.msra.mxu0 0.0
  %2985 = vmatprep.subr.mxu0 0.0
  %2986 = vmatpush1.msra.mxu0 0.0
  %2987 = vmatprep.subr.mxu0 0.0
  %2988 = vmatpush1.msra.mxu0 0.0
  %2989 = vmatprep.subr.mxu0 0.0
  %2990 = vmatpush1.msra.mxu0 0.0
  %2991 = vmatprep.subr.mxu0 0.0
  %2992 = vmatpush1.msra.mxu0 0.0
  %2993 = vmatprep.subr.mxu0 0.0
  %2994 = vmatpush1.msra.mxu0 0.0
  %2995 = vmatprep.subr.mxu0 0.0
  %2996 = vmatpush1.msra.mxu0 0.0
  %2997 = vmatprep.subr.mxu0 0.0
  %2998 = vmatpush1.msra.mxu0 0.0
  %2999 = vmatprep.subr.mxu0 0.0
  %3000 = vmatpush1.msra.mxu0 0.0
  %3001 = vmatprep.subr.mxu0 0.0
  %3002 = vmatpush1.msra.mxu0 0.0
  %3003 = vmatprep.subr.mxu0 0.0
  %3004 = vmatpush1.msra.mxu0 0.0
  %3005 = vmatprep.subr.mxu0 0.0
  %3006 = vmatpush1.msra.mxu0 0.0
  %3007 = vmatprep.subr.mxu0 0.0
  %3008 = vmatpush1.msra.mxu0 %v2771
  %3009 = vmatprep.subr.mxu0 0.0
  %3010 = vmatpush1.msra.mxu0 %v2770
  %3011 = vmatprep.subr.mxu0 0.0
  %3012 = vmatpush1.msra.mxu0 %v2769
  %3013 = vmatprep.subr.mxu0 0.0
  %3014 = vmatpush1.msra.mxu0 %v2768
  %3015 = vmatprep.subr.mxu0 0.0
  %3016 = vmatpush2.msra.mxu0 0.0
  %3017 = vmatprep.subr.mxu0 0.0
  %3018 = vmatpush2.msra.mxu0 0.0
  %3019 = vmatprep.subr.mxu0 0.0
  %3020 = vmatpush2.msra.mxu0 0.0
  %3021 = vmatprep.subr.mxu0 0.0
  %3022 = vmatpush2.msra.mxu0 0.0
  %3023 = vmatprep.subr.mxu0 0.0
  %3024 = vmatpush2.msra.mxu0 0.0
  %3025 = vmatprep.subr.mxu0 0.0
  %3026 = vmatpush2.msra.mxu0 0.0
  %3027 = vmatprep.subr.mxu0 0.0
  %3028 = vmatpush2.msra.mxu0 0.0
  %3029 = vmatprep.subr.mxu0 0.0
  %3030 = vmatpush2.msra.mxu0 0.0
  %3031 = vmatprep.subr.mxu0 0.0
  %3032 = vmatpush2.msra.mxu0 0.0
  %3033 = vmatprep.subr.mxu0 0.0
  %3034 = vmatpush2.msra.mxu0 0.0
  %3035 = vmatprep.subr.mxu0 0.0
  %3036 = vmatpush2.msra.mxu0 0.0
  %3037 = vmatprep.subr.mxu0 0.0
  %3038 = vmatpush2.msra.mxu0 0.0
  %3039 = vmatprep.subr.mxu0 0.0
  %3040 = vmatpush2.msra.mxu0 0.0
  %3041 = vmatprep.subr.mxu0 0.0
  %3042 = vmatpush2.msra.mxu0 0.0
  %3043 = vmatprep.subr.mxu0 0.0
  %3044 = vmatpush2.msra.mxu0 0.0
  %3045 = vmatprep.subr.mxu0 0.0
  %3046 = vmatpush2.msra.mxu0 0.0
  %3047 = vmatprep.mubr.f32.mxu0 0.0
  %3048 = vmatmul.mubr.f32.gmra.mxu0 %v2960
  %v3049 = vpop.f32.mrf.mxu0
  %v3050 = vadd.f32 %v2957, %v3049
  %v3051 = vpop.f32.mrf.mxu0
  %3052 = vmatprep.mubr.f32.mxu0 0.0
  %3053 = vmatmul.mubr.f32.gmra.mxu0 %v2963
  %v3054 = vpop.f32.mrf.mxu0
  %v3055 = vadd.f32 %v2957, %v3054
  %v3056 = vpop.f32.mrf.mxu0
  %3057 = vmatprep.mubr.f32.mxu0 0.0
  %3058 = vmatmul.mubr.f32.gmra.mxu0 %v2966
  %v3059 = vpop.f32.mrf.mxu0
  %v3060 = vadd.f32 %v2957, %v3059
  %v3061 = vpop.f32.mrf.mxu0
  %3062 = vmatprep.mubr.f32.mxu0 0.0
  %3063 = vmatmul.mubr.f32.gmra.mxu0 %v2969
  %v3064 = vpop.f32.mrf.mxu0
  %v3065 = vadd.f32 %v2957, %v3064
  %v3066 = vpop.f32.mrf.mxu0
  %3067 = vmatprep.mubr.f32.mxu0 0.0
  %3068 = vmatmul.mubr.f32.gmra.mxu0 %v2972
  %v3069 = vpop.f32.mrf.mxu0
  %v3070 = vadd.f32 %v2957, %v3069
  %v3071 = vpop.f32.mrf.mxu0
  %3072 = vmatprep.mubr.f32.mxu0 0.0
  %3073 = vmatmul.mubr.f32.gmra.mxu0 %v2975
  %v3074 = vpop.f32.mrf.mxu0
  %v3075 = vadd.f32 %v2957, %v3074
  %v3076 = vpop.f32.mrf.mxu0
  %3077 = vmatprep.mubr.f32.mxu0 0.0
  %3078 = vmatmul.mubr.f32.gmra.mxu0 %v2978
  %v3079 = vpop.f32.mrf.mxu0
  %v3080 = vadd.f32 %v2957, %v3079
  %v3081 = vpop.f32.mrf.mxu0
  %3082 = vmatprep.mubr.f32.mxu0 0.0
  %3083 = vmatmul.mubr.f32.gmra.mxu0 %v2981
  %v3084 = vpop.f32.mrf.mxu0
  %v3085 = vadd.f32 %v2957, %v3084
  %v3086 = vpop.f32.mrf.mxu0
  %3087 = vdwg.mxu0
  %vm3088 = vcmask 294080
  %v3089 = vsel %vm3088, %v3050, -inf
  %3090 = vmax.xlane.f32.xlu0 %v3089
  %v3091 = vpop.xlane.xlu0 %3090
  %v3092 = vsel %vm3088, %v3055, -inf
  %3093 = vmax.xlane.f32.xlu0 %v3092
  %v3094 = vpop.xlane.xlu0 %3093
  %v3095 = vsel %vm3088, %v3060, -inf
  %3096 = vmax.xlane.f32.xlu0 %v3095
  %v3097 = vpop.xlane.xlu0 %3096
  %v3098 = vsel %vm3088, %v3065, -inf
  %3099 = vmax.xlane.f32.xlu0 %v3098
  %v3100 = vpop.xlane.xlu0 %3099
  %v3101 = vsel %vm3088, %v3070, -inf
  %3102 = vmax.xlane.f32.xlu0 %v3101
  %v3103 = vpop.xlane.xlu0 %3102
  %v3104 = vsel %vm3088, %v3075, -inf
  %3105 = vmax.xlane.f32.xlu0 %v3104
  %v3106 = vpop.xlane.xlu0 %3105
  %v3107 = vsel %vm3088, %v3080, -inf
  %3108 = vmax.xlane.f32.xlu0 %v3107
  %v3109 = vpop.xlane.xlu0 %3108
  %v3110 = vsel %vm3088, %v3085, -inf
  %3111 = vmax.xlane.f32.xlu0 %v3110
  %v3112 = vpop.xlane.xlu0 %3111
  %v3113 = vsub.f32 %v3050, %v3091
  %v3114 = vsub.f32 %v3055, %v3094
  %v3115 = vsub.f32 %v3060, %v3097
  %v3116 = vsub.f32 %v3065, %v3100
  %v3117 = vsub.f32 %v3070, %v3103
  %v3118 = vsub.f32 %v3075, %v3106
  %v3119 = vsub.f32 %v3080, %v3109
  %v3120 = vsub.f32 %v3085, %v3112
  %v3121 = vmul.f32 %v3113, 1.442695
  %v3122 = vpow.pop %v3121
  %v3123 = vmul.f32 %v3114, 1.442695
  %v3124 = vpow.pop %v3123
  %v3125 = vmul.f32 %v3115, 1.442695
  %v3126 = vpow.pop %v3125
  %v3127 = vmul.f32 %v3116, 1.442695
  %v3128 = vpow.pop %v3127
  %v3129 = vmul.f32 %v3117, 1.442695
  %v3130 = vpow.pop %v3129
  %v3131 = vmul.f32 %v3118, 1.442695
  %v3132 = vpow.pop %v3131
  %v3133 = vmul.f32 %v3119, 1.442695
  %v3134 = vpow.pop %v3133
  %v3135 = vmul.f32 %v3120, 1.442695
  %v3136 = vpow.pop %v3135
  %3145 = vrot.lane.b32.xlu0 %v3122, 104
  %v3146 = vpop.permute.xlu0 %3145
  %3147 = vrot.lane.b32.xlu0 %v3124, 104
  %v3148 = vpop.permute.xlu0 %3147
  %3149 = vrot.lane.b32.xlu0 %v3126, 104
  %v3150 = vpop.permute.xlu0 %3149
  %3151 = vrot.lane.b32.xlu0 %v3128, 104
  %v3152 = vpop.permute.xlu0 %3151
  %3153 = vrot.lane.b32.xlu0 %v3130, 104
  %v3154 = vpop.permute.xlu0 %3153
  %3155 = vrot.lane.b32.xlu0 %v3132, 104
  %v3156 = vpop.permute.xlu0 %3155
  %3157 = vrot.lane.b32.xlu0 %v3134, 104
  %v3158 = vpop.permute.xlu0 %3157
  %3159 = vrot.lane.b32.xlu0 %v3136, 104
  %v3160 = vpop.permute.xlu0 %3159
  %vm3169 = vcmask 97280
  %v3170 = vsel %vm3169, %v3146, 0.0
  %3171 = vadd.xlane.f32.xlu0 %v3170
  %v3172 = vpop.xlane.xlu0 %3171
  %v3173 = vsel %vm3169, %v3148, 0.0
  %3174 = vadd.xlane.f32.xlu0 %v3173
  %v3175 = vpop.xlane.xlu0 %3174
  %v3176 = vsel %vm3169, %v3150, 0.0
  %3177 = vadd.xlane.f32.xlu0 %v3176
  %v3178 = vpop.xlane.xlu0 %3177
  %v3179 = vsel %vm3169, %v3152, 0.0
  %3180 = vadd.xlane.f32.xlu0 %v3179
  %v3181 = vpop.xlane.xlu0 %3180
  %v3182 = vsel %vm3169, %v3154, 0.0
  %3183 = vadd.xlane.f32.xlu0 %v3182
  %v3184 = vpop.xlane.xlu0 %3183
  %v3185 = vsel %vm3169, %v3156, 0.0
  %3186 = vadd.xlane.f32.xlu0 %v3185
  %v3187 = vpop.xlane.xlu0 %3186
  %v3188 = vsel %vm3169, %v3158, 0.0
  %3189 = vadd.xlane.f32.xlu0 %v3188
  %v3190 = vpop.xlane.xlu0 %3189
  %v3191 = vsel %vm3169, %v3160, 0.0
  %3192 = vadd.xlane.f32.xlu0 %v3191
  %v3193 = vpop.xlane.xlu0 %3192
  %v3194 = vrcp.pop %v3172
  %v3195 = vrcp.pop %v3175
  %v3196 = vrcp.pop %v3178
  %v3197 = vrcp.pop %v3181
  %v3198 = vrcp.pop %v3184
  %v3199 = vrcp.pop %v3187
  %v3200 = vrcp.pop %v3190
  %v3201 = vrcp.pop %v3193
  %v3202 = vmul.f32 %v3122, %v3194
  %v3203 = vmul.f32 %v3124, %v3195
  %v3204 = vmul.f32 %v3126, %v3196
  %v3205 = vmul.f32 %v3128, %v3197
  %v3206 = vmul.f32 %v3130, %v3198
  %v3207 = vmul.f32 %v3132, %v3199
  %v3208 = vmul.f32 %v3134, %v3200
  %v3209 = vmul.f32 %v3136, %v3201
  %v3210 = vmul.f32 %v2747, %v2781
  %v3211 = vmul.f32 %v2748, %v2781
  %v3212 = vmul.f32 %v2749, %v2781
  %v3213 = vmul.f32 %v2750, %v2781
  %v3214 = vmul.f32 %v2751, %v2781
  %v3215 = vmul.f32 %v2752, %v2781
  %v3216 = vmul.f32 %v2753, %v2781
  %v3217 = vmul.f32 %v2754, %v2781
  %v3218 = vadd.f32 %v3210, %v3050
  %v3219 = vadd.f32 %v3211, %v3055
  %v3220 = vadd.f32 %v3212, %v3060
  %v3221 = vadd.f32 %v3213, %v3065
  %v3222 = vadd.f32 %v3214, %v3070
  %v3223 = vadd.f32 %v3215, %v3075
  %v3224 = vadd.f32 %v3216, %v3080
  %v3225 = vadd.f32 %v3217, %v3085
  %v3226 = vsub.f32 %v3218, 0.5
  %v3227 = vsub.f32 %v3219, 0.5
  %v3228 = vsub.f32 %v3220, 0.5
  %v3229 = vsub.f32 %v3221, 0.5
  %v3230 = vsub.f32 %v3222, 0.5
  %v3231 = vsub.f32 %v3223, 0.5
  %v3232 = vsub.f32 %v3224, 0.5
  %v3233 = vsub.f32 %v3225, 0.5
  %v3234 = vmul.f32 %v2755, %v2781
  %v3235 = vmul.f32 %v2756, %v2781
  %v3236 = vmul.f32 %v2757, %v2781
  %v3237 = vmul.f32 %v2758, %v2781
  %v3238 = vmul.f32 %v2759, %v2781
  %v3239 = vmul.f32 %v2760, %v2781
  %v3240 = vmul.f32 %v2761, %v2781
  %v3241 = vmul.f32 %v2762, %v2781
  %3250 = vrot.lane.b32.xlu0 %v3050, 116
  %v3251 = vpop.permute.xlu0 %3250
  %3252 = vrot.lane.b32.xlu0 %v3055, 116
  %v3253 = vpop.permute.xlu0 %3252
  %3254 = vrot.lane.b32.xlu0 %v3060, 116
  %v3255 = vpop.permute.xlu0 %3254
  %3256 = vrot.lane.b32.xlu0 %v3065, 116
  %v3257 = vpop.permute.xlu0 %3256
  %3258 = vrot.lane.b32.xlu0 %v3070, 116
  %v3259 = vpop.permute.xlu0 %3258
  %3260 = vrot.lane.b32.xlu0 %v3075, 116
  %v3261 = vpop.permute.xlu0 %3260
  %3262 = vrot.lane.b32.xlu0 %v3080, 116
  %v3263 = vpop.permute.xlu0 %3262
  %3264 = vrot.lane.b32.xlu0 %v3085, 116
  %v3265 = vpop.permute.xlu0 %3264
  %v3274 = vadd.f32 %v3234, %v3251
  %v3275 = vadd.f32 %v3235, %v3253
  %v3276 = vadd.f32 %v3236, %v3255
  %v3277 = vadd.f32 %v3237, %v3257
  %v3278 = vadd.f32 %v3238, %v3259
  %v3279 = vadd.f32 %v3239, %v3261
  %v3280 = vadd.f32 %v3240, %v3263
  %v3281 = vadd.f32 %v3241, %v3265
  %v3282 = vsub.f32 %v3274, 0.5
  %v3283 = vsub.f32 %v3275, 0.5
  %v3284 = vsub.f32 %v3276, 0.5
  %v3285 = vsub.f32 %v3277, 0.5
  %v3286 = vsub.f32 %v3278, 0.5
  %v3287 = vsub.f32 %v3279, 0.5
  %v3288 = vsub.f32 %v3280, 0.5
  %v3289 = vsub.f32 %v3281, 0.5
  %v3290 = vfloor.f32 %v3226
  %v3291 = vfloor.f32 %v3227
  %v3292 = vfloor.f32 %v3228
  %v3293 = vfloor.f32 %v3229
  %v3294 = vfloor.f32 %v3230
  %v3295 = vfloor.f32 %v3231
  %v3296 = vfloor.f32 %v3232
  %v3297 = vfloor.f32 %v3233
  %v3298 = vfloor.f32 %v3282
  %v3299 = vfloor.f32 %v3283
  %v3300 = vfloor.f32 %v3284
  %v3301 = vfloor.f32 %v3285
  %v3302 = vfloor.f32 %v3286
  %v3303 = vfloor.f32 %v3287
  %v3304 = vfloor.f32 %v3288
  %v3305 = vfloor.f32 %v3289
  %v3306 = vsub.f32 %v3226, %v3290
  %v3307 = vsub.f32 %v3227, %v3291
  %v3308 = vsub.f32 %v3228, %v3292
  %v3309 = vsub.f32 %v3229, %v3293
  %v3310 = vsub.f32 %v3230, %v3294
  %v3311 = vsub.f32 %v3231, %v3295
  %v3312 = vsub.f32 %v3232, %v3296
  %v3313 = vsub.f32 %v3233, %v3297
  %v3314 = vsub.f32 %v3282, %v3298
  %v3315 = vsub.f32 %v3283, %v3299
  %v3316 = vsub.f32 %v3284, %v3300
  %v3317 = vsub.f32 %v3285, %v3301
  %v3318 = vsub.f32 %v3286, %v3302
  %v3319 = vsub.f32 %v3287, %v3303
  %v3320 = vsub.f32 %v3288, %v3304
  %v3321 = vsub.f32 %v3289, %v3305
  %v3322 = vcvt.f32.s32.to.zero.pseudo %v3290
  %v3323 = vcvt.f32.s32.to.zero.pseudo %v3291
  %v3324 = vcvt.f32.s32.to.zero.pseudo %v3292
  %v3325 = vcvt.f32.s32.to.zero.pseudo %v3293
  %v3326 = vcvt.f32.s32.to.zero.pseudo %v3294
  %v3327 = vcvt.f32.s32.to.zero.pseudo %v3295
  %v3328 = vcvt.f32.s32.to.zero.pseudo %v3296
  %v3329 = vcvt.f32.s32.to.zero.pseudo %v3297
  %v3330 = vcvt.f32.s32.to.zero.pseudo %v3298
  %v3331 = vcvt.f32.s32.to.zero.pseudo %v3299
  %v3332 = vcvt.f32.s32.to.zero.pseudo %v3300
  %v3333 = vcvt.f32.s32.to.zero.pseudo %v3301
  %v3334 = vcvt.f32.s32.to.zero.pseudo %v3302
  %v3335 = vcvt.f32.s32.to.zero.pseudo %v3303
  %v3336 = vcvt.f32.s32.to.zero.pseudo %v3304
  %v3337 = vcvt.f32.s32.to.zero.pseudo %v3305
  %v3338 = vadd.s32 %v3322, 1
  %v3339 = vadd.s32 %v3323, 1
  %v3340 = vadd.s32 %v3324, 1
  %v3341 = vadd.s32 %v3325, 1
  %v3342 = vadd.s32 %v3326, 1
  %v3343 = vadd.s32 %v3327, 1
  %v3344 = vadd.s32 %v3328, 1
  %v3345 = vadd.s32 %v3329, 1
  %v3346 = vadd.s32 %v3330, 1
  %v3347 = vadd.s32 %v3331, 1
  %v3348 = vadd.s32 %v3332, 1
  %v3349 = vadd.s32 %v3333, 1
  %v3350 = vadd.s32 %v3334, 1
  %v3351 = vadd.s32 %v3335, 1
  %v3352 = vadd.s32 %v3336, 1
  %v3353 = vadd.s32 %v3337, 1
  %v3354 = vsub.f32 1.0, %v3306
  %v3355 = vsub.f32 1.0, %v3307
  %v3356 = vsub.f32 1.0, %v3308
  %v3357 = vsub.f32 1.0, %v3309
  %v3358 = vsub.f32 1.0, %v3310
  %v3359 = vsub.f32 1.0, %v3311
  %v3360 = vsub.f32 1.0, %v3312
  %v3361 = vsub.f32 1.0, %v3313
  %v3362 = vsub.f32 1.0, %v3314
  %v3363 = vsub.f32 1.0, %v3315
  %v3364 = vsub.f32 1.0, %v3316
  %v3365 = vsub.f32 1.0, %v3317
  %v3366 = vsub.f32 1.0, %v3318
  %v3367 = vsub.f32 1.0, %v3319
  %v3368 = vsub.f32 1.0, %v3320
  %v3369 = vsub.f32 1.0, %v3321
  %vm3370 = vcmp.ge.s32.totalorder %v3322, 0
  %vm3371 = vcmp.ge.s32.totalorder %v3323, 0
  %vm3372 = vcmp.ge.s32.totalorder %v3324, 0
  %vm3373 = vcmp.ge.s32.totalorder %v3325, 0
  %vm3374 = vcmp.ge.s32.totalorder %v3326, 0
  %vm3375 = vcmp.ge.s32.totalorder %v3327, 0
  %vm3376 = vcmp.ge.s32.totalorder %v3328, 0
  %vm3377 = vcmp.ge.s32.totalorder %v3329, 0
  %vm3378 = vcmp.lt.s32.totalorder %v3322, %v2783
  %vm3379 = vcmp.lt.s32.totalorder %v3323, %v2783
  %vm3380 = vcmp.lt.s32.totalorder %v3324, %v2783
  %vm3381 = vcmp.lt.s32.totalorder %v3325, %v2783
  %vm3382 = vcmp.lt.s32.totalorder %v3326, %v2783
  %vm3383 = vcmp.lt.s32.totalorder %v3327, %v2783
  %vm3384 = vcmp.lt.s32.totalorder %v3328, %v2783
  %vm3385 = vcmp.lt.s32.totalorder %v3329, %v2783
  %vm3386 = vmand %vm3370, %vm3378
  %vm3387 = vmand %vm3371, %vm3379
  %vm3388 = vmand %vm3372, %vm3380
  %vm3389 = vmand %vm3373, %vm3381
  %vm3390 = vmand %vm3374, %vm3382
  %vm3391 = vmand %vm3375, %vm3383
  %vm3392 = vmand %vm3376, %vm3384
  %vm3393 = vmand %vm3377, %vm3385
  %vm3394 = vcmp.ge.s32.totalorder %v3338, 0
  %vm3395 = vcmp.ge.s32.totalorder %v3339, 0
  %vm3396 = vcmp.ge.s32.totalorder %v3340, 0
  %vm3397 = vcmp.ge.s32.totalorder %v3341, 0
  %vm3398 = vcmp.ge.s32.totalorder %v3342, 0
  %vm3399 = vcmp.ge.s32.totalorder %v3343, 0
  %vm3400 = vcmp.ge.s32.totalorder %v3344, 0
  %vm3401 = vcmp.ge.s32.totalorder %v3345, 0
  %vm3402 = vcmp.lt.s32.totalorder %v3338, %v2783
  %vm3403 = vcmp.lt.s32.totalorder %v3339, %v2783
  %vm3404 = vcmp.lt.s32.totalorder %v3340, %v2783
  %vm3405 = vcmp.lt.s32.totalorder %v3341, %v2783
  %vm3406 = vcmp.lt.s32.totalorder %v3342, %v2783
  %vm3407 = vcmp.lt.s32.totalorder %v3343, %v2783
  %vm3408 = vcmp.lt.s32.totalorder %v3344, %v2783
  %vm3409 = vcmp.lt.s32.totalorder %v3345, %v2783
  %vm3410 = vmand %vm3394, %vm3402
  %vm3411 = vmand %vm3395, %vm3403
  %vm3412 = vmand %vm3396, %vm3404
  %vm3413 = vmand %vm3397, %vm3405
  %vm3414 = vmand %vm3398, %vm3406
  %vm3415 = vmand %vm3399, %vm3407
  %vm3416 = vmand %vm3400, %vm3408
  %vm3417 = vmand %vm3401, %vm3409
  %vm3418 = vcmp.ge.s32.totalorder %v3330, 0
  %vm3419 = vcmp.ge.s32.totalorder %v3331, 0
  %vm3420 = vcmp.ge.s32.totalorder %v3332, 0
  %vm3421 = vcmp.ge.s32.totalorder %v3333, 0
  %vm3422 = vcmp.ge.s32.totalorder %v3334, 0
  %vm3423 = vcmp.ge.s32.totalorder %v3335, 0
  %vm3424 = vcmp.ge.s32.totalorder %v3336, 0
  %vm3425 = vcmp.ge.s32.totalorder %v3337, 0
  %vm3426 = vcmp.lt.s32.totalorder %v3330, %v2783
  %vm3427 = vcmp.lt.s32.totalorder %v3331, %v2783
  %vm3428 = vcmp.lt.s32.totalorder %v3332, %v2783
  %vm3429 = vcmp.lt.s32.totalorder %v3333, %v2783
  %vm3430 = vcmp.lt.s32.totalorder %v3334, %v2783
  %vm3431 = vcmp.lt.s32.totalorder %v3335, %v2783
  %vm3432 = vcmp.lt.s32.totalorder %v3336, %v2783
  %vm3433 = vcmp.lt.s32.totalorder %v3337, %v2783
  %vm3434 = vmand %vm3418, %vm3426
  %vm3435 = vmand %vm3419, %vm3427
  %vm3436 = vmand %vm3420, %vm3428
  %vm3437 = vmand %vm3421, %vm3429
  %vm3438 = vmand %vm3422, %vm3430
  %vm3439 = vmand %vm3423, %vm3431
  %vm3440 = vmand %vm3424, %vm3432
  %vm3441 = vmand %vm3425, %vm3433
  %vm3442 = vcmp.ge.s32.totalorder %v3346, 0
  %vm3443 = vcmp.ge.s32.totalorder %v3347, 0
  %vm3444 = vcmp.ge.s32.totalorder %v3348, 0
  %vm3445 = vcmp.ge.s32.totalorder %v3349, 0
  %vm3446 = vcmp.ge.s32.totalorder %v3350, 0
  %vm3447 = vcmp.ge.s32.totalorder %v3351, 0
  %vm3448 = vcmp.ge.s32.totalorder %v3352, 0
  %vm3449 = vcmp.ge.s32.totalorder %v3353, 0
  %vm3450 = vcmp.lt.s32.totalorder %v3346, %v2783
  %vm3451 = vcmp.lt.s32.totalorder %v3347, %v2783
  %vm3452 = vcmp.lt.s32.totalorder %v3348, %v2783
  %vm3453 = vcmp.lt.s32.totalorder %v3349, %v2783
  %vm3454 = vcmp.lt.s32.totalorder %v3350, %v2783
  %vm3455 = vcmp.lt.s32.totalorder %v3351, %v2783
  %vm3456 = vcmp.lt.s32.totalorder %v3352, %v2783
  %vm3457 = vcmp.lt.s32.totalorder %v3353, %v2783
  %vm3458 = vmand %vm3442, %vm3450
  %vm3459 = vmand %vm3443, %vm3451
  %vm3460 = vmand %vm3444, %vm3452
  %vm3461 = vmand %vm3445, %vm3453
  %vm3462 = vmand %vm3446, %vm3454
  %vm3463 = vmand %vm3447, %vm3455
  %vm3464 = vmand %vm3448, %vm3456
  %vm3465 = vmand %vm3449, %vm3457
  %v3466 = vmul.u32 %v3330, %v2783
  %v3467 = vmul.u32 %v3331, %v2783
  %v3468 = vmul.u32 %v3332, %v2783
  %v3469 = vmul.u32 %v3333, %v2783
  %v3470 = vmul.u32 %v3334, %v2783
  %v3471 = vmul.u32 %v3335, %v2783
  %v3472 = vmul.u32 %v3336, %v2783
  %v3473 = vmul.u32 %v3337, %v2783
  %v3474 = vadd.s32 %v3466, %v3322
  %v3475 = vadd.s32 %v3467, %v3323
  %v3476 = vadd.s32 %v3468, %v3324
  %v3477 = vadd.s32 %v3469, %v3325
  %v3478 = vadd.s32 %v3470, %v3326
  %v3479 = vadd.s32 %v3471, %v3327
  %v3480 = vadd.s32 %v3472, %v3328
  %v3481 = vadd.s32 %v3473, %v3329
  %v3482 = vadd.s32 %v3474, %v2785
  %v3483 = vadd.s32 %v3475, %v2785
  %v3484 = vadd.s32 %v3476, %v2785
  %v3485 = vadd.s32 %v3477, %v2785
  %v3486 = vadd.s32 %v3478, %v2785
  %v3487 = vadd.s32 %v3479, %v2785
  %v3488 = vadd.s32 %v3480, %v2785
  %v3489 = vadd.s32 %v3481, %v2785
  %v3490 = vadd.s32 %v3482, 1
  %v3491 = vadd.s32 %v3483, 1
  %v3492 = vadd.s32 %v3484, 1
  %v3493 = vadd.s32 %v3485, 1
  %v3494 = vadd.s32 %v3486, 1
  %v3495 = vadd.s32 %v3487, 1
  %v3496 = vadd.s32 %v3488, 1
  %v3497 = vadd.s32 %v3489, 1
  %v3498 = vadd.s32 %v3482, %v2783
  %v3499 = vadd.s32 %v3483, %v2783
  %v3500 = vadd.s32 %v3484, %v2783
  %v3501 = vadd.s32 %v3485, %v2783
  %v3502 = vadd.s32 %v3486, %v2783
  %v3503 = vadd.s32 %v3487, %v2783
  %v3504 = vadd.s32 %v3488, %v2783
  %v3505 = vadd.s32 %v3489, %v2783
  %v3506 = vadd.s32 %v3498, 1
  %v3507 = vadd.s32 %v3499, 1
  %v3508 = vadd.s32 %v3500, 1
  %v3509 = vadd.s32 %v3501, 1
  %v3510 = vadd.s32 %v3502, 1
  %v3511 = vadd.s32 %v3503, 1
  %v3512 = vadd.s32 %v3504, 1
  %v3513 = vadd.s32 %v3505, 1
  %3522 = vrot.lane.b32.xlu0 %v3202, 104
  %v3523 = vpop.permute.xlu0 %3522
  %3524 = vrot.lane.b32.xlu0 %v3203, 104
  %v3525 = vpop.permute.xlu0 %3524
  %3526 = vrot.lane.b32.xlu0 %v3204, 104
  %v3527 = vpop.permute.xlu0 %3526
  %3528 = vrot.lane.b32.xlu0 %v3205, 104
  %v3529 = vpop.permute.xlu0 %3528
  %3530 = vrot.lane.b32.xlu0 %v3206, 104
  %v3531 = vpop.permute.xlu0 %3530
  %3532 = vrot.lane.b32.xlu0 %v3207, 104
  %v3533 = vpop.permute.xlu0 %3532
  %3534 = vrot.lane.b32.xlu0 %v3208, 104
  %v3535 = vpop.permute.xlu0 %3534
  %3536 = vrot.lane.b32.xlu0 %v3209, 104
  %v3537 = vpop.permute.xlu0 %3536
  %v3546 = vmul.f32 %v3354, %v3523
  %v3547 = vmul.f32 %v3355, %v3525
  %v3548 = vmul.f32 %v3356, %v3527
  %v3549 = vmul.f32 %v3357, %v3529
  %v3550 = vmul.f32 %v3358, %v3531
  %v3551 = vmul.f32 %v3359, %v3533
  %v3552 = vmul.f32 %v3360, %v3535
  %v3553 = vmul.f32 %v3361, %v3537
  %v3554 = vmul.f32 %v3306, %v3523
  %v3555 = vmul.f32 %v3307, %v3525
  %v3556 = vmul.f32 %v3308, %v3527
  %v3557 = vmul.f32 %v3309, %v3529
  %v3558 = vmul.f32 %v3310, %v3531
  %v3559 = vmul.f32 %v3311, %v3533
  %v3560 = vmul.f32 %v3312, %v3535
  %v3561 = vmul.f32 %v3313, %v3537
  %vm3562 = vmand %vm3386, %vm3434
  %vm3563 = vmand %vm3387, %vm3435
  %vm3564 = vmand %vm3388, %vm3436
  %vm3565 = vmand %vm3389, %vm3437
  %vm3566 = vmand %vm3390, %vm3438
  %vm3567 = vmand %vm3391, %vm3439
  %vm3568 = vmand %vm3392, %vm3440
  %vm3569 = vmand %vm3393, %vm3441
  %v3570 = vmul.f32 %v3546, %v3362
  %v3571 = vmul.f32 %v3547, %v3363
  %v3572 = vmul.f32 %v3548, %v3364
  %v3573 = vmul.f32 %v3549, %v3365
  %v3574 = vmul.f32 %v3550, %v3366
  %v3575 = vmul.f32 %v3551, %v3367
  %v3576 = vmul.f32 %v3552, %v3368
  %v3577 = vmul.f32 %v3553, %v3369
  %vm3578 = vmand %vm3410, %vm3434
  %vm3579 = vmand %vm3411, %vm3435
  %vm3580 = vmand %vm3412, %vm3436
  %vm3581 = vmand %vm3413, %vm3437
  %vm3582 = vmand %vm3414, %vm3438
  %vm3583 = vmand %vm3415, %vm3439
  %vm3584 = vmand %vm3416, %vm3440
  %vm3585 = vmand %vm3417, %vm3441
  %v3586 = vmul.f32 %v3554, %v3362
  %v3587 = vmul.f32 %v3555, %v3363
  %v3588 = vmul.f32 %v3556, %v3364
  %v3589 = vmul.f32 %v3557, %v3365
  %v3590 = vmul.f32 %v3558, %v3366
  %v3591 = vmul.f32 %v3559, %v3367
  %v3592 = vmul.f32 %v3560, %v3368
  %v3593 = vmul.f32 %v3561, %v3369
  %vm3594 = vmand %vm3386, %vm3458
  %vm3595 = vmand %vm3387, %vm3459
  %vm3596 = vmand %vm3388, %vm3460
  %vm3597 = vmand %vm3389, %vm3461
  %vm3598 = vmand %vm3390, %vm3462
  %vm3599 = vmand %vm3391, %vm3463
  %vm3600 = vmand %vm3392, %vm3464
  %vm3601 = vmand %vm3393, %vm3465
  %v3602 = vmul.f32 %v3546, %v3314
  %v3603 = vmul.f32 %v3547, %v3315
  %v3604 = vmul.f32 %v3548, %v3316
  %v3605 = vmul.f32 %v3549, %v3317
  %v3606 = vmul.f32 %v3550, %v3318
  %v3607 = vmul.f32 %v3551, %v3319
  %v3608 = vmul.f32 %v3552, %v3320
  %v3609 = vmul.f32 %v3553, %v3321
  %vm3610 = vmand %vm3410, %vm3458
  %vm3611 = vmand %vm3411, %vm3459
  %vm3612 = vmand %vm3412, %vm3460
  %vm3613 = vmand %vm3413, %vm3461
  %vm3614 = vmand %vm3414, %vm3462
  %vm3615 = vmand %vm3415, %vm3463
  %vm3616 = vmand %vm3416, %vm3464
  %vm3617 = vmand %vm3417, %vm3465
  %v3618 = vmul.f32 %v3554, %v3314
  %v3619 = vmul.f32 %v3555, %v3315
  %v3620 = vmul.f32 %v3556, %v3316
  %v3621 = vmul.f32 %v3557, %v3317
  %v3622 = vmul.f32 %v3558, %v3318
  %v3623 = vmul.f32 %v3559, %v3319
  %v3624 = vmul.f32 %v3560, %v3320
  %v3625 = vmul.f32 %v3561, %v3321
  %v3626 = vsel %vm3562, %v3570, 0.0
  %v3627 = vsel %vm3563, %v3571, 0.0
  %v3628 = vsel %vm3564, %v3572, 0.0
  %v3629 = vsel %vm3565, %v3573, 0.0
  %v3630 = vsel %vm3566, %v3574, 0.0
  %v3631 = vsel %vm3567, %v3575, 0.0
  %v3632 = vsel %vm3568, %v3576, 0.0
  %v3633 = vsel %vm3569, %v3577, 0.0
  %3634 = vset.pattern.permute.xlu0 0
  %3635 = vperm.xlu0 %3634, %v3482
  %v3636 = vpop.permute.xlu0 %3635
  %3637 = vset.pattern.permute.xlu0 0
  %3638 = vperm.xlu0 %3637, %v3483
  %v3639 = vpop.permute.xlu0 %3638
  %3640 = vset.pattern.permute.xlu0 0
  %3641 = vperm.xlu0 %3640, %v3484
  %v3642 = vpop.permute.xlu0 %3641
  %3643 = vset.pattern.permute.xlu0 0
  %3644 = vperm.xlu0 %3643, %v3485
  %v3645 = vpop.permute.xlu0 %3644
  %3646 = vset.pattern.permute.xlu0 0
  %3647 = vperm.xlu0 %3646, %v3486
  %v3648 = vpop.permute.xlu0 %3647
  %3649 = vset.pattern.permute.xlu0 0
  %3650 = vperm.xlu0 %3649, %v3487
  %v3651 = vpop.permute.xlu0 %3650
  %3652 = vset.pattern.permute.xlu0 0
  %3653 = vperm.xlu0 %3652, %v3488
  %v3654 = vpop.permute.xlu0 %3653
  %3655 = vset.pattern.permute.xlu0 0
  %3656 = vperm.xlu0 %3655, %v3489
  %v3657 = vpop.permute.xlu0 %3656
  %vm3658 = vcmp.eq.s32.totalorder %v461, %v3636
  %vm3659 = vcmp.eq.s32.totalorder %v461, %v3639
  %vm3660 = vcmp.eq.s32.totalorder %v461, %v3642
  %vm3661 = vcmp.eq.s32.totalorder %v461, %v3645
  %vm3662 = vcmp.eq.s32.totalorder %v461, %v3648
  %vm3663 = vcmp.eq.s32.totalorder %v461, %v3651
  %vm3664 = vcmp.eq.s32.totalorder %v461, %v3654
  %vm3665 = vcmp.eq.s32.totalorder %v461, %v3657
  %3667 = vset.pattern.permute.xlu0 0
  %3668 = vperm.xlu0 %3667, %v3626
  %v3669 = vpop.permute.xlu0 %3668
  %3672 = vset.pattern.permute.xlu0 0
  %3673 = vperm.xlu0 %3672, %v3627
  %v3674 = vpop.permute.xlu0 %3673
  %3677 = vset.pattern.permute.xlu0 0
  %3678 = vperm.xlu0 %3677, %v3628
  %v3679 = vpop.permute.xlu0 %3678
  %3682 = vset.pattern.permute.xlu0 0
  %3683 = vperm.xlu0 %3682, %v3629
  %v3684 = vpop.permute.xlu0 %3683
  %3687 = vset.pattern.permute.xlu0 0
  %3688 = vperm.xlu0 %3687, %v3630
  %v3689 = vpop.permute.xlu0 %3688
  %3692 = vset.pattern.permute.xlu0 0
  %3693 = vperm.xlu0 %3692, %v3631
  %v3694 = vpop.permute.xlu0 %3693
  %3697 = vset.pattern.permute.xlu0 0
  %3698 = vperm.xlu0 %3697, %v3632
  %v3699 = vpop.permute.xlu0 %3698
  %3702 = vset.pattern.permute.xlu0 0
  %3703 = vperm.xlu0 %3702, %v3633
  %v3704 = vpop.permute.xlu0 %3703
  %v3706 = vsel %vm3658, %v3669, 0.0
  %v3707 = vsel %vm3659, %v3674, 0.0
  %v3708 = vsel %vm3660, %v3679, 0.0
  %v3709 = vsel %vm3661, %v3684, 0.0
  %v3710 = vsel %vm3662, %v3689, 0.0
  %v3711 = vsel %vm3663, %v3694, 0.0
  %v3712 = vsel %vm3664, %v3699, 0.0
  %v3713 = vsel %vm3665, %v3704, 0.0
  %3714 = vset.pattern.permute.xlu0 1
  %3715 = vperm.xlu0 %3714, %v3482
  %v3716 = vpop.permute.xlu0 %3715
  %3717 = vset.pattern.permute.xlu0 1
  %3718 = vperm.xlu0 %3717, %v3483
  %v3719 = vpop.permute.xlu0 %3718
  %3720 = vset.pattern.permute.xlu0 1
  %3721 = vperm.xlu0 %3720, %v3484
  %v3722 = vpop.permute.xlu0 %3721
  %3723 = vset.pattern.permute.xlu0 1
  %3724 = vperm.xlu0 %3723, %v3485
  %v3725 = vpop.permute.xlu0 %3724
  %3726 = vset.pattern.permute.xlu0 1
  %3727 = vperm.xlu0 %3726, %v3486
  %v3728 = vpop.permute.xlu0 %3727
  %3729 = vset.pattern.permute.xlu0 1
  %3730 = vperm.xlu0 %3729, %v3487
  %v3731 = vpop.permute.xlu0 %3730
  %3732 = vset.pattern.permute.xlu0 1
  %3733 = vperm.xlu0 %3732, %v3488
  %v3734 = vpop.permute.xlu0 %3733
  %3735 = vset.pattern.permute.xlu0 1
  %3736 = vperm.xlu0 %3735, %v3489
  %v3737 = vpop.permute.xlu0 %3736
  %vm3738 = vcmp.eq.s32.totalorder %v461, %v3716
  %vm3739 = vcmp.eq.s32.totalorder %v461, %v3719
  %vm3740 = vcmp.eq.s32.totalorder %v461, %v3722
  %vm3741 = vcmp.eq.s32.totalorder %v461, %v3725
  %vm3742 = vcmp.eq.s32.totalorder %v461, %v3728
  %vm3743 = vcmp.eq.s32.totalorder %v461, %v3731
  %vm3744 = vcmp.eq.s32.totalorder %v461, %v3734
  %vm3745 = vcmp.eq.s32.totalorder %v461, %v3737
  %3746 = vset.pattern.permute.xlu0 1
  %3747 = vperm.xlu0 %3746, %v3626
  %v3748 = vpop.permute.xlu0 %3747
  %3750 = vset.pattern.permute.xlu0 1
  %3751 = vperm.xlu0 %3750, %v3627
  %v3752 = vpop.permute.xlu0 %3751
  %3754 = vset.pattern.permute.xlu0 1
  %3755 = vperm.xlu0 %3754, %v3628
  %v3756 = vpop.permute.xlu0 %3755
  %3758 = vset.pattern.permute.xlu0 1
  %3759 = vperm.xlu0 %3758, %v3629
  %v3760 = vpop.permute.xlu0 %3759
  %3762 = vset.pattern.permute.xlu0 1
  %3763 = vperm.xlu0 %3762, %v3630
  %v3764 = vpop.permute.xlu0 %3763
  %3766 = vset.pattern.permute.xlu0 1
  %3767 = vperm.xlu0 %3766, %v3631
  %v3768 = vpop.permute.xlu0 %3767
  %3770 = vset.pattern.permute.xlu0 1
  %3771 = vperm.xlu0 %3770, %v3632
  %v3772 = vpop.permute.xlu0 %3771
  %3774 = vset.pattern.permute.xlu0 1
  %3775 = vperm.xlu0 %3774, %v3633
  %v3776 = vpop.permute.xlu0 %3775
  %v3778 = vsel %vm3738, %v3748, 0.0
  %v3779 = vsel %vm3739, %v3752, 0.0
  %v3780 = vsel %vm3740, %v3756, 0.0
  %v3781 = vsel %vm3741, %v3760, 0.0
  %v3782 = vsel %vm3742, %v3764, 0.0
  %v3783 = vsel %vm3743, %v3768, 0.0
  %v3784 = vsel %vm3744, %v3772, 0.0
  %v3785 = vsel %vm3745, %v3776, 0.0
  %3786 = vset.pattern.permute.xlu0 2
  %3787 = vperm.xlu0 %3786, %v3482
  %v3788 = vpop.permute.xlu0 %3787
  %3789 = vset.pattern.permute.xlu0 2
  %3790 = vperm.xlu0 %3789, %v3483
  %v3791 = vpop.permute.xlu0 %3790
  %3792 = vset.pattern.permute.xlu0 2
  %3793 = vperm.xlu0 %3792, %v3484
  %v3794 = vpop.permute.xlu0 %3793
  %3795 = vset.pattern.permute.xlu0 2
  %3796 = vperm.xlu0 %3795, %v3485
  %v3797 = vpop.permute.xlu0 %3796
  %3798 = vset.pattern.permute.xlu0 2
  %3799 = vperm.xlu0 %3798, %v3486
  %v3800 = vpop.permute.xlu0 %3799
  %3801 = vset.pattern.permute.xlu0 2
  %3802 = vperm.xlu0 %3801, %v3487
  %v3803 = vpop.permute.xlu0 %3802
  %3804 = vset.pattern.permute.xlu0 2
  %3805 = vperm.xlu0 %3804, %v3488
  %v3806 = vpop.permute.xlu0 %3805
  %3807 = vset.pattern.permute.xlu0 2
  %3808 = vperm.xlu0 %3807, %v3489
  %v3809 = vpop.permute.xlu0 %3808
  %vm3810 = vcmp.eq.s32.totalorder %v461, %v3788
  %vm3811 = vcmp.eq.s32.totalorder %v461, %v3791
  %vm3812 = vcmp.eq.s32.totalorder %v461, %v3794
  %vm3813 = vcmp.eq.s32.totalorder %v461, %v3797
  %vm3814 = vcmp.eq.s32.totalorder %v461, %v3800
  %vm3815 = vcmp.eq.s32.totalorder %v461, %v3803
  %vm3816 = vcmp.eq.s32.totalorder %v461, %v3806
  %vm3817 = vcmp.eq.s32.totalorder %v461, %v3809
  %3818 = vset.pattern.permute.xlu0 2
  %3819 = vperm.xlu0 %3818, %v3626
  %v3820 = vpop.permute.xlu0 %3819
  %3822 = vset.pattern.permute.xlu0 2
  %3823 = vperm.xlu0 %3822, %v3627
  %v3824 = vpop.permute.xlu0 %3823
  %3826 = vset.pattern.permute.xlu0 2
  %3827 = vperm.xlu0 %3826, %v3628
  %v3828 = vpop.permute.xlu0 %3827
  %3830 = vset.pattern.permute.xlu0 2
  %3831 = vperm.xlu0 %3830, %v3629
  %v3832 = vpop.permute.xlu0 %3831
  %3834 = vset.pattern.permute.xlu0 2
  %3835 = vperm.xlu0 %3834, %v3630
  %v3836 = vpop.permute.xlu0 %3835
  %3838 = vset.pattern.permute.xlu0 2
  %3839 = vperm.xlu0 %3838, %v3631
  %v3840 = vpop.permute.xlu0 %3839
  %3842 = vset.pattern.permute.xlu0 2
  %3843 = vperm.xlu0 %3842, %v3632
  %v3844 = vpop.permute.xlu0 %3843
  %3846 = vset.pattern.permute.xlu0 2
  %3847 = vperm.xlu0 %3846, %v3633
  %v3848 = vpop.permute.xlu0 %3847
  %v3850 = vsel %vm3810, %v3820, 0.0
  %v3851 = vsel %vm3811, %v3824, 0.0
  %v3852 = vsel %vm3812, %v3828, 0.0
  %v3853 = vsel %vm3813, %v3832, 0.0
  %v3854 = vsel %vm3814, %v3836, 0.0
  %v3855 = vsel %vm3815, %v3840, 0.0
  %v3856 = vsel %vm3816, %v3844, 0.0
  %v3857 = vsel %vm3817, %v3848, 0.0
  %v3858 = vadd.f32 %v3706, %v3850
  %v3859 = vadd.f32 %v3707, %v3851
  %v3860 = vadd.f32 %v3708, %v3852
  %v3861 = vadd.f32 %v3709, %v3853
  %v3862 = vadd.f32 %v3710, %v3854
  %v3863 = vadd.f32 %v3711, %v3855
  %v3864 = vadd.f32 %v3712, %v3856
  %v3865 = vadd.f32 %v3713, %v3857
  %3866 = vset.pattern.permute.xlu0 3
  %3867 = vperm.xlu0 %3866, %v3482
  %v3868 = vpop.permute.xlu0 %3867
  %3869 = vset.pattern.permute.xlu0 3
  %3870 = vperm.xlu0 %3869, %v3483
  %v3871 = vpop.permute.xlu0 %3870
  %3872 = vset.pattern.permute.xlu0 3
  %3873 = vperm.xlu0 %3872, %v3484
  %v3874 = vpop.permute.xlu0 %3873
  %3875 = vset.pattern.permute.xlu0 3
  %3876 = vperm.xlu0 %3875, %v3485
  %v3877 = vpop.permute.xlu0 %3876
  %3878 = vset.pattern.permute.xlu0 3
  %3879 = vperm.xlu0 %3878, %v3486
  %v3880 = vpop.permute.xlu0 %3879
  %3881 = vset.pattern.permute.xlu0 3
  %3882 = vperm.xlu0 %3881, %v3487
  %v3883 = vpop.permute.xlu0 %3882
  %3884 = vset.pattern.permute.xlu0 3
  %3885 = vperm.xlu0 %3884, %v3488
  %v3886 = vpop.permute.xlu0 %3885
  %3887 = vset.pattern.permute.xlu0 3
  %3888 = vperm.xlu0 %3887, %v3489
  %v3889 = vpop.permute.xlu0 %3888
  %vm3890 = vcmp.eq.s32.totalorder %v461, %v3868
  %vm3891 = vcmp.eq.s32.totalorder %v461, %v3871
  %vm3892 = vcmp.eq.s32.totalorder %v461, %v3874
  %vm3893 = vcmp.eq.s32.totalorder %v461, %v3877
  %vm3894 = vcmp.eq.s32.totalorder %v461, %v3880
  %vm3895 = vcmp.eq.s32.totalorder %v461, %v3883
  %vm3896 = vcmp.eq.s32.totalorder %v461, %v3886
  %vm3897 = vcmp.eq.s32.totalorder %v461, %v3889
  %3898 = vset.pattern.permute.xlu0 3
  %3899 = vperm.xlu0 %3898, %v3626
  %v3900 = vpop.permute.xlu0 %3899
  %3902 = vset.pattern.permute.xlu0 3
  %3903 = vperm.xlu0 %3902, %v3627
  %v3904 = vpop.permute.xlu0 %3903
  %3906 = vset.pattern.permute.xlu0 3
  %3907 = vperm.xlu0 %3906, %v3628
  %v3908 = vpop.permute.xlu0 %3907
  %3910 = vset.pattern.permute.xlu0 3
  %3911 = vperm.xlu0 %3910, %v3629
  %v3912 = vpop.permute.xlu0 %3911
  %3914 = vset.pattern.permute.xlu0 3
  %3915 = vperm.xlu0 %3914, %v3630
  %v3916 = vpop.permute.xlu0 %3915
  %3918 = vset.pattern.permute.xlu0 3
  %3919 = vperm.xlu0 %3918, %v3631
  %v3920 = vpop.permute.xlu0 %3919
  %3922 = vset.pattern.permute.xlu0 3
  %3923 = vperm.xlu0 %3922, %v3632
  %v3924 = vpop.permute.xlu0 %3923
  %3926 = vset.pattern.permute.xlu0 3
  %3927 = vperm.xlu0 %3926, %v3633
  %v3928 = vpop.permute.xlu0 %3927
  %v3930 = vsel %vm3890, %v3900, 0.0
  %v3931 = vsel %vm3891, %v3904, 0.0
  %v3932 = vsel %vm3892, %v3908, 0.0
  %v3933 = vsel %vm3893, %v3912, 0.0
  %v3934 = vsel %vm3894, %v3916, 0.0
  %v3935 = vsel %vm3895, %v3920, 0.0
  %v3936 = vsel %vm3896, %v3924, 0.0
  %v3937 = vsel %vm3897, %v3928, 0.0
  %v3938 = vadd.f32 %v3778, %v3930
  %v3939 = vadd.f32 %v3779, %v3931
  %v3940 = vadd.f32 %v3780, %v3932
  %v3941 = vadd.f32 %v3781, %v3933
  %v3942 = vadd.f32 %v3782, %v3934
  %v3943 = vadd.f32 %v3783, %v3935
  %v3944 = vadd.f32 %v3784, %v3936
  %v3945 = vadd.f32 %v3785, %v3937
  %3946 = vset.pattern.permute.xlu0 4
  %3947 = vperm.xlu0 %3946, %v3482
  %v3948 = vpop.permute.xlu0 %3947
  %3949 = vset.pattern.permute.xlu0 4
  %3950 = vperm.xlu0 %3949, %v3483
  %v3951 = vpop.permute.xlu0 %3950
  %3952 = vset.pattern.permute.xlu0 4
  %3953 = vperm.xlu0 %3952, %v3484
  %v3954 = vpop.permute.xlu0 %3953
  %3955 = vset.pattern.permute.xlu0 4
  %3956 = vperm.xlu0 %3955, %v3485
  %v3957 = vpop.permute.xlu0 %3956
  %3958 = vset.pattern.permute.xlu0 4
  %3959 = vperm.xlu0 %3958, %v3486
  %v3960 = vpop.permute.xlu0 %3959
  %3961 = vset.pattern.permute.xlu0 4
  %3962 = vperm.xlu0 %3961, %v3487
  %v3963 = vpop.permute.xlu0 %3962
  %3964 = vset.pattern.permute.xlu0 4
  %3965 = vperm.xlu0 %3964, %v3488
  %v3966 = vpop.permute.xlu0 %3965
  %3967 = vset.pattern.permute.xlu0 4
  %3968 = vperm.xlu0 %3967, %v3489
  %v3969 = vpop.permute.xlu0 %3968
  %vm3970 = vcmp.eq.s32.totalorder %v461, %v3948
  %vm3971 = vcmp.eq.s32.totalorder %v461, %v3951
  %vm3972 = vcmp.eq.s32.totalorder %v461, %v3954
  %vm3973 = vcmp.eq.s32.totalorder %v461, %v3957
  %vm3974 = vcmp.eq.s32.totalorder %v461, %v3960
  %vm3975 = vcmp.eq.s32.totalorder %v461, %v3963
  %vm3976 = vcmp.eq.s32.totalorder %v461, %v3966
  %vm3977 = vcmp.eq.s32.totalorder %v461, %v3969
  %3978 = vset.pattern.permute.xlu0 4
  %3979 = vperm.xlu0 %3978, %v3626
  %v3980 = vpop.permute.xlu0 %3979
  %3982 = vset.pattern.permute.xlu0 4
  %3983 = vperm.xlu0 %3982, %v3627
  %v3984 = vpop.permute.xlu0 %3983
  %3986 = vset.pattern.permute.xlu0 4
  %3987 = vperm.xlu0 %3986, %v3628
  %v3988 = vpop.permute.xlu0 %3987
  %3990 = vset.pattern.permute.xlu0 4
  %3991 = vperm.xlu0 %3990, %v3629
  %v3992 = vpop.permute.xlu0 %3991
  %3994 = vset.pattern.permute.xlu0 4
  %3995 = vperm.xlu0 %3994, %v3630
  %v3996 = vpop.permute.xlu0 %3995
  %3998 = vset.pattern.permute.xlu0 4
  %3999 = vperm.xlu0 %3998, %v3631
  %v4000 = vpop.permute.xlu0 %3999
  %4002 = vset.pattern.permute.xlu0 4
  %4003 = vperm.xlu0 %4002, %v3632
  %v4004 = vpop.permute.xlu0 %4003
  %4006 = vset.pattern.permute.xlu0 4
  %4007 = vperm.xlu0 %4006, %v3633
  %v4008 = vpop.permute.xlu0 %4007
  %v4010 = vsel %vm3970, %v3980, 0.0
  %v4011 = vsel %vm3971, %v3984, 0.0
  %v4012 = vsel %vm3972, %v3988, 0.0
  %v4013 = vsel %vm3973, %v3992, 0.0
  %v4014 = vsel %vm3974, %v3996, 0.0
  %v4015 = vsel %vm3975, %v4000, 0.0
  %v4016 = vsel %vm3976, %v4004, 0.0
  %v4017 = vsel %vm3977, %v4008, 0.0
  %v4018 = vadd.f32 %v3858, %v4010
  %v4019 = vadd.f32 %v3859, %v4011
  %v4020 = vadd.f32 %v3860, %v4012
  %v4021 = vadd.f32 %v3861, %v4013
  %v4022 = vadd.f32 %v3862, %v4014
  %v4023 = vadd.f32 %v3863, %v4015
  %v4024 = vadd.f32 %v3864, %v4016
  %v4025 = vadd.f32 %v3865, %v4017
  %4026 = vset.pattern.permute.xlu0 5
  %4027 = vperm.xlu0 %4026, %v3482
  %v4028 = vpop.permute.xlu0 %4027
  %4029 = vset.pattern.permute.xlu0 5
  %4030 = vperm.xlu0 %4029, %v3483
  %v4031 = vpop.permute.xlu0 %4030
  %4032 = vset.pattern.permute.xlu0 5
  %4033 = vperm.xlu0 %4032, %v3484
  %v4034 = vpop.permute.xlu0 %4033
  %4035 = vset.pattern.permute.xlu0 5
  %4036 = vperm.xlu0 %4035, %v3485
  %v4037 = vpop.permute.xlu0 %4036
  %4038 = vset.pattern.permute.xlu0 5
  %4039 = vperm.xlu0 %4038, %v3486
  %v4040 = vpop.permute.xlu0 %4039
  %4041 = vset.pattern.permute.xlu0 5
  %4042 = vperm.xlu0 %4041, %v3487
  %v4043 = vpop.permute.xlu0 %4042
  %4044 = vset.pattern.permute.xlu0 5
  %4045 = vperm.xlu0 %4044, %v3488
  %v4046 = vpop.permute.xlu0 %4045
  %4047 = vset.pattern.permute.xlu0 5
  %4048 = vperm.xlu0 %4047, %v3489
  %v4049 = vpop.permute.xlu0 %4048
  %vm4050 = vcmp.eq.s32.totalorder %v461, %v4028
  %vm4051 = vcmp.eq.s32.totalorder %v461, %v4031
  %vm4052 = vcmp.eq.s32.totalorder %v461, %v4034
  %vm4053 = vcmp.eq.s32.totalorder %v461, %v4037
  %vm4054 = vcmp.eq.s32.totalorder %v461, %v4040
  %vm4055 = vcmp.eq.s32.totalorder %v461, %v4043
  %vm4056 = vcmp.eq.s32.totalorder %v461, %v4046
  %vm4057 = vcmp.eq.s32.totalorder %v461, %v4049
  %4058 = vset.pattern.permute.xlu0 5
  %4059 = vperm.xlu0 %4058, %v3626
  %v4060 = vpop.permute.xlu0 %4059
  %4062 = vset.pattern.permute.xlu0 5
  %4063 = vperm.xlu0 %4062, %v3627
  %v4064 = vpop.permute.xlu0 %4063
  %4066 = vset.pattern.permute.xlu0 5
  %4067 = vperm.xlu0 %4066, %v3628
  %v4068 = vpop.permute.xlu0 %4067
  %4070 = vset.pattern.permute.xlu0 5
  %4071 = vperm.xlu0 %4070, %v3629
  %v4072 = vpop.permute.xlu0 %4071
  %4074 = vset.pattern.permute.xlu0 5
  %4075 = vperm.xlu0 %4074, %v3630
  %v4076 = vpop.permute.xlu0 %4075
  %4078 = vset.pattern.permute.xlu0 5
  %4079 = vperm.xlu0 %4078, %v3631
  %v4080 = vpop.permute.xlu0 %4079
  %4082 = vset.pattern.permute.xlu0 5
  %4083 = vperm.xlu0 %4082, %v3632
  %v4084 = vpop.permute.xlu0 %4083
  %4086 = vset.pattern.permute.xlu0 5
  %4087 = vperm.xlu0 %4086, %v3633
  %v4088 = vpop.permute.xlu0 %4087
  %v4090 = vsel %vm4050, %v4060, 0.0
  %v4091 = vsel %vm4051, %v4064, 0.0
  %v4092 = vsel %vm4052, %v4068, 0.0
  %v4093 = vsel %vm4053, %v4072, 0.0
  %v4094 = vsel %vm4054, %v4076, 0.0
  %v4095 = vsel %vm4055, %v4080, 0.0
  %v4096 = vsel %vm4056, %v4084, 0.0
  %v4097 = vsel %vm4057, %v4088, 0.0
  %v4098 = vadd.f32 %v3938, %v4090
  %v4099 = vadd.f32 %v3939, %v4091
  %v4100 = vadd.f32 %v3940, %v4092
  %v4101 = vadd.f32 %v3941, %v4093
  %v4102 = vadd.f32 %v3942, %v4094
  %v4103 = vadd.f32 %v3943, %v4095
  %v4104 = vadd.f32 %v3944, %v4096
  %v4105 = vadd.f32 %v3945, %v4097
  %4106 = vset.pattern.permute.xlu0 6
  %4107 = vperm.xlu0 %4106, %v3482
  %v4108 = vpop.permute.xlu0 %4107
  %4109 = vset.pattern.permute.xlu0 6
  %4110 = vperm.xlu0 %4109, %v3483
  %v4111 = vpop.permute.xlu0 %4110
  %4112 = vset.pattern.permute.xlu0 6
  %4113 = vperm.xlu0 %4112, %v3484
  %v4114 = vpop.permute.xlu0 %4113
  %4115 = vset.pattern.permute.xlu0 6
  %4116 = vperm.xlu0 %4115, %v3485
  %v4117 = vpop.permute.xlu0 %4116
  %4118 = vset.pattern.permute.xlu0 6
  %4119 = vperm.xlu0 %4118, %v3486
  %v4120 = vpop.permute.xlu0 %4119
  %4121 = vset.pattern.permute.xlu0 6
  %4122 = vperm.xlu0 %4121, %v3487
  %v4123 = vpop.permute.xlu0 %4122
  %4124 = vset.pattern.permute.xlu0 6
  %4125 = vperm.xlu0 %4124, %v3488
  %v4126 = vpop.permute.xlu0 %4125
  %4127 = vset.pattern.permute.xlu0 6
  %4128 = vperm.xlu0 %4127, %v3489
  %v4129 = vpop.permute.xlu0 %4128
  %vm4130 = vcmp.eq.s32.totalorder %v461, %v4108
  %vm4131 = vcmp.eq.s32.totalorder %v461, %v4111
  %vm4132 = vcmp.eq.s32.totalorder %v461, %v4114
  %vm4133 = vcmp.eq.s32.totalorder %v461, %v4117
  %vm4134 = vcmp.eq.s32.totalorder %v461, %v4120
  %vm4135 = vcmp.eq.s32.totalorder %v461, %v4123
  %vm4136 = vcmp.eq.s32.totalorder %v461, %v4126
  %vm4137 = vcmp.eq.s32.totalorder %v461, %v4129
  %4138 = vset.pattern.permute.xlu0 6
  %4139 = vperm.xlu0 %4138, %v3626
  %v4140 = vpop.permute.xlu0 %4139
  %4142 = vset.pattern.permute.xlu0 6
  %4143 = vperm.xlu0 %4142, %v3627
  %v4144 = vpop.permute.xlu0 %4143
  %4146 = vset.pattern.permute.xlu0 6
  %4147 = vperm.xlu0 %4146, %v3628
  %v4148 = vpop.permute.xlu0 %4147
  %4150 = vset.pattern.permute.xlu0 6
  %4151 = vperm.xlu0 %4150, %v3629
  %v4152 = vpop.permute.xlu0 %4151
  %4154 = vset.pattern.permute.xlu0 6
  %4155 = vperm.xlu0 %4154, %v3630
  %v4156 = vpop.permute.xlu0 %4155
  %4158 = vset.pattern.permute.xlu0 6
  %4159 = vperm.xlu0 %4158, %v3631
  %v4160 = vpop.permute.xlu0 %4159
  %4162 = vset.pattern.permute.xlu0 6
  %4163 = vperm.xlu0 %4162, %v3632
  %v4164 = vpop.permute.xlu0 %4163
  %4166 = vset.pattern.permute.xlu0 6
  %4167 = vperm.xlu0 %4166, %v3633
  %v4168 = vpop.permute.xlu0 %4167
  %v4170 = vsel %vm4130, %v4140, 0.0
  %v4171 = vsel %vm4131, %v4144, 0.0
  %v4172 = vsel %vm4132, %v4148, 0.0
  %v4173 = vsel %vm4133, %v4152, 0.0
  %v4174 = vsel %vm4134, %v4156, 0.0
  %v4175 = vsel %vm4135, %v4160, 0.0
  %v4176 = vsel %vm4136, %v4164, 0.0
  %v4177 = vsel %vm4137, %v4168, 0.0
  %v4178 = vadd.f32 %v4018, %v4170
  %v4179 = vadd.f32 %v4019, %v4171
  %v4180 = vadd.f32 %v4020, %v4172
  %v4181 = vadd.f32 %v4021, %v4173
  %v4182 = vadd.f32 %v4022, %v4174
  %v4183 = vadd.f32 %v4023, %v4175
  %v4184 = vadd.f32 %v4024, %v4176
  %v4185 = vadd.f32 %v4025, %v4177
  %4186 = vset.pattern.permute.xlu0 7
  %4187 = vperm.xlu0 %4186, %v3482
  %v4188 = vpop.permute.xlu0 %4187
  %4189 = vset.pattern.permute.xlu0 7
  %4190 = vperm.xlu0 %4189, %v3483
  %v4191 = vpop.permute.xlu0 %4190
  %4192 = vset.pattern.permute.xlu0 7
  %4193 = vperm.xlu0 %4192, %v3484
  %v4194 = vpop.permute.xlu0 %4193
  %4195 = vset.pattern.permute.xlu0 7
  %4196 = vperm.xlu0 %4195, %v3485
  %v4197 = vpop.permute.xlu0 %4196
  %4198 = vset.pattern.permute.xlu0 7
  %4199 = vperm.xlu0 %4198, %v3486
  %v4200 = vpop.permute.xlu0 %4199
  %4201 = vset.pattern.permute.xlu0 7
  %4202 = vperm.xlu0 %4201, %v3487
  %v4203 = vpop.permute.xlu0 %4202
  %4204 = vset.pattern.permute.xlu0 7
  %4205 = vperm.xlu0 %4204, %v3488
  %v4206 = vpop.permute.xlu0 %4205
  %4207 = vset.pattern.permute.xlu0 7
  %4208 = vperm.xlu0 %4207, %v3489
  %v4209 = vpop.permute.xlu0 %4208
  %vm4210 = vcmp.eq.s32.totalorder %v461, %v4188
  %vm4211 = vcmp.eq.s32.totalorder %v461, %v4191
  %vm4212 = vcmp.eq.s32.totalorder %v461, %v4194
  %vm4213 = vcmp.eq.s32.totalorder %v461, %v4197
  %vm4214 = vcmp.eq.s32.totalorder %v461, %v4200
  %vm4215 = vcmp.eq.s32.totalorder %v461, %v4203
  %vm4216 = vcmp.eq.s32.totalorder %v461, %v4206
  %vm4217 = vcmp.eq.s32.totalorder %v461, %v4209
  %4218 = vset.pattern.permute.xlu0 7
  %4219 = vperm.xlu0 %4218, %v3626
  %v4220 = vpop.permute.xlu0 %4219
  %4222 = vset.pattern.permute.xlu0 7
  %4223 = vperm.xlu0 %4222, %v3627
  %v4224 = vpop.permute.xlu0 %4223
  %4226 = vset.pattern.permute.xlu0 7
  %4227 = vperm.xlu0 %4226, %v3628
  %v4228 = vpop.permute.xlu0 %4227
  %4230 = vset.pattern.permute.xlu0 7
  %4231 = vperm.xlu0 %4230, %v3629
  %v4232 = vpop.permute.xlu0 %4231
  %4234 = vset.pattern.permute.xlu0 7
  %4235 = vperm.xlu0 %4234, %v3630
  %v4236 = vpop.permute.xlu0 %4235
  %4238 = vset.pattern.permute.xlu0 7
  %4239 = vperm.xlu0 %4238, %v3631
  %v4240 = vpop.permute.xlu0 %4239
  %4242 = vset.pattern.permute.xlu0 7
  %4243 = vperm.xlu0 %4242, %v3632
  %v4244 = vpop.permute.xlu0 %4243
  %4246 = vset.pattern.permute.xlu0 7
  %4247 = vperm.xlu0 %4246, %v3633
  %v4248 = vpop.permute.xlu0 %4247
  %v4250 = vsel %vm4210, %v4220, 0.0
  %v4251 = vsel %vm4211, %v4224, 0.0
  %v4252 = vsel %vm4212, %v4228, 0.0
  %v4253 = vsel %vm4213, %v4232, 0.0
  %v4254 = vsel %vm4214, %v4236, 0.0
  %v4255 = vsel %vm4215, %v4240, 0.0
  %v4256 = vsel %vm4216, %v4244, 0.0
  %v4257 = vsel %vm4217, %v4248, 0.0
  %v4258 = vadd.f32 %v4098, %v4250
  %v4259 = vadd.f32 %v4099, %v4251
  %v4260 = vadd.f32 %v4100, %v4252
  %v4261 = vadd.f32 %v4101, %v4253
  %v4262 = vadd.f32 %v4102, %v4254
  %v4263 = vadd.f32 %v4103, %v4255
  %v4264 = vadd.f32 %v4104, %v4256
  %v4265 = vadd.f32 %v4105, %v4257
  %4266 = vset.pattern.permute.xlu0 8
  %4267 = vperm.xlu0 %4266, %v3482
  %v4268 = vpop.permute.xlu0 %4267
  %4269 = vset.pattern.permute.xlu0 8
  %4270 = vperm.xlu0 %4269, %v3483
  %v4271 = vpop.permute.xlu0 %4270
  %4272 = vset.pattern.permute.xlu0 8
  %4273 = vperm.xlu0 %4272, %v3484
  %v4274 = vpop.permute.xlu0 %4273
  %4275 = vset.pattern.permute.xlu0 8
  %4276 = vperm.xlu0 %4275, %v3485
  %v4277 = vpop.permute.xlu0 %4276
  %4278 = vset.pattern.permute.xlu0 8
  %4279 = vperm.xlu0 %4278, %v3486
  %v4280 = vpop.permute.xlu0 %4279
  %4281 = vset.pattern.permute.xlu0 8
  %4282 = vperm.xlu0 %4281, %v3487
  %v4283 = vpop.permute.xlu0 %4282
  %4284 = vset.pattern.permute.xlu0 8
  %4285 = vperm.xlu0 %4284, %v3488
  %v4286 = vpop.permute.xlu0 %4285
  %4287 = vset.pattern.permute.xlu0 8
  %4288 = vperm.xlu0 %4287, %v3489
  %v4289 = vpop.permute.xlu0 %4288
  %vm4290 = vcmp.eq.s32.totalorder %v461, %v4268
  %vm4291 = vcmp.eq.s32.totalorder %v461, %v4271
  %vm4292 = vcmp.eq.s32.totalorder %v461, %v4274
  %vm4293 = vcmp.eq.s32.totalorder %v461, %v4277
  %vm4294 = vcmp.eq.s32.totalorder %v461, %v4280
  %vm4295 = vcmp.eq.s32.totalorder %v461, %v4283
  %vm4296 = vcmp.eq.s32.totalorder %v461, %v4286
  %vm4297 = vcmp.eq.s32.totalorder %v461, %v4289
  %4298 = vset.pattern.permute.xlu0 8
  %4299 = vperm.xlu0 %4298, %v3626
  %v4300 = vpop.permute.xlu0 %4299
  %4302 = vset.pattern.permute.xlu0 8
  %4303 = vperm.xlu0 %4302, %v3627
  %v4304 = vpop.permute.xlu0 %4303
  %4306 = vset.pattern.permute.xlu0 8
  %4307 = vperm.xlu0 %4306, %v3628
  %v4308 = vpop.permute.xlu0 %4307
  %4310 = vset.pattern.permute.xlu0 8
  %4311 = vperm.xlu0 %4310, %v3629
  %v4312 = vpop.permute.xlu0 %4311
  %4314 = vset.pattern.permute.xlu0 8
  %4315 = vperm.xlu0 %4314, %v3630
  %v4316 = vpop.permute.xlu0 %4315
  %4318 = vset.pattern.permute.xlu0 8
  %4319 = vperm.xlu0 %4318, %v3631
  %v4320 = vpop.permute.xlu0 %4319
  %4322 = vset.pattern.permute.xlu0 8
  %4323 = vperm.xlu0 %4322, %v3632
  %v4324 = vpop.permute.xlu0 %4323
  %4326 = vset.pattern.permute.xlu0 8
  %4327 = vperm.xlu0 %4326, %v3633
  %v4328 = vpop.permute.xlu0 %4327
  %v4330 = vsel %vm4290, %v4300, 0.0
  %v4331 = vsel %vm4291, %v4304, 0.0
  %v4332 = vsel %vm4292, %v4308, 0.0
  %v4333 = vsel %vm4293, %v4312, 0.0
  %v4334 = vsel %vm4294, %v4316, 0.0
  %v4335 = vsel %vm4295, %v4320, 0.0
  %v4336 = vsel %vm4296, %v4324, 0.0
  %v4337 = vsel %vm4297, %v4328, 0.0
  %v4338 = vadd.f32 %v4178, %v4330
  %v4339 = vadd.f32 %v4179, %v4331
  %v4340 = vadd.f32 %v4180, %v4332
  %v4341 = vadd.f32 %v4181, %v4333
  %v4342 = vadd.f32 %v4182, %v4334
  %v4343 = vadd.f32 %v4183, %v4335
  %v4344 = vadd.f32 %v4184, %v4336
  %v4345 = vadd.f32 %v4185, %v4337
  %4346 = vset.pattern.permute.xlu0 9
  %4347 = vperm.xlu0 %4346, %v3482
  %v4348 = vpop.permute.xlu0 %4347
  %4349 = vset.pattern.permute.xlu0 9
  %4350 = vperm.xlu0 %4349, %v3483
  %v4351 = vpop.permute.xlu0 %4350
  %4352 = vset.pattern.permute.xlu0 9
  %4353 = vperm.xlu0 %4352, %v3484
  %v4354 = vpop.permute.xlu0 %4353
  %4355 = vset.pattern.permute.xlu0 9
  %4356 = vperm.xlu0 %4355, %v3485
  %v4357 = vpop.permute.xlu0 %4356
  %4358 = vset.pattern.permute.xlu0 9
  %4359 = vperm.xlu0 %4358, %v3486
  %v4360 = vpop.permute.xlu0 %4359
  %4361 = vset.pattern.permute.xlu0 9
  %4362 = vperm.xlu0 %4361, %v3487
  %v4363 = vpop.permute.xlu0 %4362
  %4364 = vset.pattern.permute.xlu0 9
  %4365 = vperm.xlu0 %4364, %v3488
  %v4366 = vpop.permute.xlu0 %4365
  %4367 = vset.pattern.permute.xlu0 9
  %4368 = vperm.xlu0 %4367, %v3489
  %v4369 = vpop.permute.xlu0 %4368
  %vm4370 = vcmp.eq.s32.totalorder %v461, %v4348
  %vm4371 = vcmp.eq.s32.totalorder %v461, %v4351
  %vm4372 = vcmp.eq.s32.totalorder %v461, %v4354
  %vm4373 = vcmp.eq.s32.totalorder %v461, %v4357
  %vm4374 = vcmp.eq.s32.totalorder %v461, %v4360
  %vm4375 = vcmp.eq.s32.totalorder %v461, %v4363
  %vm4376 = vcmp.eq.s32.totalorder %v461, %v4366
  %vm4377 = vcmp.eq.s32.totalorder %v461, %v4369
  %4378 = vset.pattern.permute.xlu0 9
  %4379 = vperm.xlu0 %4378, %v3626
  %v4380 = vpop.permute.xlu0 %4379
  %4382 = vset.pattern.permute.xlu0 9
  %4383 = vperm.xlu0 %4382, %v3627
  %v4384 = vpop.permute.xlu0 %4383
  %4386 = vset.pattern.permute.xlu0 9
  %4387 = vperm.xlu0 %4386, %v3628
  %v4388 = vpop.permute.xlu0 %4387
  %4390 = vset.pattern.permute.xlu0 9
  %4391 = vperm.xlu0 %4390, %v3629
  %v4392 = vpop.permute.xlu0 %4391
  %4394 = vset.pattern.permute.xlu0 9
  %4395 = vperm.xlu0 %4394, %v3630
  %v4396 = vpop.permute.xlu0 %4395
  %4398 = vset.pattern.permute.xlu0 9
  %4399 = vperm.xlu0 %4398, %v3631
  %v4400 = vpop.permute.xlu0 %4399
  %4402 = vset.pattern.permute.xlu0 9
  %4403 = vperm.xlu0 %4402, %v3632
  %v4404 = vpop.permute.xlu0 %4403
  %4406 = vset.pattern.permute.xlu0 9
  %4407 = vperm.xlu0 %4406, %v3633
  %v4408 = vpop.permute.xlu0 %4407
  %v4410 = vsel %vm4370, %v4380, 0.0
  %v4411 = vsel %vm4371, %v4384, 0.0
  %v4412 = vsel %vm4372, %v4388, 0.0
  %v4413 = vsel %vm4373, %v4392, 0.0
  %v4414 = vsel %vm4374, %v4396, 0.0
  %v4415 = vsel %vm4375, %v4400, 0.0
  %v4416 = vsel %vm4376, %v4404, 0.0
  %v4417 = vsel %vm4377, %v4408, 0.0
  %v4418 = vadd.f32 %v4258, %v4410
  %v4419 = vadd.f32 %v4259, %v4411
  %v4420 = vadd.f32 %v4260, %v4412
  %v4421 = vadd.f32 %v4261, %v4413
  %v4422 = vadd.f32 %v4262, %v4414
  %v4423 = vadd.f32 %v4263, %v4415
  %v4424 = vadd.f32 %v4264, %v4416
  %v4425 = vadd.f32 %v4265, %v4417
  %4426 = vset.pattern.permute.xlu0 10
  %4427 = vperm.xlu0 %4426, %v3482
  %v4428 = vpop.permute.xlu0 %4427
  %4429 = vset.pattern.permute.xlu0 10
  %4430 = vperm.xlu0 %4429, %v3483
  %v4431 = vpop.permute.xlu0 %4430
  %4432 = vset.pattern.permute.xlu0 10
  %4433 = vperm.xlu0 %4432, %v3484
  %v4434 = vpop.permute.xlu0 %4433
  %4435 = vset.pattern.permute.xlu0 10
  %4436 = vperm.xlu0 %4435, %v3485
  %v4437 = vpop.permute.xlu0 %4436
  %4438 = vset.pattern.permute.xlu0 10
  %4439 = vperm.xlu0 %4438, %v3486
  %v4440 = vpop.permute.xlu0 %4439
  %4441 = vset.pattern.permute.xlu0 10
  %4442 = vperm.xlu0 %4441, %v3487
  %v4443 = vpop.permute.xlu0 %4442
  %4444 = vset.pattern.permute.xlu0 10
  %4445 = vperm.xlu0 %4444, %v3488
  %v4446 = vpop.permute.xlu0 %4445
  %4447 = vset.pattern.permute.xlu0 10
  %4448 = vperm.xlu0 %4447, %v3489
  %v4449 = vpop.permute.xlu0 %4448
  %vm4450 = vcmp.eq.s32.totalorder %v461, %v4428
  %vm4451 = vcmp.eq.s32.totalorder %v461, %v4431
  %vm4452 = vcmp.eq.s32.totalorder %v461, %v4434
  %vm4453 = vcmp.eq.s32.totalorder %v461, %v4437
  %vm4454 = vcmp.eq.s32.totalorder %v461, %v4440
  %vm4455 = vcmp.eq.s32.totalorder %v461, %v4443
  %vm4456 = vcmp.eq.s32.totalorder %v461, %v4446
  %vm4457 = vcmp.eq.s32.totalorder %v461, %v4449
  %4458 = vset.pattern.permute.xlu0 10
  %4459 = vperm.xlu0 %4458, %v3626
  %v4460 = vpop.permute.xlu0 %4459
  %4462 = vset.pattern.permute.xlu0 10
  %4463 = vperm.xlu0 %4462, %v3627
  %v4464 = vpop.permute.xlu0 %4463
  %4466 = vset.pattern.permute.xlu0 10
  %4467 = vperm.xlu0 %4466, %v3628
  %v4468 = vpop.permute.xlu0 %4467
  %4470 = vset.pattern.permute.xlu0 10
  %4471 = vperm.xlu0 %4470, %v3629
  %v4472 = vpop.permute.xlu0 %4471
  %4474 = vset.pattern.permute.xlu0 10
  %4475 = vperm.xlu0 %4474, %v3630
  %v4476 = vpop.permute.xlu0 %4475
  %4478 = vset.pattern.permute.xlu0 10
  %4479 = vperm.xlu0 %4478, %v3631
  %v4480 = vpop.permute.xlu0 %4479
  %4482 = vset.pattern.permute.xlu0 10
  %4483 = vperm.xlu0 %4482, %v3632
  %v4484 = vpop.permute.xlu0 %4483
  %4486 = vset.pattern.permute.xlu0 10
  %4487 = vperm.xlu0 %4486, %v3633
  %v4488 = vpop.permute.xlu0 %4487
  %v4490 = vsel %vm4450, %v4460, 0.0
  %v4491 = vsel %vm4451, %v4464, 0.0
  %v4492 = vsel %vm4452, %v4468, 0.0
  %v4493 = vsel %vm4453, %v4472, 0.0
  %v4494 = vsel %vm4454, %v4476, 0.0
  %v4495 = vsel %vm4455, %v4480, 0.0
  %v4496 = vsel %vm4456, %v4484, 0.0
  %v4497 = vsel %vm4457, %v4488, 0.0
  %v4498 = vadd.f32 %v4338, %v4490
  %v4499 = vadd.f32 %v4339, %v4491
  %v4500 = vadd.f32 %v4340, %v4492
  %v4501 = vadd.f32 %v4341, %v4493
  %v4502 = vadd.f32 %v4342, %v4494
  %v4503 = vadd.f32 %v4343, %v4495
  %v4504 = vadd.f32 %v4344, %v4496
  %v4505 = vadd.f32 %v4345, %v4497
  %4506 = vset.pattern.permute.xlu0 11
  %4507 = vperm.xlu0 %4506, %v3482
  %v4508 = vpop.permute.xlu0 %4507
  %4509 = vset.pattern.permute.xlu0 11
  %4510 = vperm.xlu0 %4509, %v3483
  %v4511 = vpop.permute.xlu0 %4510
  %4512 = vset.pattern.permute.xlu0 11
  %4513 = vperm.xlu0 %4512, %v3484
  %v4514 = vpop.permute.xlu0 %4513
  %4515 = vset.pattern.permute.xlu0 11
  %4516 = vperm.xlu0 %4515, %v3485
  %v4517 = vpop.permute.xlu0 %4516
  %4518 = vset.pattern.permute.xlu0 11
  %4519 = vperm.xlu0 %4518, %v3486
  %v4520 = vpop.permute.xlu0 %4519
  %4521 = vset.pattern.permute.xlu0 11
  %4522 = vperm.xlu0 %4521, %v3487
  %v4523 = vpop.permute.xlu0 %4522
  %4524 = vset.pattern.permute.xlu0 11
  %4525 = vperm.xlu0 %4524, %v3488
  %v4526 = vpop.permute.xlu0 %4525
  %4527 = vset.pattern.permute.xlu0 11
  %4528 = vperm.xlu0 %4527, %v3489
  %v4529 = vpop.permute.xlu0 %4528
  %vm4530 = vcmp.eq.s32.totalorder %v461, %v4508
  %vm4531 = vcmp.eq.s32.totalorder %v461, %v4511
  %vm4532 = vcmp.eq.s32.totalorder %v461, %v4514
  %vm4533 = vcmp.eq.s32.totalorder %v461, %v4517
  %vm4534 = vcmp.eq.s32.totalorder %v461, %v4520
  %vm4535 = vcmp.eq.s32.totalorder %v461, %v4523
  %vm4536 = vcmp.eq.s32.totalorder %v461, %v4526
  %vm4537 = vcmp.eq.s32.totalorder %v461, %v4529
  %4538 = vset.pattern.permute.xlu0 11
  %4539 = vperm.xlu0 %4538, %v3626
  %v4540 = vpop.permute.xlu0 %4539
  %4542 = vset.pattern.permute.xlu0 11
  %4543 = vperm.xlu0 %4542, %v3627
  %v4544 = vpop.permute.xlu0 %4543
  %4546 = vset.pattern.permute.xlu0 11
  %4547 = vperm.xlu0 %4546, %v3628
  %v4548 = vpop.permute.xlu0 %4547
  %4550 = vset.pattern.permute.xlu0 11
  %4551 = vperm.xlu0 %4550, %v3629
  %v4552 = vpop.permute.xlu0 %4551
  %4554 = vset.pattern.permute.xlu0 11
  %4555 = vperm.xlu0 %4554, %v3630
  %v4556 = vpop.permute.xlu0 %4555
  %4558 = vset.pattern.permute.xlu0 11
  %4559 = vperm.xlu0 %4558, %v3631
  %v4560 = vpop.permute.xlu0 %4559
  %4562 = vset.pattern.permute.xlu0 11
  %4563 = vperm.xlu0 %4562, %v3632
  %v4564 = vpop.permute.xlu0 %4563
  %4566 = vset.pattern.permute.xlu0 11
  %4567 = vperm.xlu0 %4566, %v3633
  %v4568 = vpop.permute.xlu0 %4567
  %v4570 = vsel %vm4530, %v4540, 0.0
  %v4571 = vsel %vm4531, %v4544, 0.0
  %v4572 = vsel %vm4532, %v4548, 0.0
  %v4573 = vsel %vm4533, %v4552, 0.0
  %v4574 = vsel %vm4534, %v4556, 0.0
  %v4575 = vsel %vm4535, %v4560, 0.0
  %v4576 = vsel %vm4536, %v4564, 0.0
  %v4577 = vsel %vm4537, %v4568, 0.0
  %v4578 = vadd.f32 %v4418, %v4570
  %v4579 = vadd.f32 %v4419, %v4571
  %v4580 = vadd.f32 %v4420, %v4572
  %v4581 = vadd.f32 %v4421, %v4573
  %v4582 = vadd.f32 %v4422, %v4574
  %v4583 = vadd.f32 %v4423, %v4575
  %v4584 = vadd.f32 %v4424, %v4576
  %v4585 = vadd.f32 %v4425, %v4577
  %v4586 = vsel %vm3578, %v3586, 0.0
  %v4587 = vsel %vm3579, %v3587, 0.0
  %v4588 = vsel %vm3580, %v3588, 0.0
  %v4589 = vsel %vm3581, %v3589, 0.0
  %v4590 = vsel %vm3582, %v3590, 0.0
  %v4591 = vsel %vm3583, %v3591, 0.0
  %v4592 = vsel %vm3584, %v3592, 0.0
  %v4593 = vsel %vm3585, %v3593, 0.0
  %4594 = vset.pattern.permute.xlu0 0
  %4595 = vperm.xlu0 %4594, %v3490
  %v4596 = vpop.permute.xlu0 %4595
  %4597 = vset.pattern.permute.xlu0 0
  %4598 = vperm.xlu0 %4597, %v3491
  %v4599 = vpop.permute.xlu0 %4598
  %4600 = vset.pattern.permute.xlu0 0
  %4601 = vperm.xlu0 %4600, %v3492
  %v4602 = vpop.permute.xlu0 %4601
  %4603 = vset.pattern.permute.xlu0 0
  %4604 = vperm.xlu0 %4603, %v3493
  %v4605 = vpop.permute.xlu0 %4604
  %4606 = vset.pattern.permute.xlu0 0
  %4607 = vperm.xlu0 %4606, %v3494
  %v4608 = vpop.permute.xlu0 %4607
  %4609 = vset.pattern.permute.xlu0 0
  %4610 = vperm.xlu0 %4609, %v3495
  %v4611 = vpop.permute.xlu0 %4610
  %4612 = vset.pattern.permute.xlu0 0
  %4613 = vperm.xlu0 %4612, %v3496
  %v4614 = vpop.permute.xlu0 %4613
  %4615 = vset.pattern.permute.xlu0 0
  %4616 = vperm.xlu0 %4615, %v3497
  %v4617 = vpop.permute.xlu0 %4616
  %vm4618 = vcmp.eq.s32.totalorder %v461, %v4596
  %vm4619 = vcmp.eq.s32.totalorder %v461, %v4599
  %vm4620 = vcmp.eq.s32.totalorder %v461, %v4602
  %vm4621 = vcmp.eq.s32.totalorder %v461, %v4605
  %vm4622 = vcmp.eq.s32.totalorder %v461, %v4608
  %vm4623 = vcmp.eq.s32.totalorder %v461, %v4611
  %vm4624 = vcmp.eq.s32.totalorder %v461, %v4614
  %vm4625 = vcmp.eq.s32.totalorder %v461, %v4617
  %4627 = vset.pattern.permute.xlu0 0
  %4628 = vperm.xlu0 %4627, %v4586
  %v4629 = vpop.permute.xlu0 %4628
  %4632 = vset.pattern.permute.xlu0 0
  %4633 = vperm.xlu0 %4632, %v4587
  %v4634 = vpop.permute.xlu0 %4633
  %4637 = vset.pattern.permute.xlu0 0
  %4638 = vperm.xlu0 %4637, %v4588
  %v4639 = vpop.permute.xlu0 %4638
  %4642 = vset.pattern.permute.xlu0 0
  %4643 = vperm.xlu0 %4642, %v4589
  %v4644 = vpop.permute.xlu0 %4643
  %4647 = vset.pattern.permute.xlu0 0
  %4648 = vperm.xlu0 %4647, %v4590
  %v4649 = vpop.permute.xlu0 %4648
  %4652 = vset.pattern.permute.xlu0 0
  %4653 = vperm.xlu0 %4652, %v4591
  %v4654 = vpop.permute.xlu0 %4653
  %4657 = vset.pattern.permute.xlu0 0
  %4658 = vperm.xlu0 %4657, %v4592
  %v4659 = vpop.permute.xlu0 %4658
  %4662 = vset.pattern.permute.xlu0 0
  %4663 = vperm.xlu0 %4662, %v4593
  %v4664 = vpop.permute.xlu0 %4663
  %v4666 = vsel %vm4618, %v4629, 0.0
  %v4667 = vsel %vm4619, %v4634, 0.0
  %v4668 = vsel %vm4620, %v4639, 0.0
  %v4669 = vsel %vm4621, %v4644, 0.0
  %v4670 = vsel %vm4622, %v4649, 0.0
  %v4671 = vsel %vm4623, %v4654, 0.0
  %v4672 = vsel %vm4624, %v4659, 0.0
  %v4673 = vsel %vm4625, %v4664, 0.0
  %4674 = vset.pattern.permute.xlu0 1
  %4675 = vperm.xlu0 %4674, %v3490
  %v4676 = vpop.permute.xlu0 %4675
  %4677 = vset.pattern.permute.xlu0 1
  %4678 = vperm.xlu0 %4677, %v3491
  %v4679 = vpop.permute.xlu0 %4678
  %4680 = vset.pattern.permute.xlu0 1
  %4681 = vperm.xlu0 %4680, %v3492
  %v4682 = vpop.permute.xlu0 %4681
  %4683 = vset.pattern.permute.xlu0 1
  %4684 = vperm.xlu0 %4683, %v3493
  %v4685 = vpop.permute.xlu0 %4684
  %4686 = vset.pattern.permute.xlu0 1
  %4687 = vperm.xlu0 %4686, %v3494
  %v4688 = vpop.permute.xlu0 %4687
  %4689 = vset.pattern.permute.xlu0 1
  %4690 = vperm.xlu0 %4689, %v3495
  %v4691 = vpop.permute.xlu0 %4690
  %4692 = vset.pattern.permute.xlu0 1
  %4693 = vperm.xlu0 %4692, %v3496
  %v4694 = vpop.permute.xlu0 %4693
  %4695 = vset.pattern.permute.xlu0 1
  %4696 = vperm.xlu0 %4695, %v3497
  %v4697 = vpop.permute.xlu0 %4696
  %vm4698 = vcmp.eq.s32.totalorder %v461, %v4676
  %vm4699 = vcmp.eq.s32.totalorder %v461, %v4679
  %vm4700 = vcmp.eq.s32.totalorder %v461, %v4682
  %vm4701 = vcmp.eq.s32.totalorder %v461, %v4685
  %vm4702 = vcmp.eq.s32.totalorder %v461, %v4688
  %vm4703 = vcmp.eq.s32.totalorder %v461, %v4691
  %vm4704 = vcmp.eq.s32.totalorder %v461, %v4694
  %vm4705 = vcmp.eq.s32.totalorder %v461, %v4697
  %4706 = vset.pattern.permute.xlu0 1
  %4707 = vperm.xlu0 %4706, %v4586
  %v4708 = vpop.permute.xlu0 %4707
  %4710 = vset.pattern.permute.xlu0 1
  %4711 = vperm.xlu0 %4710, %v4587
  %v4712 = vpop.permute.xlu0 %4711
  %4714 = vset.pattern.permute.xlu0 1
  %4715 = vperm.xlu0 %4714, %v4588
  %v4716 = vpop.permute.xlu0 %4715
  %4718 = vset.pattern.permute.xlu0 1
  %4719 = vperm.xlu0 %4718, %v4589
  %v4720 = vpop.permute.xlu0 %4719
  %4722 = vset.pattern.permute.xlu0 1
  %4723 = vperm.xlu0 %4722, %v4590
  %v4724 = vpop.permute.xlu0 %4723
  %4726 = vset.pattern.permute.xlu0 1
  %4727 = vperm.xlu0 %4726, %v4591
  %v4728 = vpop.permute.xlu0 %4727
  %4730 = vset.pattern.permute.xlu0 1
  %4731 = vperm.xlu0 %4730, %v4592
  %v4732 = vpop.permute.xlu0 %4731
  %4734 = vset.pattern.permute.xlu0 1
  %4735 = vperm.xlu0 %4734, %v4593
  %v4736 = vpop.permute.xlu0 %4735
  %v4738 = vsel %vm4698, %v4708, 0.0
  %v4739 = vsel %vm4699, %v4712, 0.0
  %v4740 = vsel %vm4700, %v4716, 0.0
  %v4741 = vsel %vm4701, %v4720, 0.0
  %v4742 = vsel %vm4702, %v4724, 0.0
  %v4743 = vsel %vm4703, %v4728, 0.0
  %v4744 = vsel %vm4704, %v4732, 0.0
  %v4745 = vsel %vm4705, %v4736, 0.0
  %4746 = vset.pattern.permute.xlu0 2
  %4747 = vperm.xlu0 %4746, %v3490
  %v4748 = vpop.permute.xlu0 %4747
  %4749 = vset.pattern.permute.xlu0 2
  %4750 = vperm.xlu0 %4749, %v3491
  %v4751 = vpop.permute.xlu0 %4750
  %4752 = vset.pattern.permute.xlu0 2
  %4753 = vperm.xlu0 %4752, %v3492
  %v4754 = vpop.permute.xlu0 %4753
  %4755 = vset.pattern.permute.xlu0 2
  %4756 = vperm.xlu0 %4755, %v3493
  %v4757 = vpop.permute.xlu0 %4756
  %4758 = vset.pattern.permute.xlu0 2
  %4759 = vperm.xlu0 %4758, %v3494
  %v4760 = vpop.permute.xlu0 %4759
  %4761 = vset.pattern.permute.xlu0 2
  %4762 = vperm.xlu0 %4761, %v3495
  %v4763 = vpop.permute.xlu0 %4762
  %4764 = vset.pattern.permute.xlu0 2
  %4765 = vperm.xlu0 %4764, %v3496
  %v4766 = vpop.permute.xlu0 %4765
  %4767 = vset.pattern.permute.xlu0 2
  %4768 = vperm.xlu0 %4767, %v3497
  %v4769 = vpop.permute.xlu0 %4768
  %vm4770 = vcmp.eq.s32.totalorder %v461, %v4748
  %vm4771 = vcmp.eq.s32.totalorder %v461, %v4751
  %vm4772 = vcmp.eq.s32.totalorder %v461, %v4754
  %vm4773 = vcmp.eq.s32.totalorder %v461, %v4757
  %vm4774 = vcmp.eq.s32.totalorder %v461, %v4760
  %vm4775 = vcmp.eq.s32.totalorder %v461, %v4763
  %vm4776 = vcmp.eq.s32.totalorder %v461, %v4766
  %vm4777 = vcmp.eq.s32.totalorder %v461, %v4769
  %4778 = vset.pattern.permute.xlu0 2
  %4779 = vperm.xlu0 %4778, %v4586
  %v4780 = vpop.permute.xlu0 %4779
  %4782 = vset.pattern.permute.xlu0 2
  %4783 = vperm.xlu0 %4782, %v4587
  %v4784 = vpop.permute.xlu0 %4783
  %4786 = vset.pattern.permute.xlu0 2
  %4787 = vperm.xlu0 %4786, %v4588
  %v4788 = vpop.permute.xlu0 %4787
  %4790 = vset.pattern.permute.xlu0 2
  %4791 = vperm.xlu0 %4790, %v4589
  %v4792 = vpop.permute.xlu0 %4791
  %4794 = vset.pattern.permute.xlu0 2
  %4795 = vperm.xlu0 %4794, %v4590
  %v4796 = vpop.permute.xlu0 %4795
  %4798 = vset.pattern.permute.xlu0 2
  %4799 = vperm.xlu0 %4798, %v4591
  %v4800 = vpop.permute.xlu0 %4799
  %4802 = vset.pattern.permute.xlu0 2
  %4803 = vperm.xlu0 %4802, %v4592
  %v4804 = vpop.permute.xlu0 %4803
  %4806 = vset.pattern.permute.xlu0 2
  %4807 = vperm.xlu0 %4806, %v4593
  %v4808 = vpop.permute.xlu0 %4807
  %v4810 = vsel %vm4770, %v4780, 0.0
  %v4811 = vsel %vm4771, %v4784, 0.0
  %v4812 = vsel %vm4772, %v4788, 0.0
  %v4813 = vsel %vm4773, %v4792, 0.0
  %v4814 = vsel %vm4774, %v4796, 0.0
  %v4815 = vsel %vm4775, %v4800, 0.0
  %v4816 = vsel %vm4776, %v4804, 0.0
  %v4817 = vsel %vm4777, %v4808, 0.0
  %v4818 = vadd.f32 %v4666, %v4810
  %v4819 = vadd.f32 %v4667, %v4811
  %v4820 = vadd.f32 %v4668, %v4812
  %v4821 = vadd.f32 %v4669, %v4813
  %v4822 = vadd.f32 %v4670, %v4814
  %v4823 = vadd.f32 %v4671, %v4815
  %v4824 = vadd.f32 %v4672, %v4816
  %v4825 = vadd.f32 %v4673, %v4817
  %4826 = vset.pattern.permute.xlu0 3
  %4827 = vperm.xlu0 %4826, %v3490
  %v4828 = vpop.permute.xlu0 %4827
  %4829 = vset.pattern.permute.xlu0 3
  %4830 = vperm.xlu0 %4829, %v3491
  %v4831 = vpop.permute.xlu0 %4830
  %4832 = vset.pattern.permute.xlu0 3
  %4833 = vperm.xlu0 %4832, %v3492
  %v4834 = vpop.permute.xlu0 %4833
  %4835 = vset.pattern.permute.xlu0 3
  %4836 = vperm.xlu0 %4835, %v3493
  %v4837 = vpop.permute.xlu0 %4836
  %4838 = vset.pattern.permute.xlu0 3
  %4839 = vperm.xlu0 %4838, %v3494
  %v4840 = vpop.permute.xlu0 %4839
  %4841 = vset.pattern.permute.xlu0 3
  %4842 = vperm.xlu0 %4841, %v3495
  %v4843 = vpop.permute.xlu0 %4842
  %4844 = vset.pattern.permute.xlu0 3
  %4845 = vperm.xlu0 %4844, %v3496
  %v4846 = vpop.permute.xlu0 %4845
  %4847 = vset.pattern.permute.xlu0 3
  %4848 = vperm.xlu0 %4847, %v3497
  %v4849 = vpop.permute.xlu0 %4848
  %vm4850 = vcmp.eq.s32.totalorder %v461, %v4828
  %vm4851 = vcmp.eq.s32.totalorder %v461, %v4831
  %vm4852 = vcmp.eq.s32.totalorder %v461, %v4834
  %vm4853 = vcmp.eq.s32.totalorder %v461, %v4837
  %vm4854 = vcmp.eq.s32.totalorder %v461, %v4840
  %vm4855 = vcmp.eq.s32.totalorder %v461, %v4843
  %vm4856 = vcmp.eq.s32.totalorder %v461, %v4846
  %vm4857 = vcmp.eq.s32.totalorder %v461, %v4849
  %4858 = vset.pattern.permute.xlu0 3
  %4859 = vperm.xlu0 %4858, %v4586
  %v4860 = vpop.permute.xlu0 %4859
  %4862 = vset.pattern.permute.xlu0 3
  %4863 = vperm.xlu0 %4862, %v4587
  %v4864 = vpop.permute.xlu0 %4863
  %4866 = vset.pattern.permute.xlu0 3
  %4867 = vperm.xlu0 %4866, %v4588
  %v4868 = vpop.permute.xlu0 %4867
  %4870 = vset.pattern.permute.xlu0 3
  %4871 = vperm.xlu0 %4870, %v4589
  %v4872 = vpop.permute.xlu0 %4871
  %4874 = vset.pattern.permute.xlu0 3
  %4875 = vperm.xlu0 %4874, %v4590
  %v4876 = vpop.permute.xlu0 %4875
  %4878 = vset.pattern.permute.xlu0 3
  %4879 = vperm.xlu0 %4878, %v4591
  %v4880 = vpop.permute.xlu0 %4879
  %4882 = vset.pattern.permute.xlu0 3
  %4883 = vperm.xlu0 %4882, %v4592
  %v4884 = vpop.permute.xlu0 %4883
  %4886 = vset.pattern.permute.xlu0 3
  %4887 = vperm.xlu0 %4886, %v4593
  %v4888 = vpop.permute.xlu0 %4887
  %v4890 = vsel %vm4850, %v4860, 0.0
  %v4891 = vsel %vm4851, %v4864, 0.0
  %v4892 = vsel %vm4852, %v4868, 0.0
  %v4893 = vsel %vm4853, %v4872, 0.0
  %v4894 = vsel %vm4854, %v4876, 0.0
  %v4895 = vsel %vm4855, %v4880, 0.0
  %v4896 = vsel %vm4856, %v4884, 0.0
  %v4897 = vsel %vm4857, %v4888, 0.0
  %v4898 = vadd.f32 %v4738, %v4890
  %v4899 = vadd.f32 %v4739, %v4891
  %v4900 = vadd.f32 %v4740, %v4892
  %v4901 = vadd.f32 %v4741, %v4893
  %v4902 = vadd.f32 %v4742, %v4894
  %v4903 = vadd.f32 %v4743, %v4895
  %v4904 = vadd.f32 %v4744, %v4896
  %v4905 = vadd.f32 %v4745, %v4897
  %4906 = vset.pattern.permute.xlu0 4
  %4907 = vperm.xlu0 %4906, %v3490
  %v4908 = vpop.permute.xlu0 %4907
  %4909 = vset.pattern.permute.xlu0 4
  %4910 = vperm.xlu0 %4909, %v3491
  %v4911 = vpop.permute.xlu0 %4910
  %4912 = vset.pattern.permute.xlu0 4
  %4913 = vperm.xlu0 %4912, %v3492
  %v4914 = vpop.permute.xlu0 %4913
  %4915 = vset.pattern.permute.xlu0 4
  %4916 = vperm.xlu0 %4915, %v3493
  %v4917 = vpop.permute.xlu0 %4916
  %4918 = vset.pattern.permute.xlu0 4
  %4919 = vperm.xlu0 %4918, %v3494
  %v4920 = vpop.permute.xlu0 %4919
  %4921 = vset.pattern.permute.xlu0 4
  %4922 = vperm.xlu0 %4921, %v3495
  %v4923 = vpop.permute.xlu0 %4922
  %4924 = vset.pattern.permute.xlu0 4
  %4925 = vperm.xlu0 %4924, %v3496
  %v4926 = vpop.permute.xlu0 %4925
  %4927 = vset.pattern.permute.xlu0 4
  %4928 = vperm.xlu0 %4927, %v3497
  %v4929 = vpop.permute.xlu0 %4928
  %vm4930 = vcmp.eq.s32.totalorder %v461, %v4908
  %vm4931 = vcmp.eq.s32.totalorder %v461, %v4911
  %vm4932 = vcmp.eq.s32.totalorder %v461, %v4914
  %vm4933 = vcmp.eq.s32.totalorder %v461, %v4917
  %vm4934 = vcmp.eq.s32.totalorder %v461, %v4920
  %vm4935 = vcmp.eq.s32.totalorder %v461, %v4923
  %vm4936 = vcmp.eq.s32.totalorder %v461, %v4926
  %vm4937 = vcmp.eq.s32.totalorder %v461, %v4929
  %4938 = vset.pattern.permute.xlu0 4
  %4939 = vperm.xlu0 %4938, %v4586
  %v4940 = vpop.permute.xlu0 %4939
  %4942 = vset.pattern.permute.xlu0 4
  %4943 = vperm.xlu0 %4942, %v4587
  %v4944 = vpop.permute.xlu0 %4943
  %4946 = vset.pattern.permute.xlu0 4
  %4947 = vperm.xlu0 %4946, %v4588
  %v4948 = vpop.permute.xlu0 %4947
  %4950 = vset.pattern.permute.xlu0 4
  %4951 = vperm.xlu0 %4950, %v4589
  %v4952 = vpop.permute.xlu0 %4951
  %4954 = vset.pattern.permute.xlu0 4
  %4955 = vperm.xlu0 %4954, %v4590
  %v4956 = vpop.permute.xlu0 %4955
  %4958 = vset.pattern.permute.xlu0 4
  %4959 = vperm.xlu0 %4958, %v4591
  %v4960 = vpop.permute.xlu0 %4959
  %4962 = vset.pattern.permute.xlu0 4
  %4963 = vperm.xlu0 %4962, %v4592
  %v4964 = vpop.permute.xlu0 %4963
  %4966 = vset.pattern.permute.xlu0 4
  %4967 = vperm.xlu0 %4966, %v4593
  %v4968 = vpop.permute.xlu0 %4967
  %v4970 = vsel %vm4930, %v4940, 0.0
  %v4971 = vsel %vm4931, %v4944, 0.0
  %v4972 = vsel %vm4932, %v4948, 0.0
  %v4973 = vsel %vm4933, %v4952, 0.0
  %v4974 = vsel %vm4934, %v4956, 0.0
  %v4975 = vsel %vm4935, %v4960, 0.0
  %v4976 = vsel %vm4936, %v4964, 0.0
  %v4977 = vsel %vm4937, %v4968, 0.0
  %v4978 = vadd.f32 %v4818, %v4970
  %v4979 = vadd.f32 %v4819, %v4971
  %v4980 = vadd.f32 %v4820, %v4972
  %v4981 = vadd.f32 %v4821, %v4973
  %v4982 = vadd.f32 %v4822, %v4974
  %v4983 = vadd.f32 %v4823, %v4975
  %v4984 = vadd.f32 %v4824, %v4976
  %v4985 = vadd.f32 %v4825, %v4977
  %4986 = vset.pattern.permute.xlu0 5
  %4987 = vperm.xlu0 %4986, %v3490
  %v4988 = vpop.permute.xlu0 %4987
  %4989 = vset.pattern.permute.xlu0 5
  %4990 = vperm.xlu0 %4989, %v3491
  %v4991 = vpop.permute.xlu0 %4990
  %4992 = vset.pattern.permute.xlu0 5
  %4993 = vperm.xlu0 %4992, %v3492
  %v4994 = vpop.permute.xlu0 %4993
  %4995 = vset.pattern.permute.xlu0 5
  %4996 = vperm.xlu0 %4995, %v3493
  %v4997 = vpop.permute.xlu0 %4996
  %4998 = vset.pattern.permute.xlu0 5
  %4999 = vperm.xlu0 %4998, %v3494
  %v5000 = vpop.permute.xlu0 %4999
  %5001 = vset.pattern.permute.xlu0 5
  %5002 = vperm.xlu0 %5001, %v3495
  %v5003 = vpop.permute.xlu0 %5002
  %5004 = vset.pattern.permute.xlu0 5
  %5005 = vperm.xlu0 %5004, %v3496
  %v5006 = vpop.permute.xlu0 %5005
  %5007 = vset.pattern.permute.xlu0 5
  %5008 = vperm.xlu0 %5007, %v3497
  %v5009 = vpop.permute.xlu0 %5008
  %vm5010 = vcmp.eq.s32.totalorder %v461, %v4988
  %vm5011 = vcmp.eq.s32.totalorder %v461, %v4991
  %vm5012 = vcmp.eq.s32.totalorder %v461, %v4994
  %vm5013 = vcmp.eq.s32.totalorder %v461, %v4997
  %vm5014 = vcmp.eq.s32.totalorder %v461, %v5000
  %vm5015 = vcmp.eq.s32.totalorder %v461, %v5003
  %vm5016 = vcmp.eq.s32.totalorder %v461, %v5006
  %vm5017 = vcmp.eq.s32.totalorder %v461, %v5009
  %5018 = vset.pattern.permute.xlu0 5
  %5019 = vperm.xlu0 %5018, %v4586
  %v5020 = vpop.permute.xlu0 %5019
  %5022 = vset.pattern.permute.xlu0 5
  %5023 = vperm.xlu0 %5022, %v4587
  %v5024 = vpop.permute.xlu0 %5023
  %5026 = vset.pattern.permute.xlu0 5
  %5027 = vperm.xlu0 %5026, %v4588
  %v5028 = vpop.permute.xlu0 %5027
  %5030 = vset.pattern.permute.xlu0 5
  %5031 = vperm.xlu0 %5030, %v4589
  %v5032 = vpop.permute.xlu0 %5031
  %5034 = vset.pattern.permute.xlu0 5
  %5035 = vperm.xlu0 %5034, %v4590
  %v5036 = vpop.permute.xlu0 %5035
  %5038 = vset.pattern.permute.xlu0 5
  %5039 = vperm.xlu0 %5038, %v4591
  %v5040 = vpop.permute.xlu0 %5039
  %5042 = vset.pattern.permute.xlu0 5
  %5043 = vperm.xlu0 %5042, %v4592
  %v5044 = vpop.permute.xlu0 %5043
  %5046 = vset.pattern.permute.xlu0 5
  %5047 = vperm.xlu0 %5046, %v4593
  %v5048 = vpop.permute.xlu0 %5047
  %v5050 = vsel %vm5010, %v5020, 0.0
  %v5051 = vsel %vm5011, %v5024, 0.0
  %v5052 = vsel %vm5012, %v5028, 0.0
  %v5053 = vsel %vm5013, %v5032, 0.0
  %v5054 = vsel %vm5014, %v5036, 0.0
  %v5055 = vsel %vm5015, %v5040, 0.0
  %v5056 = vsel %vm5016, %v5044, 0.0
  %v5057 = vsel %vm5017, %v5048, 0.0
  %v5058 = vadd.f32 %v4898, %v5050
  %v5059 = vadd.f32 %v4899, %v5051
  %v5060 = vadd.f32 %v4900, %v5052
  %v5061 = vadd.f32 %v4901, %v5053
  %v5062 = vadd.f32 %v4902, %v5054
  %v5063 = vadd.f32 %v4903, %v5055
  %v5064 = vadd.f32 %v4904, %v5056
  %v5065 = vadd.f32 %v4905, %v5057
  %5066 = vset.pattern.permute.xlu0 6
  %5067 = vperm.xlu0 %5066, %v3490
  %v5068 = vpop.permute.xlu0 %5067
  %5069 = vset.pattern.permute.xlu0 6
  %5070 = vperm.xlu0 %5069, %v3491
  %v5071 = vpop.permute.xlu0 %5070
  %5072 = vset.pattern.permute.xlu0 6
  %5073 = vperm.xlu0 %5072, %v3492
  %v5074 = vpop.permute.xlu0 %5073
  %5075 = vset.pattern.permute.xlu0 6
  %5076 = vperm.xlu0 %5075, %v3493
  %v5077 = vpop.permute.xlu0 %5076
  %5078 = vset.pattern.permute.xlu0 6
  %5079 = vperm.xlu0 %5078, %v3494
  %v5080 = vpop.permute.xlu0 %5079
  %5081 = vset.pattern.permute.xlu0 6
  %5082 = vperm.xlu0 %5081, %v3495
  %v5083 = vpop.permute.xlu0 %5082
  %5084 = vset.pattern.permute.xlu0 6
  %5085 = vperm.xlu0 %5084, %v3496
  %v5086 = vpop.permute.xlu0 %5085
  %5087 = vset.pattern.permute.xlu0 6
  %5088 = vperm.xlu0 %5087, %v3497
  %v5089 = vpop.permute.xlu0 %5088
  %vm5090 = vcmp.eq.s32.totalorder %v461, %v5068
  %vm5091 = vcmp.eq.s32.totalorder %v461, %v5071
  %vm5092 = vcmp.eq.s32.totalorder %v461, %v5074
  %vm5093 = vcmp.eq.s32.totalorder %v461, %v5077
  %vm5094 = vcmp.eq.s32.totalorder %v461, %v5080
  %vm5095 = vcmp.eq.s32.totalorder %v461, %v5083
  %vm5096 = vcmp.eq.s32.totalorder %v461, %v5086
  %vm5097 = vcmp.eq.s32.totalorder %v461, %v5089
  %5098 = vset.pattern.permute.xlu0 6
  %5099 = vperm.xlu0 %5098, %v4586
  %v5100 = vpop.permute.xlu0 %5099
  %5102 = vset.pattern.permute.xlu0 6
  %5103 = vperm.xlu0 %5102, %v4587
  %v5104 = vpop.permute.xlu0 %5103
  %5106 = vset.pattern.permute.xlu0 6
  %5107 = vperm.xlu0 %5106, %v4588
  %v5108 = vpop.permute.xlu0 %5107
  %5110 = vset.pattern.permute.xlu0 6
  %5111 = vperm.xlu0 %5110, %v4589
  %v5112 = vpop.permute.xlu0 %5111
  %5114 = vset.pattern.permute.xlu0 6
  %5115 = vperm.xlu0 %5114, %v4590
  %v5116 = vpop.permute.xlu0 %5115
  %5118 = vset.pattern.permute.xlu0 6
  %5119 = vperm.xlu0 %5118, %v4591
  %v5120 = vpop.permute.xlu0 %5119
  %5122 = vset.pattern.permute.xlu0 6
  %5123 = vperm.xlu0 %5122, %v4592
  %v5124 = vpop.permute.xlu0 %5123
  %5126 = vset.pattern.permute.xlu0 6
  %5127 = vperm.xlu0 %5126, %v4593
  %v5128 = vpop.permute.xlu0 %5127
  %v5130 = vsel %vm5090, %v5100, 0.0
  %v5131 = vsel %vm5091, %v5104, 0.0
  %v5132 = vsel %vm5092, %v5108, 0.0
  %v5133 = vsel %vm5093, %v5112, 0.0
  %v5134 = vsel %vm5094, %v5116, 0.0
  %v5135 = vsel %vm5095, %v5120, 0.0
  %v5136 = vsel %vm5096, %v5124, 0.0
  %v5137 = vsel %vm5097, %v5128, 0.0
  %v5138 = vadd.f32 %v4978, %v5130
  %v5139 = vadd.f32 %v4979, %v5131
  %v5140 = vadd.f32 %v4980, %v5132
  %v5141 = vadd.f32 %v4981, %v5133
  %v5142 = vadd.f32 %v4982, %v5134
  %v5143 = vadd.f32 %v4983, %v5135
  %v5144 = vadd.f32 %v4984, %v5136
  %v5145 = vadd.f32 %v4985, %v5137
  %5146 = vset.pattern.permute.xlu0 7
  %5147 = vperm.xlu0 %5146, %v3490
  %v5148 = vpop.permute.xlu0 %5147
  %5149 = vset.pattern.permute.xlu0 7
  %5150 = vperm.xlu0 %5149, %v3491
  %v5151 = vpop.permute.xlu0 %5150
  %5152 = vset.pattern.permute.xlu0 7
  %5153 = vperm.xlu0 %5152, %v3492
  %v5154 = vpop.permute.xlu0 %5153
  %5155 = vset.pattern.permute.xlu0 7
  %5156 = vperm.xlu0 %5155, %v3493
  %v5157 = vpop.permute.xlu0 %5156
  %5158 = vset.pattern.permute.xlu0 7
  %5159 = vperm.xlu0 %5158, %v3494
  %v5160 = vpop.permute.xlu0 %5159
  %5161 = vset.pattern.permute.xlu0 7
  %5162 = vperm.xlu0 %5161, %v3495
  %v5163 = vpop.permute.xlu0 %5162
  %5164 = vset.pattern.permute.xlu0 7
  %5165 = vperm.xlu0 %5164, %v3496
  %v5166 = vpop.permute.xlu0 %5165
  %5167 = vset.pattern.permute.xlu0 7
  %5168 = vperm.xlu0 %5167, %v3497
  %v5169 = vpop.permute.xlu0 %5168
  %vm5170 = vcmp.eq.s32.totalorder %v461, %v5148
  %vm5171 = vcmp.eq.s32.totalorder %v461, %v5151
  %vm5172 = vcmp.eq.s32.totalorder %v461, %v5154
  %vm5173 = vcmp.eq.s32.totalorder %v461, %v5157
  %vm5174 = vcmp.eq.s32.totalorder %v461, %v5160
  %vm5175 = vcmp.eq.s32.totalorder %v461, %v5163
  %vm5176 = vcmp.eq.s32.totalorder %v461, %v5166
  %vm5177 = vcmp.eq.s32.totalorder %v461, %v5169
  %5178 = vset.pattern.permute.xlu0 7
  %5179 = vperm.xlu0 %5178, %v4586
  %v5180 = vpop.permute.xlu0 %5179
  %5182 = vset.pattern.permute.xlu0 7
  %5183 = vperm.xlu0 %5182, %v4587
  %v5184 = vpop.permute.xlu0 %5183
  %5186 = vset.pattern.permute.xlu0 7
  %5187 = vperm.xlu0 %5186, %v4588
  %v5188 = vpop.permute.xlu0 %5187
  %5190 = vset.pattern.permute.xlu0 7
  %5191 = vperm.xlu0 %5190, %v4589
  %v5192 = vpop.permute.xlu0 %5191
  %5194 = vset.pattern.permute.xlu0 7
  %5195 = vperm.xlu0 %5194, %v4590
  %v5196 = vpop.permute.xlu0 %5195
  %5198 = vset.pattern.permute.xlu0 7
  %5199 = vperm.xlu0 %5198, %v4591
  %v5200 = vpop.permute.xlu0 %5199
  %5202 = vset.pattern.permute.xlu0 7
  %5203 = vperm.xlu0 %5202, %v4592
  %v5204 = vpop.permute.xlu0 %5203
  %5206 = vset.pattern.permute.xlu0 7
  %5207 = vperm.xlu0 %5206, %v4593
  %v5208 = vpop.permute.xlu0 %5207
  %v5210 = vsel %vm5170, %v5180, 0.0
  %v5211 = vsel %vm5171, %v5184, 0.0
  %v5212 = vsel %vm5172, %v5188, 0.0
  %v5213 = vsel %vm5173, %v5192, 0.0
  %v5214 = vsel %vm5174, %v5196, 0.0
  %v5215 = vsel %vm5175, %v5200, 0.0
  %v5216 = vsel %vm5176, %v5204, 0.0
  %v5217 = vsel %vm5177, %v5208, 0.0
  %v5218 = vadd.f32 %v5058, %v5210
  %v5219 = vadd.f32 %v5059, %v5211
  %v5220 = vadd.f32 %v5060, %v5212
  %v5221 = vadd.f32 %v5061, %v5213
  %v5222 = vadd.f32 %v5062, %v5214
  %v5223 = vadd.f32 %v5063, %v5215
  %v5224 = vadd.f32 %v5064, %v5216
  %v5225 = vadd.f32 %v5065, %v5217
  %5226 = vset.pattern.permute.xlu0 8
  %5227 = vperm.xlu0 %5226, %v3490
  %v5228 = vpop.permute.xlu0 %5227
  %5229 = vset.pattern.permute.xlu0 8
  %5230 = vperm.xlu0 %5229, %v3491
  %v5231 = vpop.permute.xlu0 %5230
  %5232 = vset.pattern.permute.xlu0 8
  %5233 = vperm.xlu0 %5232, %v3492
  %v5234 = vpop.permute.xlu0 %5233
  %5235 = vset.pattern.permute.xlu0 8
  %5236 = vperm.xlu0 %5235, %v3493
  %v5237 = vpop.permute.xlu0 %5236
  %5238 = vset.pattern.permute.xlu0 8
  %5239 = vperm.xlu0 %5238, %v3494
  %v5240 = vpop.permute.xlu0 %5239
  %5241 = vset.pattern.permute.xlu0 8
  %5242 = vperm.xlu0 %5241, %v3495
  %v5243 = vpop.permute.xlu0 %5242
  %5244 = vset.pattern.permute.xlu0 8
  %5245 = vperm.xlu0 %5244, %v3496
  %v5246 = vpop.permute.xlu0 %5245
  %5247 = vset.pattern.permute.xlu0 8
  %5248 = vperm.xlu0 %5247, %v3497
  %v5249 = vpop.permute.xlu0 %5248
  %vm5250 = vcmp.eq.s32.totalorder %v461, %v5228
  %vm5251 = vcmp.eq.s32.totalorder %v461, %v5231
  %vm5252 = vcmp.eq.s32.totalorder %v461, %v5234
  %vm5253 = vcmp.eq.s32.totalorder %v461, %v5237
  %vm5254 = vcmp.eq.s32.totalorder %v461, %v5240
  %vm5255 = vcmp.eq.s32.totalorder %v461, %v5243
  %vm5256 = vcmp.eq.s32.totalorder %v461, %v5246
  %vm5257 = vcmp.eq.s32.totalorder %v461, %v5249
  %5258 = vset.pattern.permute.xlu0 8
  %5259 = vperm.xlu0 %5258, %v4586
  %v5260 = vpop.permute.xlu0 %5259
  %5262 = vset.pattern.permute.xlu0 8
  %5263 = vperm.xlu0 %5262, %v4587
  %v5264 = vpop.permute.xlu0 %5263
  %5266 = vset.pattern.permute.xlu0 8
  %5267 = vperm.xlu0 %5266, %v4588
  %v5268 = vpop.permute.xlu0 %5267
  %5270 = vset.pattern.permute.xlu0 8
  %5271 = vperm.xlu0 %5270, %v4589
  %v5272 = vpop.permute.xlu0 %5271
  %5274 = vset.pattern.permute.xlu0 8
  %5275 = vperm.xlu0 %5274, %v4590
  %v5276 = vpop.permute.xlu0 %5275
  %5278 = vset.pattern.permute.xlu0 8
  %5279 = vperm.xlu0 %5278, %v4591
  %v5280 = vpop.permute.xlu0 %5279
  %5282 = vset.pattern.permute.xlu0 8
  %5283 = vperm.xlu0 %5282, %v4592
  %v5284 = vpop.permute.xlu0 %5283
  %5286 = vset.pattern.permute.xlu0 8
  %5287 = vperm.xlu0 %5286, %v4593
  %v5288 = vpop.permute.xlu0 %5287
  %v5290 = vsel %vm5250, %v5260, 0.0
  %v5291 = vsel %vm5251, %v5264, 0.0
  %v5292 = vsel %vm5252, %v5268, 0.0
  %v5293 = vsel %vm5253, %v5272, 0.0
  %v5294 = vsel %vm5254, %v5276, 0.0
  %v5295 = vsel %vm5255, %v5280, 0.0
  %v5296 = vsel %vm5256, %v5284, 0.0
  %v5297 = vsel %vm5257, %v5288, 0.0
  %v5298 = vadd.f32 %v5138, %v5290
  %v5299 = vadd.f32 %v5139, %v5291
  %v5300 = vadd.f32 %v5140, %v5292
  %v5301 = vadd.f32 %v5141, %v5293
  %v5302 = vadd.f32 %v5142, %v5294
  %v5303 = vadd.f32 %v5143, %v5295
  %v5304 = vadd.f32 %v5144, %v5296
  %v5305 = vadd.f32 %v5145, %v5297
  %5306 = vset.pattern.permute.xlu0 9
  %5307 = vperm.xlu0 %5306, %v3490
  %v5308 = vpop.permute.xlu0 %5307
  %5309 = vset.pattern.permute.xlu0 9
  %5310 = vperm.xlu0 %5309, %v3491
  %v5311 = vpop.permute.xlu0 %5310
  %5312 = vset.pattern.permute.xlu0 9
  %5313 = vperm.xlu0 %5312, %v3492
  %v5314 = vpop.permute.xlu0 %5313
  %5315 = vset.pattern.permute.xlu0 9
  %5316 = vperm.xlu0 %5315, %v3493
  %v5317 = vpop.permute.xlu0 %5316
  %5318 = vset.pattern.permute.xlu0 9
  %5319 = vperm.xlu0 %5318, %v3494
  %v5320 = vpop.permute.xlu0 %5319
  %5321 = vset.pattern.permute.xlu0 9
  %5322 = vperm.xlu0 %5321, %v3495
  %v5323 = vpop.permute.xlu0 %5322
  %5324 = vset.pattern.permute.xlu0 9
  %5325 = vperm.xlu0 %5324, %v3496
  %v5326 = vpop.permute.xlu0 %5325
  %5327 = vset.pattern.permute.xlu0 9
  %5328 = vperm.xlu0 %5327, %v3497
  %v5329 = vpop.permute.xlu0 %5328
  %vm5330 = vcmp.eq.s32.totalorder %v461, %v5308
  %vm5331 = vcmp.eq.s32.totalorder %v461, %v5311
  %vm5332 = vcmp.eq.s32.totalorder %v461, %v5314
  %vm5333 = vcmp.eq.s32.totalorder %v461, %v5317
  %vm5334 = vcmp.eq.s32.totalorder %v461, %v5320
  %vm5335 = vcmp.eq.s32.totalorder %v461, %v5323
  %vm5336 = vcmp.eq.s32.totalorder %v461, %v5326
  %vm5337 = vcmp.eq.s32.totalorder %v461, %v5329
  %5338 = vset.pattern.permute.xlu0 9
  %5339 = vperm.xlu0 %5338, %v4586
  %v5340 = vpop.permute.xlu0 %5339
  %5342 = vset.pattern.permute.xlu0 9
  %5343 = vperm.xlu0 %5342, %v4587
  %v5344 = vpop.permute.xlu0 %5343
  %5346 = vset.pattern.permute.xlu0 9
  %5347 = vperm.xlu0 %5346, %v4588
  %v5348 = vpop.permute.xlu0 %5347
  %5350 = vset.pattern.permute.xlu0 9
  %5351 = vperm.xlu0 %5350, %v4589
  %v5352 = vpop.permute.xlu0 %5351
  %5354 = vset.pattern.permute.xlu0 9
  %5355 = vperm.xlu0 %5354, %v4590
  %v5356 = vpop.permute.xlu0 %5355
  %5358 = vset.pattern.permute.xlu0 9
  %5359 = vperm.xlu0 %5358, %v4591
  %v5360 = vpop.permute.xlu0 %5359
  %5362 = vset.pattern.permute.xlu0 9
  %5363 = vperm.xlu0 %5362, %v4592
  %v5364 = vpop.permute.xlu0 %5363
  %5366 = vset.pattern.permute.xlu0 9
  %5367 = vperm.xlu0 %5366, %v4593
  %v5368 = vpop.permute.xlu0 %5367
  %v5370 = vsel %vm5330, %v5340, 0.0
  %v5371 = vsel %vm5331, %v5344, 0.0
  %v5372 = vsel %vm5332, %v5348, 0.0
  %v5373 = vsel %vm5333, %v5352, 0.0
  %v5374 = vsel %vm5334, %v5356, 0.0
  %v5375 = vsel %vm5335, %v5360, 0.0
  %v5376 = vsel %vm5336, %v5364, 0.0
  %v5377 = vsel %vm5337, %v5368, 0.0
  %v5378 = vadd.f32 %v5218, %v5370
  %v5379 = vadd.f32 %v5219, %v5371
  %v5380 = vadd.f32 %v5220, %v5372
  %v5381 = vadd.f32 %v5221, %v5373
  %v5382 = vadd.f32 %v5222, %v5374
  %v5383 = vadd.f32 %v5223, %v5375
  %v5384 = vadd.f32 %v5224, %v5376
  %v5385 = vadd.f32 %v5225, %v5377
  %5386 = vset.pattern.permute.xlu0 10
  %5387 = vperm.xlu0 %5386, %v3490
  %v5388 = vpop.permute.xlu0 %5387
  %5389 = vset.pattern.permute.xlu0 10
  %5390 = vperm.xlu0 %5389, %v3491
  %v5391 = vpop.permute.xlu0 %5390
  %5392 = vset.pattern.permute.xlu0 10
  %5393 = vperm.xlu0 %5392, %v3492
  %v5394 = vpop.permute.xlu0 %5393
  %5395 = vset.pattern.permute.xlu0 10
  %5396 = vperm.xlu0 %5395, %v3493
  %v5397 = vpop.permute.xlu0 %5396
  %5398 = vset.pattern.permute.xlu0 10
  %5399 = vperm.xlu0 %5398, %v3494
  %v5400 = vpop.permute.xlu0 %5399
  %5401 = vset.pattern.permute.xlu0 10
  %5402 = vperm.xlu0 %5401, %v3495
  %v5403 = vpop.permute.xlu0 %5402
  %5404 = vset.pattern.permute.xlu0 10
  %5405 = vperm.xlu0 %5404, %v3496
  %v5406 = vpop.permute.xlu0 %5405
  %5407 = vset.pattern.permute.xlu0 10
  %5408 = vperm.xlu0 %5407, %v3497
  %v5409 = vpop.permute.xlu0 %5408
  %vm5410 = vcmp.eq.s32.totalorder %v461, %v5388
  %vm5411 = vcmp.eq.s32.totalorder %v461, %v5391
  %vm5412 = vcmp.eq.s32.totalorder %v461, %v5394
  %vm5413 = vcmp.eq.s32.totalorder %v461, %v5397
  %vm5414 = vcmp.eq.s32.totalorder %v461, %v5400
  %vm5415 = vcmp.eq.s32.totalorder %v461, %v5403
  %vm5416 = vcmp.eq.s32.totalorder %v461, %v5406
  %vm5417 = vcmp.eq.s32.totalorder %v461, %v5409
  %5418 = vset.pattern.permute.xlu0 10
  %5419 = vperm.xlu0 %5418, %v4586
  %v5420 = vpop.permute.xlu0 %5419
  %5422 = vset.pattern.permute.xlu0 10
  %5423 = vperm.xlu0 %5422, %v4587
  %v5424 = vpop.permute.xlu0 %5423
  %5426 = vset.pattern.permute.xlu0 10
  %5427 = vperm.xlu0 %5426, %v4588
  %v5428 = vpop.permute.xlu0 %5427
  %5430 = vset.pattern.permute.xlu0 10
  %5431 = vperm.xlu0 %5430, %v4589
  %v5432 = vpop.permute.xlu0 %5431
  %5434 = vset.pattern.permute.xlu0 10
  %5435 = vperm.xlu0 %5434, %v4590
  %v5436 = vpop.permute.xlu0 %5435
  %5438 = vset.pattern.permute.xlu0 10
  %5439 = vperm.xlu0 %5438, %v4591
  %v5440 = vpop.permute.xlu0 %5439
  %5442 = vset.pattern.permute.xlu0 10
  %5443 = vperm.xlu0 %5442, %v4592
  %v5444 = vpop.permute.xlu0 %5443
  %5446 = vset.pattern.permute.xlu0 10
  %5447 = vperm.xlu0 %5446, %v4593
  %v5448 = vpop.permute.xlu0 %5447
  %v5450 = vsel %vm5410, %v5420, 0.0
  %v5451 = vsel %vm5411, %v5424, 0.0
  %v5452 = vsel %vm5412, %v5428, 0.0
  %v5453 = vsel %vm5413, %v5432, 0.0
  %v5454 = vsel %vm5414, %v5436, 0.0
  %v5455 = vsel %vm5415, %v5440, 0.0
  %v5456 = vsel %vm5416, %v5444, 0.0
  %v5457 = vsel %vm5417, %v5448, 0.0
  %v5458 = vadd.f32 %v5298, %v5450
  %v5459 = vadd.f32 %v5299, %v5451
  %v5460 = vadd.f32 %v5300, %v5452
  %v5461 = vadd.f32 %v5301, %v5453
  %v5462 = vadd.f32 %v5302, %v5454
  %v5463 = vadd.f32 %v5303, %v5455
  %v5464 = vadd.f32 %v5304, %v5456
  %v5465 = vadd.f32 %v5305, %v5457
  %5466 = vset.pattern.permute.xlu0 11
  %5467 = vperm.xlu0 %5466, %v3490
  %v5468 = vpop.permute.xlu0 %5467
  %5469 = vset.pattern.permute.xlu0 11
  %5470 = vperm.xlu0 %5469, %v3491
  %v5471 = vpop.permute.xlu0 %5470
  %5472 = vset.pattern.permute.xlu0 11
  %5473 = vperm.xlu0 %5472, %v3492
  %v5474 = vpop.permute.xlu0 %5473
  %5475 = vset.pattern.permute.xlu0 11
  %5476 = vperm.xlu0 %5475, %v3493
  %v5477 = vpop.permute.xlu0 %5476
  %5478 = vset.pattern.permute.xlu0 11
  %5479 = vperm.xlu0 %5478, %v3494
  %v5480 = vpop.permute.xlu0 %5479
  %5481 = vset.pattern.permute.xlu0 11
  %5482 = vperm.xlu0 %5481, %v3495
  %v5483 = vpop.permute.xlu0 %5482
  %5484 = vset.pattern.permute.xlu0 11
  %5485 = vperm.xlu0 %5484, %v3496
  %v5486 = vpop.permute.xlu0 %5485
  %5487 = vset.pattern.permute.xlu0 11
  %5488 = vperm.xlu0 %5487, %v3497
  %v5489 = vpop.permute.xlu0 %5488
  %vm5490 = vcmp.eq.s32.totalorder %v461, %v5468
  %vm5491 = vcmp.eq.s32.totalorder %v461, %v5471
  %vm5492 = vcmp.eq.s32.totalorder %v461, %v5474
  %vm5493 = vcmp.eq.s32.totalorder %v461, %v5477
  %vm5494 = vcmp.eq.s32.totalorder %v461, %v5480
  %vm5495 = vcmp.eq.s32.totalorder %v461, %v5483
  %vm5496 = vcmp.eq.s32.totalorder %v461, %v5486
  %vm5497 = vcmp.eq.s32.totalorder %v461, %v5489
  %5498 = vset.pattern.permute.xlu0 11
  %5499 = vperm.xlu0 %5498, %v4586
  %v5500 = vpop.permute.xlu0 %5499
  %5502 = vset.pattern.permute.xlu0 11
  %5503 = vperm.xlu0 %5502, %v4587
  %v5504 = vpop.permute.xlu0 %5503
  %5506 = vset.pattern.permute.xlu0 11
  %5507 = vperm.xlu0 %5506, %v4588
  %v5508 = vpop.permute.xlu0 %5507
  %5510 = vset.pattern.permute.xlu0 11
  %5511 = vperm.xlu0 %5510, %v4589
  %v5512 = vpop.permute.xlu0 %5511
  %5514 = vset.pattern.permute.xlu0 11
  %5515 = vperm.xlu0 %5514, %v4590
  %v5516 = vpop.permute.xlu0 %5515
  %5518 = vset.pattern.permute.xlu0 11
  %5519 = vperm.xlu0 %5518, %v4591
  %v5520 = vpop.permute.xlu0 %5519
  %5522 = vset.pattern.permute.xlu0 11
  %5523 = vperm.xlu0 %5522, %v4592
  %v5524 = vpop.permute.xlu0 %5523
  %5526 = vset.pattern.permute.xlu0 11
  %5527 = vperm.xlu0 %5526, %v4593
  %v5528 = vpop.permute.xlu0 %5527
  %v5530 = vsel %vm5490, %v5500, 0.0
  %v5531 = vsel %vm5491, %v5504, 0.0
  %v5532 = vsel %vm5492, %v5508, 0.0
  %v5533 = vsel %vm5493, %v5512, 0.0
  %v5534 = vsel %vm5494, %v5516, 0.0
  %v5535 = vsel %vm5495, %v5520, 0.0
  %v5536 = vsel %vm5496, %v5524, 0.0
  %v5537 = vsel %vm5497, %v5528, 0.0
  %v5538 = vadd.f32 %v5378, %v5530
  %v5539 = vadd.f32 %v5379, %v5531
  %v5540 = vadd.f32 %v5380, %v5532
  %v5541 = vadd.f32 %v5381, %v5533
  %v5542 = vadd.f32 %v5382, %v5534
  %v5543 = vadd.f32 %v5383, %v5535
  %v5544 = vadd.f32 %v5384, %v5536
  %v5545 = vadd.f32 %v5385, %v5537
  %v5546 = vsel %vm3594, %v3602, 0.0
  %v5547 = vsel %vm3595, %v3603, 0.0
  %v5548 = vsel %vm3596, %v3604, 0.0
  %v5549 = vsel %vm3597, %v3605, 0.0
  %v5550 = vsel %vm3598, %v3606, 0.0
  %v5551 = vsel %vm3599, %v3607, 0.0
  %v5552 = vsel %vm3600, %v3608, 0.0
  %v5553 = vsel %vm3601, %v3609, 0.0
  %5554 = vset.pattern.permute.xlu0 0
  %5555 = vperm.xlu0 %5554, %v3498
  %v5556 = vpop.permute.xlu0 %5555
  %5557 = vset.pattern.permute.xlu0 0
  %5558 = vperm.xlu0 %5557, %v3499
  %v5559 = vpop.permute.xlu0 %5558
  %5560 = vset.pattern.permute.xlu0 0
  %5561 = vperm.xlu0 %5560, %v3500
  %v5562 = vpop.permute.xlu0 %5561
  %5563 = vset.pattern.permute.xlu0 0
  %5564 = vperm.xlu0 %5563, %v3501
  %v5565 = vpop.permute.xlu0 %5564
  %5566 = vset.pattern.permute.xlu0 0
  %5567 = vperm.xlu0 %5566, %v3502
  %v5568 = vpop.permute.xlu0 %5567
  %5569 = vset.pattern.permute.xlu0 0
  %5570 = vperm.xlu0 %5569, %v3503
  %v5571 = vpop.permute.xlu0 %5570
  %5572 = vset.pattern.permute.xlu0 0
  %5573 = vperm.xlu0 %5572, %v3504
  %v5574 = vpop.permute.xlu0 %5573
  %5575 = vset.pattern.permute.xlu0 0
  %5576 = vperm.xlu0 %5575, %v3505
  %v5577 = vpop.permute.xlu0 %5576
  %vm5578 = vcmp.eq.s32.totalorder %v461, %v5556
  %vm5579 = vcmp.eq.s32.totalorder %v461, %v5559
  %vm5580 = vcmp.eq.s32.totalorder %v461, %v5562
  %vm5581 = vcmp.eq.s32.totalorder %v461, %v5565
  %vm5582 = vcmp.eq.s32.totalorder %v461, %v5568
  %vm5583 = vcmp.eq.s32.totalorder %v461, %v5571
  %vm5584 = vcmp.eq.s32.totalorder %v461, %v5574
  %vm5585 = vcmp.eq.s32.totalorder %v461, %v5577
  %5587 = vset.pattern.permute.xlu0 0
  %5588 = vperm.xlu0 %5587, %v5546
  %v5589 = vpop.permute.xlu0 %5588
  %5592 = vset.pattern.permute.xlu0 0
  %5593 = vperm.xlu0 %5592, %v5547
  %v5594 = vpop.permute.xlu0 %5593
  %5597 = vset.pattern.permute.xlu0 0
  %5598 = vperm.xlu0 %5597, %v5548
  %v5599 = vpop.permute.xlu0 %5598
  %5602 = vset.pattern.permute.xlu0 0
  %5603 = vperm.xlu0 %5602, %v5549
  %v5604 = vpop.permute.xlu0 %5603
  %5607 = vset.pattern.permute.xlu0 0
  %5608 = vperm.xlu0 %5607, %v5550
  %v5609 = vpop.permute.xlu0 %5608
  %5612 = vset.pattern.permute.xlu0 0
  %5613 = vperm.xlu0 %5612, %v5551
  %v5614 = vpop.permute.xlu0 %5613
  %5617 = vset.pattern.permute.xlu0 0
  %5618 = vperm.xlu0 %5617, %v5552
  %v5619 = vpop.permute.xlu0 %5618
  %5622 = vset.pattern.permute.xlu0 0
  %5623 = vperm.xlu0 %5622, %v5553
  %v5624 = vpop.permute.xlu0 %5623
  %v5626 = vsel %vm5578, %v5589, 0.0
  %v5627 = vsel %vm5579, %v5594, 0.0
  %v5628 = vsel %vm5580, %v5599, 0.0
  %v5629 = vsel %vm5581, %v5604, 0.0
  %v5630 = vsel %vm5582, %v5609, 0.0
  %v5631 = vsel %vm5583, %v5614, 0.0
  %v5632 = vsel %vm5584, %v5619, 0.0
  %v5633 = vsel %vm5585, %v5624, 0.0
  %5634 = vset.pattern.permute.xlu0 1
  %5635 = vperm.xlu0 %5634, %v3498
  %v5636 = vpop.permute.xlu0 %5635
  %5637 = vset.pattern.permute.xlu0 1
  %5638 = vperm.xlu0 %5637, %v3499
  %v5639 = vpop.permute.xlu0 %5638
  %5640 = vset.pattern.permute.xlu0 1
  %5641 = vperm.xlu0 %5640, %v3500
  %v5642 = vpop.permute.xlu0 %5641
  %5643 = vset.pattern.permute.xlu0 1
  %5644 = vperm.xlu0 %5643, %v3501
  %v5645 = vpop.permute.xlu0 %5644
  %5646 = vset.pattern.permute.xlu0 1
  %5647 = vperm.xlu0 %5646, %v3502
  %v5648 = vpop.permute.xlu0 %5647
  %5649 = vset.pattern.permute.xlu0 1
  %5650 = vperm.xlu0 %5649, %v3503
  %v5651 = vpop.permute.xlu0 %5650
  %5652 = vset.pattern.permute.xlu0 1
  %5653 = vperm.xlu0 %5652, %v3504
  %v5654 = vpop.permute.xlu0 %5653
  %5655 = vset.pattern.permute.xlu0 1
  %5656 = vperm.xlu0 %5655, %v3505
  %v5657 = vpop.permute.xlu0 %5656
  %vm5658 = vcmp.eq.s32.totalorder %v461, %v5636
  %vm5659 = vcmp.eq.s32.totalorder %v461, %v5639
  %vm5660 = vcmp.eq.s32.totalorder %v461, %v5642
  %vm5661 = vcmp.eq.s32.totalorder %v461, %v5645
  %vm5662 = vcmp.eq.s32.totalorder %v461, %v5648
  %vm5663 = vcmp.eq.s32.totalorder %v461, %v5651
  %vm5664 = vcmp.eq.s32.totalorder %v461, %v5654
  %vm5665 = vcmp.eq.s32.totalorder %v461, %v5657
  %5666 = vset.pattern.permute.xlu0 1
  %5667 = vperm.xlu0 %5666, %v5546
  %v5668 = vpop.permute.xlu0 %5667
  %5670 = vset.pattern.permute.xlu0 1
  %5671 = vperm.xlu0 %5670, %v5547
  %v5672 = vpop.permute.xlu0 %5671
  %5674 = vset.pattern.permute.xlu0 1
  %5675 = vperm.xlu0 %5674, %v5548
  %v5676 = vpop.permute.xlu0 %5675
  %5678 = vset.pattern.permute.xlu0 1
  %5679 = vperm.xlu0 %5678, %v5549
  %v5680 = vpop.permute.xlu0 %5679
  %5682 = vset.pattern.permute.xlu0 1
  %5683 = vperm.xlu0 %5682, %v5550
  %v5684 = vpop.permute.xlu0 %5683
  %5686 = vset.pattern.permute.xlu0 1
  %5687 = vperm.xlu0 %5686, %v5551
  %v5688 = vpop.permute.xlu0 %5687
  %5690 = vset.pattern.permute.xlu0 1
  %5691 = vperm.xlu0 %5690, %v5552
  %v5692 = vpop.permute.xlu0 %5691
  %5694 = vset.pattern.permute.xlu0 1
  %5695 = vperm.xlu0 %5694, %v5553
  %v5696 = vpop.permute.xlu0 %5695
  %v5698 = vsel %vm5658, %v5668, 0.0
  %v5699 = vsel %vm5659, %v5672, 0.0
  %v5700 = vsel %vm5660, %v5676, 0.0
  %v5701 = vsel %vm5661, %v5680, 0.0
  %v5702 = vsel %vm5662, %v5684, 0.0
  %v5703 = vsel %vm5663, %v5688, 0.0
  %v5704 = vsel %vm5664, %v5692, 0.0
  %v5705 = vsel %vm5665, %v5696, 0.0
  %5706 = vset.pattern.permute.xlu0 2
  %5707 = vperm.xlu0 %5706, %v3498
  %v5708 = vpop.permute.xlu0 %5707
  %5709 = vset.pattern.permute.xlu0 2
  %5710 = vperm.xlu0 %5709, %v3499
  %v5711 = vpop.permute.xlu0 %5710
  %5712 = vset.pattern.permute.xlu0 2
  %5713 = vperm.xlu0 %5712, %v3500
  %v5714 = vpop.permute.xlu0 %5713
  %5715 = vset.pattern.permute.xlu0 2
  %5716 = vperm.xlu0 %5715, %v3501
  %v5717 = vpop.permute.xlu0 %5716
  %5718 = vset.pattern.permute.xlu0 2
  %5719 = vperm.xlu0 %5718, %v3502
  %v5720 = vpop.permute.xlu0 %5719
  %5721 = vset.pattern.permute.xlu0 2
  %5722 = vperm.xlu0 %5721, %v3503
  %v5723 = vpop.permute.xlu0 %5722
  %5724 = vset.pattern.permute.xlu0 2
  %5725 = vperm.xlu0 %5724, %v3504
  %v5726 = vpop.permute.xlu0 %5725
  %5727 = vset.pattern.permute.xlu0 2
  %5728 = vperm.xlu0 %5727, %v3505
  %v5729 = vpop.permute.xlu0 %5728
  %vm5730 = vcmp.eq.s32.totalorder %v461, %v5708
  %vm5731 = vcmp.eq.s32.totalorder %v461, %v5711
  %vm5732 = vcmp.eq.s32.totalorder %v461, %v5714
  %vm5733 = vcmp.eq.s32.totalorder %v461, %v5717
  %vm5734 = vcmp.eq.s32.totalorder %v461, %v5720
  %vm5735 = vcmp.eq.s32.totalorder %v461, %v5723
  %vm5736 = vcmp.eq.s32.totalorder %v461, %v5726
  %vm5737 = vcmp.eq.s32.totalorder %v461, %v5729
  %5738 = vset.pattern.permute.xlu0 2
  %5739 = vperm.xlu0 %5738, %v5546
  %v5740 = vpop.permute.xlu0 %5739
  %5742 = vset.pattern.permute.xlu0 2
  %5743 = vperm.xlu0 %5742, %v5547
  %v5744 = vpop.permute.xlu0 %5743
  %5746 = vset.pattern.permute.xlu0 2
  %5747 = vperm.xlu0 %5746, %v5548
  %v5748 = vpop.permute.xlu0 %5747
  %5750 = vset.pattern.permute.xlu0 2
  %5751 = vperm.xlu0 %5750, %v5549
  %v5752 = vpop.permute.xlu0 %5751
  %5754 = vset.pattern.permute.xlu0 2
  %5755 = vperm.xlu0 %5754, %v5550
  %v5756 = vpop.permute.xlu0 %5755
  %5758 = vset.pattern.permute.xlu0 2
  %5759 = vperm.xlu0 %5758, %v5551
  %v5760 = vpop.permute.xlu0 %5759
  %5762 = vset.pattern.permute.xlu0 2
  %5763 = vperm.xlu0 %5762, %v5552
  %v5764 = vpop.permute.xlu0 %5763
  %5766 = vset.pattern.permute.xlu0 2
  %5767 = vperm.xlu0 %5766, %v5553
  %v5768 = vpop.permute.xlu0 %5767
  %v5770 = vsel %vm5730, %v5740, 0.0
  %v5771 = vsel %vm5731, %v5744, 0.0
  %v5772 = vsel %vm5732, %v5748, 0.0
  %v5773 = vsel %vm5733, %v5752, 0.0
  %v5774 = vsel %vm5734, %v5756, 0.0
  %v5775 = vsel %vm5735, %v5760, 0.0
  %v5776 = vsel %vm5736, %v5764, 0.0
  %v5777 = vsel %vm5737, %v5768, 0.0
  %v5778 = vadd.f32 %v5626, %v5770
  %v5779 = vadd.f32 %v5627, %v5771
  %v5780 = vadd.f32 %v5628, %v5772
  %v5781 = vadd.f32 %v5629, %v5773
  %v5782 = vadd.f32 %v5630, %v5774
  %v5783 = vadd.f32 %v5631, %v5775
  %v5784 = vadd.f32 %v5632, %v5776
  %v5785 = vadd.f32 %v5633, %v5777
  %5786 = vset.pattern.permute.xlu0 3
  %5787 = vperm.xlu0 %5786, %v3498
  %v5788 = vpop.permute.xlu0 %5787
  %5789 = vset.pattern.permute.xlu0 3
  %5790 = vperm.xlu0 %5789, %v3499
  %v5791 = vpop.permute.xlu0 %5790
  %5792 = vset.pattern.permute.xlu0 3
  %5793 = vperm.xlu0 %5792, %v3500
  %v5794 = vpop.permute.xlu0 %5793
  %5795 = vset.pattern.permute.xlu0 3
  %5796 = vperm.xlu0 %5795, %v3501
  %v5797 = vpop.permute.xlu0 %5796
  %5798 = vset.pattern.permute.xlu0 3
  %5799 = vperm.xlu0 %5798, %v3502
  %v5800 = vpop.permute.xlu0 %5799
  %5801 = vset.pattern.permute.xlu0 3
  %5802 = vperm.xlu0 %5801, %v3503
  %v5803 = vpop.permute.xlu0 %5802
  %5804 = vset.pattern.permute.xlu0 3
  %5805 = vperm.xlu0 %5804, %v3504
  %v5806 = vpop.permute.xlu0 %5805
  %5807 = vset.pattern.permute.xlu0 3
  %5808 = vperm.xlu0 %5807, %v3505
  %v5809 = vpop.permute.xlu0 %5808
  %vm5810 = vcmp.eq.s32.totalorder %v461, %v5788
  %vm5811 = vcmp.eq.s32.totalorder %v461, %v5791
  %vm5812 = vcmp.eq.s32.totalorder %v461, %v5794
  %vm5813 = vcmp.eq.s32.totalorder %v461, %v5797
  %vm5814 = vcmp.eq.s32.totalorder %v461, %v5800
  %vm5815 = vcmp.eq.s32.totalorder %v461, %v5803
  %vm5816 = vcmp.eq.s32.totalorder %v461, %v5806
  %vm5817 = vcmp.eq.s32.totalorder %v461, %v5809
  %5818 = vset.pattern.permute.xlu0 3
  %5819 = vperm.xlu0 %5818, %v5546
  %v5820 = vpop.permute.xlu0 %5819
  %5822 = vset.pattern.permute.xlu0 3
  %5823 = vperm.xlu0 %5822, %v5547
  %v5824 = vpop.permute.xlu0 %5823
  %5826 = vset.pattern.permute.xlu0 3
  %5827 = vperm.xlu0 %5826, %v5548
  %v5828 = vpop.permute.xlu0 %5827
  %5830 = vset.pattern.permute.xlu0 3
  %5831 = vperm.xlu0 %5830, %v5549
  %v5832 = vpop.permute.xlu0 %5831
  %5834 = vset.pattern.permute.xlu0 3
  %5835 = vperm.xlu0 %5834, %v5550
  %v5836 = vpop.permute.xlu0 %5835
  %5838 = vset.pattern.permute.xlu0 3
  %5839 = vperm.xlu0 %5838, %v5551
  %v5840 = vpop.permute.xlu0 %5839
  %5842 = vset.pattern.permute.xlu0 3
  %5843 = vperm.xlu0 %5842, %v5552
  %v5844 = vpop.permute.xlu0 %5843
  %5846 = vset.pattern.permute.xlu0 3
  %5847 = vperm.xlu0 %5846, %v5553
  %v5848 = vpop.permute.xlu0 %5847
  %v5850 = vsel %vm5810, %v5820, 0.0
  %v5851 = vsel %vm5811, %v5824, 0.0
  %v5852 = vsel %vm5812, %v5828, 0.0
  %v5853 = vsel %vm5813, %v5832, 0.0
  %v5854 = vsel %vm5814, %v5836, 0.0
  %v5855 = vsel %vm5815, %v5840, 0.0
  %v5856 = vsel %vm5816, %v5844, 0.0
  %v5857 = vsel %vm5817, %v5848, 0.0
  %v5858 = vadd.f32 %v5698, %v5850
  %v5859 = vadd.f32 %v5699, %v5851
  %v5860 = vadd.f32 %v5700, %v5852
  %v5861 = vadd.f32 %v5701, %v5853
  %v5862 = vadd.f32 %v5702, %v5854
  %v5863 = vadd.f32 %v5703, %v5855
  %v5864 = vadd.f32 %v5704, %v5856
  %v5865 = vadd.f32 %v5705, %v5857
  %5866 = vset.pattern.permute.xlu0 4
  %5867 = vperm.xlu0 %5866, %v3498
  %v5868 = vpop.permute.xlu0 %5867
  %5869 = vset.pattern.permute.xlu0 4
  %5870 = vperm.xlu0 %5869, %v3499
  %v5871 = vpop.permute.xlu0 %5870
  %5872 = vset.pattern.permute.xlu0 4
  %5873 = vperm.xlu0 %5872, %v3500
  %v5874 = vpop.permute.xlu0 %5873
  %5875 = vset.pattern.permute.xlu0 4
  %5876 = vperm.xlu0 %5875, %v3501
  %v5877 = vpop.permute.xlu0 %5876
  %5878 = vset.pattern.permute.xlu0 4
  %5879 = vperm.xlu0 %5878, %v3502
  %v5880 = vpop.permute.xlu0 %5879
  %5881 = vset.pattern.permute.xlu0 4
  %5882 = vperm.xlu0 %5881, %v3503
  %v5883 = vpop.permute.xlu0 %5882
  %5884 = vset.pattern.permute.xlu0 4
  %5885 = vperm.xlu0 %5884, %v3504
  %v5886 = vpop.permute.xlu0 %5885
  %5887 = vset.pattern.permute.xlu0 4
  %5888 = vperm.xlu0 %5887, %v3505
  %v5889 = vpop.permute.xlu0 %5888
  %vm5890 = vcmp.eq.s32.totalorder %v461, %v5868
  %vm5891 = vcmp.eq.s32.totalorder %v461, %v5871
  %vm5892 = vcmp.eq.s32.totalorder %v461, %v5874
  %vm5893 = vcmp.eq.s32.totalorder %v461, %v5877
  %vm5894 = vcmp.eq.s32.totalorder %v461, %v5880
  %vm5895 = vcmp.eq.s32.totalorder %v461, %v5883
  %vm5896 = vcmp.eq.s32.totalorder %v461, %v5886
  %vm5897 = vcmp.eq.s32.totalorder %v461, %v5889
  %5898 = vset.pattern.permute.xlu0 4
  %5899 = vperm.xlu0 %5898, %v5546
  %v5900 = vpop.permute.xlu0 %5899
  %5902 = vset.pattern.permute.xlu0 4
  %5903 = vperm.xlu0 %5902, %v5547
  %v5904 = vpop.permute.xlu0 %5903
  %5906 = vset.pattern.permute.xlu0 4
  %5907 = vperm.xlu0 %5906, %v5548
  %v5908 = vpop.permute.xlu0 %5907
  %5910 = vset.pattern.permute.xlu0 4
  %5911 = vperm.xlu0 %5910, %v5549
  %v5912 = vpop.permute.xlu0 %5911
  %5914 = vset.pattern.permute.xlu0 4
  %5915 = vperm.xlu0 %5914, %v5550
  %v5916 = vpop.permute.xlu0 %5915
  %5918 = vset.pattern.permute.xlu0 4
  %5919 = vperm.xlu0 %5918, %v5551
  %v5920 = vpop.permute.xlu0 %5919
  %5922 = vset.pattern.permute.xlu0 4
  %5923 = vperm.xlu0 %5922, %v5552
  %v5924 = vpop.permute.xlu0 %5923
  %5926 = vset.pattern.permute.xlu0 4
  %5927 = vperm.xlu0 %5926, %v5553
  %v5928 = vpop.permute.xlu0 %5927
  %v5930 = vsel %vm5890, %v5900, 0.0
  %v5931 = vsel %vm5891, %v5904, 0.0
  %v5932 = vsel %vm5892, %v5908, 0.0
  %v5933 = vsel %vm5893, %v5912, 0.0
  %v5934 = vsel %vm5894, %v5916, 0.0
  %v5935 = vsel %vm5895, %v5920, 0.0
  %v5936 = vsel %vm5896, %v5924, 0.0
  %v5937 = vsel %vm5897, %v5928, 0.0
  %v5938 = vadd.f32 %v5778, %v5930
  %v5939 = vadd.f32 %v5779, %v5931
  %v5940 = vadd.f32 %v5780, %v5932
  %v5941 = vadd.f32 %v5781, %v5933
  %v5942 = vadd.f32 %v5782, %v5934
  %v5943 = vadd.f32 %v5783, %v5935
  %v5944 = vadd.f32 %v5784, %v5936
  %v5945 = vadd.f32 %v5785, %v5937
  %5946 = vset.pattern.permute.xlu0 5
  %5947 = vperm.xlu0 %5946, %v3498
  %v5948 = vpop.permute.xlu0 %5947
  %5949 = vset.pattern.permute.xlu0 5
  %5950 = vperm.xlu0 %5949, %v3499
  %v5951 = vpop.permute.xlu0 %5950
  %5952 = vset.pattern.permute.xlu0 5
  %5953 = vperm.xlu0 %5952, %v3500
  %v5954 = vpop.permute.xlu0 %5953
  %5955 = vset.pattern.permute.xlu0 5
  %5956 = vperm.xlu0 %5955, %v3501
  %v5957 = vpop.permute.xlu0 %5956
  %5958 = vset.pattern.permute.xlu0 5
  %5959 = vperm.xlu0 %5958, %v3502
  %v5960 = vpop.permute.xlu0 %5959
  %5961 = vset.pattern.permute.xlu0 5
  %5962 = vperm.xlu0 %5961, %v3503
  %v5963 = vpop.permute.xlu0 %5962
  %5964 = vset.pattern.permute.xlu0 5
  %5965 = vperm.xlu0 %5964, %v3504
  %v5966 = vpop.permute.xlu0 %5965
  %5967 = vset.pattern.permute.xlu0 5
  %5968 = vperm.xlu0 %5967, %v3505
  %v5969 = vpop.permute.xlu0 %5968
  %vm5970 = vcmp.eq.s32.totalorder %v461, %v5948
  %vm5971 = vcmp.eq.s32.totalorder %v461, %v5951
  %vm5972 = vcmp.eq.s32.totalorder %v461, %v5954
  %vm5973 = vcmp.eq.s32.totalorder %v461, %v5957
  %vm5974 = vcmp.eq.s32.totalorder %v461, %v5960
  %vm5975 = vcmp.eq.s32.totalorder %v461, %v5963
  %vm5976 = vcmp.eq.s32.totalorder %v461, %v5966
  %vm5977 = vcmp.eq.s32.totalorder %v461, %v5969
  %5978 = vset.pattern.permute.xlu0 5
  %5979 = vperm.xlu0 %5978, %v5546
  %v5980 = vpop.permute.xlu0 %5979
  %5982 = vset.pattern.permute.xlu0 5
  %5983 = vperm.xlu0 %5982, %v5547
  %v5984 = vpop.permute.xlu0 %5983
  %5986 = vset.pattern.permute.xlu0 5
  %5987 = vperm.xlu0 %5986, %v5548
  %v5988 = vpop.permute.xlu0 %5987
  %5990 = vset.pattern.permute.xlu0 5
  %5991 = vperm.xlu0 %5990, %v5549
  %v5992 = vpop.permute.xlu0 %5991
  %5994 = vset.pattern.permute.xlu0 5
  %5995 = vperm.xlu0 %5994, %v5550
  %v5996 = vpop.permute.xlu0 %5995
  %5998 = vset.pattern.permute.xlu0 5
  %5999 = vperm.xlu0 %5998, %v5551
  %v6000 = vpop.permute.xlu0 %5999
  %6002 = vset.pattern.permute.xlu0 5
  %6003 = vperm.xlu0 %6002, %v5552
  %v6004 = vpop.permute.xlu0 %6003
  %6006 = vset.pattern.permute.xlu0 5
  %6007 = vperm.xlu0 %6006, %v5553
  %v6008 = vpop.permute.xlu0 %6007
  %v6010 = vsel %vm5970, %v5980, 0.0
  %v6011 = vsel %vm5971, %v5984, 0.0
  %v6012 = vsel %vm5972, %v5988, 0.0
  %v6013 = vsel %vm5973, %v5992, 0.0
  %v6014 = vsel %vm5974, %v5996, 0.0
  %v6015 = vsel %vm5975, %v6000, 0.0
  %v6016 = vsel %vm5976, %v6004, 0.0
  %v6017 = vsel %vm5977, %v6008, 0.0
  %v6018 = vadd.f32 %v5858, %v6010
  %v6019 = vadd.f32 %v5859, %v6011
  %v6020 = vadd.f32 %v5860, %v6012
  %v6021 = vadd.f32 %v5861, %v6013
  %v6022 = vadd.f32 %v5862, %v6014
  %v6023 = vadd.f32 %v5863, %v6015
  %v6024 = vadd.f32 %v5864, %v6016
  %v6025 = vadd.f32 %v5865, %v6017
  %6026 = vset.pattern.permute.xlu0 6
  %6027 = vperm.xlu0 %6026, %v3498
  %v6028 = vpop.permute.xlu0 %6027
  %6029 = vset.pattern.permute.xlu0 6
  %6030 = vperm.xlu0 %6029, %v3499
  %v6031 = vpop.permute.xlu0 %6030
  %6032 = vset.pattern.permute.xlu0 6
  %6033 = vperm.xlu0 %6032, %v3500
  %v6034 = vpop.permute.xlu0 %6033
  %6035 = vset.pattern.permute.xlu0 6
  %6036 = vperm.xlu0 %6035, %v3501
  %v6037 = vpop.permute.xlu0 %6036
  %6038 = vset.pattern.permute.xlu0 6
  %6039 = vperm.xlu0 %6038, %v3502
  %v6040 = vpop.permute.xlu0 %6039
  %6041 = vset.pattern.permute.xlu0 6
  %6042 = vperm.xlu0 %6041, %v3503
  %v6043 = vpop.permute.xlu0 %6042
  %6044 = vset.pattern.permute.xlu0 6
  %6045 = vperm.xlu0 %6044, %v3504
  %v6046 = vpop.permute.xlu0 %6045
  %6047 = vset.pattern.permute.xlu0 6
  %6048 = vperm.xlu0 %6047, %v3505
  %v6049 = vpop.permute.xlu0 %6048
  %vm6050 = vcmp.eq.s32.totalorder %v461, %v6028
  %vm6051 = vcmp.eq.s32.totalorder %v461, %v6031
  %vm6052 = vcmp.eq.s32.totalorder %v461, %v6034
  %vm6053 = vcmp.eq.s32.totalorder %v461, %v6037
  %vm6054 = vcmp.eq.s32.totalorder %v461, %v6040
  %vm6055 = vcmp.eq.s32.totalorder %v461, %v6043
  %vm6056 = vcmp.eq.s32.totalorder %v461, %v6046
  %vm6057 = vcmp.eq.s32.totalorder %v461, %v6049
  %6058 = vset.pattern.permute.xlu0 6
  %6059 = vperm.xlu0 %6058, %v5546
  %v6060 = vpop.permute.xlu0 %6059
  %6062 = vset.pattern.permute.xlu0 6
  %6063 = vperm.xlu0 %6062, %v5547
  %v6064 = vpop.permute.xlu0 %6063
  %6066 = vset.pattern.permute.xlu0 6
  %6067 = vperm.xlu0 %6066, %v5548
  %v6068 = vpop.permute.xlu0 %6067
  %6070 = vset.pattern.permute.xlu0 6
  %6071 = vperm.xlu0 %6070, %v5549
  %v6072 = vpop.permute.xlu0 %6071
  %6074 = vset.pattern.permute.xlu0 6
  %6075 = vperm.xlu0 %6074, %v5550
  %v6076 = vpop.permute.xlu0 %6075
  %6078 = vset.pattern.permute.xlu0 6
  %6079 = vperm.xlu0 %6078, %v5551
  %v6080 = vpop.permute.xlu0 %6079
  %6082 = vset.pattern.permute.xlu0 6
  %6083 = vperm.xlu0 %6082, %v5552
  %v6084 = vpop.permute.xlu0 %6083
  %6086 = vset.pattern.permute.xlu0 6
  %6087 = vperm.xlu0 %6086, %v5553
  %v6088 = vpop.permute.xlu0 %6087
  %v6090 = vsel %vm6050, %v6060, 0.0
  %v6091 = vsel %vm6051, %v6064, 0.0
  %v6092 = vsel %vm6052, %v6068, 0.0
  %v6093 = vsel %vm6053, %v6072, 0.0
  %v6094 = vsel %vm6054, %v6076, 0.0
  %v6095 = vsel %vm6055, %v6080, 0.0
  %v6096 = vsel %vm6056, %v6084, 0.0
  %v6097 = vsel %vm6057, %v6088, 0.0
  %v6098 = vadd.f32 %v5938, %v6090
  %v6099 = vadd.f32 %v5939, %v6091
  %v6100 = vadd.f32 %v5940, %v6092
  %v6101 = vadd.f32 %v5941, %v6093
  %v6102 = vadd.f32 %v5942, %v6094
  %v6103 = vadd.f32 %v5943, %v6095
  %v6104 = vadd.f32 %v5944, %v6096
  %v6105 = vadd.f32 %v5945, %v6097
  %6106 = vset.pattern.permute.xlu0 7
  %6107 = vperm.xlu0 %6106, %v3498
  %v6108 = vpop.permute.xlu0 %6107
  %6109 = vset.pattern.permute.xlu0 7
  %6110 = vperm.xlu0 %6109, %v3499
  %v6111 = vpop.permute.xlu0 %6110
  %6112 = vset.pattern.permute.xlu0 7
  %6113 = vperm.xlu0 %6112, %v3500
  %v6114 = vpop.permute.xlu0 %6113
  %6115 = vset.pattern.permute.xlu0 7
  %6116 = vperm.xlu0 %6115, %v3501
  %v6117 = vpop.permute.xlu0 %6116
  %6118 = vset.pattern.permute.xlu0 7
  %6119 = vperm.xlu0 %6118, %v3502
  %v6120 = vpop.permute.xlu0 %6119
  %6121 = vset.pattern.permute.xlu0 7
  %6122 = vperm.xlu0 %6121, %v3503
  %v6123 = vpop.permute.xlu0 %6122
  %6124 = vset.pattern.permute.xlu0 7
  %6125 = vperm.xlu0 %6124, %v3504
  %v6126 = vpop.permute.xlu0 %6125
  %6127 = vset.pattern.permute.xlu0 7
  %6128 = vperm.xlu0 %6127, %v3505
  %v6129 = vpop.permute.xlu0 %6128
  %vm6130 = vcmp.eq.s32.totalorder %v461, %v6108
  %vm6131 = vcmp.eq.s32.totalorder %v461, %v6111
  %vm6132 = vcmp.eq.s32.totalorder %v461, %v6114
  %vm6133 = vcmp.eq.s32.totalorder %v461, %v6117
  %vm6134 = vcmp.eq.s32.totalorder %v461, %v6120
  %vm6135 = vcmp.eq.s32.totalorder %v461, %v6123
  %vm6136 = vcmp.eq.s32.totalorder %v461, %v6126
  %vm6137 = vcmp.eq.s32.totalorder %v461, %v6129
  %6138 = vset.pattern.permute.xlu0 7
  %6139 = vperm.xlu0 %6138, %v5546
  %v6140 = vpop.permute.xlu0 %6139
  %6142 = vset.pattern.permute.xlu0 7
  %6143 = vperm.xlu0 %6142, %v5547
  %v6144 = vpop.permute.xlu0 %6143
  %6146 = vset.pattern.permute.xlu0 7
  %6147 = vperm.xlu0 %6146, %v5548
  %v6148 = vpop.permute.xlu0 %6147
  %6150 = vset.pattern.permute.xlu0 7
  %6151 = vperm.xlu0 %6150, %v5549
  %v6152 = vpop.permute.xlu0 %6151
  %6154 = vset.pattern.permute.xlu0 7
  %6155 = vperm.xlu0 %6154, %v5550
  %v6156 = vpop.permute.xlu0 %6155
  %6158 = vset.pattern.permute.xlu0 7
  %6159 = vperm.xlu0 %6158, %v5551
  %v6160 = vpop.permute.xlu0 %6159
  %6162 = vset.pattern.permute.xlu0 7
  %6163 = vperm.xlu0 %6162, %v5552
  %v6164 = vpop.permute.xlu0 %6163
  %6166 = vset.pattern.permute.xlu0 7
  %6167 = vperm.xlu0 %6166, %v5553
  %v6168 = vpop.permute.xlu0 %6167
  %v6170 = vsel %vm6130, %v6140, 0.0
  %v6171 = vsel %vm6131, %v6144, 0.0
  %v6172 = vsel %vm6132, %v6148, 0.0
  %v6173 = vsel %vm6133, %v6152, 0.0
  %v6174 = vsel %vm6134, %v6156, 0.0
  %v6175 = vsel %vm6135, %v6160, 0.0
  %v6176 = vsel %vm6136, %v6164, 0.0
  %v6177 = vsel %vm6137, %v6168, 0.0
  %v6178 = vadd.f32 %v6018, %v6170
  %v6179 = vadd.f32 %v6019, %v6171
  %v6180 = vadd.f32 %v6020, %v6172
  %v6181 = vadd.f32 %v6021, %v6173
  %v6182 = vadd.f32 %v6022, %v6174
  %v6183 = vadd.f32 %v6023, %v6175
  %v6184 = vadd.f32 %v6024, %v6176
  %v6185 = vadd.f32 %v6025, %v6177
  %6186 = vset.pattern.permute.xlu0 8
  %6187 = vperm.xlu0 %6186, %v3498
  %v6188 = vpop.permute.xlu0 %6187
  %6189 = vset.pattern.permute.xlu0 8
  %6190 = vperm.xlu0 %6189, %v3499
  %v6191 = vpop.permute.xlu0 %6190
  %6192 = vset.pattern.permute.xlu0 8
  %6193 = vperm.xlu0 %6192, %v3500
  %v6194 = vpop.permute.xlu0 %6193
  %6195 = vset.pattern.permute.xlu0 8
  %6196 = vperm.xlu0 %6195, %v3501
  %v6197 = vpop.permute.xlu0 %6196
  %6198 = vset.pattern.permute.xlu0 8
  %6199 = vperm.xlu0 %6198, %v3502
  %v6200 = vpop.permute.xlu0 %6199
  %6201 = vset.pattern.permute.xlu0 8
  %6202 = vperm.xlu0 %6201, %v3503
  %v6203 = vpop.permute.xlu0 %6202
  %6204 = vset.pattern.permute.xlu0 8
  %6205 = vperm.xlu0 %6204, %v3504
  %v6206 = vpop.permute.xlu0 %6205
  %6207 = vset.pattern.permute.xlu0 8
  %6208 = vperm.xlu0 %6207, %v3505
  %v6209 = vpop.permute.xlu0 %6208
  %vm6210 = vcmp.eq.s32.totalorder %v461, %v6188
  %vm6211 = vcmp.eq.s32.totalorder %v461, %v6191
  %vm6212 = vcmp.eq.s32.totalorder %v461, %v6194
  %vm6213 = vcmp.eq.s32.totalorder %v461, %v6197
  %vm6214 = vcmp.eq.s32.totalorder %v461, %v6200
  %vm6215 = vcmp.eq.s32.totalorder %v461, %v6203
  %vm6216 = vcmp.eq.s32.totalorder %v461, %v6206
  %vm6217 = vcmp.eq.s32.totalorder %v461, %v6209
  %6218 = vset.pattern.permute.xlu0 8
  %6219 = vperm.xlu0 %6218, %v5546
  %v6220 = vpop.permute.xlu0 %6219
  %6222 = vset.pattern.permute.xlu0 8
  %6223 = vperm.xlu0 %6222, %v5547
  %v6224 = vpop.permute.xlu0 %6223
  %6226 = vset.pattern.permute.xlu0 8
  %6227 = vperm.xlu0 %6226, %v5548
  %v6228 = vpop.permute.xlu0 %6227
  %6230 = vset.pattern.permute.xlu0 8
  %6231 = vperm.xlu0 %6230, %v5549
  %v6232 = vpop.permute.xlu0 %6231
  %6234 = vset.pattern.permute.xlu0 8
  %6235 = vperm.xlu0 %6234, %v5550
  %v6236 = vpop.permute.xlu0 %6235
  %6238 = vset.pattern.permute.xlu0 8
  %6239 = vperm.xlu0 %6238, %v5551
  %v6240 = vpop.permute.xlu0 %6239
  %6242 = vset.pattern.permute.xlu0 8
  %6243 = vperm.xlu0 %6242, %v5552
  %v6244 = vpop.permute.xlu0 %6243
  %6246 = vset.pattern.permute.xlu0 8
  %6247 = vperm.xlu0 %6246, %v5553
  %v6248 = vpop.permute.xlu0 %6247
  %v6250 = vsel %vm6210, %v6220, 0.0
  %v6251 = vsel %vm6211, %v6224, 0.0
  %v6252 = vsel %vm6212, %v6228, 0.0
  %v6253 = vsel %vm6213, %v6232, 0.0
  %v6254 = vsel %vm6214, %v6236, 0.0
  %v6255 = vsel %vm6215, %v6240, 0.0
  %v6256 = vsel %vm6216, %v6244, 0.0
  %v6257 = vsel %vm6217, %v6248, 0.0
  %v6258 = vadd.f32 %v6098, %v6250
  %v6259 = vadd.f32 %v6099, %v6251
  %v6260 = vadd.f32 %v6100, %v6252
  %v6261 = vadd.f32 %v6101, %v6253
  %v6262 = vadd.f32 %v6102, %v6254
  %v6263 = vadd.f32 %v6103, %v6255
  %v6264 = vadd.f32 %v6104, %v6256
  %v6265 = vadd.f32 %v6105, %v6257
  %6266 = vset.pattern.permute.xlu0 9
  %6267 = vperm.xlu0 %6266, %v3498
  %v6268 = vpop.permute.xlu0 %6267
  %6269 = vset.pattern.permute.xlu0 9
  %6270 = vperm.xlu0 %6269, %v3499
  %v6271 = vpop.permute.xlu0 %6270
  %6272 = vset.pattern.permute.xlu0 9
  %6273 = vperm.xlu0 %6272, %v3500
  %v6274 = vpop.permute.xlu0 %6273
  %6275 = vset.pattern.permute.xlu0 9
  %6276 = vperm.xlu0 %6275, %v3501
  %v6277 = vpop.permute.xlu0 %6276
  %6278 = vset.pattern.permute.xlu0 9
  %6279 = vperm.xlu0 %6278, %v3502
  %v6280 = vpop.permute.xlu0 %6279
  %6281 = vset.pattern.permute.xlu0 9
  %6282 = vperm.xlu0 %6281, %v3503
  %v6283 = vpop.permute.xlu0 %6282
  %6284 = vset.pattern.permute.xlu0 9
  %6285 = vperm.xlu0 %6284, %v3504
  %v6286 = vpop.permute.xlu0 %6285
  %6287 = vset.pattern.permute.xlu0 9
  %6288 = vperm.xlu0 %6287, %v3505
  %v6289 = vpop.permute.xlu0 %6288
  %vm6290 = vcmp.eq.s32.totalorder %v461, %v6268
  %vm6291 = vcmp.eq.s32.totalorder %v461, %v6271
  %vm6292 = vcmp.eq.s32.totalorder %v461, %v6274
  %vm6293 = vcmp.eq.s32.totalorder %v461, %v6277
  %vm6294 = vcmp.eq.s32.totalorder %v461, %v6280
  %vm6295 = vcmp.eq.s32.totalorder %v461, %v6283
  %vm6296 = vcmp.eq.s32.totalorder %v461, %v6286
  %vm6297 = vcmp.eq.s32.totalorder %v461, %v6289
  %6298 = vset.pattern.permute.xlu0 9
  %6299 = vperm.xlu0 %6298, %v5546
  %v6300 = vpop.permute.xlu0 %6299
  %6302 = vset.pattern.permute.xlu0 9
  %6303 = vperm.xlu0 %6302, %v5547
  %v6304 = vpop.permute.xlu0 %6303
  %6306 = vset.pattern.permute.xlu0 9
  %6307 = vperm.xlu0 %6306, %v5548
  %v6308 = vpop.permute.xlu0 %6307
  %6310 = vset.pattern.permute.xlu0 9
  %6311 = vperm.xlu0 %6310, %v5549
  %v6312 = vpop.permute.xlu0 %6311
  %6314 = vset.pattern.permute.xlu0 9
  %6315 = vperm.xlu0 %6314, %v5550
  %v6316 = vpop.permute.xlu0 %6315
  %6318 = vset.pattern.permute.xlu0 9
  %6319 = vperm.xlu0 %6318, %v5551
  %v6320 = vpop.permute.xlu0 %6319
  %6322 = vset.pattern.permute.xlu0 9
  %6323 = vperm.xlu0 %6322, %v5552
  %v6324 = vpop.permute.xlu0 %6323
  %6326 = vset.pattern.permute.xlu0 9
  %6327 = vperm.xlu0 %6326, %v5553
  %v6328 = vpop.permute.xlu0 %6327
  %v6330 = vsel %vm6290, %v6300, 0.0
  %v6331 = vsel %vm6291, %v6304, 0.0
  %v6332 = vsel %vm6292, %v6308, 0.0
  %v6333 = vsel %vm6293, %v6312, 0.0
  %v6334 = vsel %vm6294, %v6316, 0.0
  %v6335 = vsel %vm6295, %v6320, 0.0
  %v6336 = vsel %vm6296, %v6324, 0.0
  %v6337 = vsel %vm6297, %v6328, 0.0
  %v6338 = vadd.f32 %v6178, %v6330
  %v6339 = vadd.f32 %v6179, %v6331
  %v6340 = vadd.f32 %v6180, %v6332
  %v6341 = vadd.f32 %v6181, %v6333
  %v6342 = vadd.f32 %v6182, %v6334
  %v6343 = vadd.f32 %v6183, %v6335
  %v6344 = vadd.f32 %v6184, %v6336
  %v6345 = vadd.f32 %v6185, %v6337
  %6346 = vset.pattern.permute.xlu0 10
  %6347 = vperm.xlu0 %6346, %v3498
  %v6348 = vpop.permute.xlu0 %6347
  %6349 = vset.pattern.permute.xlu0 10
  %6350 = vperm.xlu0 %6349, %v3499
  %v6351 = vpop.permute.xlu0 %6350
  %6352 = vset.pattern.permute.xlu0 10
  %6353 = vperm.xlu0 %6352, %v3500
  %v6354 = vpop.permute.xlu0 %6353
  %6355 = vset.pattern.permute.xlu0 10
  %6356 = vperm.xlu0 %6355, %v3501
  %v6357 = vpop.permute.xlu0 %6356
  %6358 = vset.pattern.permute.xlu0 10
  %6359 = vperm.xlu0 %6358, %v3502
  %v6360 = vpop.permute.xlu0 %6359
  %6361 = vset.pattern.permute.xlu0 10
  %6362 = vperm.xlu0 %6361, %v3503
  %v6363 = vpop.permute.xlu0 %6362
  %6364 = vset.pattern.permute.xlu0 10
  %6365 = vperm.xlu0 %6364, %v3504
  %v6366 = vpop.permute.xlu0 %6365
  %6367 = vset.pattern.permute.xlu0 10
  %6368 = vperm.xlu0 %6367, %v3505
  %v6369 = vpop.permute.xlu0 %6368
  %vm6370 = vcmp.eq.s32.totalorder %v461, %v6348
  %vm6371 = vcmp.eq.s32.totalorder %v461, %v6351
  %vm6372 = vcmp.eq.s32.totalorder %v461, %v6354
  %vm6373 = vcmp.eq.s32.totalorder %v461, %v6357
  %vm6374 = vcmp.eq.s32.totalorder %v461, %v6360
  %vm6375 = vcmp.eq.s32.totalorder %v461, %v6363
  %vm6376 = vcmp.eq.s32.totalorder %v461, %v6366
  %vm6377 = vcmp.eq.s32.totalorder %v461, %v6369
  %6378 = vset.pattern.permute.xlu0 10
  %6379 = vperm.xlu0 %6378, %v5546
  %v6380 = vpop.permute.xlu0 %6379
  %6382 = vset.pattern.permute.xlu0 10
  %6383 = vperm.xlu0 %6382, %v5547
  %v6384 = vpop.permute.xlu0 %6383
  %6386 = vset.pattern.permute.xlu0 10
  %6387 = vperm.xlu0 %6386, %v5548
  %v6388 = vpop.permute.xlu0 %6387
  %6390 = vset.pattern.permute.xlu0 10
  %6391 = vperm.xlu0 %6390, %v5549
  %v6392 = vpop.permute.xlu0 %6391
  %6394 = vset.pattern.permute.xlu0 10
  %6395 = vperm.xlu0 %6394, %v5550
  %v6396 = vpop.permute.xlu0 %6395
  %6398 = vset.pattern.permute.xlu0 10
  %6399 = vperm.xlu0 %6398, %v5551
  %v6400 = vpop.permute.xlu0 %6399
  %6402 = vset.pattern.permute.xlu0 10
  %6403 = vperm.xlu0 %6402, %v5552
  %v6404 = vpop.permute.xlu0 %6403
  %6406 = vset.pattern.permute.xlu0 10
  %6407 = vperm.xlu0 %6406, %v5553
  %v6408 = vpop.permute.xlu0 %6407
  %v6410 = vsel %vm6370, %v6380, 0.0
  %v6411 = vsel %vm6371, %v6384, 0.0
  %v6412 = vsel %vm6372, %v6388, 0.0
  %v6413 = vsel %vm6373, %v6392, 0.0
  %v6414 = vsel %vm6374, %v6396, 0.0
  %v6415 = vsel %vm6375, %v6400, 0.0
  %v6416 = vsel %vm6376, %v6404, 0.0
  %v6417 = vsel %vm6377, %v6408, 0.0
  %v6418 = vadd.f32 %v6258, %v6410
  %v6419 = vadd.f32 %v6259, %v6411
  %v6420 = vadd.f32 %v6260, %v6412
  %v6421 = vadd.f32 %v6261, %v6413
  %v6422 = vadd.f32 %v6262, %v6414
  %v6423 = vadd.f32 %v6263, %v6415
  %v6424 = vadd.f32 %v6264, %v6416
  %v6425 = vadd.f32 %v6265, %v6417
  %6426 = vset.pattern.permute.xlu0 11
  %6427 = vperm.xlu0 %6426, %v3498
  %v6428 = vpop.permute.xlu0 %6427
  %6429 = vset.pattern.permute.xlu0 11
  %6430 = vperm.xlu0 %6429, %v3499
  %v6431 = vpop.permute.xlu0 %6430
  %6432 = vset.pattern.permute.xlu0 11
  %6433 = vperm.xlu0 %6432, %v3500
  %v6434 = vpop.permute.xlu0 %6433
  %6435 = vset.pattern.permute.xlu0 11
  %6436 = vperm.xlu0 %6435, %v3501
  %v6437 = vpop.permute.xlu0 %6436
  %6438 = vset.pattern.permute.xlu0 11
  %6439 = vperm.xlu0 %6438, %v3502
  %v6440 = vpop.permute.xlu0 %6439
  %6441 = vset.pattern.permute.xlu0 11
  %6442 = vperm.xlu0 %6441, %v3503
  %v6443 = vpop.permute.xlu0 %6442
  %6444 = vset.pattern.permute.xlu0 11
  %6445 = vperm.xlu0 %6444, %v3504
  %v6446 = vpop.permute.xlu0 %6445
  %6447 = vset.pattern.permute.xlu0 11
  %6448 = vperm.xlu0 %6447, %v3505
  %v6449 = vpop.permute.xlu0 %6448
  %vm6450 = vcmp.eq.s32.totalorder %v461, %v6428
  %vm6451 = vcmp.eq.s32.totalorder %v461, %v6431
  %vm6452 = vcmp.eq.s32.totalorder %v461, %v6434
  %vm6453 = vcmp.eq.s32.totalorder %v461, %v6437
  %vm6454 = vcmp.eq.s32.totalorder %v461, %v6440
  %vm6455 = vcmp.eq.s32.totalorder %v461, %v6443
  %vm6456 = vcmp.eq.s32.totalorder %v461, %v6446
  %vm6457 = vcmp.eq.s32.totalorder %v461, %v6449
  %6458 = vset.pattern.permute.xlu0 11
  %6459 = vperm.xlu0 %6458, %v5546
  %v6460 = vpop.permute.xlu0 %6459
  %6462 = vset.pattern.permute.xlu0 11
  %6463 = vperm.xlu0 %6462, %v5547
  %v6464 = vpop.permute.xlu0 %6463
  %6466 = vset.pattern.permute.xlu0 11
  %6467 = vperm.xlu0 %6466, %v5548
  %v6468 = vpop.permute.xlu0 %6467
  %6470 = vset.pattern.permute.xlu0 11
  %6471 = vperm.xlu0 %6470, %v5549
  %v6472 = vpop.permute.xlu0 %6471
  %6474 = vset.pattern.permute.xlu0 11
  %6475 = vperm.xlu0 %6474, %v5550
  %v6476 = vpop.permute.xlu0 %6475
  %6478 = vset.pattern.permute.xlu0 11
  %6479 = vperm.xlu0 %6478, %v5551
  %v6480 = vpop.permute.xlu0 %6479
  %6482 = vset.pattern.permute.xlu0 11
  %6483 = vperm.xlu0 %6482, %v5552
  %v6484 = vpop.permute.xlu0 %6483
  %6486 = vset.pattern.permute.xlu0 11
  %6487 = vperm.xlu0 %6486, %v5553
  %v6488 = vpop.permute.xlu0 %6487
  %v6490 = vsel %vm6450, %v6460, 0.0
  %v6491 = vsel %vm6451, %v6464, 0.0
  %v6492 = vsel %vm6452, %v6468, 0.0
  %v6493 = vsel %vm6453, %v6472, 0.0
  %v6494 = vsel %vm6454, %v6476, 0.0
  %v6495 = vsel %vm6455, %v6480, 0.0
  %v6496 = vsel %vm6456, %v6484, 0.0
  %v6497 = vsel %vm6457, %v6488, 0.0
  %v6498 = vadd.f32 %v6338, %v6490
  %v6499 = vadd.f32 %v6339, %v6491
  %v6500 = vadd.f32 %v6340, %v6492
  %v6501 = vadd.f32 %v6341, %v6493
  %v6502 = vadd.f32 %v6342, %v6494
  %v6503 = vadd.f32 %v6343, %v6495
  %v6504 = vadd.f32 %v6344, %v6496
  %v6505 = vadd.f32 %v6345, %v6497
  %v6506 = vsel %vm3610, %v3618, 0.0
  %v6507 = vsel %vm3611, %v3619, 0.0
  %v6508 = vsel %vm3612, %v3620, 0.0
  %v6509 = vsel %vm3613, %v3621, 0.0
  %v6510 = vsel %vm3614, %v3622, 0.0
  %v6511 = vsel %vm3615, %v3623, 0.0
  %v6512 = vsel %vm3616, %v3624, 0.0
  %v6513 = vsel %vm3617, %v3625, 0.0
  %6514 = vset.pattern.permute.xlu0 0
  %6515 = vperm.xlu0 %6514, %v3506
  %v6516 = vpop.permute.xlu0 %6515
  %6517 = vset.pattern.permute.xlu0 0
  %6518 = vperm.xlu0 %6517, %v3507
  %v6519 = vpop.permute.xlu0 %6518
  %6520 = vset.pattern.permute.xlu0 0
  %6521 = vperm.xlu0 %6520, %v3508
  %v6522 = vpop.permute.xlu0 %6521
  %6523 = vset.pattern.permute.xlu0 0
  %6524 = vperm.xlu0 %6523, %v3509
  %v6525 = vpop.permute.xlu0 %6524
  %6526 = vset.pattern.permute.xlu0 0
  %6527 = vperm.xlu0 %6526, %v3510
  %v6528 = vpop.permute.xlu0 %6527
  %6529 = vset.pattern.permute.xlu0 0
  %6530 = vperm.xlu0 %6529, %v3511
  %v6531 = vpop.permute.xlu0 %6530
  %6532 = vset.pattern.permute.xlu0 0
  %6533 = vperm.xlu0 %6532, %v3512
  %v6534 = vpop.permute.xlu0 %6533
  %6535 = vset.pattern.permute.xlu0 0
  %6536 = vperm.xlu0 %6535, %v3513
  %v6537 = vpop.permute.xlu0 %6536
  %vm6538 = vcmp.eq.s32.totalorder %v461, %v6516
  %vm6539 = vcmp.eq.s32.totalorder %v461, %v6519
  %vm6540 = vcmp.eq.s32.totalorder %v461, %v6522
  %vm6541 = vcmp.eq.s32.totalorder %v461, %v6525
  %vm6542 = vcmp.eq.s32.totalorder %v461, %v6528
  %vm6543 = vcmp.eq.s32.totalorder %v461, %v6531
  %vm6544 = vcmp.eq.s32.totalorder %v461, %v6534
  %vm6545 = vcmp.eq.s32.totalorder %v461, %v6537
  %6547 = vset.pattern.permute.xlu0 0
  %6548 = vperm.xlu0 %6547, %v6506
  %v6549 = vpop.permute.xlu0 %6548
  %6552 = vset.pattern.permute.xlu0 0
  %6553 = vperm.xlu0 %6552, %v6507
  %v6554 = vpop.permute.xlu0 %6553
  %6557 = vset.pattern.permute.xlu0 0
  %6558 = vperm.xlu0 %6557, %v6508
  %v6559 = vpop.permute.xlu0 %6558
  %6562 = vset.pattern.permute.xlu0 0
  %6563 = vperm.xlu0 %6562, %v6509
  %v6564 = vpop.permute.xlu0 %6563
  %6567 = vset.pattern.permute.xlu0 0
  %6568 = vperm.xlu0 %6567, %v6510
  %v6569 = vpop.permute.xlu0 %6568
  %6572 = vset.pattern.permute.xlu0 0
  %6573 = vperm.xlu0 %6572, %v6511
  %v6574 = vpop.permute.xlu0 %6573
  %6577 = vset.pattern.permute.xlu0 0
  %6578 = vperm.xlu0 %6577, %v6512
  %v6579 = vpop.permute.xlu0 %6578
  %6582 = vset.pattern.permute.xlu0 0
  %6583 = vperm.xlu0 %6582, %v6513
  %v6584 = vpop.permute.xlu0 %6583
  %v6586 = vsel %vm6538, %v6549, 0.0
  %v6587 = vsel %vm6539, %v6554, 0.0
  %v6588 = vsel %vm6540, %v6559, 0.0
  %v6589 = vsel %vm6541, %v6564, 0.0
  %v6590 = vsel %vm6542, %v6569, 0.0
  %v6591 = vsel %vm6543, %v6574, 0.0
  %v6592 = vsel %vm6544, %v6579, 0.0
  %v6593 = vsel %vm6545, %v6584, 0.0
  %6594 = vset.pattern.permute.xlu0 1
  %6595 = vperm.xlu0 %6594, %v3506
  %v6596 = vpop.permute.xlu0 %6595
  %6597 = vset.pattern.permute.xlu0 1
  %6598 = vperm.xlu0 %6597, %v3507
  %v6599 = vpop.permute.xlu0 %6598
  %6600 = vset.pattern.permute.xlu0 1
  %6601 = vperm.xlu0 %6600, %v3508
  %v6602 = vpop.permute.xlu0 %6601
  %6603 = vset.pattern.permute.xlu0 1
  %6604 = vperm.xlu0 %6603, %v3509
  %v6605 = vpop.permute.xlu0 %6604
  %6606 = vset.pattern.permute.xlu0 1
  %6607 = vperm.xlu0 %6606, %v3510
  %v6608 = vpop.permute.xlu0 %6607
  %6609 = vset.pattern.permute.xlu0 1
  %6610 = vperm.xlu0 %6609, %v3511
  %v6611 = vpop.permute.xlu0 %6610
  %6612 = vset.pattern.permute.xlu0 1
  %6613 = vperm.xlu0 %6612, %v3512
  %v6614 = vpop.permute.xlu0 %6613
  %6615 = vset.pattern.permute.xlu0 1
  %6616 = vperm.xlu0 %6615, %v3513
  %v6617 = vpop.permute.xlu0 %6616
  %vm6618 = vcmp.eq.s32.totalorder %v461, %v6596
  %vm6619 = vcmp.eq.s32.totalorder %v461, %v6599
  %vm6620 = vcmp.eq.s32.totalorder %v461, %v6602
  %vm6621 = vcmp.eq.s32.totalorder %v461, %v6605
  %vm6622 = vcmp.eq.s32.totalorder %v461, %v6608
  %vm6623 = vcmp.eq.s32.totalorder %v461, %v6611
  %vm6624 = vcmp.eq.s32.totalorder %v461, %v6614
  %vm6625 = vcmp.eq.s32.totalorder %v461, %v6617
  %6626 = vset.pattern.permute.xlu0 1
  %6627 = vperm.xlu0 %6626, %v6506
  %v6628 = vpop.permute.xlu0 %6627
  %6630 = vset.pattern.permute.xlu0 1
  %6631 = vperm.xlu0 %6630, %v6507
  %v6632 = vpop.permute.xlu0 %6631
  %6634 = vset.pattern.permute.xlu0 1
  %6635 = vperm.xlu0 %6634, %v6508
  %v6636 = vpop.permute.xlu0 %6635
  %6638 = vset.pattern.permute.xlu0 1
  %6639 = vperm.xlu0 %6638, %v6509
  %v6640 = vpop.permute.xlu0 %6639
  %6642 = vset.pattern.permute.xlu0 1
  %6643 = vperm.xlu0 %6642, %v6510
  %v6644 = vpop.permute.xlu0 %6643
  %6646 = vset.pattern.permute.xlu0 1
  %6647 = vperm.xlu0 %6646, %v6511
  %v6648 = vpop.permute.xlu0 %6647
  %6650 = vset.pattern.permute.xlu0 1
  %6651 = vperm.xlu0 %6650, %v6512
  %v6652 = vpop.permute.xlu0 %6651
  %6654 = vset.pattern.permute.xlu0 1
  %6655 = vperm.xlu0 %6654, %v6513
  %v6656 = vpop.permute.xlu0 %6655
  %v6658 = vsel %vm6618, %v6628, 0.0
  %v6659 = vsel %vm6619, %v6632, 0.0
  %v6660 = vsel %vm6620, %v6636, 0.0
  %v6661 = vsel %vm6621, %v6640, 0.0
  %v6662 = vsel %vm6622, %v6644, 0.0
  %v6663 = vsel %vm6623, %v6648, 0.0
  %v6664 = vsel %vm6624, %v6652, 0.0
  %v6665 = vsel %vm6625, %v6656, 0.0
  %6666 = vset.pattern.permute.xlu0 2
  %6667 = vperm.xlu0 %6666, %v3506
  %v6668 = vpop.permute.xlu0 %6667
  %6669 = vset.pattern.permute.xlu0 2
  %6670 = vperm.xlu0 %6669, %v3507
  %v6671 = vpop.permute.xlu0 %6670
  %6672 = vset.pattern.permute.xlu0 2
  %6673 = vperm.xlu0 %6672, %v3508
  %v6674 = vpop.permute.xlu0 %6673
  %6675 = vset.pattern.permute.xlu0 2
  %6676 = vperm.xlu0 %6675, %v3509
  %v6677 = vpop.permute.xlu0 %6676
  %6678 = vset.pattern.permute.xlu0 2
  %6679 = vperm.xlu0 %6678, %v3510
  %v6680 = vpop.permute.xlu0 %6679
  %6681 = vset.pattern.permute.xlu0 2
  %6682 = vperm.xlu0 %6681, %v3511
  %v6683 = vpop.permute.xlu0 %6682
  %6684 = vset.pattern.permute.xlu0 2
  %6685 = vperm.xlu0 %6684, %v3512
  %v6686 = vpop.permute.xlu0 %6685
  %6687 = vset.pattern.permute.xlu0 2
  %6688 = vperm.xlu0 %6687, %v3513
  %v6689 = vpop.permute.xlu0 %6688
  %vm6690 = vcmp.eq.s32.totalorder %v461, %v6668
  %vm6691 = vcmp.eq.s32.totalorder %v461, %v6671
  %vm6692 = vcmp.eq.s32.totalorder %v461, %v6674
  %vm6693 = vcmp.eq.s32.totalorder %v461, %v6677
  %vm6694 = vcmp.eq.s32.totalorder %v461, %v6680
  %vm6695 = vcmp.eq.s32.totalorder %v461, %v6683
  %vm6696 = vcmp.eq.s32.totalorder %v461, %v6686
  %vm6697 = vcmp.eq.s32.totalorder %v461, %v6689
  %6698 = vset.pattern.permute.xlu0 2
  %6699 = vperm.xlu0 %6698, %v6506
  %v6700 = vpop.permute.xlu0 %6699
  %6702 = vset.pattern.permute.xlu0 2
  %6703 = vperm.xlu0 %6702, %v6507
  %v6704 = vpop.permute.xlu0 %6703
  %6706 = vset.pattern.permute.xlu0 2
  %6707 = vperm.xlu0 %6706, %v6508
  %v6708 = vpop.permute.xlu0 %6707
  %6710 = vset.pattern.permute.xlu0 2
  %6711 = vperm.xlu0 %6710, %v6509
  %v6712 = vpop.permute.xlu0 %6711
  %6714 = vset.pattern.permute.xlu0 2
  %6715 = vperm.xlu0 %6714, %v6510
  %v6716 = vpop.permute.xlu0 %6715
  %6718 = vset.pattern.permute.xlu0 2
  %6719 = vperm.xlu0 %6718, %v6511
  %v6720 = vpop.permute.xlu0 %6719
  %6722 = vset.pattern.permute.xlu0 2
  %6723 = vperm.xlu0 %6722, %v6512
  %v6724 = vpop.permute.xlu0 %6723
  %6726 = vset.pattern.permute.xlu0 2
  %6727 = vperm.xlu0 %6726, %v6513
  %v6728 = vpop.permute.xlu0 %6727
  %v6730 = vsel %vm6690, %v6700, 0.0
  %v6731 = vsel %vm6691, %v6704, 0.0
  %v6732 = vsel %vm6692, %v6708, 0.0
  %v6733 = vsel %vm6693, %v6712, 0.0
  %v6734 = vsel %vm6694, %v6716, 0.0
  %v6735 = vsel %vm6695, %v6720, 0.0
  %v6736 = vsel %vm6696, %v6724, 0.0
  %v6737 = vsel %vm6697, %v6728, 0.0
  %v6738 = vadd.f32 %v6586, %v6730
  %v6739 = vadd.f32 %v6587, %v6731
  %v6740 = vadd.f32 %v6588, %v6732
  %v6741 = vadd.f32 %v6589, %v6733
  %v6742 = vadd.f32 %v6590, %v6734
  %v6743 = vadd.f32 %v6591, %v6735
  %v6744 = vadd.f32 %v6592, %v6736
  %v6745 = vadd.f32 %v6593, %v6737
  %6746 = vset.pattern.permute.xlu0 3
  %6747 = vperm.xlu0 %6746, %v3506
  %v6748 = vpop.permute.xlu0 %6747
  %6749 = vset.pattern.permute.xlu0 3
  %6750 = vperm.xlu0 %6749, %v3507
  %v6751 = vpop.permute.xlu0 %6750
  %6752 = vset.pattern.permute.xlu0 3
  %6753 = vperm.xlu0 %6752, %v3508
  %v6754 = vpop.permute.xlu0 %6753
  %6755 = vset.pattern.permute.xlu0 3
  %6756 = vperm.xlu0 %6755, %v3509
  %v6757 = vpop.permute.xlu0 %6756
  %6758 = vset.pattern.permute.xlu0 3
  %6759 = vperm.xlu0 %6758, %v3510
  %v6760 = vpop.permute.xlu0 %6759
  %6761 = vset.pattern.permute.xlu0 3
  %6762 = vperm.xlu0 %6761, %v3511
  %v6763 = vpop.permute.xlu0 %6762
  %6764 = vset.pattern.permute.xlu0 3
  %6765 = vperm.xlu0 %6764, %v3512
  %v6766 = vpop.permute.xlu0 %6765
  %6767 = vset.pattern.permute.xlu0 3
  %6768 = vperm.xlu0 %6767, %v3513
  %v6769 = vpop.permute.xlu0 %6768
  %vm6770 = vcmp.eq.s32.totalorder %v461, %v6748
  %vm6771 = vcmp.eq.s32.totalorder %v461, %v6751
  %vm6772 = vcmp.eq.s32.totalorder %v461, %v6754
  %vm6773 = vcmp.eq.s32.totalorder %v461, %v6757
  %vm6774 = vcmp.eq.s32.totalorder %v461, %v6760
  %vm6775 = vcmp.eq.s32.totalorder %v461, %v6763
  %vm6776 = vcmp.eq.s32.totalorder %v461, %v6766
  %vm6777 = vcmp.eq.s32.totalorder %v461, %v6769
  %6778 = vset.pattern.permute.xlu0 3
  %6779 = vperm.xlu0 %6778, %v6506
  %v6780 = vpop.permute.xlu0 %6779
  %6782 = vset.pattern.permute.xlu0 3
  %6783 = vperm.xlu0 %6782, %v6507
  %v6784 = vpop.permute.xlu0 %6783
  %6786 = vset.pattern.permute.xlu0 3
  %6787 = vperm.xlu0 %6786, %v6508
  %v6788 = vpop.permute.xlu0 %6787
  %6790 = vset.pattern.permute.xlu0 3
  %6791 = vperm.xlu0 %6790, %v6509
  %v6792 = vpop.permute.xlu0 %6791
  %6794 = vset.pattern.permute.xlu0 3
  %6795 = vperm.xlu0 %6794, %v6510
  %v6796 = vpop.permute.xlu0 %6795
  %6798 = vset.pattern.permute.xlu0 3
  %6799 = vperm.xlu0 %6798, %v6511
  %v6800 = vpop.permute.xlu0 %6799
  %6802 = vset.pattern.permute.xlu0 3
  %6803 = vperm.xlu0 %6802, %v6512
  %v6804 = vpop.permute.xlu0 %6803
  %6806 = vset.pattern.permute.xlu0 3
  %6807 = vperm.xlu0 %6806, %v6513
  %v6808 = vpop.permute.xlu0 %6807
  %v6810 = vsel %vm6770, %v6780, 0.0
  %v6811 = vsel %vm6771, %v6784, 0.0
  %v6812 = vsel %vm6772, %v6788, 0.0
  %v6813 = vsel %vm6773, %v6792, 0.0
  %v6814 = vsel %vm6774, %v6796, 0.0
  %v6815 = vsel %vm6775, %v6800, 0.0
  %v6816 = vsel %vm6776, %v6804, 0.0
  %v6817 = vsel %vm6777, %v6808, 0.0
  %v6818 = vadd.f32 %v6658, %v6810
  %v6819 = vadd.f32 %v6659, %v6811
  %v6820 = vadd.f32 %v6660, %v6812
  %v6821 = vadd.f32 %v6661, %v6813
  %v6822 = vadd.f32 %v6662, %v6814
  %v6823 = vadd.f32 %v6663, %v6815
  %v6824 = vadd.f32 %v6664, %v6816
  %v6825 = vadd.f32 %v6665, %v6817
  %6826 = vset.pattern.permute.xlu0 4
  %6827 = vperm.xlu0 %6826, %v3506
  %v6828 = vpop.permute.xlu0 %6827
  %6829 = vset.pattern.permute.xlu0 4
  %6830 = vperm.xlu0 %6829, %v3507
  %v6831 = vpop.permute.xlu0 %6830
  %6832 = vset.pattern.permute.xlu0 4
  %6833 = vperm.xlu0 %6832, %v3508
  %v6834 = vpop.permute.xlu0 %6833
  %6835 = vset.pattern.permute.xlu0 4
  %6836 = vperm.xlu0 %6835, %v3509
  %v6837 = vpop.permute.xlu0 %6836
  %6838 = vset.pattern.permute.xlu0 4
  %6839 = vperm.xlu0 %6838, %v3510
  %v6840 = vpop.permute.xlu0 %6839
  %6841 = vset.pattern.permute.xlu0 4
  %6842 = vperm.xlu0 %6841, %v3511
  %v6843 = vpop.permute.xlu0 %6842
  %6844 = vset.pattern.permute.xlu0 4
  %6845 = vperm.xlu0 %6844, %v3512
  %v6846 = vpop.permute.xlu0 %6845
  %6847 = vset.pattern.permute.xlu0 4
  %6848 = vperm.xlu0 %6847, %v3513
  %v6849 = vpop.permute.xlu0 %6848
  %vm6850 = vcmp.eq.s32.totalorder %v461, %v6828
  %vm6851 = vcmp.eq.s32.totalorder %v461, %v6831
  %vm6852 = vcmp.eq.s32.totalorder %v461, %v6834
  %vm6853 = vcmp.eq.s32.totalorder %v461, %v6837
  %vm6854 = vcmp.eq.s32.totalorder %v461, %v6840
  %vm6855 = vcmp.eq.s32.totalorder %v461, %v6843
  %vm6856 = vcmp.eq.s32.totalorder %v461, %v6846
  %vm6857 = vcmp.eq.s32.totalorder %v461, %v6849
  %6858 = vset.pattern.permute.xlu0 4
  %6859 = vperm.xlu0 %6858, %v6506
  %v6860 = vpop.permute.xlu0 %6859
  %6862 = vset.pattern.permute.xlu0 4
  %6863 = vperm.xlu0 %6862, %v6507
  %v6864 = vpop.permute.xlu0 %6863
  %6866 = vset.pattern.permute.xlu0 4
  %6867 = vperm.xlu0 %6866, %v6508
  %v6868 = vpop.permute.xlu0 %6867
  %6870 = vset.pattern.permute.xlu0 4
  %6871 = vperm.xlu0 %6870, %v6509
  %v6872 = vpop.permute.xlu0 %6871
  %6874 = vset.pattern.permute.xlu0 4
  %6875 = vperm.xlu0 %6874, %v6510
  %v6876 = vpop.permute.xlu0 %6875
  %6878 = vset.pattern.permute.xlu0 4
  %6879 = vperm.xlu0 %6878, %v6511
  %v6880 = vpop.permute.xlu0 %6879
  %6882 = vset.pattern.permute.xlu0 4
  %6883 = vperm.xlu0 %6882, %v6512
  %v6884 = vpop.permute.xlu0 %6883
  %6886 = vset.pattern.permute.xlu0 4
  %6887 = vperm.xlu0 %6886, %v6513
  %v6888 = vpop.permute.xlu0 %6887
  %v6890 = vsel %vm6850, %v6860, 0.0
  %v6891 = vsel %vm6851, %v6864, 0.0
  %v6892 = vsel %vm6852, %v6868, 0.0
  %v6893 = vsel %vm6853, %v6872, 0.0
  %v6894 = vsel %vm6854, %v6876, 0.0
  %v6895 = vsel %vm6855, %v6880, 0.0
  %v6896 = vsel %vm6856, %v6884, 0.0
  %v6897 = vsel %vm6857, %v6888, 0.0
  %v6898 = vadd.f32 %v6738, %v6890
  %v6899 = vadd.f32 %v6739, %v6891
  %v6900 = vadd.f32 %v6740, %v6892
  %v6901 = vadd.f32 %v6741, %v6893
  %v6902 = vadd.f32 %v6742, %v6894
  %v6903 = vadd.f32 %v6743, %v6895
  %v6904 = vadd.f32 %v6744, %v6896
  %v6905 = vadd.f32 %v6745, %v6897
  %6906 = vset.pattern.permute.xlu0 5
  %6907 = vperm.xlu0 %6906, %v3506
  %v6908 = vpop.permute.xlu0 %6907
  %6909 = vset.pattern.permute.xlu0 5
  %6910 = vperm.xlu0 %6909, %v3507
  %v6911 = vpop.permute.xlu0 %6910
  %6912 = vset.pattern.permute.xlu0 5
  %6913 = vperm.xlu0 %6912, %v3508
  %v6914 = vpop.permute.xlu0 %6913
  %6915 = vset.pattern.permute.xlu0 5
  %6916 = vperm.xlu0 %6915, %v3509
  %v6917 = vpop.permute.xlu0 %6916
  %6918 = vset.pattern.permute.xlu0 5
  %6919 = vperm.xlu0 %6918, %v3510
  %v6920 = vpop.permute.xlu0 %6919
  %6921 = vset.pattern.permute.xlu0 5
  %6922 = vperm.xlu0 %6921, %v3511
  %v6923 = vpop.permute.xlu0 %6922
  %6924 = vset.pattern.permute.xlu0 5
  %6925 = vperm.xlu0 %6924, %v3512
  %v6926 = vpop.permute.xlu0 %6925
  %6927 = vset.pattern.permute.xlu0 5
  %6928 = vperm.xlu0 %6927, %v3513
  %v6929 = vpop.permute.xlu0 %6928
  %vm6930 = vcmp.eq.s32.totalorder %v461, %v6908
  %vm6931 = vcmp.eq.s32.totalorder %v461, %v6911
  %vm6932 = vcmp.eq.s32.totalorder %v461, %v6914
  %vm6933 = vcmp.eq.s32.totalorder %v461, %v6917
  %vm6934 = vcmp.eq.s32.totalorder %v461, %v6920
  %vm6935 = vcmp.eq.s32.totalorder %v461, %v6923
  %vm6936 = vcmp.eq.s32.totalorder %v461, %v6926
  %vm6937 = vcmp.eq.s32.totalorder %v461, %v6929
  %6938 = vset.pattern.permute.xlu0 5
  %6939 = vperm.xlu0 %6938, %v6506
  %v6940 = vpop.permute.xlu0 %6939
  %6942 = vset.pattern.permute.xlu0 5
  %6943 = vperm.xlu0 %6942, %v6507
  %v6944 = vpop.permute.xlu0 %6943
  %6946 = vset.pattern.permute.xlu0 5
  %6947 = vperm.xlu0 %6946, %v6508
  %v6948 = vpop.permute.xlu0 %6947
  %6950 = vset.pattern.permute.xlu0 5
  %6951 = vperm.xlu0 %6950, %v6509
  %v6952 = vpop.permute.xlu0 %6951
  %6954 = vset.pattern.permute.xlu0 5
  %6955 = vperm.xlu0 %6954, %v6510
  %v6956 = vpop.permute.xlu0 %6955
  %6958 = vset.pattern.permute.xlu0 5
  %6959 = vperm.xlu0 %6958, %v6511
  %v6960 = vpop.permute.xlu0 %6959
  %6962 = vset.pattern.permute.xlu0 5
  %6963 = vperm.xlu0 %6962, %v6512
  %v6964 = vpop.permute.xlu0 %6963
  %6966 = vset.pattern.permute.xlu0 5
  %6967 = vperm.xlu0 %6966, %v6513
  %v6968 = vpop.permute.xlu0 %6967
  %v6970 = vsel %vm6930, %v6940, 0.0
  %v6971 = vsel %vm6931, %v6944, 0.0
  %v6972 = vsel %vm6932, %v6948, 0.0
  %v6973 = vsel %vm6933, %v6952, 0.0
  %v6974 = vsel %vm6934, %v6956, 0.0
  %v6975 = vsel %vm6935, %v6960, 0.0
  %v6976 = vsel %vm6936, %v6964, 0.0
  %v6977 = vsel %vm6937, %v6968, 0.0
  %v6978 = vadd.f32 %v6818, %v6970
  %v6979 = vadd.f32 %v6819, %v6971
  %v6980 = vadd.f32 %v6820, %v6972
  %v6981 = vadd.f32 %v6821, %v6973
  %v6982 = vadd.f32 %v6822, %v6974
  %v6983 = vadd.f32 %v6823, %v6975
  %v6984 = vadd.f32 %v6824, %v6976
  %v6985 = vadd.f32 %v6825, %v6977
  %6986 = vset.pattern.permute.xlu0 6
  %6987 = vperm.xlu0 %6986, %v3506
  %v6988 = vpop.permute.xlu0 %6987
  %6989 = vset.pattern.permute.xlu0 6
  %6990 = vperm.xlu0 %6989, %v3507
  %v6991 = vpop.permute.xlu0 %6990
  %6992 = vset.pattern.permute.xlu0 6
  %6993 = vperm.xlu0 %6992, %v3508
  %v6994 = vpop.permute.xlu0 %6993
  %6995 = vset.pattern.permute.xlu0 6
  %6996 = vperm.xlu0 %6995, %v3509
  %v6997 = vpop.permute.xlu0 %6996
  %6998 = vset.pattern.permute.xlu0 6
  %6999 = vperm.xlu0 %6998, %v3510
  %v7000 = vpop.permute.xlu0 %6999
  %7001 = vset.pattern.permute.xlu0 6
  %7002 = vperm.xlu0 %7001, %v3511
  %v7003 = vpop.permute.xlu0 %7002
  %7004 = vset.pattern.permute.xlu0 6
  %7005 = vperm.xlu0 %7004, %v3512
  %v7006 = vpop.permute.xlu0 %7005
  %7007 = vset.pattern.permute.xlu0 6
  %7008 = vperm.xlu0 %7007, %v3513
  %v7009 = vpop.permute.xlu0 %7008
  %vm7010 = vcmp.eq.s32.totalorder %v461, %v6988
  %vm7011 = vcmp.eq.s32.totalorder %v461, %v6991
  %vm7012 = vcmp.eq.s32.totalorder %v461, %v6994
  %vm7013 = vcmp.eq.s32.totalorder %v461, %v6997
  %vm7014 = vcmp.eq.s32.totalorder %v461, %v7000
  %vm7015 = vcmp.eq.s32.totalorder %v461, %v7003
  %vm7016 = vcmp.eq.s32.totalorder %v461, %v7006
  %vm7017 = vcmp.eq.s32.totalorder %v461, %v7009
  %7018 = vset.pattern.permute.xlu0 6
  %7019 = vperm.xlu0 %7018, %v6506
  %v7020 = vpop.permute.xlu0 %7019
  %7022 = vset.pattern.permute.xlu0 6
  %7023 = vperm.xlu0 %7022, %v6507
  %v7024 = vpop.permute.xlu0 %7023
  %7026 = vset.pattern.permute.xlu0 6
  %7027 = vperm.xlu0 %7026, %v6508
  %v7028 = vpop.permute.xlu0 %7027
  %7030 = vset.pattern.permute.xlu0 6
  %7031 = vperm.xlu0 %7030, %v6509
  %v7032 = vpop.permute.xlu0 %7031
  %7034 = vset.pattern.permute.xlu0 6
  %7035 = vperm.xlu0 %7034, %v6510
  %v7036 = vpop.permute.xlu0 %7035
  %7038 = vset.pattern.permute.xlu0 6
  %7039 = vperm.xlu0 %7038, %v6511
  %v7040 = vpop.permute.xlu0 %7039
  %7042 = vset.pattern.permute.xlu0 6
  %7043 = vperm.xlu0 %7042, %v6512
  %v7044 = vpop.permute.xlu0 %7043
  %7046 = vset.pattern.permute.xlu0 6
  %7047 = vperm.xlu0 %7046, %v6513
  %v7048 = vpop.permute.xlu0 %7047
  %v7050 = vsel %vm7010, %v7020, 0.0
  %v7051 = vsel %vm7011, %v7024, 0.0
  %v7052 = vsel %vm7012, %v7028, 0.0
  %v7053 = vsel %vm7013, %v7032, 0.0
  %v7054 = vsel %vm7014, %v7036, 0.0
  %v7055 = vsel %vm7015, %v7040, 0.0
  %v7056 = vsel %vm7016, %v7044, 0.0
  %v7057 = vsel %vm7017, %v7048, 0.0
  %v7058 = vadd.f32 %v6898, %v7050
  %v7059 = vadd.f32 %v6899, %v7051
  %v7060 = vadd.f32 %v6900, %v7052
  %v7061 = vadd.f32 %v6901, %v7053
  %v7062 = vadd.f32 %v6902, %v7054
  %v7063 = vadd.f32 %v6903, %v7055
  %v7064 = vadd.f32 %v6904, %v7056
  %v7065 = vadd.f32 %v6905, %v7057
  %7066 = vset.pattern.permute.xlu0 7
  %7067 = vperm.xlu0 %7066, %v3506
  %v7068 = vpop.permute.xlu0 %7067
  %7069 = vset.pattern.permute.xlu0 7
  %7070 = vperm.xlu0 %7069, %v3507
  %v7071 = vpop.permute.xlu0 %7070
  %7072 = vset.pattern.permute.xlu0 7
  %7073 = vperm.xlu0 %7072, %v3508
  %v7074 = vpop.permute.xlu0 %7073
  %7075 = vset.pattern.permute.xlu0 7
  %7076 = vperm.xlu0 %7075, %v3509
  %v7077 = vpop.permute.xlu0 %7076
  %7078 = vset.pattern.permute.xlu0 7
  %7079 = vperm.xlu0 %7078, %v3510
  %v7080 = vpop.permute.xlu0 %7079
  %7081 = vset.pattern.permute.xlu0 7
  %7082 = vperm.xlu0 %7081, %v3511
  %v7083 = vpop.permute.xlu0 %7082
  %7084 = vset.pattern.permute.xlu0 7
  %7085 = vperm.xlu0 %7084, %v3512
  %v7086 = vpop.permute.xlu0 %7085
  %7087 = vset.pattern.permute.xlu0 7
  %7088 = vperm.xlu0 %7087, %v3513
  %v7089 = vpop.permute.xlu0 %7088
  %vm7090 = vcmp.eq.s32.totalorder %v461, %v7068
  %vm7091 = vcmp.eq.s32.totalorder %v461, %v7071
  %vm7092 = vcmp.eq.s32.totalorder %v461, %v7074
  %vm7093 = vcmp.eq.s32.totalorder %v461, %v7077
  %vm7094 = vcmp.eq.s32.totalorder %v461, %v7080
  %vm7095 = vcmp.eq.s32.totalorder %v461, %v7083
  %vm7096 = vcmp.eq.s32.totalorder %v461, %v7086
  %vm7097 = vcmp.eq.s32.totalorder %v461, %v7089
  %7098 = vset.pattern.permute.xlu0 7
  %7099 = vperm.xlu0 %7098, %v6506
  %v7100 = vpop.permute.xlu0 %7099
  %7102 = vset.pattern.permute.xlu0 7
  %7103 = vperm.xlu0 %7102, %v6507
  %v7104 = vpop.permute.xlu0 %7103
  %7106 = vset.pattern.permute.xlu0 7
  %7107 = vperm.xlu0 %7106, %v6508
  %v7108 = vpop.permute.xlu0 %7107
  %7110 = vset.pattern.permute.xlu0 7
  %7111 = vperm.xlu0 %7110, %v6509
  %v7112 = vpop.permute.xlu0 %7111
  %7114 = vset.pattern.permute.xlu0 7
  %7115 = vperm.xlu0 %7114, %v6510
  %v7116 = vpop.permute.xlu0 %7115
  %7118 = vset.pattern.permute.xlu0 7
  %7119 = vperm.xlu0 %7118, %v6511
  %v7120 = vpop.permute.xlu0 %7119
  %7122 = vset.pattern.permute.xlu0 7
  %7123 = vperm.xlu0 %7122, %v6512
  %v7124 = vpop.permute.xlu0 %7123
  %7126 = vset.pattern.permute.xlu0 7
  %7127 = vperm.xlu0 %7126, %v6513
  %v7128 = vpop.permute.xlu0 %7127
  %v7130 = vsel %vm7090, %v7100, 0.0
  %v7131 = vsel %vm7091, %v7104, 0.0
  %v7132 = vsel %vm7092, %v7108, 0.0
  %v7133 = vsel %vm7093, %v7112, 0.0
  %v7134 = vsel %vm7094, %v7116, 0.0
  %v7135 = vsel %vm7095, %v7120, 0.0
  %v7136 = vsel %vm7096, %v7124, 0.0
  %v7137 = vsel %vm7097, %v7128, 0.0
  %v7138 = vadd.f32 %v6978, %v7130
  %v7139 = vadd.f32 %v6979, %v7131
  %v7140 = vadd.f32 %v6980, %v7132
  %v7141 = vadd.f32 %v6981, %v7133
  %v7142 = vadd.f32 %v6982, %v7134
  %v7143 = vadd.f32 %v6983, %v7135
  %v7144 = vadd.f32 %v6984, %v7136
  %v7145 = vadd.f32 %v6985, %v7137
  %7146 = vset.pattern.permute.xlu0 8
  %7147 = vperm.xlu0 %7146, %v3506
  %v7148 = vpop.permute.xlu0 %7147
  %7149 = vset.pattern.permute.xlu0 8
  %7150 = vperm.xlu0 %7149, %v3507
  %v7151 = vpop.permute.xlu0 %7150
  %7152 = vset.pattern.permute.xlu0 8
  %7153 = vperm.xlu0 %7152, %v3508
  %v7154 = vpop.permute.xlu0 %7153
  %7155 = vset.pattern.permute.xlu0 8
  %7156 = vperm.xlu0 %7155, %v3509
  %v7157 = vpop.permute.xlu0 %7156
  %7158 = vset.pattern.permute.xlu0 8
  %7159 = vperm.xlu0 %7158, %v3510
  %v7160 = vpop.permute.xlu0 %7159
  %7161 = vset.pattern.permute.xlu0 8
  %7162 = vperm.xlu0 %7161, %v3511
  %v7163 = vpop.permute.xlu0 %7162
  %7164 = vset.pattern.permute.xlu0 8
  %7165 = vperm.xlu0 %7164, %v3512
  %v7166 = vpop.permute.xlu0 %7165
  %7167 = vset.pattern.permute.xlu0 8
  %7168 = vperm.xlu0 %7167, %v3513
  %v7169 = vpop.permute.xlu0 %7168
  %vm7170 = vcmp.eq.s32.totalorder %v461, %v7148
  %vm7171 = vcmp.eq.s32.totalorder %v461, %v7151
  %vm7172 = vcmp.eq.s32.totalorder %v461, %v7154
  %vm7173 = vcmp.eq.s32.totalorder %v461, %v7157
  %vm7174 = vcmp.eq.s32.totalorder %v461, %v7160
  %vm7175 = vcmp.eq.s32.totalorder %v461, %v7163
  %vm7176 = vcmp.eq.s32.totalorder %v461, %v7166
  %vm7177 = vcmp.eq.s32.totalorder %v461, %v7169
  %7178 = vset.pattern.permute.xlu0 8
  %7179 = vperm.xlu0 %7178, %v6506
  %v7180 = vpop.permute.xlu0 %7179
  %7182 = vset.pattern.permute.xlu0 8
  %7183 = vperm.xlu0 %7182, %v6507
  %v7184 = vpop.permute.xlu0 %7183
  %7186 = vset.pattern.permute.xlu0 8
  %7187 = vperm.xlu0 %7186, %v6508
  %v7188 = vpop.permute.xlu0 %7187
  %7190 = vset.pattern.permute.xlu0 8
  %7191 = vperm.xlu0 %7190, %v6509
  %v7192 = vpop.permute.xlu0 %7191
  %7194 = vset.pattern.permute.xlu0 8
  %7195 = vperm.xlu0 %7194, %v6510
  %v7196 = vpop.permute.xlu0 %7195
  %7198 = vset.pattern.permute.xlu0 8
  %7199 = vperm.xlu0 %7198, %v6511
  %v7200 = vpop.permute.xlu0 %7199
  %7202 = vset.pattern.permute.xlu0 8
  %7203 = vperm.xlu0 %7202, %v6512
  %v7204 = vpop.permute.xlu0 %7203
  %7206 = vset.pattern.permute.xlu0 8
  %7207 = vperm.xlu0 %7206, %v6513
  %v7208 = vpop.permute.xlu0 %7207
  %v7210 = vsel %vm7170, %v7180, 0.0
  %v7211 = vsel %vm7171, %v7184, 0.0
  %v7212 = vsel %vm7172, %v7188, 0.0
  %v7213 = vsel %vm7173, %v7192, 0.0
  %v7214 = vsel %vm7174, %v7196, 0.0
  %v7215 = vsel %vm7175, %v7200, 0.0
  %v7216 = vsel %vm7176, %v7204, 0.0
  %v7217 = vsel %vm7177, %v7208, 0.0
  %v7218 = vadd.f32 %v7058, %v7210
  %v7219 = vadd.f32 %v7059, %v7211
  %v7220 = vadd.f32 %v7060, %v7212
  %v7221 = vadd.f32 %v7061, %v7213
  %v7222 = vadd.f32 %v7062, %v7214
  %v7223 = vadd.f32 %v7063, %v7215
  %v7224 = vadd.f32 %v7064, %v7216
  %v7225 = vadd.f32 %v7065, %v7217
  %7226 = vset.pattern.permute.xlu0 9
  %7227 = vperm.xlu0 %7226, %v3506
  %v7228 = vpop.permute.xlu0 %7227
  %7229 = vset.pattern.permute.xlu0 9
  %7230 = vperm.xlu0 %7229, %v3507
  %v7231 = vpop.permute.xlu0 %7230
  %7232 = vset.pattern.permute.xlu0 9
  %7233 = vperm.xlu0 %7232, %v3508
  %v7234 = vpop.permute.xlu0 %7233
  %7235 = vset.pattern.permute.xlu0 9
  %7236 = vperm.xlu0 %7235, %v3509
  %v7237 = vpop.permute.xlu0 %7236
  %7238 = vset.pattern.permute.xlu0 9
  %7239 = vperm.xlu0 %7238, %v3510
  %v7240 = vpop.permute.xlu0 %7239
  %7241 = vset.pattern.permute.xlu0 9
  %7242 = vperm.xlu0 %7241, %v3511
  %v7243 = vpop.permute.xlu0 %7242
  %7244 = vset.pattern.permute.xlu0 9
  %7245 = vperm.xlu0 %7244, %v3512
  %v7246 = vpop.permute.xlu0 %7245
  %7247 = vset.pattern.permute.xlu0 9
  %7248 = vperm.xlu0 %7247, %v3513
  %v7249 = vpop.permute.xlu0 %7248
  %vm7250 = vcmp.eq.s32.totalorder %v461, %v7228
  %vm7251 = vcmp.eq.s32.totalorder %v461, %v7231
  %vm7252 = vcmp.eq.s32.totalorder %v461, %v7234
  %vm7253 = vcmp.eq.s32.totalorder %v461, %v7237
  %vm7254 = vcmp.eq.s32.totalorder %v461, %v7240
  %vm7255 = vcmp.eq.s32.totalorder %v461, %v7243
  %vm7256 = vcmp.eq.s32.totalorder %v461, %v7246
  %vm7257 = vcmp.eq.s32.totalorder %v461, %v7249
  %7258 = vset.pattern.permute.xlu0 9
  %7259 = vperm.xlu0 %7258, %v6506
  %v7260 = vpop.permute.xlu0 %7259
  %7262 = vset.pattern.permute.xlu0 9
  %7263 = vperm.xlu0 %7262, %v6507
  %v7264 = vpop.permute.xlu0 %7263
  %7266 = vset.pattern.permute.xlu0 9
  %7267 = vperm.xlu0 %7266, %v6508
  %v7268 = vpop.permute.xlu0 %7267
  %7270 = vset.pattern.permute.xlu0 9
  %7271 = vperm.xlu0 %7270, %v6509
  %v7272 = vpop.permute.xlu0 %7271
  %7274 = vset.pattern.permute.xlu0 9
  %7275 = vperm.xlu0 %7274, %v6510
  %v7276 = vpop.permute.xlu0 %7275
  %7278 = vset.pattern.permute.xlu0 9
  %7279 = vperm.xlu0 %7278, %v6511
  %v7280 = vpop.permute.xlu0 %7279
  %7282 = vset.pattern.permute.xlu0 9
  %7283 = vperm.xlu0 %7282, %v6512
  %v7284 = vpop.permute.xlu0 %7283
  %7286 = vset.pattern.permute.xlu0 9
  %7287 = vperm.xlu0 %7286, %v6513
  %v7288 = vpop.permute.xlu0 %7287
  %v7290 = vsel %vm7250, %v7260, 0.0
  %v7291 = vsel %vm7251, %v7264, 0.0
  %v7292 = vsel %vm7252, %v7268, 0.0
  %v7293 = vsel %vm7253, %v7272, 0.0
  %v7294 = vsel %vm7254, %v7276, 0.0
  %v7295 = vsel %vm7255, %v7280, 0.0
  %v7296 = vsel %vm7256, %v7284, 0.0
  %v7297 = vsel %vm7257, %v7288, 0.0
  %v7298 = vadd.f32 %v7138, %v7290
  %v7299 = vadd.f32 %v7139, %v7291
  %v7300 = vadd.f32 %v7140, %v7292
  %v7301 = vadd.f32 %v7141, %v7293
  %v7302 = vadd.f32 %v7142, %v7294
  %v7303 = vadd.f32 %v7143, %v7295
  %v7304 = vadd.f32 %v7144, %v7296
  %v7305 = vadd.f32 %v7145, %v7297
  %7306 = vset.pattern.permute.xlu0 10
  %7307 = vperm.xlu0 %7306, %v3506
  %v7308 = vpop.permute.xlu0 %7307
  %7309 = vset.pattern.permute.xlu0 10
  %7310 = vperm.xlu0 %7309, %v3507
  %v7311 = vpop.permute.xlu0 %7310
  %7312 = vset.pattern.permute.xlu0 10
  %7313 = vperm.xlu0 %7312, %v3508
  %v7314 = vpop.permute.xlu0 %7313
  %7315 = vset.pattern.permute.xlu0 10
  %7316 = vperm.xlu0 %7315, %v3509
  %v7317 = vpop.permute.xlu0 %7316
  %7318 = vset.pattern.permute.xlu0 10
  %7319 = vperm.xlu0 %7318, %v3510
  %v7320 = vpop.permute.xlu0 %7319
  %7321 = vset.pattern.permute.xlu0 10
  %7322 = vperm.xlu0 %7321, %v3511
  %v7323 = vpop.permute.xlu0 %7322
  %7324 = vset.pattern.permute.xlu0 10
  %7325 = vperm.xlu0 %7324, %v3512
  %v7326 = vpop.permute.xlu0 %7325
  %7327 = vset.pattern.permute.xlu0 10
  %7328 = vperm.xlu0 %7327, %v3513
  %v7329 = vpop.permute.xlu0 %7328
  %vm7330 = vcmp.eq.s32.totalorder %v461, %v7308
  %vm7331 = vcmp.eq.s32.totalorder %v461, %v7311
  %vm7332 = vcmp.eq.s32.totalorder %v461, %v7314
  %vm7333 = vcmp.eq.s32.totalorder %v461, %v7317
  %vm7334 = vcmp.eq.s32.totalorder %v461, %v7320
  %vm7335 = vcmp.eq.s32.totalorder %v461, %v7323
  %vm7336 = vcmp.eq.s32.totalorder %v461, %v7326
  %vm7337 = vcmp.eq.s32.totalorder %v461, %v7329
  %7338 = vset.pattern.permute.xlu0 10
  %7339 = vperm.xlu0 %7338, %v6506
  %v7340 = vpop.permute.xlu0 %7339
  %7342 = vset.pattern.permute.xlu0 10
  %7343 = vperm.xlu0 %7342, %v6507
  %v7344 = vpop.permute.xlu0 %7343
  %7346 = vset.pattern.permute.xlu0 10
  %7347 = vperm.xlu0 %7346, %v6508
  %v7348 = vpop.permute.xlu0 %7347
  %7350 = vset.pattern.permute.xlu0 10
  %7351 = vperm.xlu0 %7350, %v6509
  %v7352 = vpop.permute.xlu0 %7351
  %7354 = vset.pattern.permute.xlu0 10
  %7355 = vperm.xlu0 %7354, %v6510
  %v7356 = vpop.permute.xlu0 %7355
  %7358 = vset.pattern.permute.xlu0 10
  %7359 = vperm.xlu0 %7358, %v6511
  %v7360 = vpop.permute.xlu0 %7359
  %7362 = vset.pattern.permute.xlu0 10
  %7363 = vperm.xlu0 %7362, %v6512
  %v7364 = vpop.permute.xlu0 %7363
  %7366 = vset.pattern.permute.xlu0 10
  %7367 = vperm.xlu0 %7366, %v6513
  %v7368 = vpop.permute.xlu0 %7367
  %v7370 = vsel %vm7330, %v7340, 0.0
  %v7371 = vsel %vm7331, %v7344, 0.0
  %v7372 = vsel %vm7332, %v7348, 0.0
  %v7373 = vsel %vm7333, %v7352, 0.0
  %v7374 = vsel %vm7334, %v7356, 0.0
  %v7375 = vsel %vm7335, %v7360, 0.0
  %v7376 = vsel %vm7336, %v7364, 0.0
  %v7377 = vsel %vm7337, %v7368, 0.0
  %v7378 = vadd.f32 %v7218, %v7370
  %v7379 = vadd.f32 %v7219, %v7371
  %v7380 = vadd.f32 %v7220, %v7372
  %v7381 = vadd.f32 %v7221, %v7373
  %v7382 = vadd.f32 %v7222, %v7374
  %v7383 = vadd.f32 %v7223, %v7375
  %v7384 = vadd.f32 %v7224, %v7376
  %v7385 = vadd.f32 %v7225, %v7377
  %7386 = vset.pattern.permute.xlu0 11
  %7387 = vperm.xlu0 %7386, %v3506
  %v7388 = vpop.permute.xlu0 %7387
  %7389 = vset.pattern.permute.xlu0 11
  %7390 = vperm.xlu0 %7389, %v3507
  %v7391 = vpop.permute.xlu0 %7390
  %7392 = vset.pattern.permute.xlu0 11
  %7393 = vperm.xlu0 %7392, %v3508
  %v7394 = vpop.permute.xlu0 %7393
  %7395 = vset.pattern.permute.xlu0 11
  %7396 = vperm.xlu0 %7395, %v3509
  %v7397 = vpop.permute.xlu0 %7396
  %7398 = vset.pattern.permute.xlu0 11
  %7399 = vperm.xlu0 %7398, %v3510
  %v7400 = vpop.permute.xlu0 %7399
  %7401 = vset.pattern.permute.xlu0 11
  %7402 = vperm.xlu0 %7401, %v3511
  %v7403 = vpop.permute.xlu0 %7402
  %7404 = vset.pattern.permute.xlu0 11
  %7405 = vperm.xlu0 %7404, %v3512
  %v7406 = vpop.permute.xlu0 %7405
  %7407 = vset.pattern.permute.xlu0 11
  %7408 = vperm.xlu0 %7407, %v3513
  %v7409 = vpop.permute.xlu0 %7408
  %vm7410 = vcmp.eq.s32.totalorder %v461, %v7388
  %vm7411 = vcmp.eq.s32.totalorder %v461, %v7391
  %vm7412 = vcmp.eq.s32.totalorder %v461, %v7394
  %vm7413 = vcmp.eq.s32.totalorder %v461, %v7397
  %vm7414 = vcmp.eq.s32.totalorder %v461, %v7400
  %vm7415 = vcmp.eq.s32.totalorder %v461, %v7403
  %vm7416 = vcmp.eq.s32.totalorder %v461, %v7406
  %vm7417 = vcmp.eq.s32.totalorder %v461, %v7409
  %7418 = vset.pattern.permute.xlu0 11
  %7419 = vperm.xlu0 %7418, %v6506
  %v7420 = vpop.permute.xlu0 %7419
  %7422 = vset.pattern.permute.xlu0 11
  %7423 = vperm.xlu0 %7422, %v6507
  %v7424 = vpop.permute.xlu0 %7423
  %7426 = vset.pattern.permute.xlu0 11
  %7427 = vperm.xlu0 %7426, %v6508
  %v7428 = vpop.permute.xlu0 %7427
  %7430 = vset.pattern.permute.xlu0 11
  %7431 = vperm.xlu0 %7430, %v6509
  %v7432 = vpop.permute.xlu0 %7431
  %7434 = vset.pattern.permute.xlu0 11
  %7435 = vperm.xlu0 %7434, %v6510
  %v7436 = vpop.permute.xlu0 %7435
  %7438 = vset.pattern.permute.xlu0 11
  %7439 = vperm.xlu0 %7438, %v6511
  %v7440 = vpop.permute.xlu0 %7439
  %7442 = vset.pattern.permute.xlu0 11
  %7443 = vperm.xlu0 %7442, %v6512
  %v7444 = vpop.permute.xlu0 %7443
  %7446 = vset.pattern.permute.xlu0 11
  %7447 = vperm.xlu0 %7446, %v6513
  %v7448 = vpop.permute.xlu0 %7447
  %v7450 = vsel %vm7410, %v7420, 0.0
  %v7451 = vsel %vm7411, %v7424, 0.0
  %v7452 = vsel %vm7412, %v7428, 0.0
  %v7453 = vsel %vm7413, %v7432, 0.0
  %v7454 = vsel %vm7414, %v7436, 0.0
  %v7455 = vsel %vm7415, %v7440, 0.0
  %v7456 = vsel %vm7416, %v7444, 0.0
  %v7457 = vsel %vm7417, %v7448, 0.0
  %v7458 = vadd.f32 %v7298, %v7450
  %v7459 = vadd.f32 %v7299, %v7451
  %v7460 = vadd.f32 %v7300, %v7452
  %v7461 = vadd.f32 %v7301, %v7453
  %v7462 = vadd.f32 %v7302, %v7454
  %v7463 = vadd.f32 %v7303, %v7455
  %v7464 = vadd.f32 %v7304, %v7456
  %v7465 = vadd.f32 %v7305, %v7457
  %v7466 = vadd.f32 %v4498, %v4578
  %v7467 = vadd.f32 %v4499, %v4579
  %v7468 = vadd.f32 %v4500, %v4580
  %v7469 = vadd.f32 %v4501, %v4581
  %v7470 = vadd.f32 %v4502, %v4582
  %v7471 = vadd.f32 %v4503, %v4583
  %v7472 = vadd.f32 %v4504, %v4584
  %v7473 = vadd.f32 %v4505, %v4585
  %v7474 = vadd.f32 %v5458, %v5538
  %v7475 = vadd.f32 %v5459, %v5539
  %v7476 = vadd.f32 %v5460, %v5540
  %v7477 = vadd.f32 %v5461, %v5541
  %v7478 = vadd.f32 %v5462, %v5542
  %v7479 = vadd.f32 %v5463, %v5543
  %v7480 = vadd.f32 %v5464, %v5544
  %v7481 = vadd.f32 %v5465, %v5545
  %v7482 = vadd.f32 %v6418, %v6498
  %v7483 = vadd.f32 %v6419, %v6499
  %v7484 = vadd.f32 %v6420, %v6500
  %v7485 = vadd.f32 %v6421, %v6501
  %v7486 = vadd.f32 %v6422, %v6502
  %v7487 = vadd.f32 %v6423, %v6503
  %v7488 = vadd.f32 %v6424, %v6504
  %v7489 = vadd.f32 %v6425, %v6505
  %v7490 = vadd.f32 %v7378, %v7458
  %v7491 = vadd.f32 %v7379, %v7459
  %v7492 = vadd.f32 %v7380, %v7460
  %v7493 = vadd.f32 %v7381, %v7461
  %v7494 = vadd.f32 %v7382, %v7462
  %v7495 = vadd.f32 %v7383, %v7463
  %v7496 = vadd.f32 %v7384, %v7464
  %v7497 = vadd.f32 %v7385, %v7465
  %v7498 = vadd.f32 %v7466, %v7474
  %v7499 = vadd.f32 %v7467, %v7475
  %v7500 = vadd.f32 %v7468, %v7476
  %v7501 = vadd.f32 %v7469, %v7477
  %v7502 = vadd.f32 %v7470, %v7478
  %v7503 = vadd.f32 %v7471, %v7479
  %v7504 = vadd.f32 %v7472, %v7480
  %v7505 = vadd.f32 %v7473, %v7481
  %v7506 = vadd.f32 %v7482, %v7490
  %v7507 = vadd.f32 %v7483, %v7491
  %v7508 = vadd.f32 %v7484, %v7492
  %v7509 = vadd.f32 %v7485, %v7493
  %v7510 = vadd.f32 %v7486, %v7494
  %v7511 = vadd.f32 %v7487, %v7495
  %v7512 = vadd.f32 %v7488, %v7496
  %v7513 = vadd.f32 %v7489, %v7497
  %v7514 = vadd.f32 %v7498, %v7506
  %v7515 = vadd.f32 %v7499, %v7507
  %v7516 = vadd.f32 %v7500, %v7508
  %v7517 = vadd.f32 %v7501, %v7509
  %v7518 = vadd.f32 %v7502, %v7510
  %v7519 = vadd.f32 %v7503, %v7511
  %v7520 = vadd.f32 %v7504, %v7512
  %v7521 = vadd.f32 %v7505, %v7513
  %v7523 = vsel %vm195, %v2900, 0
  %v7526 = vsel %vm195, %v2905, 0
  %v7529 = vsel %vm195, %v2910, 0
  %v7532 = vsel %vm195, %v2915, 0
  %v7535 = vsel %vm195, %v2920, 0
  %v7538 = vsel %vm195, %v2925, 0
  %v7541 = vsel %vm195, %v2930, 0
  %v7544 = vsel %vm195, %v2935, 0
  %v7547 = vsel %vm195, %v2940, 0
  %v7550 = vsel %vm195, %v2945, 0
  %v7553 = vsel %vm195, %v2950, 0
  %7555 = vmatprep.subr.mxu0 0.0
  %7556 = vmatpush1.msra.mxu0 0.0
  %7557 = vmatprep.subr.mxu0 0.0
  %7558 = vmatpush1.msra.mxu0 0.0
  %7559 = vmatprep.subr.mxu0 0.0
  %7560 = vmatpush1.msra.mxu0 0.0
  %7561 = vmatprep.subr.mxu0 0.0
  %7562 = vmatpush1.msra.mxu0 0.0
  %7563 = vmatprep.subr.mxu0 0.0
  %7564 = vmatpush1.msra.mxu0 0.0
  %7565 = vmatprep.subr.mxu0 0.0
  %7566 = vmatpush1.msra.mxu0 0.0
  %7567 = vmatprep.subr.mxu0 0.0
  %7568 = vmatpush1.msra.mxu0 0.0
  %7569 = vmatprep.subr.mxu0 0.0
  %7570 = vmatpush1.msra.mxu0 0.0
  %7571 = vmatprep.subr.mxu0 0.0
  %7572 = vmatpush1.msra.mxu0 0.0
  %7573 = vmatprep.subr.mxu0 0.0
  %7574 = vmatpush1.msra.mxu0 0.0
  %7575 = vmatprep.subr.mxu0 0.0
  %7576 = vmatpush1.msra.mxu0 0.0
  %7577 = vmatprep.subr.mxu0 0.0
  %7578 = vmatpush1.msra.mxu0 0.0
  %7579 = vmatprep.subr.mxu0 0.0
  %7580 = vmatpush1.msra.mxu0 %v2776
  %7581 = vmatprep.subr.mxu0 0.0
  %7582 = vmatpush1.msra.mxu0 %v2775
  %7583 = vmatprep.subr.mxu0 0.0
  %7584 = vmatpush1.msra.mxu0 %v2774
  %7585 = vmatprep.subr.mxu0 0.0
  %7586 = vmatpush1.msra.mxu0 %v2773
  %7587 = vmatprep.subr.mxu0 0.0
  %7588 = vmatpush2.msra.mxu0 0.0
  %7589 = vmatprep.subr.mxu0 0.0
  %7590 = vmatpush2.msra.mxu0 0.0
  %7591 = vmatprep.subr.mxu0 0.0
  %7592 = vmatpush2.msra.mxu0 0.0
  %7593 = vmatprep.subr.mxu0 0.0
  %7594 = vmatpush2.msra.mxu0 0.0
  %7595 = vmatprep.subr.mxu0 0.0
  %7596 = vmatpush2.msra.mxu0 0.0
  %7597 = vmatprep.subr.mxu0 0.0
  %7598 = vmatpush2.msra.mxu0 0.0
  %7599 = vmatprep.subr.mxu0 0.0
  %7600 = vmatpush2.msra.mxu0 0.0
  %7601 = vmatprep.subr.mxu0 0.0
  %7602 = vmatpush2.msra.mxu0 0.0
  %7603 = vmatprep.subr.mxu0 0.0
  %7604 = vmatpush2.msra.mxu0 0.0
  %7605 = vmatprep.subr.mxu0 0.0
  %7606 = vmatpush2.msra.mxu0 0.0
  %7607 = vmatprep.subr.mxu0 0.0
  %7608 = vmatpush2.msra.mxu0 0.0
  %7609 = vmatprep.subr.mxu0 0.0
  %7610 = vmatpush2.msra.mxu0 0.0
  %7611 = vmatprep.subr.mxu0 0.0
  %7612 = vmatpush2.msra.mxu0 0.0
  %7613 = vmatprep.subr.mxu0 0.0
  %7614 = vmatpush2.msra.mxu0 0.0
  %7615 = vmatprep.subr.mxu0 0.0
  %7616 = vmatpush2.msra.mxu0 0.0
  %7617 = vmatprep.subr.mxu0 0.0
  %7618 = vmatpush2.msra.mxu0 0.0
  %7619 = vmatprep.mubr.f32.mxu0 0.0
  %7620 = vmatmul.mubr.f32.gmra.mxu0 %v7523
  %v7621 = vpop.f32.mrf.mxu0
  %v7622 = vadd.f32 0.0, %v7621
  %v7623 = vpop.f32.mrf.mxu0
  %7624 = vmatprep.mubr.f32.mxu0 0.0
  %7625 = vmatmul.mubr.f32.gmra.mxu0 %v7526
  %v7626 = vpop.f32.mrf.mxu0
  %v7627 = vadd.f32 0.0, %v7626
  %v7628 = vpop.f32.mrf.mxu0
  %7629 = vmatprep.mubr.f32.mxu0 0.0
  %7630 = vmatmul.mubr.f32.gmra.mxu0 %v7529
  %v7631 = vpop.f32.mrf.mxu0
  %v7632 = vadd.f32 0.0, %v7631
  %v7633 = vpop.f32.mrf.mxu0
  %7634 = vmatprep.mubr.f32.mxu0 0.0
  %7635 = vmatmul.mubr.f32.gmra.mxu0 %v7532
  %v7636 = vpop.f32.mrf.mxu0
  %v7637 = vadd.f32 0.0, %v7636
  %v7638 = vpop.f32.mrf.mxu0
  %7639 = vmatprep.mubr.f32.mxu0 0.0
  %7640 = vmatmul.mubr.f32.gmra.mxu0 %v7535
  %v7641 = vpop.f32.mrf.mxu0
  %v7642 = vadd.f32 0.0, %v7641
  %v7643 = vpop.f32.mrf.mxu0
  %7644 = vmatprep.mubr.f32.mxu0 0.0
  %7645 = vmatmul.mubr.f32.gmra.mxu0 %v7538
  %v7646 = vpop.f32.mrf.mxu0
  %v7647 = vadd.f32 0.0, %v7646
  %v7648 = vpop.f32.mrf.mxu0
  %7649 = vmatprep.mubr.f32.mxu0 0.0
  %7650 = vmatmul.mubr.f32.gmra.mxu0 %v7541
  %v7651 = vpop.f32.mrf.mxu0
  %v7652 = vadd.f32 0.0, %v7651
  %v7653 = vpop.f32.mrf.mxu0
  %7654 = vmatprep.mubr.f32.mxu0 0.0
  %7655 = vmatmul.mubr.f32.gmra.mxu0 %v7544
  %v7656 = vpop.f32.mrf.mxu0
  %v7657 = vadd.f32 0.0, %v7656
  %v7658 = vpop.f32.mrf.mxu0
  %7659 = vmatprep.mubr.f32.mxu0 0.0
  %7660 = vmatmul.mubr.f32.gmra.mxu0 %v7547
  %v7661 = vpop.f32.mrf.mxu0
  %v7662 = vadd.f32 0.0, %v7661
  %v7663 = vpop.f32.mrf.mxu0
  %7664 = vmatprep.mubr.f32.mxu0 0.0
  %7665 = vmatmul.mubr.f32.gmra.mxu0 %v7550
  %v7666 = vpop.f32.mrf.mxu0
  %v7667 = vadd.f32 0.0, %v7666
  %v7668 = vpop.f32.mrf.mxu0
  %7669 = vmatprep.mubr.f32.mxu0 0.0
  %7670 = vmatmul.mubr.f32.gmra.mxu0 %v7553
  %v7671 = vpop.f32.mrf.mxu0
  %v7672 = vadd.f32 0.0, %v7671
  %v7673 = vpop.f32.mrf.mxu0
  %7674 = vdwg.mxu0
  %v7676 = vlaneseq
  %v7677 = vshrl.u32 %v7676, 7
  %v7678 = vsub.s32 0, %v7677
  %v7679 = vrot.slane %v2777, %v7678
  %vm7681 = vcmask 687104
  %v7683 = vsel %vm7681, %v7514, 0
  %v7686 = vsel %vm7681, %v7515, 0
  %v7689 = vsel %vm7681, %v7516, 0
  %v7692 = vsel %vm7681, %v7517, 0
  %v7695 = vsel %vm7681, %v7518, 0
  %v7698 = vsel %vm7681, %v7519, 0
  %v7701 = vsel %vm7681, %v7520, 0
  %v7704 = vsel %vm7681, %v7521, 0
  %vm7706 = vcmask 1043456
  %v7708 = vsel %vm7706, %v7672, 0
  %7710 = vmatprep.subr.mxu0 0.0
  %7711 = vmatpush1.msra.mxu0 0.0
  %7712 = vmatprep.subr.mxu0 0.0
  %7713 = vmatpush1.msra.mxu0 0.0
  %7714 = vmatprep.subr.mxu0 0.0
  %7715 = vmatpush1.msra.mxu0 0.0
  %7716 = vmatprep.subr.mxu0 0.0
  %7717 = vmatpush1.msra.mxu0 0.0
  %7718 = vmatprep.subr.mxu0 0.0
  %7719 = vmatpush1.msra.mxu0 0.0
  %7720 = vmatprep.subr.mxu0 0.0
  %7721 = vmatpush1.msra.mxu0 %v7708
  %7722 = vmatprep.subr.mxu0 0.0
  %7723 = vmatpush1.msra.mxu0 %v7667
  %7724 = vmatprep.subr.mxu0 0.0
  %7725 = vmatpush1.msra.mxu0 %v7662
  %7726 = vmatprep.subr.mxu0 0.0
  %7727 = vmatpush1.msra.mxu0 %v7657
  %7728 = vmatprep.subr.mxu0 0.0
  %7729 = vmatpush1.msra.mxu0 %v7652
  %7730 = vmatprep.subr.mxu0 0.0
  %7731 = vmatpush1.msra.mxu0 %v7647
  %7732 = vmatprep.subr.mxu0 0.0
  %7733 = vmatpush1.msra.mxu0 %v7642
  %7734 = vmatprep.subr.mxu0 0.0
  %7735 = vmatpush1.msra.mxu0 %v7637
  %7736 = vmatprep.subr.mxu0 0.0
  %7737 = vmatpush1.msra.mxu0 %v7632
  %7738 = vmatprep.subr.mxu0 0.0
  %7739 = vmatpush1.msra.mxu0 %v7627
  %7740 = vmatprep.subr.mxu0 0.0
  %7741 = vmatpush1.msra.mxu0 %v7622
  %7742 = vmatprep.subr.mxu0 0.0
  %7743 = vmatpush2.msra.mxu0 0.0
  %7744 = vmatprep.subr.mxu0 0.0
  %7745 = vmatpush2.msra.mxu0 0.0
  %7746 = vmatprep.subr.mxu0 0.0
  %7747 = vmatpush2.msra.mxu0 0.0
  %7748 = vmatprep.subr.mxu0 0.0
  %7749 = vmatpush2.msra.mxu0 0.0
  %7750 = vmatprep.subr.mxu0 0.0
  %7751 = vmatpush2.msra.mxu0 0.0
  %7752 = vmatprep.subr.mxu0 0.0
  %7753 = vmatpush2.msra.mxu0 0.0
  %7754 = vmatprep.subr.mxu0 0.0
  %7755 = vmatpush2.msra.mxu0 0.0
  %7756 = vmatprep.subr.mxu0 0.0
  %7757 = vmatpush2.msra.mxu0 0.0
  %7758 = vmatprep.subr.mxu0 0.0
  %7759 = vmatpush2.msra.mxu0 0.0
  %7760 = vmatprep.subr.mxu0 0.0
  %7761 = vmatpush2.msra.mxu0 0.0
  %7762 = vmatprep.subr.mxu0 0.0
  %7763 = vmatpush2.msra.mxu0 0.0
  %7764 = vmatprep.subr.mxu0 0.0
  %7765 = vmatpush2.msra.mxu0 0.0
  %7766 = vmatprep.subr.mxu0 0.0
  %7767 = vmatpush2.msra.mxu0 0.0
  %7768 = vmatprep.subr.mxu0 0.0
  %7769 = vmatpush2.msra.mxu0 0.0
  %7770 = vmatprep.subr.mxu0 0.0
  %7771 = vmatpush2.msra.mxu0 0.0
  %7772 = vmatprep.subr.mxu0 0.0
  %7773 = vmatpush2.msra.mxu0 0.0
  %7774 = vmatprep.mubr.f32.mxu0 0.0
  %7775 = vmatmul.mubr.f32.gmra.mxu0 %v7683
  %v7776 = vpop.f32.mrf.mxu0
  %v7777 = vadd.f32 %v7679, %v7776
  %v7778 = vpop.f32.mrf.mxu0
  %7779 = vmatprep.mubr.f32.mxu0 0.0
  %7780 = vmatmul.mubr.f32.gmra.mxu0 %v7686
  %v7781 = vpop.f32.mrf.mxu0
  %v7782 = vadd.f32 %v7679, %v7781
  %v7783 = vpop.f32.mrf.mxu0
  %7784 = vmatprep.mubr.f32.mxu0 0.0
  %7785 = vmatmul.mubr.f32.gmra.mxu0 %v7689
  %v7786 = vpop.f32.mrf.mxu0
  %v7787 = vadd.f32 %v7679, %v7786
  %v7788 = vpop.f32.mrf.mxu0
  %7789 = vmatprep.mubr.f32.mxu0 0.0
  %7790 = vmatmul.mubr.f32.gmra.mxu0 %v7692
  %v7791 = vpop.f32.mrf.mxu0
  %v7792 = vadd.f32 %v7679, %v7791
  %v7793 = vpop.f32.mrf.mxu0
  %7794 = vmatprep.mubr.f32.mxu0 0.0
  %7795 = vmatmul.mubr.f32.gmra.mxu0 %v7695
  %v7796 = vpop.f32.mrf.mxu0
  %v7797 = vadd.f32 %v7679, %v7796
  %v7798 = vpop.f32.mrf.mxu0
  %7799 = vmatprep.mubr.f32.mxu0 0.0
  %7800 = vmatmul.mubr.f32.gmra.mxu0 %v7698
  %v7801 = vpop.f32.mrf.mxu0
  %v7802 = vadd.f32 %v7679, %v7801
  %v7803 = vpop.f32.mrf.mxu0
  %7804 = vmatprep.mubr.f32.mxu0 0.0
  %7805 = vmatmul.mubr.f32.gmra.mxu0 %v7701
  %v7806 = vpop.f32.mrf.mxu0
  %v7807 = vadd.f32 %v7679, %v7806
  %v7808 = vpop.f32.mrf.mxu0
  %7809 = vmatprep.mubr.f32.mxu0 0.0
  %7810 = vmatmul.mubr.f32.gmra.mxu0 %v7704
  %v7811 = vpop.f32.mrf.mxu0
  %v7812 = vadd.f32 %v7679, %v7811
  %v7813 = vpop.f32.mrf.mxu0
  %7814 = vdwg.mxu0
  %v7815 = vadd.f32 %v7777, %v2728
  %v7816 = vadd.f32 %v7782, %v2729
  %v7817 = vadd.f32 %v7787, %v2730
  %v7818 = vadd.f32 %v7792, %v2731
  %v7819 = vadd.f32 %v7797, %v2732
  %v7820 = vadd.f32 %v7802, %v2733
  %v7821 = vadd.f32 %v7807, %v2734
  %v7822 = vadd.f32 %v7812, %v2735
  %v7823 = vld [vmem:[%s45] sm:$0x1]
  %v7824 = vld [vmem:[%s47] sm:$0x1]
  %v7825 = vsel %vm195, %v7815, 0.0
  %7826 = vadd.xlane.f32.xlu0 %v7825
  %v7827 = vpop.xlane.xlu0 %7826
  %v7828 = vsel %vm195, %v7816, 0.0
  %7829 = vadd.xlane.f32.xlu0 %v7828
  %v7830 = vpop.xlane.xlu0 %7829
  %v7831 = vsel %vm195, %v7817, 0.0
  %7832 = vadd.xlane.f32.xlu0 %v7831
  %v7833 = vpop.xlane.xlu0 %7832
  %v7834 = vsel %vm195, %v7818, 0.0
  %7835 = vadd.xlane.f32.xlu0 %v7834
  %v7836 = vpop.xlane.xlu0 %7835
  %v7837 = vsel %vm195, %v7819, 0.0
  %7838 = vadd.xlane.f32.xlu0 %v7837
  %v7839 = vpop.xlane.xlu0 %7838
  %v7840 = vsel %vm195, %v7820, 0.0
  %7841 = vadd.xlane.f32.xlu0 %v7840
  %v7842 = vpop.xlane.xlu0 %7841
  %v7843 = vsel %vm195, %v7821, 0.0
  %7844 = vadd.xlane.f32.xlu0 %v7843
  %v7845 = vpop.xlane.xlu0 %7844
  %v7846 = vsel %vm195, %v7822, 0.0
  %7847 = vadd.xlane.f32.xlu0 %v7846
  %v7848 = vpop.xlane.xlu0 %7847
  %v7849 = vmul.f32 %v7827, %v2627
  %v7850 = vmul.f32 %v7830, %v2627
  %v7851 = vmul.f32 %v7833, %v2627
  %v7852 = vmul.f32 %v7836, %v2627
  %v7853 = vmul.f32 %v7839, %v2627
  %v7854 = vmul.f32 %v7842, %v2627
  %v7855 = vmul.f32 %v7845, %v2627
  %v7856 = vmul.f32 %v7848, %v2627
  %v7857 = vsub.f32 %v7815, %v7849
  %v7858 = vsub.f32 %v7816, %v7850
  %v7859 = vsub.f32 %v7817, %v7851
  %v7860 = vsub.f32 %v7818, %v7852
  %v7861 = vsub.f32 %v7819, %v7853
  %v7862 = vsub.f32 %v7820, %v7854
  %v7863 = vsub.f32 %v7821, %v7855
  %v7864 = vsub.f32 %v7822, %v7856
  %v7865 = vmul.f32 %v7857, %v7857
  %v7866 = vmul.f32 %v7858, %v7858
  %v7867 = vmul.f32 %v7859, %v7859
  %v7868 = vmul.f32 %v7860, %v7860
  %v7869 = vmul.f32 %v7861, %v7861
  %v7870 = vmul.f32 %v7862, %v7862
  %v7871 = vmul.f32 %v7863, %v7863
  %v7872 = vmul.f32 %v7864, %v7864
  %v7873 = vsel %vm195, %v7865, 0.0
  %7874 = vadd.xlane.f32.xlu0 %v7873
  %v7875 = vpop.xlane.xlu0 %7874
  %v7876 = vsel %vm195, %v7866, 0.0
  %7877 = vadd.xlane.f32.xlu0 %v7876
  %v7878 = vpop.xlane.xlu0 %7877
  %v7879 = vsel %vm195, %v7867, 0.0
  %7880 = vadd.xlane.f32.xlu0 %v7879
  %v7881 = vpop.xlane.xlu0 %7880
  %v7882 = vsel %vm195, %v7868, 0.0
  %7883 = vadd.xlane.f32.xlu0 %v7882
  %v7884 = vpop.xlane.xlu0 %7883
  %v7885 = vsel %vm195, %v7869, 0.0
  %7886 = vadd.xlane.f32.xlu0 %v7885
  %v7887 = vpop.xlane.xlu0 %7886
  %v7888 = vsel %vm195, %v7870, 0.0
  %7889 = vadd.xlane.f32.xlu0 %v7888
  %v7890 = vpop.xlane.xlu0 %7889
  %v7891 = vsel %vm195, %v7871, 0.0
  %7892 = vadd.xlane.f32.xlu0 %v7891
  %v7893 = vpop.xlane.xlu0 %7892
  %v7894 = vsel %vm195, %v7872, 0.0
  %7895 = vadd.xlane.f32.xlu0 %v7894
  %v7896 = vpop.xlane.xlu0 %7895
  %v7897 = vmul.f32 %v7875, %v2627
  %v7898 = vmul.f32 %v7878, %v2627
  %v7899 = vmul.f32 %v7881, %v2627
  %v7900 = vmul.f32 %v7884, %v2627
  %v7901 = vmul.f32 %v7887, %v2627
  %v7902 = vmul.f32 %v7890, %v2627
  %v7903 = vmul.f32 %v7893, %v2627
  %v7904 = vmul.f32 %v7896, %v2627
  %v7905 = vadd.f32 %v7897, 1e-05
  %v7906 = vadd.f32 %v7898, 1e-05
  %v7907 = vadd.f32 %v7899, 1e-05
  %v7908 = vadd.f32 %v7900, 1e-05
  %v7909 = vadd.f32 %v7901, 1e-05
  %v7910 = vadd.f32 %v7902, 1e-05
  %v7911 = vadd.f32 %v7903, 1e-05
  %v7912 = vadd.f32 %v7904, 1e-05
  %v7913 = vrsqrt.pop %v7905
  %v7914 = vrsqrt.pop %v7906
  %v7915 = vrsqrt.pop %v7907
  %v7916 = vrsqrt.pop %v7908
  %v7917 = vrsqrt.pop %v7909
  %v7918 = vrsqrt.pop %v7910
  %v7919 = vrsqrt.pop %v7911
  %v7920 = vrsqrt.pop %v7912
  %v7921 = vmul.f32 %v7857, %v7913
  %v7922 = vmul.f32 %v7858, %v7914
  %v7923 = vmul.f32 %v7859, %v7915
  %v7924 = vmul.f32 %v7860, %v7916
  %v7925 = vmul.f32 %v7861, %v7917
  %v7926 = vmul.f32 %v7862, %v7918
  %v7927 = vmul.f32 %v7863, %v7919
  %v7928 = vmul.f32 %v7864, %v7920
  %v7930 = vlaneseq
  %v7931 = vshrl.u32 %v7930, 7
  %v7932 = vsub.s32 0, %v7931
  %v7933 = vrot.slane %v7823, %v7932
  %v7935 = vmul.f32 %v7921, %v7933
  %v7936 = vmul.f32 %v7922, %v7933
  %v7937 = vmul.f32 %v7923, %v7933
  %v7938 = vmul.f32 %v7924, %v7933
  %v7939 = vmul.f32 %v7925, %v7933
  %v7940 = vmul.f32 %v7926, %v7933
  %v7941 = vmul.f32 %v7927, %v7933
  %v7942 = vmul.f32 %v7928, %v7933
  %v7944 = vlaneseq
  %v7945 = vshrl.u32 %v7944, 7
  %v7946 = vsub.s32 0, %v7945
  %v7947 = vrot.slane %v7824, %v7946
  %v7949 = vadd.f32 %v7935, %v7947
  %v7950 = vadd.f32 %v7936, %v7947
  %v7951 = vadd.f32 %v7937, %v7947
  %v7952 = vadd.f32 %v7938, %v7947
  %v7953 = vadd.f32 %v7939, %v7947
  %v7954 = vadd.f32 %v7940, %v7947
  %v7955 = vadd.f32 %v7941, %v7947
  %v7956 = vadd.f32 %v7942, %v7947
  %v7957 = vld [vmem:[%s49] sm:$0xff]
  %v7958 = vld [vmem:[%s49 + $0x8] sm:$0xff]
  %v7959 = vld [vmem:[%s49 + $0x10] sm:$0xff]
  %v7960 = vld [vmem:[%s49 + $0x18] sm:$0xff]
  %v7961 = vld [vmem:[%s51] sm:$0x1]
  %v7963 = vlaneseq
  %v7964 = vshrl.u32 %v7963, 7
  %v7965 = vsub.s32 0, %v7964
  %v7966 = vrot.slane %v7961, %v7965
  %v7969 = vsel %vm195, %v7949, 0
  %v7972 = vsel %vm195, %v7950, 0
  %v7975 = vsel %vm195, %v7951, 0
  %v7978 = vsel %vm195, %v7952, 0
  %v7981 = vsel %vm195, %v7953, 0
  %v7984 = vsel %vm195, %v7954, 0
  %v7987 = vsel %vm195, %v7955, 0
  %v7990 = vsel %vm195, %v7956, 0
  %7992 = vmatprep.subr.mxu0 0.0
  %7993 = vmatpush1.msra.mxu0 0.0
  %7994 = vmatprep.subr.mxu0 0.0
  %7995 = vmatpush1.msra.mxu0 0.0
  %7996 = vmatprep.subr.mxu0 0.0
  %7997 = vmatpush1.msra.mxu0 0.0
  %7998 = vmatprep.subr.mxu0 0.0
  %7999 = vmatpush1.msra.mxu0 0.0
  %8000 = vmatprep.subr.mxu0 0.0
  %8001 = vmatpush1.msra.mxu0 0.0
  %8002 = vmatprep.subr.mxu0 0.0
  %8003 = vmatpush1.msra.mxu0 0.0
  %8004 = vmatprep.subr.mxu0 0.0
  %8005 = vmatpush1.msra.mxu0 0.0
  %8006 = vmatprep.subr.mxu0 0.0
  %8007 = vmatpush1.msra.mxu0 0.0
  %8008 = vmatprep.subr.mxu0 0.0
  %8009 = vmatpush1.msra.mxu0 0.0
  %8010 = vmatprep.subr.mxu0 0.0
  %8011 = vmatpush1.msra.mxu0 0.0
  %8012 = vmatprep.subr.mxu0 0.0
  %8013 = vmatpush1.msra.mxu0 0.0
  %8014 = vmatprep.subr.mxu0 0.0
  %8015 = vmatpush1.msra.mxu0 0.0
  %8016 = vmatprep.subr.mxu0 0.0
  %8017 = vmatpush1.msra.mxu0 %v7960
  %8018 = vmatprep.subr.mxu0 0.0
  %8019 = vmatpush1.msra.mxu0 %v7959
  %8020 = vmatprep.subr.mxu0 0.0
  %8021 = vmatpush1.msra.mxu0 %v7958
  %8022 = vmatprep.subr.mxu0 0.0
  %8023 = vmatpush1.msra.mxu0 %v7957
  %8024 = vmatprep.subr.mxu0 0.0
  %8025 = vmatpush2.msra.mxu0 0.0
  %8026 = vmatprep.subr.mxu0 0.0
  %8027 = vmatpush2.msra.mxu0 0.0
  %8028 = vmatprep.subr.mxu0 0.0
  %8029 = vmatpush2.msra.mxu0 0.0
  %8030 = vmatprep.subr.mxu0 0.0
  %8031 = vmatpush2.msra.mxu0 0.0
  %8032 = vmatprep.subr.mxu0 0.0
  %8033 = vmatpush2.msra.mxu0 0.0
  %8034 = vmatprep.subr.mxu0 0.0
  %8035 = vmatpush2.msra.mxu0 0.0
  %8036 = vmatprep.subr.mxu0 0.0
  %8037 = vmatpush2.msra.mxu0 0.0
  %8038 = vmatprep.subr.mxu0 0.0
  %8039 = vmatpush2.msra.mxu0 0.0
  %8040 = vmatprep.subr.mxu0 0.0
  %8041 = vmatpush2.msra.mxu0 0.0
  %8042 = vmatprep.subr.mxu0 0.0
  %8043 = vmatpush2.msra.mxu0 0.0
  %8044 = vmatprep.subr.mxu0 0.0
  %8045 = vmatpush2.msra.mxu0 0.0
  %8046 = vmatprep.subr.mxu0 0.0
  %8047 = vmatpush2.msra.mxu0 0.0
  %8048 = vmatprep.subr.mxu0 0.0
  %8049 = vmatpush2.msra.mxu0 0.0
  %8050 = vmatprep.subr.mxu0 0.0
  %8051 = vmatpush2.msra.mxu0 0.0
  %8052 = vmatprep.subr.mxu0 0.0
  %8053 = vmatpush2.msra.mxu0 0.0
  %8054 = vmatprep.subr.mxu0 0.0
  %8055 = vmatpush2.msra.mxu0 0.0
  %8056 = vmatprep.mubr.f32.mxu0 0.0
  %8057 = vmatmul.mubr.f32.gmra.mxu0 %v7969
  %v8058 = vpop.f32.mrf.mxu0
  %v8059 = vadd.f32 %v7966, %v8058
  %v8060 = vpop.f32.mrf.mxu0
  %8061 = vmatprep.mubr.f32.mxu0 0.0
  %8062 = vmatmul.mubr.f32.gmra.mxu0 %v7972
  %v8063 = vpop.f32.mrf.mxu0
  %v8064 = vadd.f32 %v7966, %v8063
  %v8065 = vpop.f32.mrf.mxu0
  %8066 = vmatprep.mubr.f32.mxu0 0.0
  %8067 = vmatmul.mubr.f32.gmra.mxu0 %v7975
  %v8068 = vpop.f32.mrf.mxu0
  %v8069 = vadd.f32 %v7966, %v8068
  %v8070 = vpop.f32.mrf.mxu0
  %8071 = vmatprep.mubr.f32.mxu0 0.0
  %8072 = vmatmul.mubr.f32.gmra.mxu0 %v7978
  %v8073 = vpop.f32.mrf.mxu0
  %v8074 = vadd.f32 %v7966, %v8073
  %v8075 = vpop.f32.mrf.mxu0
  %8076 = vmatprep.mubr.f32.mxu0 0.0
  %8077 = vmatmul.mubr.f32.gmra.mxu0 %v7981
  %v8078 = vpop.f32.mrf.mxu0
  %v8079 = vadd.f32 %v7966, %v8078
  %v8080 = vpop.f32.mrf.mxu0
  %8081 = vmatprep.mubr.f32.mxu0 0.0
  %8082 = vmatmul.mubr.f32.gmra.mxu0 %v7984
  %v8083 = vpop.f32.mrf.mxu0
  %v8084 = vadd.f32 %v7966, %v8083
  %v8085 = vpop.f32.mrf.mxu0
  %8086 = vmatprep.mubr.f32.mxu0 0.0
  %8087 = vmatmul.mubr.f32.gmra.mxu0 %v7987
  %v8088 = vpop.f32.mrf.mxu0
  %v8089 = vadd.f32 %v7966, %v8088
  %v8090 = vpop.f32.mrf.mxu0
  %8091 = vmatprep.mubr.f32.mxu0 0.0
  %8092 = vmatmul.mubr.f32.gmra.mxu0 %v7990
  %v8093 = vpop.f32.mrf.mxu0
  %v8094 = vadd.f32 %v7966, %v8093
  %v8095 = vpop.f32.mrf.mxu0
  %8096 = vdwg.mxu0
  %v8097 = vmax.f32 %v8059, 0.0
  %v8098 = vmax.f32 %v8064, 0.0
  %v8099 = vmax.f32 %v8069, 0.0
  %v8100 = vmax.f32 %v8074, 0.0
  %v8101 = vmax.f32 %v8079, 0.0
  %v8102 = vmax.f32 %v8084, 0.0
  %v8103 = vmax.f32 %v8089, 0.0
  %v8104 = vmax.f32 %v8094, 0.0
  %v8105 = vld [vmem:[%s53] sm:$0xff]
  %v8106 = vld [vmem:[%s53 + $0x8] sm:$0xff]
  %v8107 = vld [vmem:[%s53 + $0x10] sm:$0xff]
  %v8108 = vld [vmem:[%s53 + $0x18] sm:$0xff]
  %v8109 = vld [vmem:[%s53 + $0x20] sm:$0xff]
  %v8110 = vld [vmem:[%s53 + $0x28] sm:$0xff]
  %v8111 = vld [vmem:[%s53 + $0x30] sm:$0xff]
  %v8112 = vld [vmem:[%s53 + $0x38] sm:$0xff]
  %v8113 = vld [vmem:[%s53 + $0x40] sm:$0xff]
  %v8114 = vld [vmem:[%s53 + $0x48] sm:$0xff]
  %v8115 = vld [vmem:[%s53 + $0x50] sm:$0xff]
  %v8116 = vld [vmem:[%s53 + $0x58] sm:$0xff]
  %v8117 = vld [vmem:[%s53 + $0x60] sm:$0xff]
  %v8118 = vld [vmem:[%s53 + $0x68] sm:$0xff]
  %v8119 = vld [vmem:[%s53 + $0x70] sm:$0xff]
  %v8120 = vld [vmem:[%s53 + $0x78] sm:$0xff]
  %8121 = vmatprep.subr.mxu0 0.0
  %8122 = vmatpush1.msra.mxu0 %v8120
  %8123 = vmatprep.subr.mxu0 0.0
  %8124 = vmatpush1.msra.mxu0 %v8119
  %8125 = vmatprep.subr.mxu0 0.0
  %8126 = vmatpush1.msra.mxu0 %v8118
  %8127 = vmatprep.subr.mxu0 0.0
  %8128 = vmatpush1.msra.mxu0 %v8117
  %8129 = vmatprep.subr.mxu0 0.0
  %8130 = vmatpush1.msra.mxu0 %v8116
  %8131 = vmatprep.subr.mxu0 0.0
  %8132 = vmatpush1.msra.mxu0 %v8115
  %8133 = vmatprep.subr.mxu0 0.0
  %8134 = vmatpush1.msra.mxu0 %v8114
  %8135 = vmatprep.subr.mxu0 0.0
  %8136 = vmatpush1.msra.mxu0 %v8113
  %8137 = vmatprep.subr.mxu0 0.0
  %8138 = vmatpush1.msra.mxu0 %v8112
  %8139 = vmatprep.subr.mxu0 0.0
  %8140 = vmatpush1.msra.mxu0 %v8111
  %8141 = vmatprep.subr.mxu0 0.0
  %8142 = vmatpush1.msra.mxu0 %v8110
  %8143 = vmatprep.subr.mxu0 0.0
  %8144 = vmatpush1.msra.mxu0 %v8109
  %8145 = vmatprep.subr.mxu0 0.0
  %8146 = vmatpush1.msra.mxu0 %v8108
  %8147 = vmatprep.subr.mxu0 0.0
  %8148 = vmatpush1.msra.mxu0 %v8107
  %8149 = vmatprep.subr.mxu0 0.0
  %8150 = vmatpush1.msra.mxu0 %v8106
  %8151 = vmatprep.subr.mxu0 0.0
  %8152 = vmatpush1.msra.mxu0 %v8105
  %8153 = vmatprep.subr.mxu0 0.0
  %8154 = vmatpush2.msra.mxu0 0.0
  %8155 = vmatprep.subr.mxu0 0.0
  %8156 = vmatpush2.msra.mxu0 0.0
  %8157 = vmatprep.subr.mxu0 0.0
  %8158 = vmatpush2.msra.mxu0 0.0
  %8159 = vmatprep.subr.mxu0 0.0
  %8160 = vmatpush2.msra.mxu0 0.0
  %8161 = vmatprep.subr.mxu0 0.0
  %8162 = vmatpush2.msra.mxu0 0.0
  %8163 = vmatprep.subr.mxu0 0.0
  %8164 = vmatpush2.msra.mxu0 0.0
  %8165 = vmatprep.subr.mxu0 0.0
  %8166 = vmatpush2.msra.mxu0 0.0
  %8167 = vmatprep.subr.mxu0 0.0
  %8168 = vmatpush2.msra.mxu0 0.0
  %8169 = vmatprep.subr.mxu0 0.0
  %8170 = vmatpush2.msra.mxu0 0.0
  %8171 = vmatprep.subr.mxu0 0.0
  %8172 = vmatpush2.msra.mxu0 0.0
  %8173 = vmatprep.subr.mxu0 0.0
  %8174 = vmatpush2.msra.mxu0 0.0
  %8175 = vmatprep.subr.mxu0 0.0
  %8176 = vmatpush2.msra.mxu0 0.0
  %8177 = vmatprep.subr.mxu0 0.0
  %8178 = vmatpush2.msra.mxu0 0.0
  %8179 = vmatprep.subr.mxu0 0.0
  %8180 = vmatpush2.msra.mxu0 0.0
  %8181 = vmatprep.subr.mxu0 0.0
  %8182 = vmatpush2.msra.mxu0 0.0
  %8183 = vmatprep.subr.mxu0 0.0
  %8184 = vmatpush2.msra.mxu0 0.0
  %8185 = vmatprep.mubr.f32.mxu0 0.0
  %8186 = vmatmul.mubr.f32.gmra.mxu0 %v8097
  %v8187 = vpop.f32.mrf.mxu0
  %v8188 = vadd.f32 0.0, %v8187
  %v8189 = vpop.f32.mrf.mxu0
  %8190 = vmatprep.mubr.f32.mxu0 0.0
  %8191 = vmatmul.mubr.f32.gmra.mxu0 %v8098
  %v8192 = vpop.f32.mrf.mxu0
  %v8193 = vadd.f32 0.0, %v8192
  %v8194 = vpop.f32.mrf.mxu0
  %8195 = vmatprep.mubr.f32.mxu0 0.0
  %8196 = vmatmul.mubr.f32.gmra.mxu0 %v8099
  %v8197 = vpop.f32.mrf.mxu0
  %v8198 = vadd.f32 0.0, %v8197
  %v8199 = vpop.f32.mrf.mxu0
  %8200 = vmatprep.mubr.f32.mxu0 0.0
  %8201 = vmatmul.mubr.f32.gmra.mxu0 %v8100
  %v8202 = vpop.f32.mrf.mxu0
  %v8203 = vadd.f32 0.0, %v8202
  %v8204 = vpop.f32.mrf.mxu0
  %8205 = vmatprep.mubr.f32.mxu0 0.0
  %8206 = vmatmul.mubr.f32.gmra.mxu0 %v8101
  %v8207 = vpop.f32.mrf.mxu0
  %v8208 = vadd.f32 0.0, %v8207
  %v8209 = vpop.f32.mrf.mxu0
  %8210 = vmatprep.mubr.f32.mxu0 0.0
  %8211 = vmatmul.mubr.f32.gmra.mxu0 %v8102
  %v8212 = vpop.f32.mrf.mxu0
  %v8213 = vadd.f32 0.0, %v8212
  %v8214 = vpop.f32.mrf.mxu0
  %8215 = vmatprep.mubr.f32.mxu0 0.0
  %8216 = vmatmul.mubr.f32.gmra.mxu0 %v8103
  %v8217 = vpop.f32.mrf.mxu0
  %v8218 = vadd.f32 0.0, %v8217
  %v8219 = vpop.f32.mrf.mxu0
  %8220 = vmatprep.mubr.f32.mxu0 0.0
  %8221 = vmatmul.mubr.f32.gmra.mxu0 %v8104
  %v8222 = vpop.f32.mrf.mxu0
  %v8223 = vadd.f32 0.0, %v8222
  %v8224 = vpop.f32.mrf.mxu0
  %8225 = vdwg.mxu0
  %v8226 = vadd.f32 %v7949, %v8188
  %v8227 = vadd.f32 %v7950, %v8193
  %v8228 = vadd.f32 %v7951, %v8198
  %v8229 = vadd.f32 %v7952, %v8203
  %v8230 = vadd.f32 %v7953, %v8208
  %v8231 = vadd.f32 %v7954, %v8213
  %v8232 = vadd.f32 %v7955, %v8218
  %v8233 = vadd.f32 %v7956, %v8223
  %v8234 = vld [vmem:[%s55] sm:$0x1]
  %v8236 = vlaneseq
  %v8237 = vshrl.u32 %v8236, 7
  %v8238 = vsub.s32 0, %v8237
  %v8239 = vrot.slane %v8234, %v8238
  %v8241 = vadd.f32 %v8226, %v8239
  %v8242 = vadd.f32 %v8227, %v8239
  %v8243 = vadd.f32 %v8228, %v8239
  %v8244 = vadd.f32 %v8229, %v8239
  %v8245 = vadd.f32 %v8230, %v8239
  %v8246 = vadd.f32 %v8231, %v8239
  %v8247 = vadd.f32 %v8232, %v8239
  %v8248 = vadd.f32 %v8233, %v8239
  %v8249 = vld [vmem:[%s57] sm:$0x1]
  %v8250 = vld [vmem:[%s59] sm:$0x1]
  %v8251 = vsel %vm195, %v8241, 0.0
  %8252 = vadd.xlane.f32.xlu0 %v8251
  %v8253 = vpop.xlane.xlu0 %8252
  %v8254 = vsel %vm195, %v8242, 0.0
  %8255 = vadd.xlane.f32.xlu0 %v8254
  %v8256 = vpop.xlane.xlu0 %8255
  %v8257 = vsel %vm195, %v8243, 0.0
  %8258 = vadd.xlane.f32.xlu0 %v8257
  %v8259 = vpop.xlane.xlu0 %8258
  %v8260 = vsel %vm195, %v8244, 0.0
  %8261 = vadd.xlane.f32.xlu0 %v8260
  %v8262 = vpop.xlane.xlu0 %8261
  %v8263 = vsel %vm195, %v8245, 0.0
  %8264 = vadd.xlane.f32.xlu0 %v8263
  %v8265 = vpop.xlane.xlu0 %8264
  %v8266 = vsel %vm195, %v8246, 0.0
  %8267 = vadd.xlane.f32.xlu0 %v8266
  %v8268 = vpop.xlane.xlu0 %8267
  %v8269 = vsel %vm195, %v8247, 0.0
  %8270 = vadd.xlane.f32.xlu0 %v8269
  %v8271 = vpop.xlane.xlu0 %8270
  %v8272 = vsel %vm195, %v8248, 0.0
  %8273 = vadd.xlane.f32.xlu0 %v8272
  %v8274 = vpop.xlane.xlu0 %8273
  %v8275 = vmul.f32 %v8253, %v2627
  %v8276 = vmul.f32 %v8256, %v2627
  %v8277 = vmul.f32 %v8259, %v2627
  %v8278 = vmul.f32 %v8262, %v2627
  %v8279 = vmul.f32 %v8265, %v2627
  %v8280 = vmul.f32 %v8268, %v2627
  %v8281 = vmul.f32 %v8271, %v2627
  %v8282 = vmul.f32 %v8274, %v2627
  %v8283 = vsub.f32 %v8241, %v8275
  %v8284 = vsub.f32 %v8242, %v8276
  %v8285 = vsub.f32 %v8243, %v8277
  %v8286 = vsub.f32 %v8244, %v8278
  %v8287 = vsub.f32 %v8245, %v8279
  %v8288 = vsub.f32 %v8246, %v8280
  %v8289 = vsub.f32 %v8247, %v8281
  %v8290 = vsub.f32 %v8248, %v8282
  %v8291 = vmul.f32 %v8283, %v8283
  %v8292 = vmul.f32 %v8284, %v8284
  %v8293 = vmul.f32 %v8285, %v8285
  %v8294 = vmul.f32 %v8286, %v8286
  %v8295 = vmul.f32 %v8287, %v8287
  %v8296 = vmul.f32 %v8288, %v8288
  %v8297 = vmul.f32 %v8289, %v8289
  %v8298 = vmul.f32 %v8290, %v8290
  %v8299 = vsel %vm195, %v8291, 0.0
  %8300 = vadd.xlane.f32.xlu0 %v8299
  %v8301 = vpop.xlane.xlu0 %8300
  %v8302 = vsel %vm195, %v8292, 0.0
  %8303 = vadd.xlane.f32.xlu0 %v8302
  %v8304 = vpop.xlane.xlu0 %8303
  %v8305 = vsel %vm195, %v8293, 0.0
  %8306 = vadd.xlane.f32.xlu0 %v8305
  %v8307 = vpop.xlane.xlu0 %8306
  %v8308 = vsel %vm195, %v8294, 0.0
  %8309 = vadd.xlane.f32.xlu0 %v8308
  %v8310 = vpop.xlane.xlu0 %8309
  %v8311 = vsel %vm195, %v8295, 0.0
  %8312 = vadd.xlane.f32.xlu0 %v8311
  %v8313 = vpop.xlane.xlu0 %8312
  %v8314 = vsel %vm195, %v8296, 0.0
  %8315 = vadd.xlane.f32.xlu0 %v8314
  %v8316 = vpop.xlane.xlu0 %8315
  %v8317 = vsel %vm195, %v8297, 0.0
  %8318 = vadd.xlane.f32.xlu0 %v8317
  %v8319 = vpop.xlane.xlu0 %8318
  %v8320 = vsel %vm195, %v8298, 0.0
  %8321 = vadd.xlane.f32.xlu0 %v8320
  %v8322 = vpop.xlane.xlu0 %8321
  %v8323 = vmul.f32 %v8301, %v2627
  %v8324 = vmul.f32 %v8304, %v2627
  %v8325 = vmul.f32 %v8307, %v2627
  %v8326 = vmul.f32 %v8310, %v2627
  %v8327 = vmul.f32 %v8313, %v2627
  %v8328 = vmul.f32 %v8316, %v2627
  %v8329 = vmul.f32 %v8319, %v2627
  %v8330 = vmul.f32 %v8322, %v2627
  %v8331 = vadd.f32 %v8323, 1e-05
  %v8332 = vadd.f32 %v8324, 1e-05
  %v8333 = vadd.f32 %v8325, 1e-05
  %v8334 = vadd.f32 %v8326, 1e-05
  %v8335 = vadd.f32 %v8327, 1e-05
  %v8336 = vadd.f32 %v8328, 1e-05
  %v8337 = vadd.f32 %v8329, 1e-05
  %v8338 = vadd.f32 %v8330, 1e-05
  %v8339 = vrsqrt.pop %v8331
  %v8340 = vrsqrt.pop %v8332
  %v8341 = vrsqrt.pop %v8333
  %v8342 = vrsqrt.pop %v8334
  %v8343 = vrsqrt.pop %v8335
  %v8344 = vrsqrt.pop %v8336
  %v8345 = vrsqrt.pop %v8337
  %v8346 = vrsqrt.pop %v8338
  %v8347 = vmul.f32 %v8283, %v8339
  %v8348 = vmul.f32 %v8284, %v8340
  %v8349 = vmul.f32 %v8285, %v8341
  %v8350 = vmul.f32 %v8286, %v8342
  %v8351 = vmul.f32 %v8287, %v8343
  %v8352 = vmul.f32 %v8288, %v8344
  %v8353 = vmul.f32 %v8289, %v8345
  %v8354 = vmul.f32 %v8290, %v8346
  %v8356 = vlaneseq
  %v8357 = vshrl.u32 %v8356, 7
  %v8358 = vsub.s32 0, %v8357
  %v8359 = vrot.slane %v8249, %v8358
  %v8361 = vmul.f32 %v8347, %v8359
  %v8362 = vmul.f32 %v8348, %v8359
  %v8363 = vmul.f32 %v8349, %v8359
  %v8364 = vmul.f32 %v8350, %v8359
  %v8365 = vmul.f32 %v8351, %v8359
  %v8366 = vmul.f32 %v8352, %v8359
  %v8367 = vmul.f32 %v8353, %v8359
  %v8368 = vmul.f32 %v8354, %v8359
  %v8370 = vlaneseq
  %v8371 = vshrl.u32 %v8370, 7
  %v8372 = vsub.s32 0, %v8371
  %v8373 = vrot.slane %v8250, %v8372
  %v8375 = vadd.f32 %v8361, %v8373
  %v8376 = vadd.f32 %v8362, %v8373
  %v8377 = vadd.f32 %v8363, %v8373
  %v8378 = vadd.f32 %v8364, %v8373
  %v8379 = vadd.f32 %v8365, %v8373
  %v8380 = vadd.f32 %v8366, %v8373
  %v8381 = vadd.f32 %v8367, %v8373
  %v8382 = vadd.f32 %v8368, %v8373
  %8383 = vst.msk [vmem:[%s61] sm:$0xff] %vm195, %v8375
  %8384 = vst.msk [vmem:[%s61 + $0x8] sm:$0xff] %vm195, %v8376
  %8385 = vst.msk [vmem:[%s61 + $0x10] sm:$0xff] %vm195, %v8377
  %8386 = vst.msk [vmem:[%s61 + $0x18] sm:$0xff] %vm195, %v8378
  %8387 = vst.msk [vmem:[%s61 + $0x20] sm:$0xff] %vm195, %v8379
  %8388 = vst.msk [vmem:[%s61 + $0x28] sm:$0xff] %vm195, %v8380
  %8389 = vst.msk [vmem:[%s61 + $0x30] sm:$0xff] %vm195, %v8381
  %8390 = vst.msk [vmem:[%s61 + $0x38] sm:$0xff] %vm195, %v8382
  // Predicated region
  $region122: #{tpu_custom_call.1} parent=0 // pred_check
    _
  $region123: #{tpu_custom_call.1} parent=0 // pred_check_branch
    %8392 = sbr.rel (0) target = $region125
  $region124: #{tpu_custom_call.1} parent=0 // pred_region
    _
  $region125: #{tpu_custom_call.1} parent=0 // pred_fallthru
    _
  // Predicated region
  $region126: #{tpu_custom_call.1} parent=0 // pred_check
    _
  $region127: #{tpu_custom_call.1} parent=0 // pred_check_branch
    %8394 = sbr.rel (0) target = $region129
  $region128: #{tpu_custom_call.1} parent=0 // pred_region
    _
  $region129: #{tpu_custom_call.1} parent=0 // pred_fallthru
    _

</llo_original>
